<compile_context>
chip_gen: v7x
topology: tpu7x:2x2x1
jax: 0.10.0
libtpu: 0.0.40
codegen_flags: <defaults>
</compile_context>

<pallas_src>
from functools import partial

import jax
import jax.numpy as jnp
from jax.experimental import pallas as pl
from jax.experimental.pallas import tpu as pltpu

F32 = jnp.float32
BF16 = jnp.bfloat16

# GEMM tile caps (256x256 MXU-shaped tiles for v6e/v7x; on v5e a 256 tile is
# simply two 128-wide MXU passes, still well inside VMEM).
TM_CAP = 256
TN_CAP = 256
TK_CAP = 512
POOL_TM_CAP = 512


def _rup(x, m):
    return (x + m - 1) // m * m


def _tile_and_pad(d, cap, align):
    """Pick tile size <= cap (multiple of `align`) and a padded extent it divides."""
    dp = _rup(d, align)
    if dp <= cap:
        return dp, dp
    t = cap
    while t > align and dp % t != 0:
        t //= 2
    if dp % t != 0:
        dp = _rup(dp, t)
    return t, dp


def _pad_to(x, shape, value=0.0):
    if tuple(x.shape) == tuple(shape):
        return x
    pads = [(0, s - d) for d, s in zip(x.shape, shape)]
    return jnp.pad(x, pads, constant_values=value)


# ----------------------------------------------------------------------------
# Pallas kernels
# ----------------------------------------------------------------------------
def _gemm_bias_kernel(a_ref, b_ref, bias_ref, o_ref, acc_ref, *, relu):
    # a: (tm, tk) bf16, b: (tk, tn) bf16, bias: (1, tn) f32, acc: (tm, tn) f32
    @pl.when(pl.program_id(2) == 0)
    def _():
        acc_ref[...] = jnp.zeros_like(acc_ref)

    acc_ref[...] += jnp.dot(a_ref[...], b_ref[...],
                            preferred_element_type=jnp.float32)

    @pl.when(pl.program_id(2) == pl.num_programs(2) - 1)
    def _():
        r = acc_ref[...] + bias_ref[...]
        if relu:
            r = jnp.maximum(r, 0.0)
        o_ref[...] = r.astype(o_ref.dtype)


def _maxpool_kernel(p_ref, o_ref):
    # p: (KK, tm, Cp) -> o: (tm, Cp); max over the window axis (leading axis).
    o_ref[...] = jnp.max(p_ref[...], axis=0)


# ----------------------------------------------------------------------------
# Pallas wrappers
# ----------------------------------------------------------------------------
def gemm_bias(a, b_p, bias_p, n_out, *, relu, out_dtype=BF16):
    """a:(M,K) bf16 @ b_p:(Kp0,Np0) bf16 (pre-padded) + bias, fused ReLU.

    b_p / bias_p are GEMM-ready weights prepared once (transposed, reshaped
    and zero-padded to multiples of 128).  Returns (M, n_out) in out_dtype.
    """
    M, K = a.shape
    Kp0, Np0 = b_p.shape

    tm, Mp = _tile_and_pad(M, TM_CAP, 16)       # bf16 sublane packing -> 16
    tk, Kp = _tile_and_pad(Kp0, TK_CAP, 128)
    tn, Np = _tile_and_pad(Np0, TN_CAP, 128)

    a_p = _pad_to(a.astype(BF16), (Mp, Kp))
    b_pp = _pad_to(b_p, (Kp, Np))
    bias_pp = _pad_to(bias_p, (1, Np))

    grid = (Mp // tm, Np // tn, Kp // tk)

    out = pl.pallas_call(
        partial(_gemm_bias_kernel, relu=relu),
        out_shape=jax.ShapeDtypeStruct((Mp, Np), out_dtype),
        grid=grid,
        in_specs=[
            pl.BlockSpec((tm, tk), lambda i, j, k: (i, k)),
            pl.BlockSpec((tk, tn), lambda i, j, k: (k, j)),
            pl.BlockSpec((1, tn), lambda i, j, k: (0, j)),
        ],
        out_specs=pl.BlockSpec((tm, tn), lambda i, j, k: (i, j)),
        scratch_shapes=[pltpu.VMEM((tm, tn), F32)],
        compiler_params=pltpu.CompilerParams(
            dimension_semantics=("parallel", "parallel", "arbitrary")),
    )(a_p, b_pp, bias_pp)
    return out[:M, :n_out]


def _im2col_nhwc(x, kh, kw, stride, padding):
    """x: (N, H, W, C) -> patches (N*OH*OW, kh*kw*C) in (kh, kw, C) order."""
    N, H, W, C = x.shape
    if padding:
        x = jnp.pad(x, ((0, 0), (padding, padding), (padding, padding), (0, 0)))
    Hp, Wp = H + 2 * padding, W + 2 * padding
    OH = (Hp - kh) // stride + 1
    OW = (Wp - kw) // stride + 1
    cols = []
    for i in range(kh):
        for j in range(kw):
            cols.append(
                x[:, i: i + stride * (OH - 1) + 1: stride,
                     j: j + stride * (OW - 1) + 1: stride, :]
            )
    patches = jnp.stack(cols, axis=3).reshape(N * OH * OW, kh * kw * C)
    return patches, OH, OW


def conv2d_nhwc(x, w_p, bias_p, cout, kh, kw, *, stride=1, padding=0, relu=False):
    """Conv2d on NHWC input via im2col + tiled Pallas GEMM (weights pre-packed)."""
    N = x.shape[0]
    patches, OH, OW = _im2col_nhwc(x, kh, kw, stride, padding)
    out = gemm_bias(patches, w_p, bias_p, cout, relu=relu, out_dtype=BF16)
    return out.reshape(N, OH, OW, cout)


def maxpool2d_nhwc(x, k, stride, padding):
    """PyTorch MaxPool2d semantics (floor mode), NHWC, padding acts as -inf."""
    N, H, W, C = x.shape
    neg = float(jnp.finfo(x.dtype).min)
    if padding:
        x = jnp.pad(
            x, ((0, 0), (padding, padding), (padding, padding), (0, 0)),
            constant_values=neg,
        )
    Hp, Wp = H + 2 * padding, W + 2 * padding
    OH = (Hp - k) // stride + 1
    OW = (Wp - k) // stride + 1
    cols = []
    for i in range(k):
        for j in range(k):
            cols.append(
                x[:, i: i + stride * (OH - 1) + 1: stride,
                     j: j + stride * (OW - 1) + 1: stride, :]
            )
    KK = k * k
    M = N * OH * OW
    patches = jnp.stack(cols, axis=0).reshape(KK, M, C)

    tm, Mp = _tile_and_pad(M, POOL_TM_CAP, 16)
    Cp = _rup(C, 128)
    p_p = jnp.full((KK, Mp, Cp), neg, x.dtype).at[:, :M, :C].set(patches)

    out = pl.pallas_call(
        _maxpool_kernel,
        out_shape=jax.ShapeDtypeStruct((Mp, Cp), x.dtype),
        grid=(Mp // tm,),
        in_specs=[pl.BlockSpec((KK, tm, Cp), lambda i: (0, i, 0))],
        out_specs=pl.BlockSpec((tm, Cp), lambda i: (i, 0)),
        compiler_params=pltpu.CompilerParams(
            dimension_semantics=("parallel",)),
    )(p_p)

    return out[:M, :C].reshape(N, OH, OW, C)


# ----------------------------------------------------------------------------
# Parameters
# ----------------------------------------------------------------------------
def init_params(key, classes_num, flat_features):
    """PyTorch-layout synthetic parameters (deterministic)."""
    def w(k, shape, scale=0.05):
        return scale * jax.random.normal(k, shape, F32)

    names_shapes = [
        ("conv11", (48, 3, 11, 11)), ("conv12", (48, 3, 11, 11)),
        ("conv21", (128, 48, 5, 5)), ("conv22", (128, 48, 5, 5)),
        ("conv31", (192, 256, 3, 3)), ("conv32", (192, 256, 3, 3)),
        ("conv41", (192, 192, 3, 3)), ("conv42", (192, 192, 3, 3)),
        ("conv51", (128, 192, 3, 3)), ("conv52", (128, 192, 3, 3)),
        ("ffn11", (1024, flat_features)), ("ffn12", (1024, flat_features)),
        ("ffn21", (1024, 2048)), ("ffn22", (1024, 2048)),
        ("ffn31", (classes_num, 2048)),
    ]
    keys = jax.random.split(key, 2 * len(names_shapes))
    params = {}
    for idx, (name, shape) in enumerate(names_shapes):
        params[name + "_w"] = w(keys[2 * idx], shape)
        params[name + "_b"] = w(keys[2 * idx + 1], (shape[0],), scale=0.01)
    return params


def prepare_params(p):
    """Convert PyTorch-layout params into GEMM-ready, lane-padded bf16 matrices.

    Done ONCE (outside the forward pass): conv weights -> (kh*kw*Cin, Cout),
    linear weights -> (in, out), twin branches sharing an input fused along the
    output dimension, everything zero-padded to multiples of 128 and cast to
    bf16 (biases stay f32).
    """
    def pad_cast(m):
        K, N = m.shape
        out = jnp.zeros((_rup(K, 128), _rup(N, 128)), BF16)
        return out.at[:K, :N].set(m.astype(BF16))

    def conv_w(w):  # (Cout, Cin, kh, kw) -> padded (kh*kw*Cin, Cout)
        cout, cin, kh, kw = w.shape
        return pad_cast(w.transpose(2, 3, 1, 0).reshape(kh * kw * cin, cout))

    def lin_w(w):   # (out, in) -> padded (in, out)
        return pad_cast(w.T)

    def bias2(b):
        n = b.shape[0]
        return jnp.zeros((1, _rup(n, 128)), F32).at[0, :n].set(b.astype(F32))

    g = {}
    # Fused twin branches (same input): conv11+conv12, conv31+conv32, ffn1, ffn2.
    g["conv1_w"] = conv_w(jnp.concatenate([p["conv11_w"], p["conv12_w"]], axis=0))
    g["conv1_b"] = bias2(jnp.concatenate([p["conv11_b"], p["conv12_b"]], axis=0))
    g["conv3_w"] = conv_w(jnp.concatenate([p["conv31_w"], p["conv32_w"]], axis=0))
    g["conv3_b"] = bias2(jnp.concatenate([p["conv31_b"], p["conv32_b"]], axis=0))
    for name in ("conv21", "conv22", "conv41", "conv42", "conv51", "conv52"):
        g[name + "_w"] = conv_w(p[name + "_w"])
        g[name + "_b"] = bias2(p[name + "_b"])
    g["ffn1_w"] = lin_w(jnp.concatenate([p["ffn11_w"], p["ffn12_w"]], axis=0))
    g["ffn1_b"] = bias2(jnp.concatenate([p["ffn11_b"], p["ffn12_b"]], axis=0))
    g["ffn2_w"] = lin_w(jnp.concatenate([p["ffn21_w"], p["ffn22_w"]], axis=0))
    g["ffn2_b"] = bias2(jnp.concatenate([p["ffn21_b"], p["ffn22_b"]], axis=0))
    g["ffn31_w"] = lin_w(p["ffn31_w"])
    g["ffn31_b"] = bias2(p["ffn31_b"])
    return g


# ----------------------------------------------------------------------------
# Forward pass (matches the PyTorch AlexNet.forward; dropout = eval/identity)
# ----------------------------------------------------------------------------
def alexnet_forward(x_nchw, g, *, classes_num):
    # Single relayout to NHWC + bf16 at the network input.
    x = x_nchw.transpose(0, 2, 3, 1).astype(BF16)

    # Stage 1 — conv11/conv12 fused (shared input), then per-branch conv2,
    # then one pool on the channel-concatenated tensor (pool21 == pool22).
    y = conv2d_nhwc(x, g["conv1_w"], g["conv1_b"], 96, 11, 11,
                    stride=4, padding=0, relu=True)
    st = conv2d_nhwc(y[..., :48], g["conv21_w"], g["conv21_b"], 128, 5, 5,
                     stride=1, padding=2, relu=True)
    nd = conv2d_nhwc(y[..., 48:], g["conv22_w"], g["conv22_b"], 128, 5, 5,
                     stride=1, padding=2, relu=True)
    x = jnp.concatenate([st, nd], axis=-1)            # (N, h, w, 256)
    x = maxpool2d_nhwc(x, 3, 2, 1)

    # Stage 2 — conv31/conv32 fused, shared pool, then per-branch conv4/conv5.
    y = conv2d_nhwc(x, g["conv3_w"], g["conv3_b"], 384, 3, 3,
                    padding=1, relu=True)
    y = maxpool2d_nhwc(y, 3, 2, 0)
    st = conv2d_nhwc(y[..., :192], g["conv41_w"], g["conv41_b"], 192, 3, 3,
                     padding=1, relu=True)
    st = conv2d_nhwc(st, g["conv51_w"], g["conv51_b"], 128, 3, 3,
                     padding=1, relu=False)
    nd = conv2d_nhwc(y[..., 192:], g["conv42_w"], g["conv42_b"], 192, 3, 3,
                     padding=1, relu=True)
    nd = conv2d_nhwc(nd, g["conv52_w"], g["conv52_b"], 128, 3, 3,
                     padding=1, relu=False)
    x = jnp.concatenate([st, nd], axis=-1)            # (N, h, w, 256)

    # Flatten in NCHW order (torch.nn.Flatten semantics).
    n = x.shape[0]
    x = x.transpose(0, 3, 1, 2).reshape(n, -1)

    # Classifier — ffn11+ffn12 and ffn21+ffn22 fused into single GEMMs whose
    # output is already the concatenated activation.  Dropout = identity.
    # TODO(synk): stochastic nn.Dropout (train mode) not implemented; eval-mode identity used.
    x = gemm_bias(x.astype(BF16), g["ffn1_w"], g["ffn1_b"], 2048,
                  relu=True, out_dtype=BF16)
    x = gemm_bias(x, g["ffn2_w"], g["ffn2_b"], 2048,
                  relu=True, out_dtype=BF16)
    return gemm_bias(x, g["ffn31_w"], g["ffn31_b"], classes_num,
                     relu=False, out_dtype=F32)


if __name__ == "__main__":
    # Smallest spatial size that keeps every conv/pool valid: 27x27.
    #   conv1 (k11,s4) -> 5x5 ; pool2 (k3,s2,p1) -> 3x3 ; pool3 (k3,s2) -> 1x1
    # Flatten features = 256 * 1 * 1 = 256  (LazyLinear in_features).
    N, C, H, W = 2, 3, 27, 27
    classes_num = 10
    flat_features = 256

    key = jax.random.PRNGKey(0)
    k_x, k_p = jax.random.split(key)
    x = jax.random.normal(k_x, (N, C, H, W), F32)
    params = init_params(k_p, classes_num, flat_features)
    gemm_params = prepare_params(params)   # one-time weight packing

    fwd = jax.jit(partial(alexnet_forward, classes_num=classes_num))
    logits = fwd(x, gemm_params)
    logits = jax.block_until_ready(logits)

    assert logits.shape == (N, classes_num), logits.shape
    assert bool(jnp.all(jnp.isfinite(logits)))
    print("KERNEL_OK")
</pallas_src>

<mosaic_0001>
module attributes {stable_mosaic.version = 11 : i64} {
  func.func @_gemm_bias_kernel(%arg0: i32, %arg1: i32, %arg2: i32, %arg3: memref<64x384xbf16, #tpu.memory_space<vmem>>, %arg4: memref<384x128xbf16, #tpu.memory_space<vmem>>, %arg5: memref<1x128xf32, #tpu.memory_space<vmem>>, %arg6: memref<64x128xbf16, #tpu.memory_space<vmem>>, %arg7: memref<64x128xf32, #tpu.memory_space<vmem>>) attributes {dimension_semantics = [#tpu.dimension_semantics<parallel>, #tpu.dimension_semantics<parallel>, #tpu.dimension_semantics<arbitrary>], iteration_bounds = array<i64: 1, 1, 1>, scalar_prefetch = 0 : i64, scratch_operands = 1 : i64, tpu.core_type = #tpu.core_type<tc>, window_params = [{transform_indices = @transform_0, window_bounds = array<i64: 64, 384>}, {transform_indices = @transform_1, window_bounds = array<i64: 384, 128>}, {transform_indices = @transform_2, window_bounds = array<i64: 1, 128>}, {transform_indices = @transform_3, window_bounds = array<i64: 64, 128>}]} {
    %c0_i32 = arith.constant 0 : i32
    %0 = arith.cmpi eq, %arg2, %c0_i32 : i32
    %1 = arith.extui %0 : i1 to i32
    %c0_i32_0 = arith.constant 0 : i32
    %2 = arith.cmpi ne, %1, %c0_i32_0 : i32
    scf.if %2 {
      %cst_10 = arith.constant 0.000000e+00 : f32
      %12 = vector.broadcast %cst_10 : f32 to vector<64x128xf32>
      %c0_11 = arith.constant 0 : index
      %c0_12 = arith.constant 0 : index
      %13 = vector.load %arg7[%c0_11, %c0_12] : memref<64x128xf32, #tpu.memory_space<vmem>>, vector<64x128xf32>
      tpu.vector_store %arg7[%c0_11, %c0_12], %12 {strides = array<i32>} : memref<64x128xf32, #tpu.memory_space<vmem>>, vector<64x128xf32>,
    } else {
    }
    %c0 = arith.constant 0 : index
    %c0_1 = arith.constant 0 : index
    %3 = vector.load %arg7[%c0, %c0_1] : memref<64x128xf32, #tpu.memory_space<vmem>>, vector<64x128xf32>
    %c0_2 = arith.constant 0 : index
    %c0_3 = arith.constant 0 : index
    %4 = vector.load %arg3[%c0_2, %c0_3] : memref<64x384xbf16, #tpu.memory_space<vmem>>, vector<64x384xbf16>
    %c0_4 = arith.constant 0 : index
    %c0_5 = arith.constant 0 : index
    %5 = vector.load %arg4[%c0_4, %c0_5] : memref<384x128xbf16, #tpu.memory_space<vmem>>, vector<384x128xbf16>
    %cst = arith.constant dense<0.000000e+00> : vector<64x128xf32>
    %6 = tpu.matmul %4, %5, %cst {dimension_numbers = #tpu.dot_dimension_numbers<[1], [0], [0], [1], [0, 0, 1, 1], [], []>} : vector<64x384xbf16>, vector<384x128xbf16>, vector<64x128xf32> -> vector<64x128xf32>
    %7 = arith.addf %3, %6 : vector<64x128xf32>
    %c0_6 = arith.constant 0 : index
    %c0_7 = arith.constant 0 : index
    %8 = vector.load %arg7[%c0_6, %c0_7] : memref<64x128xf32, #tpu.memory_space<vmem>>, vector<64x128xf32>
    tpu.vector_store %arg7[%c0_6, %c0_7], %7 {strides = array<i32>} : memref<64x128xf32, #tpu.memory_space<vmem>>, vector<64x128xf32>,
    %c0_i32_8 = arith.constant 0 : i32
    %9 = arith.cmpi eq, %arg2, %c0_i32_8 : i32
    %10 = arith.extui %9 : i1 to i32
    %c0_i32_9 = arith.constant 0 : i32
    %11 = arith.cmpi ne, %10, %c0_i32_9 : i32
    scf.if %11 {
      %c0_10 = arith.constant 0 : index
      %c0_11 = arith.constant 0 : index
      %12 = vector.load %arg7[%c0_10, %c0_11] : memref<64x128xf32, #tpu.memory_space<vmem>>, vector<64x128xf32>
      %c0_12 = arith.constant 0 : index
      %c0_13 = arith.constant 0 : index
      %13 = vector.load %arg5[%c0_12, %c0_13] : memref<1x128xf32, #tpu.memory_space<vmem>>, vector<1x128xf32>
      %14 = vector.broadcast %13 : vector<1x128xf32> to vector<64x128xf32>
      %15 = arith.addf %12, %14 : vector<64x128xf32>
      %cst_14 = arith.constant 0.000000e+00 : f32
      %16 = vector.broadcast %cst_14 : f32 to vector<64x128xf32>
      %17 = arith.maximumf %15, %16 : vector<64x128xf32>
      %18 = arith.truncf %17 : vector<64x128xf32> to vector<64x128xbf16>
      %c0_15 = arith.constant 0 : index
      %c0_16 = arith.constant 0 : index
      %19 = vector.load %arg6[%c0_15, %c0_16] : memref<64x128xbf16, #tpu.memory_space<vmem>>, vector<64x128xbf16>
      tpu.vector_store %arg6[%c0_15, %c0_16], %18 {strides = array<i32>} : memref<64x128xbf16, #tpu.memory_space<vmem>>, vector<64x128xbf16>,
    } else {
    }
    return
  }
  func.func @transform_0(%arg0: i32, %arg1: i32, %arg2: i32) -> (i32, i32) {
    %c0_i32 = arith.constant 0 : i32
    return %arg0, %arg2 : i32, i32
  }
  func.func @transform_1(%arg0: i32, %arg1: i32, %arg2: i32) -> (i32, i32) {
    %c0_i32 = arith.constant 0 : i32
    return %arg2, %arg1 : i32, i32
  }
  func.func @transform_2(%arg0: i32, %arg1: i32, %arg2: i32) -> (i32, i32) {
    %c0_i32 = arith.constant 0 : i32
    %c0_i32_0 = arith.constant 0 : i32
    return %c0_i32, %arg1 : i32, i32
  }
  func.func @transform_3(%arg0: i32, %arg1: i32, %arg2: i32) -> (i32, i32) {
    %c0_i32 = arith.constant 0 : i32
    return %arg0, %arg1 : i32, i32
  }
}

module attributes {stable_mosaic.version = 11 : i64} {
  func.func @_gemm_bias_kernel(%arg0: i32, %arg1: i32, %arg2: i32, %arg3: memref<64x256xbf16, #tpu.memory_space<vmem>>, %arg4: memref<256x128xbf16, #tpu.memory_space<vmem>>, %arg5: memref<1x128xf32, #tpu.memory_space<vmem>>, %arg6: memref<64x128xbf16, #tpu.memory_space<vmem>>, %arg7: memref<64x128xf32, #tpu.memory_space<vmem>>) attributes {dimension_semantics = [#tpu.dimension_semantics<parallel>, #tpu.dimension_semantics<parallel>, #tpu.dimension_semantics<arbitrary>], iteration_bounds = array<i64: 1, 1, 5>, scalar_prefetch = 0 : i64, scratch_operands = 1 : i64, tpu.core_type = #tpu.core_type<tc>, window_params = [{transform_indices = @transform_0, window_bounds = array<i64: 64, 256>}, {transform_indices = @transform_1, window_bounds = array<i64: 256, 128>}, {transform_indices = @transform_2, window_bounds = array<i64: 1, 128>}, {transform_indices = @transform_3, window_bounds = array<i64: 64, 128>}]} {
    %c0_i32 = arith.constant 0 : i32
    %0 = arith.cmpi eq, %arg2, %c0_i32 : i32
    %1 = arith.extui %0 : i1 to i32
    %c0_i32_0 = arith.constant 0 : i32
    %2 = arith.cmpi ne, %1, %c0_i32_0 : i32
    scf.if %2 {
      %cst_9 = arith.constant 0.000000e+00 : f32
      %12 = vector.broadcast %cst_9 : f32 to vector<64x128xf32>
      %c0_10 = arith.constant 0 : index
      %c0_11 = arith.constant 0 : index
      %13 = vector.load %arg7[%c0_10, %c0_11] : memref<64x128xf32, #tpu.memory_space<vmem>>, vector<64x128xf32>
      tpu.vector_store %arg7[%c0_10, %c0_11], %12 {strides = array<i32>} : memref<64x128xf32, #tpu.memory_space<vmem>>, vector<64x128xf32>,
    } else {
    }
    %c0 = arith.constant 0 : index
    %c0_1 = arith.constant 0 : index
    %3 = vector.load %arg7[%c0, %c0_1] : memref<64x128xf32, #tpu.memory_space<vmem>>, vector<64x128xf32>
    %c0_2 = arith.constant 0 : index
    %c0_3 = arith.constant 0 : index
    %4 = vector.load %arg3[%c0_2, %c0_3] : memref<64x256xbf16, #tpu.memory_space<vmem>>, vector<64x256xbf16>
    %c0_4 = arith.constant 0 : index
    %c0_5 = arith.constant 0 : index
    %5 = vector.load %arg4[%c0_4, %c0_5] : memref<256x128xbf16, #tpu.memory_space<vmem>>, vector<256x128xbf16>
    %cst = arith.constant dense<0.000000e+00> : vector<64x128xf32>
    %6 = tpu.matmul %4, %5, %cst {dimension_numbers = #tpu.dot_dimension_numbers<[1], [0], [0], [1], [0, 0, 1, 1], [], []>} : vector<64x256xbf16>, vector<256x128xbf16>, vector<64x128xf32> -> vector<64x128xf32>
    %7 = arith.addf %3, %6 : vector<64x128xf32>
    %c0_6 = arith.constant 0 : index
    %c0_7 = arith.constant 0 : index
    %8 = vector.load %arg7[%c0_6, %c0_7] : memref<64x128xf32, #tpu.memory_space<vmem>>, vector<64x128xf32>
    tpu.vector_store %arg7[%c0_6, %c0_7], %7 {strides = array<i32>} : memref<64x128xf32, #tpu.memory_space<vmem>>, vector<64x128xf32>,
    %c4_i32 = arith.constant 4 : i32
    %9 = arith.cmpi eq, %arg2, %c4_i32 : i32
    %10 = arith.extui %9 : i1 to i32
    %c0_i32_8 = arith.constant 0 : i32
    %11 = arith.cmpi ne, %10, %c0_i32_8 : i32
    scf.if %11 {
      %c0_9 = arith.constant 0 : index
      %c0_10 = arith.constant 0 : index
      %12 = vector.load %arg7[%c0_9, %c0_10] : memref<64x128xf32, #tpu.memory_space<vmem>>, vector<64x128xf32>
      %c0_11 = arith.constant 0 : index
      %c0_12 = arith.constant 0 : index
      %13 = vector.load %arg5[%c0_11, %c0_12] : memref<1x128xf32, #tpu.memory_space<vmem>>, vector<1x128xf32>
      %14 = vector.broadcast %13 : vector<1x128xf32> to vector<64x128xf32>
      %15 = arith.addf %12, %14 : vector<64x128xf32>
      %cst_13 = arith.constant 0.000000e+00 : f32
      %16 = vector.broadcast %cst_13 : f32 to vector<64x128xf32>
      %17 = arith.maximumf %15, %16 : vector<64x128xf32>
      %18 = arith.truncf %17 : vector<64x128xf32> to vector<64x128xbf16>
      %c0_14 = arith.constant 0 : index
      %c0_15 = arith.constant 0 : index
      %19 = vector.load %arg6[%c0_14, %c0_15] : memref<64x128xbf16, #tpu.memory_space<vmem>>, vector<64x128xbf16>
      tpu.vector_store %arg6[%c0_14, %c0_15], %18 {strides = array<i32>} : memref<64x128xbf16, #tpu.memory_space<vmem>>, vector<64x128xbf16>,
    } else {
    }
    return
  }
  func.func @transform_0(%arg0: i32, %arg1: i32, %arg2: i32) -> (i32, i32) {
    %c0_i32 = arith.constant 0 : i32
    return %arg0, %arg2 : i32, i32
  }
  func.func @transform_1(%arg0: i32, %arg1: i32, %arg2: i32) -> (i32, i32) {
    %c0_i32 = arith.constant 0 : i32
    return %arg2, %arg1 : i32, i32
  }
  func.func @transform_2(%arg0: i32, %arg1: i32, %arg2: i32) -> (i32, i32) {
    %c0_i32 = arith.constant 0 : i32
    %c0_i32_0 = arith.constant 0 : i32
    return %c0_i32, %arg1 : i32, i32
  }
  func.func @transform_3(%arg0: i32, %arg1: i32, %arg2: i32) -> (i32, i32) {
    %c0_i32 = arith.constant 0 : i32
    return %arg0, %arg1 : i32, i32
  }
}

module attributes {stable_mosaic.version = 11 : i64} {
  func.func @_maxpool_kernel(%arg0: i32, %arg1: memref<9x32x256xbf16, #tpu.memory_space<vmem>>, %arg2: memref<32x256xbf16, #tpu.memory_space<vmem>>) attributes {dimension_semantics = [#tpu.dimension_semantics<parallel>], iteration_bounds = array<i64: 1>, scalar_prefetch = 0 : i64, scratch_operands = 0 : i64, tpu.core_type = #tpu.core_type<tc>, window_params = [{transform_indices = @transform_0, window_bounds = array<i64: 9, 32, 256>}, {transform_indices = @transform_1, window_bounds = array<i64: 32, 256>}]} {
    %c0 = arith.constant 0 : index
    %c0_0 = arith.constant 0 : index
    %c0_1 = arith.constant 0 : index
    %0 = vector.load %arg1[%c0, %c0_0, %c0_1] : memref<9x32x256xbf16, #tpu.memory_space<vmem>>, vector<9x32x256xbf16>
    %cst = arith.constant dense<0xFF80> : vector<32x256xbf16>
    %1 = vector.multi_reduction <maximumf>, %0, %cst [0] : vector<9x32x256xbf16> to vector<32x256xbf16>
    %c0_2 = arith.constant 0 : index
    %c0_3 = arith.constant 0 : index
    %2 = vector.load %arg2[%c0_2, %c0_3] : memref<32x256xbf16, #tpu.memory_space<vmem>>, vector<32x256xbf16>
    tpu.vector_store %arg2[%c0_2, %c0_3], %1 {strides = array<i32>} : memref<32x256xbf16, #tpu.memory_space<vmem>>, vector<32x256xbf16>,
    return
  }
  func.func @transform_0(%arg0: i32) -> (i32, i32, i32) {
    %c0_i32 = arith.constant 0 : i32
    %c0_i32_0 = arith.constant 0 : i32
    %c0_i32_1 = arith.constant 0 : i32
    return %c0_i32, %arg0, %c0_i32_0 : i32, i32, i32
  }
  func.func @transform_1(%arg0: i32) -> (i32, i32) {
    %c0_i32 = arith.constant 0 : i32
    %c0_i32_0 = arith.constant 0 : i32
    return %arg0, %c0_i32 : i32, i32
  }
}

module attributes {stable_mosaic.version = 11 : i64} {
  func.func @_gemm_bias_kernel(%arg0: i32, %arg1: i32, %arg2: i32, %arg3: memref<32x256xbf16, #tpu.memory_space<vmem>>, %arg4: memref<256x128xbf16, #tpu.memory_space<vmem>>, %arg5: memref<1x128xf32, #tpu.memory_space<vmem>>, %arg6: memref<32x128xbf16, #tpu.memory_space<vmem>>, %arg7: memref<32x128xf32, #tpu.memory_space<vmem>>) attributes {dimension_semantics = [#tpu.dimension_semantics<parallel>, #tpu.dimension_semantics<parallel>, #tpu.dimension_semantics<arbitrary>], iteration_bounds = array<i64: 1, 3, 9>, scalar_prefetch = 0 : i64, scratch_operands = 1 : i64, tpu.core_type = #tpu.core_type<tc>, window_params = [{transform_indices = @transform_0, window_bounds = array<i64: 32, 256>}, {transform_indices = @transform_1, window_bounds = array<i64: 256, 128>}, {transform_indices = @transform_2, window_bounds = array<i64: 1, 128>}, {transform_indices = @transform_3, window_bounds = array<i64: 32, 128>}]} {
    %c0_i32 = arith.constant 0 : i32
    %0 = arith.cmpi eq, %arg2, %c0_i32 : i32
    %1 = arith.extui %0 : i1 to i32
    %c0_i32_0 = arith.constant 0 : i32
    %2 = arith.cmpi ne, %1, %c0_i32_0 : i32
    scf.if %2 {
      %cst_9 = arith.constant 0.000000e+00 : f32
      %12 = vector.broadcast %cst_9 : f32 to vector<32x128xf32>
      %c0_10 = arith.constant 0 : index
      %c0_11 = arith.constant 0 : index
      %13 = vector.load %arg7[%c0_10, %c0_11] : memref<32x128xf32, #tpu.memory_space<vmem>>, vector<32x128xf32>
      tpu.vector_store %arg7[%c0_10, %c0_11], %12 {strides = array<i32>} : memref<32x128xf32, #tpu.memory_space<vmem>>, vector<32x128xf32>,
    } else {
    }
    %c0 = arith.constant 0 : index
    %c0_1 = arith.constant 0 : index
    %3 = vector.load %arg7[%c0, %c0_1] : memref<32x128xf32, #tpu.memory_space<vmem>>, vector<32x128xf32>
    %c0_2 = arith.constant 0 : index
    %c0_3 = arith.constant 0 : index
    %4 = vector.load %arg3[%c0_2, %c0_3] : memref<32x256xbf16, #tpu.memory_space<vmem>>, vector<32x256xbf16>
    %c0_4 = arith.constant 0 : index
    %c0_5 = arith.constant 0 : index
    %5 = vector.load %arg4[%c0_4, %c0_5] : memref<256x128xbf16, #tpu.memory_space<vmem>>, vector<256x128xbf16>
    %cst = arith.constant dense<0.000000e+00> : vector<32x128xf32>
    %6 = tpu.matmul %4, %5, %cst {dimension_numbers = #tpu.dot_dimension_numbers<[1], [0], [0], [1], [0, 0, 1, 1], [], []>} : vector<32x256xbf16>, vector<256x128xbf16>, vector<32x128xf32> -> vector<32x128xf32>
    %7 = arith.addf %3, %6 : vector<32x128xf32>
    %c0_6 = arith.constant 0 : index
    %c0_7 = arith.constant 0 : index
    %8 = vector.load %arg7[%c0_6, %c0_7] : memref<32x128xf32, #tpu.memory_space<vmem>>, vector<32x128xf32>
    tpu.vector_store %arg7[%c0_6, %c0_7], %7 {strides = array<i32>} : memref<32x128xf32, #tpu.memory_space<vmem>>, vector<32x128xf32>,
    %c8_i32 = arith.constant 8 : i32
    %9 = arith.cmpi eq, %arg2, %c8_i32 : i32
    %10 = arith.extui %9 : i1 to i32
    %c0_i32_8 = arith.constant 0 : i32
    %11 = arith.cmpi ne, %10, %c0_i32_8 : i32
    scf.if %11 {
      %c0_9 = arith.constant 0 : index
      %c0_10 = arith.constant 0 : index
      %12 = vector.load %arg7[%c0_9, %c0_10] : memref<32x128xf32, #tpu.memory_space<vmem>>, vector<32x128xf32>
      %c0_11 = arith.constant 0 : index
      %c0_12 = arith.constant 0 : index
      %13 = vector.load %arg5[%c0_11, %c0_12] : memref<1x128xf32, #tpu.memory_space<vmem>>, vector<1x128xf32>
      %14 = vector.broadcast %13 : vector<1x128xf32> to vector<32x128xf32>
      %15 = arith.addf %12, %14 : vector<32x128xf32>
      %cst_13 = arith.constant 0.000000e+00 : f32
      %16 = vector.broadcast %cst_13 : f32 to vector<32x128xf32>
      %17 = arith.maximumf %15, %16 : vector<32x128xf32>
      %18 = arith.truncf %17 : vector<32x128xf32> to vector<32x128xbf16>
      %c0_14 = arith.constant 0 : index
      %c0_15 = arith.constant 0 : index
      %19 = vector.load %arg6[%c0_14, %c0_15] : memref<32x128xbf16, #tpu.memory_space<vmem>>, vector<32x128xbf16>
      tpu.vector_store %arg6[%c0_14, %c0_15], %18 {strides = array<i32>} : memref<32x128xbf16, #tpu.memory_space<vmem>>, vector<32x128xbf16>,
    } else {
    }
    return
  }
  func.func @transform_0(%arg0: i32, %arg1: i32, %arg2: i32) -> (i32, i32) {
    %c0_i32 = arith.constant 0 : i32
    return %arg0, %arg2 : i32, i32
  }
  func.func @transform_1(%arg0: i32, %arg1: i32, %arg2: i32) -> (i32, i32) {
    %c0_i32 = arith.constant 0 : i32
    return %arg2, %arg1 : i32, i32
  }
  func.func @transform_2(%arg0: i32, %arg1: i32, %arg2: i32) -> (i32, i32) {
    %c0_i32 = arith.constant 0 : i32
    %c0_i32_0 = arith.constant 0 : i32
    return %c0_i32, %arg1 : i32, i32
  }
  func.func @transform_3(%arg0: i32, %arg1: i32, %arg2: i32) -> (i32, i32) {
    %c0_i32 = arith.constant 0 : i32
    return %arg0, %arg1 : i32, i32
  }
}

module attributes {stable_mosaic.version = 11 : i64} {
  func.func @_maxpool_kernel(%arg0: i32, %arg1: memref<9x16x384xbf16, #tpu.memory_space<vmem>>, %arg2: memref<16x384xbf16, #tpu.memory_space<vmem>>) attributes {dimension_semantics = [#tpu.dimension_semantics<parallel>], iteration_bounds = array<i64: 1>, scalar_prefetch = 0 : i64, scratch_operands = 0 : i64, tpu.core_type = #tpu.core_type<tc>, window_params = [{transform_indices = @transform_0, window_bounds = array<i64: 9, 16, 384>}, {transform_indices = @transform_1, window_bounds = array<i64: 16, 384>}]} {
    %c0 = arith.constant 0 : index
    %c0_0 = arith.constant 0 : index
    %c0_1 = arith.constant 0 : index
    %0 = vector.load %arg1[%c0, %c0_0, %c0_1] : memref<9x16x384xbf16, #tpu.memory_space<vmem>>, vector<9x16x384xbf16>
    %cst = arith.constant dense<0xFF80> : vector<16x384xbf16>
    %1 = vector.multi_reduction <maximumf>, %0, %cst [0] : vector<9x16x384xbf16> to vector<16x384xbf16>
    %c0_2 = arith.constant 0 : index
    %c0_3 = arith.constant 0 : index
    %2 = vector.load %arg2[%c0_2, %c0_3] : memref<16x384xbf16, #tpu.memory_space<vmem>>, vector<16x384xbf16>
    tpu.vector_store %arg2[%c0_2, %c0_3], %1 {strides = array<i32>} : memref<16x384xbf16, #tpu.memory_space<vmem>>, vector<16x384xbf16>,
    return
  }
  func.func @transform_0(%arg0: i32) -> (i32, i32, i32) {
    %c0_i32 = arith.constant 0 : i32
    %c0_i32_0 = arith.constant 0 : i32
    %c0_i32_1 = arith.constant 0 : i32
    return %c0_i32, %arg0, %c0_i32_0 : i32, i32, i32
  }
  func.func @transform_1(%arg0: i32) -> (i32, i32) {
    %c0_i32 = arith.constant 0 : i32
    %c0_i32_0 = arith.constant 0 : i32
    return %arg0, %c0_i32 : i32, i32
  }
}

module attributes {stable_mosaic.version = 11 : i64} {
  func.func @_gemm_bias_kernel(%arg0: i32, %arg1: i32, %arg2: i32, %arg3: memref<16x256xbf16, #tpu.memory_space<vmem>>, %arg4: memref<256x256xbf16, #tpu.memory_space<vmem>>, %arg5: memref<1x256xf32, #tpu.memory_space<vmem>>, %arg6: memref<16x256xbf16, #tpu.memory_space<vmem>>, %arg7: memref<16x256xf32, #tpu.memory_space<vmem>>) attributes {dimension_semantics = [#tpu.dimension_semantics<parallel>, #tpu.dimension_semantics<parallel>, #tpu.dimension_semantics<arbitrary>], iteration_bounds = array<i64: 1, 1, 7>, scalar_prefetch = 0 : i64, scratch_operands = 1 : i64, tpu.core_type = #tpu.core_type<tc>, window_params = [{transform_indices = @transform_0, window_bounds = array<i64: 16, 256>}, {transform_indices = @transform_1, window_bounds = array<i64: 256, 256>}, {transform_indices = @transform_2, window_bounds = array<i64: 1, 256>}, {transform_indices = @transform_3, window_bounds = array<i64: 16, 256>}]} {
    %c0_i32 = arith.constant 0 : i32
    %0 = arith.cmpi eq, %arg2, %c0_i32 : i32
    %1 = arith.extui %0 : i1 to i32
    %c0_i32_0 = arith.constant 0 : i32
    %2 = arith.cmpi ne, %1, %c0_i32_0 : i32
    scf.if %2 {
      %cst_9 = arith.constant 0.000000e+00 : f32
      %12 = vector.broadcast %cst_9 : f32 to vector<16x256xf32>
      %c0_10 = arith.constant 0 : index
      %c0_11 = arith.constant 0 : index
      %13 = vector.load %arg7[%c0_10, %c0_11] : memref<16x256xf32, #tpu.memory_space<vmem>>, vector<16x256xf32>
      tpu.vector_store %arg7[%c0_10, %c0_11], %12 {strides = array<i32>} : memref<16x256xf32, #tpu.memory_space<vmem>>, vector<16x256xf32>,
    } else {
    }
    %c0 = arith.constant 0 : index
    %c0_1 = arith.constant 0 : index
    %3 = vector.load %arg7[%c0, %c0_1] : memref<16x256xf32, #tpu.memory_space<vmem>>, vector<16x256xf32>
    %c0_2 = arith.constant 0 : index
    %c0_3 = arith.constant 0 : index
    %4 = vector.load %arg3[%c0_2, %c0_3] : memref<16x256xbf16, #tpu.memory_space<vmem>>, vector<16x256xbf16>
    %c0_4 = arith.constant 0 : index
    %c0_5 = arith.constant 0 : index
    %5 = vector.load %arg4[%c0_4, %c0_5] : memref<256x256xbf16, #tpu.memory_space<vmem>>, vector<256x256xbf16>
    %cst = arith.constant dense<0.000000e+00> : vector<16x256xf32>
    %6 = tpu.matmul %4, %5, %cst {dimension_numbers = #tpu.dot_dimension_numbers<[1], [0], [0], [1], [0, 0, 1, 1], [], []>} : vector<16x256xbf16>, vector<256x256xbf16>, vector<16x256xf32> -> vector<16x256xf32>
    %7 = arith.addf %3, %6 : vector<16x256xf32>
    %c0_6 = arith.constant 0 : index
    %c0_7 = arith.constant 0 : index
    %8 = vector.load %arg7[%c0_6, %c0_7] : memref<16x256xf32, #tpu.memory_space<vmem>>, vector<16x256xf32>
    tpu.vector_store %arg7[%c0_6, %c0_7], %7 {strides = array<i32>} : memref<16x256xf32, #tpu.memory_space<vmem>>, vector<16x256xf32>,
    %c6_i32 = arith.constant 6 : i32
    %9 = arith.cmpi eq, %arg2, %c6_i32 : i32
    %10 = arith.extui %9 : i1 to i32
    %c0_i32_8 = arith.constant 0 : i32
    %11 = arith.cmpi ne, %10, %c0_i32_8 : i32
    scf.if %11 {
      %c0_9 = arith.constant 0 : index
      %c0_10 = arith.constant 0 : index
      %12 = vector.load %arg7[%c0_9, %c0_10] : memref<16x256xf32, #tpu.memory_space<vmem>>, vector<16x256xf32>
      %c0_11 = arith.constant 0 : index
      %c0_12 = arith.constant 0 : index
      %13 = vector.load %arg5[%c0_11, %c0_12] : memref<1x256xf32, #tpu.memory_space<vmem>>, vector<1x256xf32>
      %14 = vector.broadcast %13 : vector<1x256xf32> to vector<16x256xf32>
      %15 = arith.addf %12, %14 : vector<16x256xf32>
      %cst_13 = arith.constant 0.000000e+00 : f32
      %16 = vector.broadcast %cst_13 : f32 to vector<16x256xf32>
      %17 = arith.maximumf %15, %16 : vector<16x256xf32>
      %18 = arith.truncf %17 : vector<16x256xf32> to vector<16x256xbf16>
      %c0_14 = arith.constant 0 : index
      %c0_15 = arith.constant 0 : index
      %19 = vector.load %arg6[%c0_14, %c0_15] : memref<16x256xbf16, #tpu.memory_space<vmem>>, vector<16x256xbf16>
      tpu.vector_store %arg6[%c0_14, %c0_15], %18 {strides = array<i32>} : memref<16x256xbf16, #tpu.memory_space<vmem>>, vector<16x256xbf16>,
    } else {
    }
    return
  }
  func.func @transform_0(%arg0: i32, %arg1: i32, %arg2: i32) -> (i32, i32) {
    %c0_i32 = arith.constant 0 : i32
    return %arg0, %arg2 : i32, i32
  }
  func.func @transform_1(%arg0: i32, %arg1: i32, %arg2: i32) -> (i32, i32) {
    %c0_i32 = arith.constant 0 : i32
    return %arg2, %arg1 : i32, i32
  }
  func.func @transform_2(%arg0: i32, %arg1: i32, %arg2: i32) -> (i32, i32) {
    %c0_i32 = arith.constant 0 : i32
    %c0_i32_0 = arith.constant 0 : i32
    return %c0_i32, %arg1 : i32, i32
  }
  func.func @transform_3(%arg0: i32, %arg1: i32, %arg2: i32) -> (i32, i32) {
    %c0_i32 = arith.constant 0 : i32
    return %arg0, %arg1 : i32, i32
  }
}

module attributes {stable_mosaic.version = 11 : i64} {
  func.func @_gemm_bias_kernel(%arg0: i32, %arg1: i32, %arg2: i32, %arg3: memref<16x256xbf16, #tpu.memory_space<vmem>>, %arg4: memref<256x128xbf16, #tpu.memory_space<vmem>>, %arg5: memref<1x128xf32, #tpu.memory_space<vmem>>, %arg6: memref<16x128xbf16, #tpu.memory_space<vmem>>, %arg7: memref<16x128xf32, #tpu.memory_space<vmem>>) attributes {dimension_semantics = [#tpu.dimension_semantics<parallel>, #tpu.dimension_semantics<parallel>, #tpu.dimension_semantics<arbitrary>], iteration_bounds = array<i64: 1, 1, 7>, scalar_prefetch = 0 : i64, scratch_operands = 1 : i64, tpu.core_type = #tpu.core_type<tc>, window_params = [{transform_indices = @transform_0, window_bounds = array<i64: 16, 256>}, {transform_indices = @transform_1, window_bounds = array<i64: 256, 128>}, {transform_indices = @transform_2, window_bounds = array<i64: 1, 128>}, {transform_indices = @transform_3, window_bounds = array<i64: 16, 128>}]} {
    %c0_i32 = arith.constant 0 : i32
    %0 = arith.cmpi eq, %arg2, %c0_i32 : i32
    %1 = arith.extui %0 : i1 to i32
    %c0_i32_0 = arith.constant 0 : i32
    %2 = arith.cmpi ne, %1, %c0_i32_0 : i32
    scf.if %2 {
      %cst_9 = arith.constant 0.000000e+00 : f32
      %12 = vector.broadcast %cst_9 : f32 to vector<16x128xf32>
      %c0_10 = arith.constant 0 : index
      %c0_11 = arith.constant 0 : index
      %13 = vector.load %arg7[%c0_10, %c0_11] : memref<16x128xf32, #tpu.memory_space<vmem>>, vector<16x128xf32>
      tpu.vector_store %arg7[%c0_10, %c0_11], %12 {strides = array<i32>} : memref<16x128xf32, #tpu.memory_space<vmem>>, vector<16x128xf32>,
    } else {
    }
    %c0 = arith.constant 0 : index
    %c0_1 = arith.constant 0 : index
    %3 = vector.load %arg7[%c0, %c0_1] : memref<16x128xf32, #tpu.memory_space<vmem>>, vector<16x128xf32>
    %c0_2 = arith.constant 0 : index
    %c0_3 = arith.constant 0 : index
    %4 = vector.load %arg3[%c0_2, %c0_3] : memref<16x256xbf16, #tpu.memory_space<vmem>>, vector<16x256xbf16>
    %c0_4 = arith.constant 0 : index
    %c0_5 = arith.constant 0 : index
    %5 = vector.load %arg4[%c0_4, %c0_5] : memref<256x128xbf16, #tpu.memory_space<vmem>>, vector<256x128xbf16>
    %cst = arith.constant dense<0.000000e+00> : vector<16x128xf32>
    %6 = tpu.matmul %4, %5, %cst {dimension_numbers = #tpu.dot_dimension_numbers<[1], [0], [0], [1], [0, 0, 1, 1], [], []>} : vector<16x256xbf16>, vector<256x128xbf16>, vector<16x128xf32> -> vector<16x128xf32>
    %7 = arith.addf %3, %6 : vector<16x128xf32>
    %c0_6 = arith.constant 0 : index
    %c0_7 = arith.constant 0 : index
    %8 = vector.load %arg7[%c0_6, %c0_7] : memref<16x128xf32, #tpu.memory_space<vmem>>, vector<16x128xf32>
    tpu.vector_store %arg7[%c0_6, %c0_7], %7 {strides = array<i32>} : memref<16x128xf32, #tpu.memory_space<vmem>>, vector<16x128xf32>,
    %c6_i32 = arith.constant 6 : i32
    %9 = arith.cmpi eq, %arg2, %c6_i32 : i32
    %10 = arith.extui %9 : i1 to i32
    %c0_i32_8 = arith.constant 0 : i32
    %11 = arith.cmpi ne, %10, %c0_i32_8 : i32
    scf.if %11 {
      %c0_9 = arith.constant 0 : index
      %c0_10 = arith.constant 0 : index
      %12 = vector.load %arg7[%c0_9, %c0_10] : memref<16x128xf32, #tpu.memory_space<vmem>>, vector<16x128xf32>
      %c0_11 = arith.constant 0 : index
      %c0_12 = arith.constant 0 : index
      %13 = vector.load %arg5[%c0_11, %c0_12] : memref<1x128xf32, #tpu.memory_space<vmem>>, vector<1x128xf32>
      %14 = vector.broadcast %13 : vector<1x128xf32> to vector<16x128xf32>
      %15 = arith.addf %12, %14 : vector<16x128xf32>
      %16 = arith.truncf %15 : vector<16x128xf32> to vector<16x128xbf16>
      %c0_13 = arith.constant 0 : index
      %c0_14 = arith.constant 0 : index
      %17 = vector.load %arg6[%c0_13, %c0_14] : memref<16x128xbf16, #tpu.memory_space<vmem>>, vector<16x128xbf16>
      tpu.vector_store %arg6[%c0_13, %c0_14], %16 {strides = array<i32>} : memref<16x128xbf16, #tpu.memory_space<vmem>>, vector<16x128xbf16>,
    } else {
    }
    return
  }
  func.func @transform_0(%arg0: i32, %arg1: i32, %arg2: i32) -> (i32, i32) {
    %c0_i32 = arith.constant 0 : i32
    return %arg0, %arg2 : i32, i32
  }
  func.func @transform_1(%arg0: i32, %arg1: i32, %arg2: i32) -> (i32, i32) {
    %c0_i32 = arith.constant 0 : i32
    return %arg2, %arg1 : i32, i32
  }
  func.func @transform_2(%arg0: i32, %arg1: i32, %arg2: i32) -> (i32, i32) {
    %c0_i32 = arith.constant 0 : i32
    %c0_i32_0 = arith.constant 0 : i32
    return %c0_i32, %arg1 : i32, i32
  }
  func.func @transform_3(%arg0: i32, %arg1: i32, %arg2: i32) -> (i32, i32) {
    %c0_i32 = arith.constant 0 : i32
    return %arg0, %arg1 : i32, i32
  }
}

module attributes {stable_mosaic.version = 11 : i64} {
  func.func @_gemm_bias_kernel(%arg0: i32, %arg1: i32, %arg2: i32, %arg3: memref<16x256xbf16, #tpu.memory_space<vmem>>, %arg4: memref<256x256xbf16, #tpu.memory_space<vmem>>, %arg5: memref<1x256xf32, #tpu.memory_space<vmem>>, %arg6: memref<16x256xbf16, #tpu.memory_space<vmem>>, %arg7: memref<16x256xf32, #tpu.memory_space<vmem>>) attributes {dimension_semantics = [#tpu.dimension_semantics<parallel>, #tpu.dimension_semantics<parallel>, #tpu.dimension_semantics<arbitrary>], iteration_bounds = array<i64: 1, 8, 1>, scalar_prefetch = 0 : i64, scratch_operands = 1 : i64, tpu.core_type = #tpu.core_type<tc>, window_params = [{transform_indices = @transform_0, window_bounds = array<i64: 16, 256>}, {transform_indices = @transform_1, window_bounds = array<i64: 256, 256>}, {transform_indices = @transform_2, window_bounds = array<i64: 1, 256>}, {transform_indices = @transform_3, window_bounds = array<i64: 16, 256>}]} {
    %c0_i32 = arith.constant 0 : i32
    %0 = arith.cmpi eq, %arg2, %c0_i32 : i32
    %1 = arith.extui %0 : i1 to i32
    %c0_i32_0 = arith.constant 0 : i32
    %2 = arith.cmpi ne, %1, %c0_i32_0 : i32
    scf.if %2 {
      %cst_10 = arith.constant 0.000000e+00 : f32
      %12 = vector.broadcast %cst_10 : f32 to vector<16x256xf32>
      %c0_11 = arith.constant 0 : index
      %c0_12 = arith.constant 0 : index
      %13 = vector.load %arg7[%c0_11, %c0_12] : memref<16x256xf32, #tpu.memory_space<vmem>>, vector<16x256xf32>
      tpu.vector_store %arg7[%c0_11, %c0_12], %12 {strides = array<i32>} : memref<16x256xf32, #tpu.memory_space<vmem>>, vector<16x256xf32>,
    } else {
    }
    %c0 = arith.constant 0 : index
    %c0_1 = arith.constant 0 : index
    %3 = vector.load %arg7[%c0, %c0_1] : memref<16x256xf32, #tpu.memory_space<vmem>>, vector<16x256xf32>
    %c0_2 = arith.constant 0 : index
    %c0_3 = arith.constant 0 : index
    %4 = vector.load %arg3[%c0_2, %c0_3] : memref<16x256xbf16, #tpu.memory_space<vmem>>, vector<16x256xbf16>
    %c0_4 = arith.constant 0 : index
    %c0_5 = arith.constant 0 : index
    %5 = vector.load %arg4[%c0_4, %c0_5] : memref<256x256xbf16, #tpu.memory_space<vmem>>, vector<256x256xbf16>
    %cst = arith.constant dense<0.000000e+00> : vector<16x256xf32>
    %6 = tpu.matmul %4, %5, %cst {dimension_numbers = #tpu.dot_dimension_numbers<[1], [0], [0], [1], [0, 0, 1, 1], [], []>} : vector<16x256xbf16>, vector<256x256xbf16>, vector<16x256xf32> -> vector<16x256xf32>
    %7 = arith.addf %3, %6 : vector<16x256xf32>
    %c0_6 = arith.constant 0 : index
    %c0_7 = arith.constant 0 : index
    %8 = vector.load %arg7[%c0_6, %c0_7] : memref<16x256xf32, #tpu.memory_space<vmem>>, vector<16x256xf32>
    tpu.vector_store %arg7[%c0_6, %c0_7], %7 {strides = array<i32>} : memref<16x256xf32, #tpu.memory_space<vmem>>, vector<16x256xf32>,
    %c0_i32_8 = arith.constant 0 : i32
    %9 = arith.cmpi eq, %arg2, %c0_i32_8 : i32
    %10 = arith.extui %9 : i1 to i32
    %c0_i32_9 = arith.constant 0 : i32
    %11 = arith.cmpi ne, %10, %c0_i32_9 : i32
    scf.if %11 {
      %c0_10 = arith.constant 0 : index
      %c0_11 = arith.constant 0 : index
      %12 = vector.load %arg7[%c0_10, %c0_11] : memref<16x256xf32, #tpu.memory_space<vmem>>, vector<16x256xf32>
      %c0_12 = arith.constant 0 : index
      %c0_13 = arith.constant 0 : index
      %13 = vector.load %arg5[%c0_12, %c0_13] : memref<1x256xf32, #tpu.memory_space<vmem>>, vector<1x256xf32>
      %14 = vector.broadcast %13 : vector<1x256xf32> to vector<16x256xf32>
      %15 = arith.addf %12, %14 : vector<16x256xf32>
      %cst_14 = arith.constant 0.000000e+00 : f32
      %16 = vector.broadcast %cst_14 : f32 to vector<16x256xf32>
      %17 = arith.maximumf %15, %16 : vector<16x256xf32>
      %18 = arith.truncf %17 : vector<16x256xf32> to vector<16x256xbf16>
      %c0_15 = arith.constant 0 : index
      %c0_16 = arith.constant 0 : index
      %19 = vector.load %arg6[%c0_15, %c0_16] : memref<16x256xbf16, #tpu.memory_space<vmem>>, vector<16x256xbf16>
      tpu.vector_store %arg6[%c0_15, %c0_16], %18 {strides = array<i32>} : memref<16x256xbf16, #tpu.memory_space<vmem>>, vector<16x256xbf16>,
    } else {
    }
    return
  }
  func.func @transform_0(%arg0: i32, %arg1: i32, %arg2: i32) -> (i32, i32) {
    %c0_i32 = arith.constant 0 : i32
    return %arg0, %arg2 : i32, i32
  }
  func.func @transform_1(%arg0: i32, %arg1: i32, %arg2: i32) -> (i32, i32) {
    %c0_i32 = arith.constant 0 : i32
    return %arg2, %arg1 : i32, i32
  }
  func.func @transform_2(%arg0: i32, %arg1: i32, %arg2: i32) -> (i32, i32) {
    %c0_i32 = arith.constant 0 : i32
    %c0_i32_0 = arith.constant 0 : i32
    return %c0_i32, %arg1 : i32, i32
  }
  func.func @transform_3(%arg0: i32, %arg1: i32, %arg2: i32) -> (i32, i32) {
    %c0_i32 = arith.constant 0 : i32
    return %arg0, %arg1 : i32, i32
  }
}

module attributes {stable_mosaic.version = 11 : i64} {
  func.func @_gemm_bias_kernel(%arg0: i32, %arg1: i32, %arg2: i32, %arg3: memref<16x512xbf16, #tpu.memory_space<vmem>>, %arg4: memref<512x256xbf16, #tpu.memory_space<vmem>>, %arg5: memref<1x256xf32, #tpu.memory_space<vmem>>, %arg6: memref<16x256xbf16, #tpu.memory_space<vmem>>, %arg7: memref<16x256xf32, #tpu.memory_space<vmem>>) attributes {dimension_semantics = [#tpu.dimension_semantics<parallel>, #tpu.dimension_semantics<parallel>, #tpu.dimension_semantics<arbitrary>], iteration_bounds = array<i64: 1, 8, 4>, scalar_prefetch = 0 : i64, scratch_operands = 1 : i64, tpu.core_type = #tpu.core_type<tc>, window_params = [{transform_indices = @transform_0, window_bounds = array<i64: 16, 512>}, {transform_indices = @transform_1, window_bounds = array<i64: 512, 256>}, {transform_indices = @transform_2, window_bounds = array<i64: 1, 256>}, {transform_indices = @transform_3, window_bounds = array<i64: 16, 256>}]} {
    %c0_i32 = arith.constant 0 : i32
    %0 = arith.cmpi eq, %arg2, %c0_i32 : i32
    %1 = arith.extui %0 : i1 to i32
    %c0_i32_0 = arith.constant 0 : i32
    %2 = arith.cmpi ne, %1, %c0_i32_0 : i32
    scf.if %2 {
      %cst_9 = arith.constant 0.000000e+00 : f32
      %12 = vector.broadcast %cst_9 : f32 to vector<16x256xf32>
      %c0_10 = arith.constant 0 : index
      %c0_11 = arith.constant 0 : index
      %13 = vector.load %arg7[%c0_10, %c0_11] : memref<16x256xf32, #tpu.memory_space<vmem>>, vector<16x256xf32>
      tpu.vector_store %arg7[%c0_10, %c0_11], %12 {strides = array<i32>} : memref<16x256xf32, #tpu.memory_space<vmem>>, vector<16x256xf32>,
    } else {
    }
    %c0 = arith.constant 0 : index
    %c0_1 = arith.constant 0 : index
    %3 = vector.load %arg7[%c0, %c0_1] : memref<16x256xf32, #tpu.memory_space<vmem>>, vector<16x256xf32>
    %c0_2 = arith.constant 0 : index
    %c0_3 = arith.constant 0 : index
    %4 = vector.load %arg3[%c0_2, %c0_3] : memref<16x512xbf16, #tpu.memory_space<vmem>>, vector<16x512xbf16>
    %c0_4 = arith.constant 0 : index
    %c0_5 = arith.constant 0 : index
    %5 = vector.load %arg4[%c0_4, %c0_5] : memref<512x256xbf16, #tpu.memory_space<vmem>>, vector<512x256xbf16>
    %cst = arith.constant dense<0.000000e+00> : vector<16x256xf32>
    %6 = tpu.matmul %4, %5, %cst {dimension_numbers = #tpu.dot_dimension_numbers<[1], [0], [0], [1], [0, 0, 1, 1], [], []>} : vector<16x512xbf16>, vector<512x256xbf16>, vector<16x256xf32> -> vector<16x256xf32>
    %7 = arith.addf %3, %6 : vector<16x256xf32>
    %c0_6 = arith.constant 0 : index
    %c0_7 = arith.constant 0 : index
    %8 = vector.load %arg7[%c0_6, %c0_7] : memref<16x256xf32, #tpu.memory_space<vmem>>, vector<16x256xf32>
    tpu.vector_store %arg7[%c0_6, %c0_7], %7 {strides = array<i32>} : memref<16x256xf32, #tpu.memory_space<vmem>>, vector<16x256xf32>,
    %c3_i32 = arith.constant 3 : i32
    %9 = arith.cmpi eq, %arg2, %c3_i32 : i32
    %10 = arith.extui %9 : i1 to i32
    %c0_i32_8 = arith.constant 0 : i32
    %11 = arith.cmpi ne, %10, %c0_i32_8 : i32
    scf.if %11 {
      %c0_9 = arith.constant 0 : index
      %c0_10 = arith.constant 0 : index
      %12 = vector.load %arg7[%c0_9, %c0_10] : memref<16x256xf32, #tpu.memory_space<vmem>>, vector<16x256xf32>
      %c0_11 = arith.constant 0 : index
      %c0_12 = arith.constant 0 : index
      %13 = vector.load %arg5[%c0_11, %c0_12] : memref<1x256xf32, #tpu.memory_space<vmem>>, vector<1x256xf32>
      %14 = vector.broadcast %13 : vector<1x256xf32> to vector<16x256xf32>
      %15 = arith.addf %12, %14 : vector<16x256xf32>
      %cst_13 = arith.constant 0.000000e+00 : f32
      %16 = vector.broadcast %cst_13 : f32 to vector<16x256xf32>
      %17 = arith.maximumf %15, %16 : vector<16x256xf32>
      %18 = arith.truncf %17 : vector<16x256xf32> to vector<16x256xbf16>
      %c0_14 = arith.constant 0 : index
      %c0_15 = arith.constant 0 : index
      %19 = vector.load %arg6[%c0_14, %c0_15] : memref<16x256xbf16, #tpu.memory_space<vmem>>, vector<16x256xbf16>
      tpu.vector_store %arg6[%c0_14, %c0_15], %18 {strides = array<i32>} : memref<16x256xbf16, #tpu.memory_space<vmem>>, vector<16x256xbf16>,
    } else {
    }
    return
  }
  func.func @transform_0(%arg0: i32, %arg1: i32, %arg2: i32) -> (i32, i32) {
    %c0_i32 = arith.constant 0 : i32
    return %arg0, %arg2 : i32, i32
  }
  func.func @transform_1(%arg0: i32, %arg1: i32, %arg2: i32) -> (i32, i32) {
    %c0_i32 = arith.constant 0 : i32
    return %arg2, %arg1 : i32, i32
  }
  func.func @transform_2(%arg0: i32, %arg1: i32, %arg2: i32) -> (i32, i32) {
    %c0_i32 = arith.constant 0 : i32
    %c0_i32_0 = arith.constant 0 : i32
    return %c0_i32, %arg1 : i32, i32
  }
  func.func @transform_3(%arg0: i32, %arg1: i32, %arg2: i32) -> (i32, i32) {
    %c0_i32 = arith.constant 0 : i32
    return %arg0, %arg1 : i32, i32
  }
}

module attributes {stable_mosaic.version = 11 : i64} {
  func.func @_gemm_bias_kernel(%arg0: i32, %arg1: i32, %arg2: i32, %arg3: memref<16x512xbf16, #tpu.memory_space<vmem>>, %arg4: memref<512x128xbf16, #tpu.memory_space<vmem>>, %arg5: memref<1x128xf32, #tpu.memory_space<vmem>>, %arg6: memref<16x128xf32, #tpu.memory_space<vmem>>, %arg7: memref<16x128xf32, #tpu.memory_space<vmem>>) attributes {dimension_semantics = [#tpu.dimension_semantics<parallel>, #tpu.dimension_semantics<parallel>, #tpu.dimension_semantics<arbitrary>], iteration_bounds = array<i64: 1, 1, 4>, scalar_prefetch = 0 : i64, scratch_operands = 1 : i64, tpu.core_type = #tpu.core_type<tc>, window_params = [{transform_indices = @transform_0, window_bounds = array<i64: 16, 512>}, {transform_indices = @transform_1, window_bounds = array<i64: 512, 128>}, {transform_indices = @transform_2, window_bounds = array<i64: 1, 128>}, {transform_indices = @transform_3, window_bounds = array<i64: 16, 128>}]} {
    %c0_i32 = arith.constant 0 : i32
    %0 = arith.cmpi eq, %arg2, %c0_i32 : i32
    %1 = arith.extui %0 : i1 to i32
    %c0_i32_0 = arith.constant 0 : i32
    %2 = arith.cmpi ne, %1, %c0_i32_0 : i32
    scf.if %2 {
      %cst_9 = arith.constant 0.000000e+00 : f32
      %12 = vector.broadcast %cst_9 : f32 to vector<16x128xf32>
      %c0_10 = arith.constant 0 : index
      %c0_11 = arith.constant 0 : index
      %13 = vector.load %arg7[%c0_10, %c0_11] : memref<16x128xf32, #tpu.memory_space<vmem>>, vector<16x128xf32>
      tpu.vector_store %arg7[%c0_10, %c0_11], %12 {strides = array<i32>} : memref<16x128xf32, #tpu.memory_space<vmem>>, vector<16x128xf32>,
    } else {
    }
    %c0 = arith.constant 0 : index
    %c0_1 = arith.constant 0 : index
    %3 = vector.load %arg7[%c0, %c0_1] : memref<16x128xf32, #tpu.memory_space<vmem>>, vector<16x128xf32>
    %c0_2 = arith.constant 0 : index
    %c0_3 = arith.constant 0 : index
    %4 = vector.load %arg3[%c0_2, %c0_3] : memref<16x512xbf16, #tpu.memory_space<vmem>>, vector<16x512xbf16>
    %c0_4 = arith.constant 0 : index
    %c0_5 = arith.constant 0 : index
    %5 = vector.load %arg4[%c0_4, %c0_5] : memref<512x128xbf16, #tpu.memory_space<vmem>>, vector<512x128xbf16>
    %cst = arith.constant dense<0.000000e+00> : vector<16x128xf32>
    %6 = tpu.matmul %4, %5, %cst {dimension_numbers = #tpu.dot_dimension_numbers<[1], [0], [0], [1], [0, 0, 1, 1], [], []>} : vector<16x512xbf16>, vector<512x128xbf16>, vector<16x128xf32> -> vector<16x128xf32>
    %7 = arith.addf %3, %6 : vector<16x128xf32>
    %c0_6 = arith.constant 0 : index
    %c0_7 = arith.constant 0 : index
    %8 = vector.load %arg7[%c0_6, %c0_7] : memref<16x128xf32, #tpu.memory_space<vmem>>, vector<16x128xf32>
    tpu.vector_store %arg7[%c0_6, %c0_7], %7 {strides = array<i32>} : memref<16x128xf32, #tpu.memory_space<vmem>>, vector<16x128xf32>,
    %c3_i32 = arith.constant 3 : i32
    %9 = arith.cmpi eq, %arg2, %c3_i32 : i32
    %10 = arith.extui %9 : i1 to i32
    %c0_i32_8 = arith.constant 0 : i32
    %11 = arith.cmpi ne, %10, %c0_i32_8 : i32
    scf.if %11 {
      %c0_9 = arith.constant 0 : index
      %c0_10 = arith.constant 0 : index
      %12 = vector.load %arg7[%c0_9, %c0_10] : memref<16x128xf32, #tpu.memory_space<vmem>>, vector<16x128xf32>
      %c0_11 = arith.constant 0 : index
      %c0_12 = arith.constant 0 : index
      %13 = vector.load %arg5[%c0_11, %c0_12] : memref<1x128xf32, #tpu.memory_space<vmem>>, vector<1x128xf32>
      %14 = vector.broadcast %13 : vector<1x128xf32> to vector<16x128xf32>
      %15 = arith.addf %12, %14 : vector<16x128xf32>
      %c0_13 = arith.constant 0 : index
      %c0_14 = arith.constant 0 : index
      %16 = vector.load %arg6[%c0_13, %c0_14] : memref<16x128xf32, #tpu.memory_space<vmem>>, vector<16x128xf32>
      tpu.vector_store %arg6[%c0_13, %c0_14], %15 {strides = array<i32>} : memref<16x128xf32, #tpu.memory_space<vmem>>, vector<16x128xf32>,
    } else {
    }
    return
  }
  func.func @transform_0(%arg0: i32, %arg1: i32, %arg2: i32) -> (i32, i32) {
    %c0_i32 = arith.constant 0 : i32
    return %arg0, %arg2 : i32, i32
  }
  func.func @transform_1(%arg0: i32, %arg1: i32, %arg2: i32) -> (i32, i32) {
    %c0_i32 = arith.constant 0 : i32
    return %arg2, %arg1 : i32, i32
  }
  func.func @transform_2(%arg0: i32, %arg1: i32, %arg2: i32) -> (i32, i32) {
    %c0_i32 = arith.constant 0 : i32
    %c0_i32_0 = arith.constant 0 : i32
    return %c0_i32, %arg1 : i32, i32
  }
  func.func @transform_3(%arg0: i32, %arg1: i32, %arg2: i32) -> (i32, i32) {
    %c0_i32 = arith.constant 0 : i32
    return %arg0, %arg1 : i32, i32
  }
}

</mosaic_0001>

<llo_original>
// kernel: alexnet_forward.13
$region0: #{alexnet_forward.13}
  #allocation0 [shape = 'u32[]', space=smem, size = 0x4, offset = 0x4, fixed_abs, tag = 'smem constant byte address 0x4 - core index']
  #allocation1 [shape = 'u32[144,128]{1,0:T(1,128)}', space=vmem, size = 0x12000, scoped, tag = 'internal scratch']
  #allocation2 [shape = 'f32[64,128]{1,0:T(8,128)}', space=vmem, size = 0x8000, scoped, tag = 'scratch operand']
  %s0 = inlined_call_operand.vmem [shape: bf16[64,384], index: 0, kind: input, shape index: {}]
  %s1 = inlined_call_operand.vmem [shape: bf16[384,128], index: 1, kind: input, shape index: {}]
  %s2 = inlined_call_operand.vmem [shape: f32[1,128], index: 2, kind: input, shape index: {}]
  %s3 = inlined_call_operand.vmem [shape: bf16[64,128], index: 3, kind: output, shape index: {}]
  %s4 = sld [smem:[#allocation0]]
  $region30: #{alexnet_forward.13} parent=0
    _
  %s6 = ssub.s32 1, %s4
  %s7 = scalar_select 0, %s6, %s4
  // Predicated region
  $region2: #{alexnet_forward.13} parent=0 // pred_check
    _
  $region3: #{alexnet_forward.13} parent=0 // pred_check_branch
    %9 = sbr.rel (0) target = $region5
  $region4: #{alexnet_forward.13} parent=0 // pred_region
    _
  $region5: #{alexnet_forward.13} parent=0 // pred_fallthru
    _
  // Predicated region
  $region6: #{alexnet_forward.13} parent=0 // pred_check
    _
  $region7: #{alexnet_forward.13} parent=0 // pred_check_branch
    %11 = sbr.rel (0) target = $region9
  $region8: #{alexnet_forward.13} parent=0 // pred_region
    _
  $region9: #{alexnet_forward.13} parent=0 // pred_fallthru
    _
  // Predicated region
  $region10: #{alexnet_forward.13} parent=0 // pred_check
    _
  $region11: #{alexnet_forward.13} parent=0 // pred_check_branch
    %13 = sbr.rel (0) target = $region13
  $region12: #{alexnet_forward.13} parent=0 // pred_region
    _
  $region13: #{alexnet_forward.13} parent=0 // pred_fallthru
    _
  %p15 = scmp.eq.s32.totalorder 0, 0
  // Predicated region
  $region14: #{alexnet_forward.13} parent=0 // pred_check
    %p16 = pneg %p15
  $region15: #{alexnet_forward.13} parent=0 // pred_check_branch
    %18 = sbr.rel (%p16) target = $region17
  $region16: #{alexnet_forward.13} parent=0 // pred_region
    %19 = vst [vmem:[#allocation2] sm:$0xff] 0.0
    %20 = vst [vmem:[#allocation2 + $0x8] sm:$0xff] 0.0
    %21 = vst [vmem:[#allocation2 + $0x10] sm:$0xff] 0.0
    %22 = vst [vmem:[#allocation2 + $0x18] sm:$0xff] 0.0
    %23 = vst [vmem:[#allocation2 + $0x20] sm:$0xff] 0.0
    %24 = vst [vmem:[#allocation2 + $0x28] sm:$0xff] 0.0
    %25 = vst [vmem:[#allocation2 + $0x30] sm:$0xff] 0.0
    %26 = vst [vmem:[#allocation2 + $0x38] sm:$0xff] 0.0
  $region17: #{alexnet_forward.13} parent=0 // pred_fallthru
    _
  %v27 = vld [vmem:[#allocation2] sm:$0xff]
  %v28 = vld [vmem:[#allocation2 + $0x8] sm:$0xff]
  %v29 = vld [vmem:[#allocation2 + $0x10] sm:$0xff]
  %v30 = vld [vmem:[#allocation2 + $0x18] sm:$0xff]
  %v31 = vld [vmem:[#allocation2 + $0x20] sm:$0xff]
  %v32 = vld [vmem:[#allocation2 + $0x28] sm:$0xff]
  %v33 = vld [vmem:[#allocation2 + $0x30] sm:$0xff]
  %v34 = vld [vmem:[#allocation2 + $0x38] sm:$0xff]
  %v35 = vld [vmem:[%s0] sm:$0xff]
  %v36 = vld [vmem:[%s0 + $0x8] sm:$0xf]
  %v37 = vld [vmem:[%s0 + $0xc] sm:$0xff]
  %v38 = vld [vmem:[%s0 + $0x14] sm:$0xf]
  %v39 = vld [vmem:[%s0 + $0x18] sm:$0xff]
  %v40 = vld [vmem:[%s0 + $0x20] sm:$0xf]
  %v41 = vld [vmem:[%s0 + $0x24] sm:$0xff]
  %v42 = vld [vmem:[%s0 + $0x2c] sm:$0xf]
  %v43 = vld [vmem:[%s0 + $0x30] sm:$0xff]
  %v44 = vld [vmem:[%s0 + $0x38] sm:$0xf]
  %v45 = vld [vmem:[%s0 + $0x3c] sm:$0xff]
  %v46 = vld [vmem:[%s0 + $0x44] sm:$0xf]
  %v47 = vld [vmem:[%s0 + $0x48] sm:$0xff]
  %v48 = vld [vmem:[%s0 + $0x50] sm:$0xf]
  %v49 = vld [vmem:[%s0 + $0x54] sm:$0xff]
  %v50 = vld [vmem:[%s0 + $0x5c] sm:$0xf]
  %v51 = vld [vmem:[%s1] sm:$0xf]
  %v52 = vld [vmem:[%s1 + $0x4] sm:$0xf]
  %v53 = vld [vmem:[%s1 + $0x8] sm:$0xf]
  %v54 = vld [vmem:[%s1 + $0xc] sm:$0xf]
  %v55 = vld [vmem:[%s1 + $0x10] sm:$0xf]
  %v56 = vld [vmem:[%s1 + $0x14] sm:$0xf]
  %v57 = vld [vmem:[%s1 + $0x18] sm:$0xf]
  %v58 = vld [vmem:[%s1 + $0x1c] sm:$0xf]
  %v59 = vld [vmem:[%s1 + $0x20] sm:$0xf]
  %v60 = vld [vmem:[%s1 + $0x24] sm:$0xf]
  %v61 = vld [vmem:[%s1 + $0x28] sm:$0xf]
  %v62 = vld [vmem:[%s1 + $0x2c] sm:$0xf]
  %v63 = vld [vmem:[%s1 + $0x30] sm:$0xf]
  %v64 = vld [vmem:[%s1 + $0x34] sm:$0xf]
  %v65 = vld [vmem:[%s1 + $0x38] sm:$0xf]
  %v66 = vld [vmem:[%s1 + $0x3c] sm:$0xf]
  %v67 = vld [vmem:[%s1 + $0x40] sm:$0xf]
  %v68 = vld [vmem:[%s1 + $0x44] sm:$0xf]
  %v69 = vld [vmem:[%s1 + $0x48] sm:$0xf]
  %v70 = vld [vmem:[%s1 + $0x4c] sm:$0xf]
  %v71 = vld [vmem:[%s1 + $0x50] sm:$0xf]
  %v72 = vld [vmem:[%s1 + $0x54] sm:$0xf]
  %v73 = vld [vmem:[%s1 + $0x58] sm:$0xf]
  %v74 = vld [vmem:[%s1 + $0x5c] sm:$0xf]
  %v75 = vld [vmem:[%s1 + $0x60] sm:$0xf]
  %v76 = vld [vmem:[%s1 + $0x64] sm:$0xf]
  %v77 = vld [vmem:[%s1 + $0x68] sm:$0xf]
  %v78 = vld [vmem:[%s1 + $0x6c] sm:$0xf]
  %v79 = vld [vmem:[%s1 + $0x70] sm:$0xf]
  %v80 = vld [vmem:[%s1 + $0x74] sm:$0xf]
  %v81 = vld [vmem:[%s1 + $0x78] sm:$0xf]
  %v82 = vld [vmem:[%s1 + $0x7c] sm:$0xf]
  %v83 = vld [vmem:[%s1 + $0x80] sm:$0xf]
  %v84 = vld [vmem:[%s1 + $0x84] sm:$0xf]
  %v85 = vld [vmem:[%s1 + $0x88] sm:$0xf]
  %v86 = vld [vmem:[%s1 + $0x8c] sm:$0xf]
  %v87 = vld [vmem:[%s1 + $0x90] sm:$0xf]
  %v88 = vld [vmem:[%s1 + $0x94] sm:$0xf]
  %v89 = vld [vmem:[%s1 + $0x98] sm:$0xf]
  %v90 = vld [vmem:[%s1 + $0x9c] sm:$0xf]
  %v91 = vld [vmem:[%s1 + $0xa0] sm:$0xf]
  %v92 = vld [vmem:[%s1 + $0xa4] sm:$0xf]
  %v93 = vld [vmem:[%s1 + $0xa8] sm:$0xf]
  %v94 = vld [vmem:[%s1 + $0xac] sm:$0xf]
  %v95 = vld [vmem:[%s1 + $0xb0] sm:$0xf]
  %v96 = vld [vmem:[%s1 + $0xb4] sm:$0xf]
  %v97 = vld [vmem:[%s1 + $0xb8] sm:$0xf]
  %v98 = vld [vmem:[%s1 + $0xbc] sm:$0xf]
  %v115 = vunpack.c.l.b16 %v35
  %v116 = vunpack.c.h.b16 %v35
  %v117 = vunpack.c.l.b16 %v36
  %v118 = vunpack.c.l.b16 %v37
  %v119 = vunpack.c.h.b16 %v37
  %v120 = vunpack.c.l.b16 %v38
  %v121 = vunpack.c.l.b16 %v39
  %v122 = vunpack.c.h.b16 %v39
  %v123 = vunpack.c.l.b16 %v40
  %v124 = vunpack.c.l.b16 %v41
  %v125 = vunpack.c.h.b16 %v41
  %v126 = vunpack.c.l.b16 %v42
  %v127 = vunpack.c.l.b16 %v43
  %v128 = vunpack.c.h.b16 %v43
  %v129 = vunpack.c.l.b16 %v44
  %v130 = vunpack.c.l.b16 %v45
  %v131 = vunpack.c.h.b16 %v45
  %v132 = vunpack.c.l.b16 %v46
  %v133 = vunpack.c.l.b16 %v47
  %v134 = vunpack.c.h.b16 %v47
  %v135 = vunpack.c.l.b16 %v48
  %v136 = vunpack.c.l.b16 %v49
  %v137 = vunpack.c.h.b16 %v49
  %v138 = vunpack.c.l.b16 %v50
  %v139 = vpack.c.b16 %v118, %v115
  %v140 = vpack.c.b16 %v119, %v116
  %v141 = vpack.c.b16 %v120, %v117
  %v142 = vpack.c.b16 %v124, %v121
  %v143 = vpack.c.b16 %v125, %v122
  %v144 = vpack.c.b16 %v126, %v123
  %v145 = vpack.c.b16 %v130, %v127
  %v146 = vpack.c.b16 %v131, %v128
  %v147 = vpack.c.b16 %v132, %v129
  %v148 = vpack.c.b16 %v136, %v133
  %v149 = vpack.c.b16 %v137, %v134
  %v150 = vpack.c.b16 %v138, %v135
  %v211 = vunpack.c.l.b16 %v51
  %v212 = vunpack.c.l.b16 %v52
  %v213 = vunpack.c.l.b16 %v53
  %v214 = vunpack.c.l.b16 %v54
  %v215 = vunpack.c.l.b16 %v55
  %v216 = vunpack.c.l.b16 %v56
  %v217 = vunpack.c.l.b16 %v57
  %v218 = vunpack.c.l.b16 %v58
  %v219 = vunpack.c.l.b16 %v59
  %v220 = vunpack.c.l.b16 %v60
  %v221 = vunpack.c.l.b16 %v61
  %v222 = vunpack.c.l.b16 %v62
  %v223 = vunpack.c.l.b16 %v63
  %v224 = vunpack.c.l.b16 %v64
  %v225 = vunpack.c.l.b16 %v65
  %v226 = vunpack.c.l.b16 %v66
  %v227 = vunpack.c.l.b16 %v67
  %v228 = vunpack.c.l.b16 %v68
  %v229 = vunpack.c.l.b16 %v69
  %v230 = vunpack.c.l.b16 %v70
  %v231 = vunpack.c.l.b16 %v71
  %v232 = vunpack.c.l.b16 %v72
  %v233 = vunpack.c.l.b16 %v73
  %v234 = vunpack.c.l.b16 %v74
  %v235 = vunpack.c.l.b16 %v75
  %v236 = vunpack.c.l.b16 %v76
  %v237 = vunpack.c.l.b16 %v77
  %v238 = vunpack.c.l.b16 %v78
  %v239 = vunpack.c.l.b16 %v79
  %v240 = vunpack.c.l.b16 %v80
  %v241 = vunpack.c.l.b16 %v81
  %v242 = vunpack.c.l.b16 %v82
  %v243 = vunpack.c.l.b16 %v83
  %v244 = vunpack.c.l.b16 %v84
  %v245 = vunpack.c.l.b16 %v85
  %v246 = vunpack.c.l.b16 %v86
  %v247 = vunpack.c.l.b16 %v87
  %v248 = vunpack.c.l.b16 %v88
  %v249 = vunpack.c.l.b16 %v89
  %v250 = vunpack.c.l.b16 %v90
  %v251 = vunpack.c.l.b16 %v91
  %v252 = vunpack.c.l.b16 %v92
  %v253 = vunpack.c.l.b16 %v93
  %v254 = vunpack.c.l.b16 %v94
  %v255 = vunpack.c.l.b16 %v95
  %v256 = vunpack.c.l.b16 %v96
  %v257 = vunpack.c.l.b16 %v97
  %v258 = vunpack.c.l.b16 %v98
  %v259 = vpack.c.b16 %v212, %v211
  %v260 = vpack.c.b16 %v214, %v213
  %v261 = vpack.c.b16 %v216, %v215
  %v262 = vpack.c.b16 %v218, %v217
  %v263 = vpack.c.b16 %v220, %v219
  %v264 = vpack.c.b16 %v222, %v221
  %v265 = vpack.c.b16 %v224, %v223
  %v266 = vpack.c.b16 %v226, %v225
  %v267 = vpack.c.b16 %v228, %v227
  %v268 = vpack.c.b16 %v230, %v229
  %v269 = vpack.c.b16 %v232, %v231
  %v270 = vpack.c.b16 %v234, %v233
  %v271 = vpack.c.b16 %v236, %v235
  %v272 = vpack.c.b16 %v238, %v237
  %v273 = vpack.c.b16 %v240, %v239
  %v274 = vpack.c.b16 %v242, %v241
  %v275 = vpack.c.b16 %v244, %v243
  %v276 = vpack.c.b16 %v246, %v245
  %v277 = vpack.c.b16 %v248, %v247
  %v278 = vpack.c.b16 %v250, %v249
  %v279 = vpack.c.b16 %v252, %v251
  %v280 = vpack.c.b16 %v254, %v253
  %v281 = vpack.c.b16 %v256, %v255
  %v282 = vpack.c.b16 %v258, %v257
  %307 = vmatprep.subr.bf16.mxu0 0
  %308 = vmatpush1.bf16.msra.mxu0 %v259
  %309 = vmatprep.subr.bf16.mxu0 0
  %310 = vmatpush1.bf16.msra.mxu0 %v260
  %311 = vmatprep.subr.bf16.mxu0 0
  %312 = vmatpush1.bf16.msra.mxu0 %v261
  %313 = vmatprep.subr.bf16.mxu0 0
  %314 = vmatpush1.bf16.msra.mxu0 %v262
  %315 = vmatprep.subr.bf16.mxu0 0
  %316 = vmatpush1.bf16.msra.mxu0 %v263
  %317 = vmatprep.subr.bf16.mxu0 0
  %318 = vmatpush1.bf16.msra.mxu0 %v264
  %319 = vmatprep.subr.bf16.mxu0 0
  %320 = vmatpush1.bf16.msra.mxu0 %v265
  %321 = vmatprep.subr.bf16.mxu0 0
  %322 = vmatpush1.bf16.msra.mxu0 %v266
  %323 = vmatprep.subr.bf16.mxu0 0
  %324 = vmatpush1.bf16.msra.mxu0 %v267
  %325 = vmatprep.subr.bf16.mxu0 0
  %326 = vmatpush1.bf16.msra.mxu0 %v268
  %327 = vmatprep.subr.bf16.mxu0 0
  %328 = vmatpush1.bf16.msra.mxu0 %v269
  %329 = vmatprep.subr.bf16.mxu0 0
  %330 = vmatpush1.bf16.msra.mxu0 %v270
  %331 = vmatprep.subr.bf16.mxu0 0
  %332 = vmatpush1.bf16.msra.mxu0 %v271
  %333 = vmatprep.subr.bf16.mxu0 0
  %334 = vmatpush1.bf16.msra.mxu0 %v272
  %335 = vmatprep.subr.bf16.mxu0 0
  %336 = vmatpush1.bf16.msra.mxu0 %v273
  %337 = vmatprep.subr.bf16.mxu0 0
  %338 = vmatpush1.bf16.msra.mxu0 %v274
  %339 = vmatprep.mubr.bf16.mxu0 %v140
  %340 = vmatmul.mubr.bf16.gmra.mrb[0].mxu0 %v139
  %v341 = vpop.f32.mrb[0].mxu0
  %v342 = vadd.f32 0.0, %v341
  %v343 = vpop.f32.mrb[0].mxu0
  %v344 = vpop.f32.mrb[0].mxu0
  %v345 = vadd.f32 0.0, %v344
  %v346 = vpop.f32.mrb[0].mxu0
  %347 = vmatprep.mubr.bf16.mxu0 %v143
  %348 = vmatmul.mubr.bf16.gmra.mrb[0].mxu0 %v142
  %v349 = vpop.f32.mrb[0].mxu0
  %v350 = vadd.f32 0.0, %v349
  %v351 = vpop.f32.mrb[0].mxu0
  %v352 = vpop.f32.mrb[0].mxu0
  %v353 = vadd.f32 0.0, %v352
  %v354 = vpop.f32.mrb[0].mxu0
  %355 = vmatprep.mubr.bf16.mxu0 %v146
  %356 = vmatmul.mubr.bf16.gmra.mrb[0].mxu0 %v145
  %v357 = vpop.f32.mrb[0].mxu0
  %v358 = vadd.f32 0.0, %v357
  %v359 = vpop.f32.mrb[0].mxu0
  %v360 = vpop.f32.mrb[0].mxu0
  %v361 = vadd.f32 0.0, %v360
  %v362 = vpop.f32.mrb[0].mxu0
  %363 = vmatprep.mubr.bf16.mxu0 %v149
  %364 = vmatmul.mubr.bf16.gmra.mrb[0].mxu0 %v148
  %v365 = vpop.f32.mrb[0].mxu0
  %v366 = vadd.f32 0.0, %v365
  %v367 = vpop.f32.mrb[0].mxu0
  %v368 = vpop.f32.mrb[0].mxu0
  %v369 = vadd.f32 0.0, %v368
  %v370 = vpop.f32.mrb[0].mxu0
  %371 = vdwg.mxu0
  %372 = vmatprep.subr.bf16.mxu0 0
  %373 = vmatpush1.bf16.msra.mxu0 %v275
  %374 = vmatprep.subr.bf16.mxu0 0
  %375 = vmatpush1.bf16.msra.mxu0 %v276
  %376 = vmatprep.subr.bf16.mxu0 0
  %377 = vmatpush1.bf16.msra.mxu0 %v277
  %378 = vmatprep.subr.bf16.mxu0 0
  %379 = vmatpush1.bf16.msra.mxu0 %v278
  %380 = vmatprep.subr.bf16.mxu0 0
  %381 = vmatpush1.bf16.msra.mxu0 %v279
  %382 = vmatprep.subr.bf16.mxu0 0
  %383 = vmatpush1.bf16.msra.mxu0 %v280
  %384 = vmatprep.subr.bf16.mxu0 0
  %385 = vmatpush1.bf16.msra.mxu0 %v281
  %386 = vmatprep.subr.bf16.mxu0 0
  %387 = vmatpush1.bf16.msra.mxu0 %v282
  %388 = vmatprep.subr.bf16.mxu0 0
  %389 = vmatpush1.bf16.msra.mxu0 0
  %390 = vmatprep.subr.bf16.mxu0 0
  %391 = vmatpush1.bf16.msra.mxu0 0
  %392 = vmatprep.subr.bf16.mxu0 0
  %393 = vmatpush1.bf16.msra.mxu0 0
  %394 = vmatprep.subr.bf16.mxu0 0
  %395 = vmatpush1.bf16.msra.mxu0 0
  %396 = vmatprep.subr.bf16.mxu0 0
  %397 = vmatpush1.bf16.msra.mxu0 0
  %398 = vmatprep.subr.bf16.mxu0 0
  %399 = vmatpush1.bf16.msra.mxu0 0
  %400 = vmatprep.subr.bf16.mxu0 0
  %401 = vmatpush1.bf16.msra.mxu0 0
  %402 = vmatprep.subr.bf16.mxu0 0
  %403 = vmatpush1.bf16.msra.mxu0 0
  %404 = vmatprep.mubr.bf16.mxu0 0
  %405 = vmatmul.mubr.bf16.gmra.mrb[0].mxu0 %v141
  %v406 = vpop.f32.mrb[0].mxu0
  %v407 = vadd.f32 %v342, %v406
  %v408 = vpop.f32.mrb[0].mxu0
  %v409 = vpop.f32.mrb[0].mxu0
  %v410 = vadd.f32 %v345, %v409
  %v411 = vpop.f32.mrb[0].mxu0
  %412 = vmatprep.mubr.bf16.mxu0 0
  %413 = vmatmul.mubr.bf16.gmra.mrb[0].mxu0 %v144
  %v414 = vpop.f32.mrb[0].mxu0
  %v415 = vadd.f32 %v350, %v414
  %v416 = vpop.f32.mrb[0].mxu0
  %v417 = vpop.f32.mrb[0].mxu0
  %v418 = vadd.f32 %v353, %v417
  %v419 = vpop.f32.mrb[0].mxu0
  %420 = vmatprep.mubr.bf16.mxu0 0
  %421 = vmatmul.mubr.bf16.gmra.mrb[0].mxu0 %v147
  %v422 = vpop.f32.mrb[0].mxu0
  %v423 = vadd.f32 %v358, %v422
  %v424 = vpop.f32.mrb[0].mxu0
  %v425 = vpop.f32.mrb[0].mxu0
  %v426 = vadd.f32 %v361, %v425
  %v427 = vpop.f32.mrb[0].mxu0
  %428 = vmatprep.mubr.bf16.mxu0 0
  %429 = vmatmul.mubr.bf16.gmra.mrb[0].mxu0 %v150
  %v430 = vpop.f32.mrb[0].mxu0
  %v431 = vadd.f32 %v366, %v430
  %v432 = vpop.f32.mrb[0].mxu0
  %v433 = vpop.f32.mrb[0].mxu0
  %v434 = vadd.f32 %v369, %v433
  %v435 = vpop.f32.mrb[0].mxu0
  %436 = vdwg.mxu0
  %v437 = vadd.f32 %v27, %v407
  %v438 = vadd.f32 %v28, %v410
  %v439 = vadd.f32 %v29, %v415
  %v440 = vadd.f32 %v30, %v418
  %v441 = vadd.f32 %v31, %v423
  %v442 = vadd.f32 %v32, %v426
  %v443 = vadd.f32 %v33, %v431
  %v444 = vadd.f32 %v34, %v434
  %445 = vst [vmem:[#allocation2] sm:$0xff] %v437
  %446 = vst [vmem:[#allocation2 + $0x8] sm:$0xff] %v438
  %447 = vst [vmem:[#allocation2 + $0x10] sm:$0xff] %v439
  %448 = vst [vmem:[#allocation2 + $0x18] sm:$0xff] %v440
  %449 = vst [vmem:[#allocation2 + $0x20] sm:$0xff] %v441
  %450 = vst [vmem:[#allocation2 + $0x28] sm:$0xff] %v442
  %451 = vst [vmem:[#allocation2 + $0x30] sm:$0xff] %v443
  %452 = vst [vmem:[#allocation2 + $0x38] sm:$0xff] %v444
  // Predicated region
  $region18: #{alexnet_forward.13} parent=0 // pred_check
    %p453 = pneg %p15
  $region19: #{alexnet_forward.13} parent=0 // pred_check_branch
    %455 = sbr.rel (%p453) target = $region21
  $region20: #{alexnet_forward.13} parent=0 // pred_region
    %v456 = vld [vmem:[#allocation2] sm:$0xff]
    %v457 = vld [vmem:[#allocation2 + $0x8] sm:$0xff]
    %v458 = vld [vmem:[#allocation2 + $0x10] sm:$0xff]
    %v459 = vld [vmem:[#allocation2 + $0x18] sm:$0xff]
    %v460 = vld [vmem:[#allocation2 + $0x20] sm:$0xff]
    %v461 = vld [vmem:[#allocation2 + $0x28] sm:$0xff]
    %v462 = vld [vmem:[#allocation2 + $0x30] sm:$0xff]
    %v463 = vld [vmem:[#allocation2 + $0x38] sm:$0xff]
    %v464 = vld [vmem:[%s2] sm:$0x1]
    %v466 = vlaneseq
    %v467 = vshrl.u32 %v466, 7
    %v468 = vsub.s32 0, %v467
    %v469 = vrot.slane %v464, %v468
    %v471 = vadd.f32 %v456, %v469
    %v472 = vadd.f32 %v457, %v469
    %v473 = vadd.f32 %v458, %v469
    %v474 = vadd.f32 %v459, %v469
    %v475 = vadd.f32 %v460, %v469
    %v476 = vadd.f32 %v461, %v469
    %v477 = vadd.f32 %v462, %v469
    %v478 = vadd.f32 %v463, %v469
    %v479 = vmax.f32 %v471, 0.0
    %v480 = vmax.f32 %v472, 0.0
    %v481 = vmax.f32 %v473, 0.0
    %v482 = vmax.f32 %v474, 0.0
    %v483 = vmax.f32 %v475, 0.0
    %v484 = vmax.f32 %v476, 0.0
    %v485 = vmax.f32 %v477, 0.0
    %v486 = vmax.f32 %v478, 0.0
    %v487 = vpack.c.bf16 %v480, %v479
    %v488 = vpack.c.bf16 %v482, %v481
    %v489 = vpack.c.bf16 %v484, %v483
    %v490 = vpack.c.bf16 %v486, %v485
    %v495 = vunpack.c.l.b16 %v487
    %v496 = vunpack.c.h.b16 %v487
    %v497 = vunpack.c.l.b16 %v488
    %v498 = vunpack.c.h.b16 %v488
    %v499 = vunpack.c.l.b16 %v489
    %v500 = vunpack.c.h.b16 %v489
    %v501 = vunpack.c.l.b16 %v490
    %v502 = vunpack.c.h.b16 %v490
    %v503 = vpack.c.b16 %v495, %v495
    %v504 = vpack.c.b16 %v496, %v496
    %v505 = vpack.c.b16 %v497, %v497
    %v506 = vpack.c.b16 %v498, %v498
    %v507 = vpack.c.b16 %v499, %v499
    %v508 = vpack.c.b16 %v500, %v500
    %v509 = vpack.c.b16 %v501, %v501
    %v510 = vpack.c.b16 %v502, %v502
    %519 = vst [vmem:[%s3] sm:$0xf] %v503
    %520 = vst [vmem:[%s3 + $0x4] sm:$0xf] %v504
    %521 = vst [vmem:[%s3 + $0x8] sm:$0xf] %v505
    %522 = vst [vmem:[%s3 + $0xc] sm:$0xf] %v506
    %523 = vst [vmem:[%s3 + $0x10] sm:$0xf] %v507
    %524 = vst [vmem:[%s3 + $0x14] sm:$0xf] %v508
    %525 = vst [vmem:[%s3 + $0x18] sm:$0xf] %v509
    %526 = vst [vmem:[%s3 + $0x1c] sm:$0xf] %v510
  $region21: #{alexnet_forward.13} parent=0 // pred_fallthru
    _
  // Predicated region
  $region22: #{alexnet_forward.13} parent=0 // pred_check
    _
  $region23: #{alexnet_forward.13} parent=0 // pred_check_branch
    %528 = sbr.rel (0) target = $region25
  $region24: #{alexnet_forward.13} parent=0 // pred_region
    _
  $region25: #{alexnet_forward.13} parent=0 // pred_fallthru
    _
  // Predicated region
  $region26: #{alexnet_forward.13} parent=0 // pred_check
    _
  $region27: #{alexnet_forward.13} parent=0 // pred_check_branch
    %530 = sbr.rel (0) target = $region29
  $region28: #{alexnet_forward.13} parent=0 // pred_region
    _
  $region29: #{alexnet_forward.13} parent=0 // pred_fallthru
    _

// kernel: alexnet_forward.14
$region0: #{alexnet_forward.14}
  #allocation0 [shape = 'u32[]', space=smem, size = 0x4, offset = 0x4, fixed_abs, tag = 'smem constant byte address 0x4 - core index']
  #allocation1 [shape = 'u32[144,128]{1,0:T(1,128)}', space=vmem, size = 0x12000, scoped, tag = 'internal scratch']
  #allocation2 [shape = 'f32[64,128]{1,0:T(8,128)}', space=vmem, size = 0x8000, scoped, tag = 'scratch operand']
  %s0 = inlined_call_operand.vmem [shape: bf16[64,1280], index: 0, kind: input, shape index: {}]
  %s1 = inlined_call_operand.vmem [shape: bf16[1280,128], index: 1, kind: input, shape index: {}]
  %s2 = inlined_call_operand.vmem [shape: f32[1,128], index: 2, kind: input, shape index: {}]
  %s3 = inlined_call_operand.vmem [shape: bf16[64,128], index: 3, kind: output, shape index: {}]
  %s4 = sld [smem:[#allocation0]]
  $region91: #{alexnet_forward.14} parent=0
    _
  %s6 = ssub.s32 1, %s4
  %s7 = scalar_select 0, %s6, %s4
  $region1: #{alexnet_forward.14} parent=0
    #allocation3 [shape = 'u8[65536]{0}', space=vmem, size = 0x10000, scoped, tag = 'input window, operand 0']
    loop: start=0, step=1, limit=7
    $region2: #{alexnet_forward.14} parent=1 // loop_pre_header
      _
    $region3: #{alexnet_forward.14} parent=1 // loop_header
      %s9 = sphi 0, %s13
      %p10 = scmp.ge.s32.totalorder %s9, 7
      %s16 = sphi 0, %s35
      %s17 = sphi 0, %s31
      %s18 = sphi 0, %s27
      %s19 = sphi 0, %s16
      %s20 = sphi 0, %s17
      %s21 = sphi 0, %s18
      %s22 = sphi 0, %s19
      %s23 = sphi 0, %s20
      %s24 = sphi 0, %s21
      %s40 = sphi 0, %s42
      %s43 = sphi 0, %s40
      %s44 = sphi 0, %s43
      %s60 = sphi 0, %s44
      %s68 = sphi 0, %s70
      %s71 = sphi 0, %s68
      %s72 = sphi 0, %s71
      %s88 = sphi 0, %s72
      %s94 = sphi 0, %s96
      %s97 = sphi 0, %s94
      %s98 = sphi 0, %s97
      %s114 = sphi 0, %s98
      %s122 = sphi 0, %s124
      %s125 = sphi 0, %s122
      %s126 = sphi 0, %s125
      %s142 = sphi 0, %s126
    $region4: #{alexnet_forward.14} parent=1 // loop_header_branch
      %12 = sbr.rel (%p10) target = $region8
    $region5: #{alexnet_forward.14} parent=1 // loop_body
      %s14 = ssub.s32 %s9, 1
      %s15 = ssub.s32 %s9, 2
      %s25 = sadd.s32 1, %s18
      %p26 = scmp.ge.s32.totalorder %s25, 5
      %s27 = scalar_select %p26, 0, %s25
      %s28 = sadd.s32 1, %s17
      %s29 = scalar_select %p26, %s28, %s17
      %p30 = scmp.ge.s32.totalorder %s29, 1
      %s31 = scalar_select %p30, 0, %s29
      %s32 = sadd.s32 1, %s16
      %s33 = scalar_select %p30, %s32, %s16
      %p34 = scmp.ge.s32.totalorder %s33, 1
      %s35 = scalar_select %p34, 0, %s33
      %s36 = ssub.s32 %s16, %s35
      %s37 = ssub.s32 %s18, %s27
      %s38 = sor.u32 %s36, %s37
      %p39 = scmp.eq.s32.totalorder %s38, 0
      %s41 = sadd.s32 %s40, 1
      %s42 = scalar_select %p39, %s40, %s41
      %p45 = pneg %p39
      %p46 = scmp.eq.s32.totalorder %s9, 4
      %p47 = por %p45, %p46
      %p48 = scmp.ne.s32.totalorder %s40, %s43
      %p49 = scmp.eq.s32.totalorder %s9, 0
      %p50 = por %p48, %p49
      %p51 = scmp.ne.s32.totalorder %s40, %s43
      %p52 = scmp.eq.s32.totalorder %s14, 4
      %p53 = por %p51, %p52
      %p54 = scmp.ne.s32.totalorder %s43, %s44
      %p55 = scmp.eq.s32.totalorder %s14, 0
      %p56 = por %p54, %p55
      %p57 = scmp.ne.s32.totalorder %s43, %s44
      %p58 = scmp.eq.s32.totalorder %s15, 4
      %p59 = por %p57, %p58
      %p61 = scmp.ne.s32.totalorder %s44, %s60
      %p62 = scmp.eq.s32.totalorder %s15, 0
      %p63 = por %p61, %p62
      %s64 = ssub.s32 %s18, %s27
      %s65 = ssub.s32 %s17, %s31
      %s66 = sor.u32 %s64, %s65
      %p67 = scmp.eq.s32.totalorder %s66, 0
      %s69 = sadd.s32 %s68, 1
      %s70 = scalar_select %p67, %s68, %s69
      %p73 = pneg %p67
      %p74 = scmp.eq.s32.totalorder %s9, 4
      %p75 = por %p73, %p74
      %p76 = scmp.ne.s32.totalorder %s68, %s71
      %p77 = scmp.eq.s32.totalorder %s9, 0
      %p78 = por %p76, %p77
      %p79 = scmp.ne.s32.totalorder %s68, %s71
      %p80 = scmp.eq.s32.totalorder %s14, 4
      %p81 = por %p79, %p80
      %p82 = scmp.ne.s32.totalorder %s71, %s72
      %p83 = scmp.eq.s32.totalorder %s14, 0
      %p84 = por %p82, %p83
      %p85 = scmp.ne.s32.totalorder %s71, %s72
      %p86 = scmp.eq.s32.totalorder %s15, 4
      %p87 = por %p85, %p86
      %p89 = scmp.ne.s32.totalorder %s72, %s88
      %p90 = scmp.eq.s32.totalorder %s15, 0
      %p91 = por %p89, %p90
      %s92 = ssub.s32 %s17, %s31
      %p93 = scmp.eq.s32.totalorder %s92, 0
      %s95 = sadd.s32 %s94, 1
      %s96 = scalar_select %p93, %s94, %s95
      %p99 = pneg %p93
      %p100 = scmp.eq.s32.totalorder %s9, 4
      %p101 = por %p99, %p100
      %p102 = scmp.ne.s32.totalorder %s94, %s97
      %p103 = scmp.eq.s32.totalorder %s9, 0
      %p104 = por %p102, %p103
      %p105 = scmp.ne.s32.totalorder %s94, %s97
      %p106 = scmp.eq.s32.totalorder %s14, 4
      %p107 = por %p105, %p106
      %p108 = scmp.ne.s32.totalorder %s97, %s98
      %p109 = scmp.eq.s32.totalorder %s14, 0
      %p110 = por %p108, %p109
      %p111 = scmp.ne.s32.totalorder %s97, %s98
      %p112 = scmp.eq.s32.totalorder %s15, 4
      %p113 = por %p111, %p112
      %p115 = scmp.ne.s32.totalorder %s98, %s114
      %p116 = scmp.eq.s32.totalorder %s15, 0
      %p117 = por %p115, %p116
      %s118 = ssub.s32 %s16, %s35
      %s119 = ssub.s32 %s17, %s31
      %s120 = sor.u32 %s118, %s119
      %p121 = scmp.eq.s32.totalorder %s120, 0
      %s123 = sadd.s32 %s122, 1
      %s124 = scalar_select %p121, %s122, %s123
      %p127 = pneg %p121
      %p128 = scmp.eq.s32.totalorder %s9, 4
      %p129 = por %p127, %p128
      %p130 = scmp.ne.s32.totalorder %s122, %s125
      %p131 = scmp.eq.s32.totalorder %s9, 0
      %p132 = por %p130, %p131
      %p133 = scmp.ne.s32.totalorder %s122, %s125
      %p134 = scmp.eq.s32.totalorder %s14, 4
      %p135 = por %p133, %p134
      %p136 = scmp.ne.s32.totalorder %s125, %s126
      %p137 = scmp.eq.s32.totalorder %s14, 0
      %p138 = por %p136, %p137
      %p139 = scmp.ne.s32.totalorder %s125, %s126
      %p140 = scmp.eq.s32.totalorder %s15, 4
      %p141 = por %p139, %p140
      %p143 = scmp.ne.s32.totalorder %s126, %s142
      %p144 = scmp.eq.s32.totalorder %s15, 0
      %p145 = por %p143, %p144
      %p146 = scmp.le.s32.totalorder 1, %s9
      %p147 = scmp.lt.s32.totalorder %s9, 6
      %p148 = pnand %p146, %p147
      %p149 = pneg %p148
      // Predicated region
      $region9: #{alexnet_forward.14} parent=5 // pred_check
        _
      $region10: #{alexnet_forward.14} parent=5 // pred_check_branch
        %151 = sbr.rel (%p148) target = $region12
      $region11: #{alexnet_forward.14} parent=5 // pred_region
        %s152 = ssub.s32 %s9, 1
        // Predicated region
        $region13: #{alexnet_forward.14} parent=11 // pred_check
          %p153 = pneg %p110
        $region14: #{alexnet_forward.14} parent=11 // pred_check_branch
          %155 = sbr.rel (%p153) target = $region16
        $region15: #{alexnet_forward.14} parent=11 // pred_region
          %p156 = scmp.lt.s32.totalorder %s20, 0
          %s157 = scalar_select %p156, %s20, 0
          %s158 = scalar_lea.vmem %s2, %s157
        $region16: #{alexnet_forward.14} parent=11 // pred_fallthru
          _
      $region12: #{alexnet_forward.14} parent=5 // pred_fallthru
        _
      %p159 = scmp.lt.s32.totalorder %s9, 5
      // Predicated region
      $region17: #{alexnet_forward.14} parent=5 // pred_check
        %p160 = pneg %p159
      $region18: #{alexnet_forward.14} parent=5 // pred_check_branch
        %162 = sbr.rel (%p160) target = $region20
      $region19: #{alexnet_forward.14} parent=5 // pred_region
        // Predicated region
        $region21: #{alexnet_forward.14} parent=19 // pred_check
          %p163 = pneg %p50
        $region22: #{alexnet_forward.14} parent=19 // pred_check_branch
          %165 = sbr.rel (%p163) target = $region24
        $region23: #{alexnet_forward.14} parent=19 // pred_region
          %s166 = sand.u32 %s40, 1
          %s167 = sand.u32 %s40, 1
          %s168 = smul.addr %s167, 64
          %s169 = scalar_lea.vmem [#allocation3], %s168
          %s170 = smul.u32 8, %s16
          %s171 = smul.u32 2, %s18
          %s172 = smul.addr %s170, 10
          %s173 = sadd.s32 %s171, %s172
          %s174 = smul.addr %s173, 4
          %s175 = scalar_lea.vmem %s0, %s174
          // Predicated region
          $region25: #{alexnet_forward.14} parent=23 // pred_check
            _
          $region26: #{alexnet_forward.14} parent=23 // pred_check_branch
            %177 = sbr.rel (0) target = $region28
          $region27: #{alexnet_forward.14} parent=23 // pred_region
            // Predicated region
            $region29: #{alexnet_forward.14} parent=27 // pred_check
              _
            $region30: #{alexnet_forward.14} parent=27 // pred_check_branch
              %179 = sbr.rel (0) target = $region32
            $region31: #{alexnet_forward.14} parent=27 // pred_region
              // Predicated region
              $region44: #{alexnet_forward.14} parent=31 // pred_check
                _
              $region45: #{alexnet_forward.14} parent=31 // pred_check_branch
                %208 = sbr.rel (0) target = $region47
              $region46: #{alexnet_forward.14} parent=31 // pred_region
                loop: start=0, step=1, limit=1
                $region48: #{alexnet_forward.14} parent=46 // loop_pre_header
                  _
                $region49: #{alexnet_forward.14} parent=46 // loop_header
                  %s210 = sphi 0, %s214
                  %p211 = scmp.ge.s32.totalorder %s210, 1
                  %s215 = sphi %s175, %s175
                  %s216 = sphi %s169, %s169
                $region50: #{alexnet_forward.14} parent=46 // loop_header_branch
                  %213 = sbr.rel (%p211) target = $region54
                $region51: #{alexnet_forward.14} parent=46 // loop_body
                  %v217 = vld [vmem:[%s215] sm:$0xff]
                  %218 = vst [vmem:[%s216] sm:$0xff] %v217
                  %v219 = vld [vmem:[%s215 + $0x28] sm:$0xff]
                  %220 = vst [vmem:[%s216 + $0x8] sm:$0xff] %v219
                  %v221 = vld [vmem:[%s215 + $0x50] sm:$0xff]
                  %222 = vst [vmem:[%s216 + $0x10] sm:$0xff] %v221
                  %v223 = vld [vmem:[%s215 + $0x78] sm:$0xff]
                  %224 = vst [vmem:[%s216 + $0x18] sm:$0xff] %v223
                  %v225 = vld [vmem:[%s215 + $0xa0] sm:$0xff]
                  %226 = vst [vmem:[%s216 + $0x20] sm:$0xff] %v225
                  %v227 = vld [vmem:[%s215 + $0xc8] sm:$0xff]
                  %228 = vst [vmem:[%s216 + $0x28] sm:$0xff] %v227
                  %v229 = vld [vmem:[%s215 + $0xf0] sm:$0xff]
                  %230 = vst [vmem:[%s216 + $0x30] sm:$0xff] %v229
                  %v231 = vld [vmem:[%s215 + $0x118] sm:$0xff]
                  %232 = vst [vmem:[%s216 + $0x38] sm:$0xff] %v231
                $region52: #{alexnet_forward.14} parent=46 // loop_footer
                  %s214 = sadd.s32 1, %s210
                $region53: #{alexnet_forward.14} parent=46 // loop_footer_branch
                  %209 = sbr.rel target = $region49
                $region54: #{alexnet_forward.14} parent=46 // loop_exit
                  _
              $region47: #{alexnet_forward.14} parent=31 // pred_fallthru
                _
              // Predicated region
              $region55: #{alexnet_forward.14} parent=31 // pred_check
                _
              $region56: #{alexnet_forward.14} parent=31 // pred_check_branch
                %234 = sbr.rel target = $region58
              $region57: #{alexnet_forward.14} parent=31 // pred_region
                _
              $region58: #{alexnet_forward.14} parent=31 // pred_fallthru
                _
            $region32: #{alexnet_forward.14} parent=27 // pred_fallthru
              _
            // Predicated region
            $region33: #{alexnet_forward.14} parent=27 // pred_check
              _
            $region34: #{alexnet_forward.14} parent=27 // pred_check_branch
              %181 = sbr.rel target = $region36
            $region35: #{alexnet_forward.14} parent=27 // pred_region
              loop: start=0, step=1, limit=1
              $region37: #{alexnet_forward.14} parent=35 // loop_pre_header
                _
              $region38: #{alexnet_forward.14} parent=35 // loop_header
                %s184 = sphi 0, %s188
                %p185 = scmp.ge.s32.totalorder %s184, 1
                %s189 = sphi %s175, %s175
                %s190 = sphi %s169, %s169
              $region39: #{alexnet_forward.14} parent=35 // loop_header_branch
                %187 = sbr.rel (%p185) target = $region43
              $region40: #{alexnet_forward.14} parent=35 // loop_body
                %v191 = vld [vmem:[%s189] sm:$0xff]
                %192 = vst [vmem:[%s190] sm:$0xff] %v191
                %v193 = vld [vmem:[%s189 + $0x28] sm:$0xff]
                %194 = vst [vmem:[%s190 + $0x8] sm:$0xff] %v193
                %v195 = vld [vmem:[%s189 + $0x50] sm:$0xff]
                %196 = vst [vmem:[%s190 + $0x10] sm:$0xff] %v195
                %v197 = vld [vmem:[%s189 + $0x78] sm:$0xff]
                %198 = vst [vmem:[%s190 + $0x18] sm:$0xff] %v197
                %v199 = vld [vmem:[%s189 + $0xa0] sm:$0xff]
                %200 = vst [vmem:[%s190 + $0x20] sm:$0xff] %v199
                %v201 = vld [vmem:[%s189 + $0xc8] sm:$0xff]
                %202 = vst [vmem:[%s190 + $0x28] sm:$0xff] %v201
                %v203 = vld [vmem:[%s189 + $0xf0] sm:$0xff]
                %204 = vst [vmem:[%s190 + $0x30] sm:$0xff] %v203
                %v205 = vld [vmem:[%s189 + $0x118] sm:$0xff]
                %206 = vst [vmem:[%s190 + $0x38] sm:$0xff] %v205
              $region41: #{alexnet_forward.14} parent=35 // loop_footer
                %s188 = sadd.s32 1, %s184
              $region42: #{alexnet_forward.14} parent=35 // loop_footer_branch
                %183 = sbr.rel target = $region38
              $region43: #{alexnet_forward.14} parent=35 // loop_exit
                _
            $region36: #{alexnet_forward.14} parent=27 // pred_fallthru
              _
          $region28: #{alexnet_forward.14} parent=23 // pred_fallthru
            _
          %235 = vnop
        $region24: #{alexnet_forward.14} parent=19 // pred_fallthru
          _
        // Predicated region
        $region59: #{alexnet_forward.14} parent=19 // pred_check
          %p236 = pneg %p78
        $region60: #{alexnet_forward.14} parent=19 // pred_check_branch
          %238 = sbr.rel (%p236) target = $region62
        $region61: #{alexnet_forward.14} parent=19 // pred_region
          %s239 = smul.u32 32, %s18
          %p240 = scmp.lt.s32.totalorder %s239, 159
          %s241 = scalar_select %p240, %s239, 159
          %p242 = scmp.lt.s32.totalorder %s17, 0
          %s243 = scalar_select %p242, %s17, 0
          %s244 = sadd.s32 %s243, %s241
          %s245 = smul.addr %s244, 4
          %s246 = scalar_lea.vmem %s1, %s245
          %s247 = smul.u32 32, %s18
        $region62: #{alexnet_forward.14} parent=19 // pred_fallthru
          _
      $region20: #{alexnet_forward.14} parent=5 // pred_fallthru
        _
      %p248 = scmp.le.s32.totalorder 1, %s9
      %p249 = scmp.lt.s32.totalorder %s9, 6
      %p250 = pnand %p248, %p249
      %p251 = pneg %p250
      // Predicated region
      $region63: #{alexnet_forward.14} parent=5 // pred_check
        _
      $region64: #{alexnet_forward.14} parent=5 // pred_check_branch
        %253 = sbr.rel (%p250) target = $region66
      $region65: #{alexnet_forward.14} parent=5 // pred_region
        %s254 = ssub.s32 %s9, 1
        %s255 = sand.u32 %s43, 1
        %s256 = sand.u32 %s43, 1
        %s257 = smul.addr %s256, 64
        %s258 = scalar_lea.vmem [#allocation3], %s257
        // Predicated region
        $region67: #{alexnet_forward.14} parent=65 // pred_check
          %p259 = pneg %p56
        $region68: #{alexnet_forward.14} parent=65 // pred_check_branch
          %261 = sbr.rel (%p259) target = $region70
        $region69: #{alexnet_forward.14} parent=65 // pred_region
          _
        $region70: #{alexnet_forward.14} parent=65 // pred_fallthru
          _
        %s262 = sand.u32 %s43, 1
        %s263 = sand.u32 %s43, 1
        %s264 = smul.addr %s263, 64
        %s265 = scalar_lea.vmem [#allocation3], %s264
        %p266 = pneg %p56
        %p267 = pneg %p53
        %s268 = smul.u32 32, %s21
        %p269 = scmp.lt.s32.totalorder %s268, 159
        %s270 = scalar_select %p269, %s268, 159
        %p271 = scmp.lt.s32.totalorder %s20, 0
        %s272 = scalar_select %p271, %s20, 0
        %s273 = sadd.s32 %s272, %s270
        %s274 = smul.addr %s273, 4
        %s275 = scalar_lea.vmem %s1, %s274
        %p276 = pneg %p84
        %p277 = pneg %p81
        %p278 = scmp.lt.s32.totalorder %s20, 0
        %s279 = scalar_select %p278, %s20, 0
        %s280 = scalar_lea.vmem %s2, %s279
        %p281 = pneg %p110
        %p282 = pneg %p107
        %p283 = pneg %p138
        %p284 = pneg %p135
        %s285 = smul.u32 8, %s19
        %p286 = scmp.lt.s32.totalorder %s285, 7
        %s287 = scalar_select %p286, %s285, 7
        %p288 = scmp.lt.s32.totalorder %s20, 0
        %s289 = scalar_select %p288, %s20, 0
        %s290 = sadd.s32 %s289, %s287
        %s291 = smul.addr %s290, 4
        %s292 = scalar_lea.vmem %s3, %s291
        %s293 = smul.u32 8, %s19
        %s294 = smul.u32 2, %s21
        %s295 = smul.u32 32, %s21
        %p296 = scmp.lt.s32.totalorder %s295, 159
        %s297 = scalar_select %p296, %s295, 159
        %p298 = scmp.lt.s32.totalorder %s20, 0
        %s299 = scalar_select %p298, %s20, 0
        %s300 = sadd.s32 %s299, %s297
        %s301 = smul.addr %s300, 4
        %s302 = scalar_lea.vmem %s1, %s301
        %s303 = smul.u32 32, %s21
        %p304 = scmp.lt.s32.totalorder %s20, 0
        %s305 = scalar_select %p304, %s20, 0
        %s306 = scalar_lea.vmem %s2, %s305
        %s307 = smul.u32 8, %s19
        %p308 = scmp.lt.s32.totalorder %s307, 7
        %s309 = scalar_select %p308, %s307, 7
        %p310 = scmp.lt.s32.totalorder %s20, 0
        %s311 = scalar_select %p310, %s20, 0
        %s312 = sadd.s32 %s311, %s309
        %s313 = smul.addr %s312, 4
        %s314 = scalar_lea.vmem %s3, %s313
        %s315 = smul.u32 8, %s19
        %p317 = scmp.eq.s32.totalorder %s21, 0
        // Predicated region
        $region71: #{alexnet_forward.14} parent=65 // pred_check
          %p318 = pneg %p317
        $region72: #{alexnet_forward.14} parent=65 // pred_check_branch
          %320 = sbr.rel (%p318) target = $region74
        $region73: #{alexnet_forward.14} parent=65 // pred_region
          %321 = vst [vmem:[#allocation2] sm:$0xff] 0.0
          %322 = vst [vmem:[#allocation2 + $0x8] sm:$0xff] 0.0
          %323 = vst [vmem:[#allocation2 + $0x10] sm:$0xff] 0.0
          %324 = vst [vmem:[#allocation2 + $0x18] sm:$0xff] 0.0
          %325 = vst [vmem:[#allocation2 + $0x20] sm:$0xff] 0.0
          %326 = vst [vmem:[#allocation2 + $0x28] sm:$0xff] 0.0
          %327 = vst [vmem:[#allocation2 + $0x30] sm:$0xff] 0.0
          %328 = vst [vmem:[#allocation2 + $0x38] sm:$0xff] 0.0
        $region74: #{alexnet_forward.14} parent=65 // pred_fallthru
          _
        %v329 = vld [vmem:[#allocation2] sm:$0xff]
        %v330 = vld [vmem:[#allocation2 + $0x8] sm:$0xff]
        %v331 = vld [vmem:[#allocation2 + $0x10] sm:$0xff]
        %v332 = vld [vmem:[#allocation2 + $0x18] sm:$0xff]
        %v333 = vld [vmem:[#allocation2 + $0x20] sm:$0xff]
        %v334 = vld [vmem:[#allocation2 + $0x28] sm:$0xff]
        %v335 = vld [vmem:[#allocation2 + $0x30] sm:$0xff]
        %v336 = vld [vmem:[#allocation2 + $0x38] sm:$0xff]
        %v337 = vld [vmem:[%s258] sm:$0xff]
        %v338 = vld [vmem:[%s258 + $0x8] sm:$0xff]
        %v339 = vld [vmem:[%s258 + $0x10] sm:$0xff]
        %v340 = vld [vmem:[%s258 + $0x18] sm:$0xff]
        %v341 = vld [vmem:[%s258 + $0x20] sm:$0xff]
        %v342 = vld [vmem:[%s258 + $0x28] sm:$0xff]
        %v343 = vld [vmem:[%s258 + $0x30] sm:$0xff]
        %v344 = vld [vmem:[%s258 + $0x38] sm:$0xff]
        %v345 = vld [vmem:[%s302] sm:$0xf]
        %v346 = vld [vmem:[%s302 + $0x4] sm:$0xf]
        %v347 = vld [vmem:[%s302 + $0x8] sm:$0xf]
        %v348 = vld [vmem:[%s302 + $0xc] sm:$0xf]
        %v349 = vld [vmem:[%s302 + $0x10] sm:$0xf]
        %v350 = vld [vmem:[%s302 + $0x14] sm:$0xf]
        %v351 = vld [vmem:[%s302 + $0x18] sm:$0xf]
        %v352 = vld [vmem:[%s302 + $0x1c] sm:$0xf]
        %v353 = vld [vmem:[%s302 + $0x20] sm:$0xf]
        %v354 = vld [vmem:[%s302 + $0x24] sm:$0xf]
        %v355 = vld [vmem:[%s302 + $0x28] sm:$0xf]
        %v356 = vld [vmem:[%s302 + $0x2c] sm:$0xf]
        %v357 = vld [vmem:[%s302 + $0x30] sm:$0xf]
        %v358 = vld [vmem:[%s302 + $0x34] sm:$0xf]
        %v359 = vld [vmem:[%s302 + $0x38] sm:$0xf]
        %v360 = vld [vmem:[%s302 + $0x3c] sm:$0xf]
        %v361 = vld [vmem:[%s302 + $0x40] sm:$0xf]
        %v362 = vld [vmem:[%s302 + $0x44] sm:$0xf]
        %v363 = vld [vmem:[%s302 + $0x48] sm:$0xf]
        %v364 = vld [vmem:[%s302 + $0x4c] sm:$0xf]
        %v365 = vld [vmem:[%s302 + $0x50] sm:$0xf]
        %v366 = vld [vmem:[%s302 + $0x54] sm:$0xf]
        %v367 = vld [vmem:[%s302 + $0x58] sm:$0xf]
        %v368 = vld [vmem:[%s302 + $0x5c] sm:$0xf]
        %v369 = vld [vmem:[%s302 + $0x60] sm:$0xf]
        %v370 = vld [vmem:[%s302 + $0x64] sm:$0xf]
        %v371 = vld [vmem:[%s302 + $0x68] sm:$0xf]
        %v372 = vld [vmem:[%s302 + $0x6c] sm:$0xf]
        %v373 = vld [vmem:[%s302 + $0x70] sm:$0xf]
        %v374 = vld [vmem:[%s302 + $0x74] sm:$0xf]
        %v375 = vld [vmem:[%s302 + $0x78] sm:$0xf]
        %v376 = vld [vmem:[%s302 + $0x7c] sm:$0xf]
        %v385 = vunpack.c.l.b16 %v337
        %v386 = vunpack.c.h.b16 %v337
        %v387 = vunpack.c.l.b16 %v338
        %v388 = vunpack.c.h.b16 %v338
        %v389 = vunpack.c.l.b16 %v339
        %v390 = vunpack.c.h.b16 %v339
        %v391 = vunpack.c.l.b16 %v340
        %v392 = vunpack.c.h.b16 %v340
        %v393 = vunpack.c.l.b16 %v341
        %v394 = vunpack.c.h.b16 %v341
        %v395 = vunpack.c.l.b16 %v342
        %v396 = vunpack.c.h.b16 %v342
        %v397 = vunpack.c.l.b16 %v343
        %v398 = vunpack.c.h.b16 %v343
        %v399 = vunpack.c.l.b16 %v344
        %v400 = vunpack.c.h.b16 %v344
        %v401 = vpack.c.b16 %v387, %v385
        %v402 = vpack.c.b16 %v388, %v386
        %v403 = vpack.c.b16 %v391, %v389
        %v404 = vpack.c.b16 %v392, %v390
        %v405 = vpack.c.b16 %v395, %v393
        %v406 = vpack.c.b16 %v396, %v394
        %v407 = vpack.c.b16 %v399, %v397
        %v408 = vpack.c.b16 %v400, %v398
        %v449 = vunpack.c.l.b16 %v345
        %v450 = vunpack.c.l.b16 %v346
        %v451 = vunpack.c.l.b16 %v347
        %v452 = vunpack.c.l.b16 %v348
        %v453 = vunpack.c.l.b16 %v349
        %v454 = vunpack.c.l.b16 %v350
        %v455 = vunpack.c.l.b16 %v351
        %v456 = vunpack.c.l.b16 %v352
        %v457 = vunpack.c.l.b16 %v353
        %v458 = vunpack.c.l.b16 %v354
        %v459 = vunpack.c.l.b16 %v355
        %v460 = vunpack.c.l.b16 %v356
        %v461 = vunpack.c.l.b16 %v357
        %v462 = vunpack.c.l.b16 %v358
        %v463 = vunpack.c.l.b16 %v359
        %v464 = vunpack.c.l.b16 %v360
        %v465 = vunpack.c.l.b16 %v361
        %v466 = vunpack.c.l.b16 %v362
        %v467 = vunpack.c.l.b16 %v363
        %v468 = vunpack.c.l.b16 %v364
        %v469 = vunpack.c.l.b16 %v365
        %v470 = vunpack.c.l.b16 %v366
        %v471 = vunpack.c.l.b16 %v367
        %v472 = vunpack.c.l.b16 %v368
        %v473 = vunpack.c.l.b16 %v369
        %v474 = vunpack.c.l.b16 %v370
        %v475 = vunpack.c.l.b16 %v371
        %v476 = vunpack.c.l.b16 %v372
        %v477 = vunpack.c.l.b16 %v373
        %v478 = vunpack.c.l.b16 %v374
        %v479 = vunpack.c.l.b16 %v375
        %v480 = vunpack.c.l.b16 %v376
        %v481 = vpack.c.b16 %v450, %v449
        %v482 = vpack.c.b16 %v452, %v451
        %v483 = vpack.c.b16 %v454, %v453
        %v484 = vpack.c.b16 %v456, %v455
        %v485 = vpack.c.b16 %v458, %v457
        %v486 = vpack.c.b16 %v460, %v459
        %v487 = vpack.c.b16 %v462, %v461
        %v488 = vpack.c.b16 %v464, %v463
        %v489 = vpack.c.b16 %v466, %v465
        %v490 = vpack.c.b16 %v468, %v467
        %v491 = vpack.c.b16 %v470, %v469
        %v492 = vpack.c.b16 %v472, %v471
        %v493 = vpack.c.b16 %v474, %v473
        %v494 = vpack.c.b16 %v476, %v475
        %v495 = vpack.c.b16 %v478, %v477
        %v496 = vpack.c.b16 %v480, %v479
        %513 = vmatprep.subr.bf16.mxu0 0
        %514 = vmatpush1.bf16.msra.mxu0 %v481
        %515 = vmatprep.subr.bf16.mxu0 0
        %516 = vmatpush1.bf16.msra.mxu0 %v482
        %517 = vmatprep.subr.bf16.mxu0 0
        %518 = vmatpush1.bf16.msra.mxu0 %v483
        %519 = vmatprep.subr.bf16.mxu0 0
        %520 = vmatpush1.bf16.msra.mxu0 %v484
        %521 = vmatprep.subr.bf16.mxu0 0
        %522 = vmatpush1.bf16.msra.mxu0 %v485
        %523 = vmatprep.subr.bf16.mxu0 0
        %524 = vmatpush1.bf16.msra.mxu0 %v486
        %525 = vmatprep.subr.bf16.mxu0 0
        %526 = vmatpush1.bf16.msra.mxu0 %v487
        %527 = vmatprep.subr.bf16.mxu0 0
        %528 = vmatpush1.bf16.msra.mxu0 %v488
        %529 = vmatprep.subr.bf16.mxu0 0
        %530 = vmatpush1.bf16.msra.mxu0 %v489
        %531 = vmatprep.subr.bf16.mxu0 0
        %532 = vmatpush1.bf16.msra.mxu0 %v490
        %533 = vmatprep.subr.bf16.mxu0 0
        %534 = vmatpush1.bf16.msra.mxu0 %v491
        %535 = vmatprep.subr.bf16.mxu0 0
        %536 = vmatpush1.bf16.msra.mxu0 %v492
        %537 = vmatprep.subr.bf16.mxu0 0
        %538 = vmatpush1.bf16.msra.mxu0 %v493
        %539 = vmatprep.subr.bf16.mxu0 0
        %540 = vmatpush1.bf16.msra.mxu0 %v494
        %541 = vmatprep.subr.bf16.mxu0 0
        %542 = vmatpush1.bf16.msra.mxu0 %v495
        %543 = vmatprep.subr.bf16.mxu0 0
        %544 = vmatpush1.bf16.msra.mxu0 %v496
        %545 = vmatprep.mubr.bf16.mxu0 %v402
        %546 = vmatmul.mubr.bf16.gmra.mrb[0].mxu0 %v401
        %v547 = vpop.f32.mrb[0].mxu0
        %v548 = vadd.f32 0.0, %v547
        %v549 = vpop.f32.mrb[0].mxu0
        %v550 = vpop.f32.mrb[0].mxu0
        %v551 = vadd.f32 0.0, %v550
        %v552 = vpop.f32.mrb[0].mxu0
        %553 = vmatprep.mubr.bf16.mxu0 %v404
        %554 = vmatmul.mubr.bf16.gmra.mrb[0].mxu0 %v403
        %v555 = vpop.f32.mrb[0].mxu0
        %v556 = vadd.f32 0.0, %v555
        %v557 = vpop.f32.mrb[0].mxu0
        %v558 = vpop.f32.mrb[0].mxu0
        %v559 = vadd.f32 0.0, %v558
        %v560 = vpop.f32.mrb[0].mxu0
        %561 = vmatprep.mubr.bf16.mxu0 %v406
        %562 = vmatmul.mubr.bf16.gmra.mrb[0].mxu0 %v405
        %v563 = vpop.f32.mrb[0].mxu0
        %v564 = vadd.f32 0.0, %v563
        %v565 = vpop.f32.mrb[0].mxu0
        %v566 = vpop.f32.mrb[0].mxu0
        %v567 = vadd.f32 0.0, %v566
        %v568 = vpop.f32.mrb[0].mxu0
        %569 = vmatprep.mubr.bf16.mxu0 %v408
        %570 = vmatmul.mubr.bf16.gmra.mrb[0].mxu0 %v407
        %v571 = vpop.f32.mrb[0].mxu0
        %v572 = vadd.f32 0.0, %v571
        %v573 = vpop.f32.mrb[0].mxu0
        %v574 = vpop.f32.mrb[0].mxu0
        %v575 = vadd.f32 0.0, %v574
        %v576 = vpop.f32.mrb[0].mxu0
        %577 = vdwg.mxu0
        %v578 = vadd.f32 %v329, %v548
        %v579 = vadd.f32 %v330, %v551
        %v580 = vadd.f32 %v331, %v556
        %v581 = vadd.f32 %v332, %v559
        %v582 = vadd.f32 %v333, %v564
        %v583 = vadd.f32 %v334, %v567
        %v584 = vadd.f32 %v335, %v572
        %v585 = vadd.f32 %v336, %v575
        %586 = vst [vmem:[#allocation2] sm:$0xff] %v578
        %587 = vst [vmem:[#allocation2 + $0x8] sm:$0xff] %v579
        %588 = vst [vmem:[#allocation2 + $0x10] sm:$0xff] %v580
        %589 = vst [vmem:[#allocation2 + $0x18] sm:$0xff] %v581
        %590 = vst [vmem:[#allocation2 + $0x20] sm:$0xff] %v582
        %591 = vst [vmem:[#allocation2 + $0x28] sm:$0xff] %v583
        %592 = vst [vmem:[#allocation2 + $0x30] sm:$0xff] %v584
        %593 = vst [vmem:[#allocation2 + $0x38] sm:$0xff] %v585
        %p594 = scmp.eq.s32.totalorder %s21, 4
        // Predicated region
        $region75: #{alexnet_forward.14} parent=65 // pred_check
          %p595 = pneg %p594
        $region76: #{alexnet_forward.14} parent=65 // pred_check_branch
          %597 = sbr.rel (%p595) target = $region78
        $region77: #{alexnet_forward.14} parent=65 // pred_region
          %v598 = vld [vmem:[#allocation2] sm:$0xff]
          %v599 = vld [vmem:[#allocation2 + $0x8] sm:$0xff]
          %v600 = vld [vmem:[#allocation2 + $0x10] sm:$0xff]
          %v601 = vld [vmem:[#allocation2 + $0x18] sm:$0xff]
          %v602 = vld [vmem:[#allocation2 + $0x20] sm:$0xff]
          %v603 = vld [vmem:[#allocation2 + $0x28] sm:$0xff]
          %v604 = vld [vmem:[#allocation2 + $0x30] sm:$0xff]
          %v605 = vld [vmem:[#allocation2 + $0x38] sm:$0xff]
          %v606 = vld [vmem:[%s306] sm:$0x1]
          %v608 = vlaneseq
          %v609 = vshrl.u32 %v608, 7
          %v610 = vsub.s32 0, %v609
          %v611 = vrot.slane %v606, %v610
          %v613 = vadd.f32 %v598, %v611
          %v614 = vadd.f32 %v599, %v611
          %v615 = vadd.f32 %v600, %v611
          %v616 = vadd.f32 %v601, %v611
          %v617 = vadd.f32 %v602, %v611
          %v618 = vadd.f32 %v603, %v611
          %v619 = vadd.f32 %v604, %v611
          %v620 = vadd.f32 %v605, %v611
          %v621 = vmax.f32 %v613, 0.0
          %v622 = vmax.f32 %v614, 0.0
          %v623 = vmax.f32 %v615, 0.0
          %v624 = vmax.f32 %v616, 0.0
          %v625 = vmax.f32 %v617, 0.0
          %v626 = vmax.f32 %v618, 0.0
          %v627 = vmax.f32 %v619, 0.0
          %v628 = vmax.f32 %v620, 0.0
          %v629 = vpack.c.bf16 %v622, %v621
          %v630 = vpack.c.bf16 %v624, %v623
          %v631 = vpack.c.bf16 %v626, %v625
          %v632 = vpack.c.bf16 %v628, %v627
          %v637 = vunpack.c.l.b16 %v629
          %v638 = vunpack.c.h.b16 %v629
          %v639 = vunpack.c.l.b16 %v630
          %v640 = vunpack.c.h.b16 %v630
          %v641 = vunpack.c.l.b16 %v631
          %v642 = vunpack.c.h.b16 %v631
          %v643 = vunpack.c.l.b16 %v632
          %v644 = vunpack.c.h.b16 %v632
          %v645 = vpack.c.b16 %v637, %v637
          %v646 = vpack.c.b16 %v638, %v638
          %v647 = vpack.c.b16 %v639, %v639
          %v648 = vpack.c.b16 %v640, %v640
          %v649 = vpack.c.b16 %v641, %v641
          %v650 = vpack.c.b16 %v642, %v642
          %v651 = vpack.c.b16 %v643, %v643
          %v652 = vpack.c.b16 %v644, %v644
          %661 = vst [vmem:[%s314] sm:$0xf] %v645
          %662 = vst [vmem:[%s314 + $0x4] sm:$0xf] %v646
          %663 = vst [vmem:[%s314 + $0x8] sm:$0xf] %v647
          %664 = vst [vmem:[%s314 + $0xc] sm:$0xf] %v648
          %665 = vst [vmem:[%s314 + $0x10] sm:$0xf] %v649
          %666 = vst [vmem:[%s314 + $0x14] sm:$0xf] %v650
          %667 = vst [vmem:[%s314 + $0x18] sm:$0xf] %v651
          %668 = vst [vmem:[%s314 + $0x1c] sm:$0xf] %v652
        $region78: #{alexnet_forward.14} parent=65 // pred_fallthru
          _
        %s669 = smul.u32 8, %s19
        %p670 = scmp.lt.s32.totalorder %s669, 7
        %s671 = scalar_select %p670, %s669, 7
        %p672 = scmp.lt.s32.totalorder %s20, 0
        %s673 = scalar_select %p672, %s20, 0
        %s674 = sadd.s32 %s673, %s671
        %s675 = smul.addr %s674, 4
        %s676 = scalar_lea.vmem %s3, %s675
        // Predicated region
        $region79: #{alexnet_forward.14} parent=65 // pred_check
          %p677 = pneg %p135
        $region80: #{alexnet_forward.14} parent=65 // pred_check_branch
          %679 = sbr.rel (%p677) target = $region82
        $region81: #{alexnet_forward.14} parent=65 // pred_region
          %s680 = smul.u32 8, %s19
        $region82: #{alexnet_forward.14} parent=65 // pred_fallthru
          _
        // Predicated region
        $region83: #{alexnet_forward.14} parent=65 // pred_check
          %p681 = pneg %p135
        $region84: #{alexnet_forward.14} parent=65 // pred_check_branch
          %683 = sbr.rel (%p681) target = $region86
        $region85: #{alexnet_forward.14} parent=65 // pred_region
          %s684 = smul.u32 8, %s19
          %p685 = scmp.lt.s32.totalorder %s684, 7
          %s686 = scalar_select %p685, %s684, 7
          %p687 = scmp.lt.s32.totalorder %s20, 0
          %s688 = scalar_select %p687, %s20, 0
          %s689 = sadd.s32 %s688, %s686
          %s690 = smul.addr %s689, 4
          %s691 = scalar_lea.vmem %s3, %s690
        $region86: #{alexnet_forward.14} parent=65 // pred_fallthru
          _
      $region66: #{alexnet_forward.14} parent=5 // pred_fallthru
        _
      %p692 = scmp.le.s32.totalorder 2, %s9
      // Predicated region
      $region87: #{alexnet_forward.14} parent=5 // pred_check
        %p693 = pneg %p692
      $region88: #{alexnet_forward.14} parent=5 // pred_check_branch
        %695 = sbr.rel (%p693) target = $region90
      $region89: #{alexnet_forward.14} parent=5 // pred_region
        %s696 = ssub.s32 %s9, 2
      $region90: #{alexnet_forward.14} parent=5 // pred_fallthru
        _
    $region6: #{alexnet_forward.14} parent=1 // loop_footer
      %s13 = sadd.s32 1, %s9
    $region7: #{alexnet_forward.14} parent=1 // loop_footer_branch
      %8 = sbr.rel target = $region3
    $region8: #{alexnet_forward.14} parent=1 // loop_exit
      _

// kernel: alexnet_forward.16
$region0: #{alexnet_forward.16}
  #allocation0 [shape = 'u32[]', space=smem, size = 0x4, offset = 0x4, fixed_abs, tag = 'smem constant byte address 0x4 - core index']
  #allocation1 [shape = 'u32[144,128]{1,0:T(1,128)}', space=vmem, size = 0x12000, scoped, tag = 'internal scratch']
  %s0 = inlined_call_operand.vmem [shape: bf16[9,32,256], index: 0, kind: input, shape index: {}]
  %s1 = inlined_call_operand.vmem [shape: bf16[32,256], index: 1, kind: output, shape index: {}]
  %s2 = sld [smem:[#allocation0]]
  $region14: #{alexnet_forward.16} parent=0
    _
  %s4 = ssub.s32 1, %s2
  %s5 = scalar_select 0, %s4, %s2
  // Predicated region
  $region2: #{alexnet_forward.16} parent=0 // pred_check
    _
  $region3: #{alexnet_forward.16} parent=0 // pred_check_branch
    %7 = sbr.rel (0) target = $region5
  $region4: #{alexnet_forward.16} parent=0 // pred_region
    _
  $region5: #{alexnet_forward.16} parent=0 // pred_fallthru
    _
  %v8 = vld [vmem:[%s0] sm:$0xff]
  %v9 = vld [vmem:[%s0 + $0x8] sm:$0xff]
  %v10 = vld [vmem:[%s0 + $0x10] sm:$0xff]
  %v11 = vld [vmem:[%s0 + $0x18] sm:$0xff]
  %v12 = vld [vmem:[%s0 + $0x20] sm:$0xff]
  %v13 = vld [vmem:[%s0 + $0x28] sm:$0xff]
  %v14 = vld [vmem:[%s0 + $0x30] sm:$0xff]
  %v15 = vld [vmem:[%s0 + $0x38] sm:$0xff]
  %v16 = vld [vmem:[%s0 + $0x40] sm:$0xff]
  %v17 = vld [vmem:[%s0 + $0x48] sm:$0xff]
  %v18 = vld [vmem:[%s0 + $0x50] sm:$0xff]
  %v19 = vld [vmem:[%s0 + $0x58] sm:$0xff]
  %v20 = vld [vmem:[%s0 + $0x60] sm:$0xff]
  %v21 = vld [vmem:[%s0 + $0x68] sm:$0xff]
  %v22 = vld [vmem:[%s0 + $0x70] sm:$0xff]
  %v23 = vld [vmem:[%s0 + $0x78] sm:$0xff]
  %v24 = vld [vmem:[%s0 + $0x80] sm:$0xff]
  %v25 = vld [vmem:[%s0 + $0x88] sm:$0xff]
  %v26 = vld [vmem:[%s0 + $0x90] sm:$0xff]
  %v27 = vld [vmem:[%s0 + $0x98] sm:$0xff]
  %v28 = vld [vmem:[%s0 + $0xa0] sm:$0xff]
  %v29 = vld [vmem:[%s0 + $0xa8] sm:$0xff]
  %v30 = vld [vmem:[%s0 + $0xb0] sm:$0xff]
  %v31 = vld [vmem:[%s0 + $0xb8] sm:$0xff]
  %v32 = vld [vmem:[%s0 + $0xc0] sm:$0xff]
  %v33 = vld [vmem:[%s0 + $0xc8] sm:$0xff]
  %v34 = vld [vmem:[%s0 + $0xd0] sm:$0xff]
  %v35 = vld [vmem:[%s0 + $0xd8] sm:$0xff]
  %v36 = vld [vmem:[%s0 + $0xe0] sm:$0xff]
  %v37 = vld [vmem:[%s0 + $0xe8] sm:$0xff]
  %v38 = vld [vmem:[%s0 + $0xf0] sm:$0xff]
  %v39 = vld [vmem:[%s0 + $0xf8] sm:$0xff]
  %v40 = vld [vmem:[%s0 + $0x100] sm:$0xff]
  %v41 = vld [vmem:[%s0 + $0x108] sm:$0xff]
  %v42 = vld [vmem:[%s0 + $0x110] sm:$0xff]
  %v43 = vld [vmem:[%s0 + $0x118] sm:$0xff]
  %v44 = vmax.bf16 %v8, %v12
  %v45 = vmax.bf16 %v44, %v16
  %v46 = vmax.bf16 %v45, %v20
  %v47 = vmax.bf16 %v46, %v24
  %v48 = vmax.bf16 %v47, %v28
  %v49 = vmax.bf16 %v48, %v32
  %v50 = vmax.bf16 %v49, %v36
  %v51 = vmax.bf16 %v50, %v40
  %v52 = vmax.bf16 %v9, %v13
  %v53 = vmax.bf16 %v52, %v17
  %v54 = vmax.bf16 %v53, %v21
  %v55 = vmax.bf16 %v54, %v25
  %v56 = vmax.bf16 %v55, %v29
  %v57 = vmax.bf16 %v56, %v33
  %v58 = vmax.bf16 %v57, %v37
  %v59 = vmax.bf16 %v58, %v41
  %v60 = vmax.bf16 %v10, %v14
  %v61 = vmax.bf16 %v60, %v18
  %v62 = vmax.bf16 %v61, %v22
  %v63 = vmax.bf16 %v62, %v26
  %v64 = vmax.bf16 %v63, %v30
  %v65 = vmax.bf16 %v64, %v34
  %v66 = vmax.bf16 %v65, %v38
  %v67 = vmax.bf16 %v66, %v42
  %v68 = vmax.bf16 %v11, %v15
  %v69 = vmax.bf16 %v68, %v19
  %v70 = vmax.bf16 %v69, %v23
  %v71 = vmax.bf16 %v70, %v27
  %v72 = vmax.bf16 %v71, %v31
  %v73 = vmax.bf16 %v72, %v35
  %v74 = vmax.bf16 %v73, %v39
  %v75 = vmax.bf16 %v74, %v43
  %76 = vst [vmem:[%s1] sm:$0xff] %v51
  %77 = vst [vmem:[%s1 + $0x8] sm:$0xff] %v59
  %78 = vst [vmem:[%s1 + $0x10] sm:$0xff] %v67
  %79 = vst [vmem:[%s1 + $0x18] sm:$0xff] %v75
  // Predicated region
  $region6: #{alexnet_forward.16} parent=0 // pred_check
    _
  $region7: #{alexnet_forward.16} parent=0 // pred_check_branch
    %81 = sbr.rel (0) target = $region9
  $region8: #{alexnet_forward.16} parent=0 // pred_region
    _
  $region9: #{alexnet_forward.16} parent=0 // pred_fallthru
    _
  // Predicated region
  $region10: #{alexnet_forward.16} parent=0 // pred_check
    _
  $region11: #{alexnet_forward.16} parent=0 // pred_check_branch
    %83 = sbr.rel (0) target = $region13
  $region12: #{alexnet_forward.16} parent=0 // pred_region
    _
  $region13: #{alexnet_forward.16} parent=0 // pred_fallthru
    _

// kernel: alexnet_forward.17
$region0: #{alexnet_forward.17}
  #allocation0 [shape = 'u32[]', space=smem, size = 0x4, offset = 0x4, fixed_abs, tag = 'smem constant byte address 0x4 - core index']
  #allocation1 [shape = 'u32[144,128]{1,0:T(1,128)}', space=vmem, size = 0x12000, scoped, tag = 'internal scratch']
  #allocation2 [shape = 'f32[32,128]{1,0:T(8,128)}', space=vmem, size = 0x4000, scoped, tag = 'scratch operand']
  %s0 = inlined_call_operand.vmem [shape: bf16[32,2304], index: 0, kind: input, shape index: {}]
  %s1 = inlined_call_operand.vmem [shape: bf16[2304,384], index: 1, kind: input, shape index: {}]
  %s2 = inlined_call_operand.vmem [shape: f32[1,384], index: 2, kind: input, shape index: {}]
  %s3 = inlined_call_operand.vmem [shape: bf16[32,384], index: 3, kind: output, shape index: {}]
  %s4 = sld [smem:[#allocation0]]
  $region169: #{alexnet_forward.17} parent=0
    _
  %s6 = ssub.s32 1, %s4
  %s7 = scalar_select 0, %s6, %s4
  $region1: #{alexnet_forward.17} parent=0
    #allocation3 [shape = 'u8[32768]{0}', space=vmem, size = 0x8000, scoped, tag = 'input window, operand 0']
    #allocation4 [shape = 'u8[131072]{0}', space=vmem, size = 0x20000, scoped, tag = 'input window, operand 1']
    #allocation5 [shape = 'u8[16384]{0}', space=vmem, size = 0x4000, scoped, tag = 'output window, operand 0']
    loop: start=0, step=1, limit=29
    $region2: #{alexnet_forward.17} parent=1 // loop_pre_header
      _
    $region3: #{alexnet_forward.17} parent=1 // loop_header
      %s9 = sphi 0, %s13
      %p10 = scmp.ge.s32.totalorder %s9, 29
      %s16 = sphi 0, %s35
      %s17 = sphi 0, %s31
      %s18 = sphi 0, %s27
      %s19 = sphi 0, %s16
      %s20 = sphi 0, %s17
      %s21 = sphi 0, %s18
      %s22 = sphi 0, %s19
      %s23 = sphi 0, %s20
      %s24 = sphi 0, %s21
      %s40 = sphi 0, %s42
      %s43 = sphi 0, %s40
      %s44 = sphi 0, %s43
      %s60 = sphi 0, %s44
      %s68 = sphi 0, %s70
      %s71 = sphi 0, %s68
      %s72 = sphi 0, %s71
      %s88 = sphi 0, %s72
      %s94 = sphi 0, %s96
      %s97 = sphi 0, %s94
      %s98 = sphi 0, %s97
      %s114 = sphi 0, %s98
      %s122 = sphi 0, %s124
      %s125 = sphi 0, %s122
      %s126 = sphi 0, %s125
      %s142 = sphi 0, %s126
    $region4: #{alexnet_forward.17} parent=1 // loop_header_branch
      %12 = sbr.rel (%p10) target = $region8
    $region5: #{alexnet_forward.17} parent=1 // loop_body
      %s14 = ssub.s32 %s9, 1
      %s15 = ssub.s32 %s9, 2
      %s25 = sadd.s32 1, %s18
      %p26 = scmp.ge.s32.totalorder %s25, 9
      %s27 = scalar_select %p26, 0, %s25
      %s28 = sadd.s32 1, %s17
      %s29 = scalar_select %p26, %s28, %s17
      %p30 = scmp.ge.s32.totalorder %s29, 3
      %s31 = scalar_select %p30, 0, %s29
      %s32 = sadd.s32 1, %s16
      %s33 = scalar_select %p30, %s32, %s16
      %p34 = scmp.ge.s32.totalorder %s33, 1
      %s35 = scalar_select %p34, 0, %s33
      %s36 = ssub.s32 %s16, %s35
      %s37 = ssub.s32 %s18, %s27
      %s38 = sor.u32 %s36, %s37
      %p39 = scmp.eq.s32.totalorder %s38, 0
      %s41 = sadd.s32 %s40, 1
      %s42 = scalar_select %p39, %s40, %s41
      %p45 = pneg %p39
      %p46 = scmp.eq.s32.totalorder %s9, 26
      %p47 = por %p45, %p46
      %p48 = scmp.ne.s32.totalorder %s40, %s43
      %p49 = scmp.eq.s32.totalorder %s9, 0
      %p50 = por %p48, %p49
      %p51 = scmp.ne.s32.totalorder %s40, %s43
      %p52 = scmp.eq.s32.totalorder %s14, 26
      %p53 = por %p51, %p52
      %p54 = scmp.ne.s32.totalorder %s43, %s44
      %p55 = scmp.eq.s32.totalorder %s14, 0
      %p56 = por %p54, %p55
      %p57 = scmp.ne.s32.totalorder %s43, %s44
      %p58 = scmp.eq.s32.totalorder %s15, 26
      %p59 = por %p57, %p58
      %p61 = scmp.ne.s32.totalorder %s44, %s60
      %p62 = scmp.eq.s32.totalorder %s15, 0
      %p63 = por %p61, %p62
      %s64 = ssub.s32 %s18, %s27
      %s65 = ssub.s32 %s17, %s31
      %s66 = sor.u32 %s64, %s65
      %p67 = scmp.eq.s32.totalorder %s66, 0
      %s69 = sadd.s32 %s68, 1
      %s70 = scalar_select %p67, %s68, %s69
      %p73 = pneg %p67
      %p74 = scmp.eq.s32.totalorder %s9, 26
      %p75 = por %p73, %p74
      %p76 = scmp.ne.s32.totalorder %s68, %s71
      %p77 = scmp.eq.s32.totalorder %s9, 0
      %p78 = por %p76, %p77
      %p79 = scmp.ne.s32.totalorder %s68, %s71
      %p80 = scmp.eq.s32.totalorder %s14, 26
      %p81 = por %p79, %p80
      %p82 = scmp.ne.s32.totalorder %s71, %s72
      %p83 = scmp.eq.s32.totalorder %s14, 0
      %p84 = por %p82, %p83
      %p85 = scmp.ne.s32.totalorder %s71, %s72
      %p86 = scmp.eq.s32.totalorder %s15, 26
      %p87 = por %p85, %p86
      %p89 = scmp.ne.s32.totalorder %s72, %s88
      %p90 = scmp.eq.s32.totalorder %s15, 0
      %p91 = por %p89, %p90
      %s92 = ssub.s32 %s17, %s31
      %p93 = scmp.eq.s32.totalorder %s92, 0
      %s95 = sadd.s32 %s94, 1
      %s96 = scalar_select %p93, %s94, %s95
      %p99 = pneg %p93
      %p100 = scmp.eq.s32.totalorder %s9, 26
      %p101 = por %p99, %p100
      %p102 = scmp.ne.s32.totalorder %s94, %s97
      %p103 = scmp.eq.s32.totalorder %s9, 0
      %p104 = por %p102, %p103
      %p105 = scmp.ne.s32.totalorder %s94, %s97
      %p106 = scmp.eq.s32.totalorder %s14, 26
      %p107 = por %p105, %p106
      %p108 = scmp.ne.s32.totalorder %s97, %s98
      %p109 = scmp.eq.s32.totalorder %s14, 0
      %p110 = por %p108, %p109
      %p111 = scmp.ne.s32.totalorder %s97, %s98
      %p112 = scmp.eq.s32.totalorder %s15, 26
      %p113 = por %p111, %p112
      %p115 = scmp.ne.s32.totalorder %s98, %s114
      %p116 = scmp.eq.s32.totalorder %s15, 0
      %p117 = por %p115, %p116
      %s118 = ssub.s32 %s16, %s35
      %s119 = ssub.s32 %s17, %s31
      %s120 = sor.u32 %s118, %s119
      %p121 = scmp.eq.s32.totalorder %s120, 0
      %s123 = sadd.s32 %s122, 1
      %s124 = scalar_select %p121, %s122, %s123
      %p127 = pneg %p121
      %p128 = scmp.eq.s32.totalorder %s9, 26
      %p129 = por %p127, %p128
      %p130 = scmp.ne.s32.totalorder %s122, %s125
      %p131 = scmp.eq.s32.totalorder %s9, 0
      %p132 = por %p130, %p131
      %p133 = scmp.ne.s32.totalorder %s122, %s125
      %p134 = scmp.eq.s32.totalorder %s14, 26
      %p135 = por %p133, %p134
      %p136 = scmp.ne.s32.totalorder %s125, %s126
      %p137 = scmp.eq.s32.totalorder %s14, 0
      %p138 = por %p136, %p137
      %p139 = scmp.ne.s32.totalorder %s125, %s126
      %p140 = scmp.eq.s32.totalorder %s15, 26
      %p141 = por %p139, %p140
      %p143 = scmp.ne.s32.totalorder %s126, %s142
      %p144 = scmp.eq.s32.totalorder %s15, 0
      %p145 = por %p143, %p144
      %p146 = scmp.le.s32.totalorder 1, %s9
      %p147 = scmp.lt.s32.totalorder %s9, 28
      %p148 = pnand %p146, %p147
      %p149 = pneg %p148
      // Predicated region
      $region9: #{alexnet_forward.17} parent=5 // pred_check
        _
      $region10: #{alexnet_forward.17} parent=5 // pred_check_branch
        %151 = sbr.rel (%p148) target = $region12
      $region11: #{alexnet_forward.17} parent=5 // pred_region
        %s152 = ssub.s32 %s9, 1
      $region12: #{alexnet_forward.17} parent=5 // pred_fallthru
        _
      %p153 = scmp.lt.s32.totalorder %s9, 27
      // Predicated region
      $region13: #{alexnet_forward.17} parent=5 // pred_check
        %p154 = pneg %p153
      $region14: #{alexnet_forward.17} parent=5 // pred_check_branch
        %156 = sbr.rel (%p154) target = $region16
      $region15: #{alexnet_forward.17} parent=5 // pred_region
        // Predicated region
        $region17: #{alexnet_forward.17} parent=15 // pred_check
          %p157 = pneg %p50
        $region18: #{alexnet_forward.17} parent=15 // pred_check_branch
          %159 = sbr.rel (%p157) target = $region20
        $region19: #{alexnet_forward.17} parent=15 // pred_region
          %s160 = sand.u32 %s40, 1
          %s161 = sand.u32 %s40, 1
          %s162 = smul.addr %s161, 32
          %s163 = scalar_lea.vmem [#allocation3], %s162
          %s164 = smul.u32 4, %s16
          %s165 = smul.u32 2, %s18
          %s166 = smul.addr %s164, 18
          %s167 = sadd.s32 %s165, %s166
          %s168 = smul.addr %s167, 4
          %s169 = scalar_lea.vmem %s0, %s168
          // Predicated region
          $region21: #{alexnet_forward.17} parent=19 // pred_check
            _
          $region22: #{alexnet_forward.17} parent=19 // pred_check_branch
            %171 = sbr.rel (0) target = $region24
          $region23: #{alexnet_forward.17} parent=19 // pred_region
            // Predicated region
            $region25: #{alexnet_forward.17} parent=23 // pred_check
              _
            $region26: #{alexnet_forward.17} parent=23 // pred_check_branch
              %173 = sbr.rel (0) target = $region28
            $region27: #{alexnet_forward.17} parent=23 // pred_region
              // Predicated region
              $region40: #{alexnet_forward.17} parent=27 // pred_check
                _
              $region41: #{alexnet_forward.17} parent=27 // pred_check_branch
                %194 = sbr.rel (0) target = $region43
              $region42: #{alexnet_forward.17} parent=27 // pred_region
                loop: start=0, step=1, limit=1
                $region44: #{alexnet_forward.17} parent=42 // loop_pre_header
                  _
                $region45: #{alexnet_forward.17} parent=42 // loop_header
                  %s196 = sphi 0, %s200
                  %p197 = scmp.ge.s32.totalorder %s196, 1
                  %s201 = sphi %s169, %s169
                  %s202 = sphi %s163, %s163
                $region46: #{alexnet_forward.17} parent=42 // loop_header_branch
                  %199 = sbr.rel (%p197) target = $region50
                $region47: #{alexnet_forward.17} parent=42 // loop_body
                  %v203 = vld [vmem:[%s201] sm:$0xff]
                  %204 = vst [vmem:[%s202] sm:$0xff] %v203
                  %v205 = vld [vmem:[%s201 + $0x48] sm:$0xff]
                  %206 = vst [vmem:[%s202 + $0x8] sm:$0xff] %v205
                  %v207 = vld [vmem:[%s201 + $0x90] sm:$0xff]
                  %208 = vst [vmem:[%s202 + $0x10] sm:$0xff] %v207
                  %v209 = vld [vmem:[%s201 + $0xd8] sm:$0xff]
                  %210 = vst [vmem:[%s202 + $0x18] sm:$0xff] %v209
                $region48: #{alexnet_forward.17} parent=42 // loop_footer
                  %s200 = sadd.s32 1, %s196
                $region49: #{alexnet_forward.17} parent=42 // loop_footer_branch
                  %195 = sbr.rel target = $region45
                $region50: #{alexnet_forward.17} parent=42 // loop_exit
                  _
              $region43: #{alexnet_forward.17} parent=27 // pred_fallthru
                _
              // Predicated region
              $region51: #{alexnet_forward.17} parent=27 // pred_check
                _
              $region52: #{alexnet_forward.17} parent=27 // pred_check_branch
                %212 = sbr.rel target = $region54
              $region53: #{alexnet_forward.17} parent=27 // pred_region
                _
              $region54: #{alexnet_forward.17} parent=27 // pred_fallthru
                _
            $region28: #{alexnet_forward.17} parent=23 // pred_fallthru
              _
            // Predicated region
            $region29: #{alexnet_forward.17} parent=23 // pred_check
              _
            $region30: #{alexnet_forward.17} parent=23 // pred_check_branch
              %175 = sbr.rel target = $region32
            $region31: #{alexnet_forward.17} parent=23 // pred_region
              loop: start=0, step=1, limit=1
              $region33: #{alexnet_forward.17} parent=31 // loop_pre_header
                _
              $region34: #{alexnet_forward.17} parent=31 // loop_header
                %s178 = sphi 0, %s182
                %p179 = scmp.ge.s32.totalorder %s178, 1
                %s183 = sphi %s169, %s169
                %s184 = sphi %s163, %s163
              $region35: #{alexnet_forward.17} parent=31 // loop_header_branch
                %181 = sbr.rel (%p179) target = $region39
              $region36: #{alexnet_forward.17} parent=31 // loop_body
                %v185 = vld [vmem:[%s183] sm:$0xff]
                %186 = vst [vmem:[%s184] sm:$0xff] %v185
                %v187 = vld [vmem:[%s183 + $0x48] sm:$0xff]
                %188 = vst [vmem:[%s184 + $0x8] sm:$0xff] %v187
                %v189 = vld [vmem:[%s183 + $0x90] sm:$0xff]
                %190 = vst [vmem:[%s184 + $0x10] sm:$0xff] %v189
                %v191 = vld [vmem:[%s183 + $0xd8] sm:$0xff]
                %192 = vst [vmem:[%s184 + $0x18] sm:$0xff] %v191
              $region37: #{alexnet_forward.17} parent=31 // loop_footer
                %s182 = sadd.s32 1, %s178
              $region38: #{alexnet_forward.17} parent=31 // loop_footer_branch
                %177 = sbr.rel target = $region34
              $region39: #{alexnet_forward.17} parent=31 // loop_exit
                _
            $region32: #{alexnet_forward.17} parent=23 // pred_fallthru
              _
          $region24: #{alexnet_forward.17} parent=19 // pred_fallthru
            _
          %213 = vnop
        $region20: #{alexnet_forward.17} parent=15 // pred_fallthru
          _
        // Predicated region
        $region55: #{alexnet_forward.17} parent=15 // pred_check
          %p214 = pneg %p78
        $region56: #{alexnet_forward.17} parent=15 // pred_check_branch
          %216 = sbr.rel (%p214) target = $region58
        $region57: #{alexnet_forward.17} parent=15 // pred_region
          %s217 = sand.u32 %s68, 1
          %s218 = sand.u32 %s68, 1
          %s219 = smul.addr %s218, 128
          %s220 = scalar_lea.vmem [#allocation4], %s219
          %s221 = smul.u32 32, %s18
          %s222 = smul.addr %s221, 3
          %s223 = sadd.s32 %s17, %s222
          %s224 = smul.addr %s223, 4
          %s225 = scalar_lea.vmem %s1, %s224
          // Predicated region
          $region59: #{alexnet_forward.17} parent=57 // pred_check
            _
          $region60: #{alexnet_forward.17} parent=57 // pred_check_branch
            %227 = sbr.rel (0) target = $region62
          $region61: #{alexnet_forward.17} parent=57 // pred_region
            // Predicated region
            $region63: #{alexnet_forward.17} parent=61 // pred_check
              _
            $region64: #{alexnet_forward.17} parent=61 // pred_check_branch
              %229 = sbr.rel target = $region66
            $region65: #{alexnet_forward.17} parent=61 // pred_region
              // Predicated region
              $region78: #{alexnet_forward.17} parent=65 // pred_check
                _
              $region79: #{alexnet_forward.17} parent=65 // pred_check_branch
                %306 = sbr.rel (0) target = $region81
              $region80: #{alexnet_forward.17} parent=65 // pred_region
                loop: start=0, step=1, limit=1
                $region82: #{alexnet_forward.17} parent=80 // loop_pre_header
                  _
                $region83: #{alexnet_forward.17} parent=80 // loop_header
                  %s308 = sphi 0, %s312
                  %p309 = scmp.ge.s32.totalorder %s308, 1
                  %s313 = sphi %s225, %s225
                  %s314 = sphi %s220, %s220
                $region84: #{alexnet_forward.17} parent=80 // loop_header_branch
                  %311 = sbr.rel (%p309) target = $region88
                $region85: #{alexnet_forward.17} parent=80 // loop_body
                  _
                $region86: #{alexnet_forward.17} parent=80 // loop_footer
                  %s312 = sadd.s32 1, %s308
                $region87: #{alexnet_forward.17} parent=80 // loop_footer_branch
                  %307 = sbr.rel target = $region83
                $region88: #{alexnet_forward.17} parent=80 // loop_exit
                  _
                loop: start=0, step=1, limit=1
                $region89: #{alexnet_forward.17} parent=80 // loop_pre_header
                  _
                $region90: #{alexnet_forward.17} parent=80 // loop_header
                  %s317 = sphi 0, %s321
                  %p318 = scmp.ge.s32.totalorder %s317, 1
                  %s322 = sphi %s225, %s225
                  %s323 = sphi %s220, %s220
                $region91: #{alexnet_forward.17} parent=80 // loop_header_branch
                  %320 = sbr.rel (%p318) target = $region95
                $region92: #{alexnet_forward.17} parent=80 // loop_body
                  %v324 = vld [vmem:[%s322] sm:$0xf]
                  %325 = vst [vmem:[%s323] sm:$0xf] %v324
                  %v326 = vld [vmem:[%s322 + $0xc] sm:$0xf]
                  %327 = vst [vmem:[%s323 + $0x4] sm:$0xf] %v326
                  %v328 = vld [vmem:[%s322 + $0x18] sm:$0xf]
                  %329 = vst [vmem:[%s323 + $0x8] sm:$0xf] %v328
                  %v330 = vld [vmem:[%s322 + $0x24] sm:$0xf]
                  %331 = vst [vmem:[%s323 + $0xc] sm:$0xf] %v330
                  %v332 = vld [vmem:[%s322 + $0x30] sm:$0xf]
                  %333 = vst [vmem:[%s323 + $0x10] sm:$0xf] %v332
                  %v334 = vld [vmem:[%s322 + $0x3c] sm:$0xf]
                  %335 = vst [vmem:[%s323 + $0x14] sm:$0xf] %v334
                  %v336 = vld [vmem:[%s322 + $0x48] sm:$0xf]
                  %337 = vst [vmem:[%s323 + $0x18] sm:$0xf] %v336
                  %v338 = vld [vmem:[%s322 + $0x54] sm:$0xf]
                  %339 = vst [vmem:[%s323 + $0x1c] sm:$0xf] %v338
                  %v340 = vld [vmem:[%s322 + $0x60] sm:$0xf]
                  %341 = vst [vmem:[%s323 + $0x20] sm:$0xf] %v340
                  %v342 = vld [vmem:[%s322 + $0x6c] sm:$0xf]
                  %343 = vst [vmem:[%s323 + $0x24] sm:$0xf] %v342
                  %v344 = vld [vmem:[%s322 + $0x78] sm:$0xf]
                  %345 = vst [vmem:[%s323 + $0x28] sm:$0xf] %v344
                  %v346 = vld [vmem:[%s322 + $0x84] sm:$0xf]
                  %347 = vst [vmem:[%s323 + $0x2c] sm:$0xf] %v346
                  %v348 = vld [vmem:[%s322 + $0x90] sm:$0xf]
                  %349 = vst [vmem:[%s323 + $0x30] sm:$0xf] %v348
                  %v350 = vld [vmem:[%s322 + $0x9c] sm:$0xf]
                  %351 = vst [vmem:[%s323 + $0x34] sm:$0xf] %v350
                  %v352 = vld [vmem:[%s322 + $0xa8] sm:$0xf]
                  %353 = vst [vmem:[%s323 + $0x38] sm:$0xf] %v352
                  %v354 = vld [vmem:[%s322 + $0xb4] sm:$0xf]
                  %355 = vst [vmem:[%s323 + $0x3c] sm:$0xf] %v354
                  %v356 = vld [vmem:[%s322 + $0xc0] sm:$0xf]
                  %357 = vst [vmem:[%s323 + $0x40] sm:$0xf] %v356
                  %v358 = vld [vmem:[%s322 + $0xcc] sm:$0xf]
                  %359 = vst [vmem:[%s323 + $0x44] sm:$0xf] %v358
                  %v360 = vld [vmem:[%s322 + $0xd8] sm:$0xf]
                  %361 = vst [vmem:[%s323 + $0x48] sm:$0xf] %v360
                  %v362 = vld [vmem:[%s322 + $0xe4] sm:$0xf]
                  %363 = vst [vmem:[%s323 + $0x4c] sm:$0xf] %v362
                  %v364 = vld [vmem:[%s322 + $0xf0] sm:$0xf]
                  %365 = vst [vmem:[%s323 + $0x50] sm:$0xf] %v364
                  %v366 = vld [vmem:[%s322 + $0xfc] sm:$0xf]
                  %367 = vst [vmem:[%s323 + $0x54] sm:$0xf] %v366
                  %v368 = vld [vmem:[%s322 + $0x108] sm:$0xf]
                  %369 = vst [vmem:[%s323 + $0x58] sm:$0xf] %v368
                  %v370 = vld [vmem:[%s322 + $0x114] sm:$0xf]
                  %371 = vst [vmem:[%s323 + $0x5c] sm:$0xf] %v370
                  %v372 = vld [vmem:[%s322 + $0x120] sm:$0xf]
                  %373 = vst [vmem:[%s323 + $0x60] sm:$0xf] %v372
                  %v374 = vld [vmem:[%s322 + $0x12c] sm:$0xf]
                  %375 = vst [vmem:[%s323 + $0x64] sm:$0xf] %v374
                  %v376 = vld [vmem:[%s322 + $0x138] sm:$0xf]
                  %377 = vst [vmem:[%s323 + $0x68] sm:$0xf] %v376
                  %v378 = vld [vmem:[%s322 + $0x144] sm:$0xf]
                  %379 = vst [vmem:[%s323 + $0x6c] sm:$0xf] %v378
                  %v380 = vld [vmem:[%s322 + $0x150] sm:$0xf]
                  %381 = vst [vmem:[%s323 + $0x70] sm:$0xf] %v380
                  %v382 = vld [vmem:[%s322 + $0x15c] sm:$0xf]
                  %383 = vst [vmem:[%s323 + $0x74] sm:$0xf] %v382
                  %v384 = vld [vmem:[%s322 + $0x168] sm:$0xf]
                  %385 = vst [vmem:[%s323 + $0x78] sm:$0xf] %v384
                  %v386 = vld [vmem:[%s322 + $0x174] sm:$0xf]
                  %387 = vst [vmem:[%s323 + $0x7c] sm:$0xf] %v386
                $region93: #{alexnet_forward.17} parent=80 // loop_footer
                  %s321 = sadd.s32 1, %s317
                $region94: #{alexnet_forward.17} parent=80 // loop_footer_branch
                  %316 = sbr.rel target = $region90
                $region95: #{alexnet_forward.17} parent=80 // loop_exit
                  _
              $region81: #{alexnet_forward.17} parent=65 // pred_fallthru
                _
            $region66: #{alexnet_forward.17} parent=61 // pred_fallthru
              _
            // Predicated region
            $region67: #{alexnet_forward.17} parent=61 // pred_check
              _
            $region68: #{alexnet_forward.17} parent=61 // pred_check_branch
              %231 = sbr.rel (0) target = $region70
            $region69: #{alexnet_forward.17} parent=61 // pred_region
              loop: start=0, step=1, limit=1
              $region71: #{alexnet_forward.17} parent=69 // loop_pre_header
                _
              $region72: #{alexnet_forward.17} parent=69 // loop_header
                %s234 = sphi 0, %s238
                %p235 = scmp.ge.s32.totalorder %s234, 1
                %s239 = sphi %s225, %s225
                %s240 = sphi %s220, %s220
              $region73: #{alexnet_forward.17} parent=69 // loop_header_branch
                %237 = sbr.rel (%p235) target = $region77
              $region74: #{alexnet_forward.17} parent=69 // loop_body
                %v241 = vld [vmem:[%s239] sm:$0xf]
                %242 = vst [vmem:[%s240] sm:$0xf] %v241
                %v243 = vld [vmem:[%s239 + $0xc] sm:$0xf]
                %244 = vst [vmem:[%s240 + $0x4] sm:$0xf] %v243
                %v245 = vld [vmem:[%s239 + $0x18] sm:$0xf]
                %246 = vst [vmem:[%s240 + $0x8] sm:$0xf] %v245
                %v247 = vld [vmem:[%s239 + $0x24] sm:$0xf]
                %248 = vst [vmem:[%s240 + $0xc] sm:$0xf] %v247
                %v249 = vld [vmem:[%s239 + $0x30] sm:$0xf]
                %250 = vst [vmem:[%s240 + $0x10] sm:$0xf] %v249
                %v251 = vld [vmem:[%s239 + $0x3c] sm:$0xf]
                %252 = vst [vmem:[%s240 + $0x14] sm:$0xf] %v251
                %v253 = vld [vmem:[%s239 + $0x48] sm:$0xf]
                %254 = vst [vmem:[%s240 + $0x18] sm:$0xf] %v253
                %v255 = vld [vmem:[%s239 + $0x54] sm:$0xf]
                %256 = vst [vmem:[%s240 + $0x1c] sm:$0xf] %v255
                %v257 = vld [vmem:[%s239 + $0x60] sm:$0xf]
                %258 = vst [vmem:[%s240 + $0x20] sm:$0xf] %v257
                %v259 = vld [vmem:[%s239 + $0x6c] sm:$0xf]
                %260 = vst [vmem:[%s240 + $0x24] sm:$0xf] %v259
                %v261 = vld [vmem:[%s239 + $0x78] sm:$0xf]
                %262 = vst [vmem:[%s240 + $0x28] sm:$0xf] %v261
                %v263 = vld [vmem:[%s239 + $0x84] sm:$0xf]
                %264 = vst [vmem:[%s240 + $0x2c] sm:$0xf] %v263
                %v265 = vld [vmem:[%s239 + $0x90] sm:$0xf]
                %266 = vst [vmem:[%s240 + $0x30] sm:$0xf] %v265
                %v267 = vld [vmem:[%s239 + $0x9c] sm:$0xf]
                %268 = vst [vmem:[%s240 + $0x34] sm:$0xf] %v267
                %v269 = vld [vmem:[%s239 + $0xa8] sm:$0xf]
                %270 = vst [vmem:[%s240 + $0x38] sm:$0xf] %v269
                %v271 = vld [vmem:[%s239 + $0xb4] sm:$0xf]
                %272 = vst [vmem:[%s240 + $0x3c] sm:$0xf] %v271
                %v273 = vld [vmem:[%s239 + $0xc0] sm:$0xf]
                %274 = vst [vmem:[%s240 + $0x40] sm:$0xf] %v273
                %v275 = vld [vmem:[%s239 + $0xcc] sm:$0xf]
                %276 = vst [vmem:[%s240 + $0x44] sm:$0xf] %v275
                %v277 = vld [vmem:[%s239 + $0xd8] sm:$0xf]
                %278 = vst [vmem:[%s240 + $0x48] sm:$0xf] %v277
                %v279 = vld [vmem:[%s239 + $0xe4] sm:$0xf]
                %280 = vst [vmem:[%s240 + $0x4c] sm:$0xf] %v279
                %v281 = vld [vmem:[%s239 + $0xf0] sm:$0xf]
                %282 = vst [vmem:[%s240 + $0x50] sm:$0xf] %v281
                %v283 = vld [vmem:[%s239 + $0xfc] sm:$0xf]
                %284 = vst [vmem:[%s240 + $0x54] sm:$0xf] %v283
                %v285 = vld [vmem:[%s239 + $0x108] sm:$0xf]
                %286 = vst [vmem:[%s240 + $0x58] sm:$0xf] %v285
                %v287 = vld [vmem:[%s239 + $0x114] sm:$0xf]
                %288 = vst [vmem:[%s240 + $0x5c] sm:$0xf] %v287
                %v289 = vld [vmem:[%s239 + $0x120] sm:$0xf]
                %290 = vst [vmem:[%s240 + $0x60] sm:$0xf] %v289
                %v291 = vld [vmem:[%s239 + $0x12c] sm:$0xf]
                %292 = vst [vmem:[%s240 + $0x64] sm:$0xf] %v291
                %v293 = vld [vmem:[%s239 + $0x138] sm:$0xf]
                %294 = vst [vmem:[%s240 + $0x68] sm:$0xf] %v293
                %v295 = vld [vmem:[%s239 + $0x144] sm:$0xf]
                %296 = vst [vmem:[%s240 + $0x6c] sm:$0xf] %v295
                %v297 = vld [vmem:[%s239 + $0x150] sm:$0xf]
                %298 = vst [vmem:[%s240 + $0x70] sm:$0xf] %v297
                %v299 = vld [vmem:[%s239 + $0x15c] sm:$0xf]
                %300 = vst [vmem:[%s240 + $0x74] sm:$0xf] %v299
                %v301 = vld [vmem:[%s239 + $0x168] sm:$0xf]
                %302 = vst [vmem:[%s240 + $0x78] sm:$0xf] %v301
                %v303 = vld [vmem:[%s239 + $0x174] sm:$0xf]
                %304 = vst [vmem:[%s240 + $0x7c] sm:$0xf] %v303
              $region75: #{alexnet_forward.17} parent=69 // loop_footer
                %s238 = sadd.s32 1, %s234
              $region76: #{alexnet_forward.17} parent=69 // loop_footer_branch
                %233 = sbr.rel target = $region72
              $region77: #{alexnet_forward.17} parent=69 // loop_exit
                _
            $region70: #{alexnet_forward.17} parent=61 // pred_fallthru
              _
          $region62: #{alexnet_forward.17} parent=57 // pred_fallthru
            _
          %388 = vnop
        $region58: #{alexnet_forward.17} parent=15 // pred_fallthru
          _
        // Predicated region
        $region96: #{alexnet_forward.17} parent=15 // pred_check
          %p389 = pneg %p104
        $region97: #{alexnet_forward.17} parent=15 // pred_check_branch
          %391 = sbr.rel (%p389) target = $region99
        $region98: #{alexnet_forward.17} parent=15 // pred_region
          %p392 = scmp.lt.s32.totalorder %s17, 2
          %s393 = scalar_select %p392, %s17, 2
          %s394 = scalar_lea.vmem %s2, %s393
        $region99: #{alexnet_forward.17} parent=15 // pred_fallthru
          _
      $region16: #{alexnet_forward.17} parent=5 // pred_fallthru
        _
      %p395 = scmp.le.s32.totalorder 1, %s9
      %p396 = scmp.lt.s32.totalorder %s9, 28
      %p397 = pnand %p395, %p396
      %p398 = pneg %p397
      // Predicated region
      $region100: #{alexnet_forward.17} parent=5 // pred_check
        _
      $region101: #{alexnet_forward.17} parent=5 // pred_check_branch
        %400 = sbr.rel (%p397) target = $region103
      $region102: #{alexnet_forward.17} parent=5 // pred_region
        %s401 = ssub.s32 %s9, 1
        %s402 = sand.u32 %s43, 1
        %s403 = sand.u32 %s43, 1
        %s404 = smul.addr %s403, 32
        %s405 = scalar_lea.vmem [#allocation3], %s404
        // Predicated region
        $region104: #{alexnet_forward.17} parent=102 // pred_check
          %p406 = pneg %p56
        $region105: #{alexnet_forward.17} parent=102 // pred_check_branch
          %408 = sbr.rel (%p406) target = $region107
        $region106: #{alexnet_forward.17} parent=102 // pred_region
          _
        $region107: #{alexnet_forward.17} parent=102 // pred_fallthru
          _
        %s409 = sand.u32 %s71, 1
        %s410 = sand.u32 %s71, 1
        %s411 = smul.addr %s410, 128
        %s412 = scalar_lea.vmem [#allocation4], %s411
        // Predicated region
        $region108: #{alexnet_forward.17} parent=102 // pred_check
          %p413 = pneg %p84
        $region109: #{alexnet_forward.17} parent=102 // pred_check_branch
          %415 = sbr.rel (%p413) target = $region111
        $region110: #{alexnet_forward.17} parent=102 // pred_region
          _
        $region111: #{alexnet_forward.17} parent=102 // pred_fallthru
          _
        %s416 = sand.u32 %s43, 1
        %s417 = sand.u32 %s43, 1
        %s418 = smul.addr %s417, 32
        %s419 = scalar_lea.vmem [#allocation3], %s418
        %p420 = pneg %p56
        %p421 = pneg %p53
        %s422 = sand.u32 %s71, 1
        %s423 = sand.u32 %s71, 1
        %s424 = smul.addr %s423, 128
        %s425 = scalar_lea.vmem [#allocation4], %s424
        %p426 = pneg %p84
        %p427 = pneg %p81
        %p428 = scmp.lt.s32.totalorder %s20, 2
        %s429 = scalar_select %p428, %s20, 2
        %s430 = scalar_lea.vmem %s2, %s429
        %p431 = pneg %p110
        %p432 = pneg %p107
        %p433 = pneg %p138
        %p434 = pneg %p135
        %s435 = sand.u32 %s125, 1
        %s436 = sand.u32 %s125, 1
        %s437 = smul.addr %s436, 16
        %s438 = scalar_lea.vmem [#allocation5], %s437
        %s439 = smul.u32 4, %s19
        %s440 = smul.u32 2, %s21
        %s441 = smul.u32 32, %s21
        %p442 = scmp.lt.s32.totalorder %s20, 2
        %s443 = scalar_select %p442, %s20, 2
        %s444 = scalar_lea.vmem %s2, %s443
        %s445 = smul.u32 4, %s19
        %p447 = scmp.eq.s32.totalorder %s21, 0
        // Predicated region
        $region112: #{alexnet_forward.17} parent=102 // pred_check
          %p448 = pneg %p447
        $region113: #{alexnet_forward.17} parent=102 // pred_check_branch
          %450 = sbr.rel (%p448) target = $region115
        $region114: #{alexnet_forward.17} parent=102 // pred_region
          %451 = vst [vmem:[#allocation2] sm:$0xff] 0.0
          %452 = vst [vmem:[#allocation2 + $0x8] sm:$0xff] 0.0
          %453 = vst [vmem:[#allocation2 + $0x10] sm:$0xff] 0.0
          %454 = vst [vmem:[#allocation2 + $0x18] sm:$0xff] 0.0
        $region115: #{alexnet_forward.17} parent=102 // pred_fallthru
          _
        %v455 = vld [vmem:[#allocation2] sm:$0xff]
        %v456 = vld [vmem:[#allocation2 + $0x8] sm:$0xff]
        %v457 = vld [vmem:[#allocation2 + $0x10] sm:$0xff]
        %v458 = vld [vmem:[#allocation2 + $0x18] sm:$0xff]
        %v459 = vld [vmem:[%s405] sm:$0xff]
        %v460 = vld [vmem:[%s405 + $0x8] sm:$0xff]
        %v461 = vld [vmem:[%s405 + $0x10] sm:$0xff]
        %v462 = vld [vmem:[%s405 + $0x18] sm:$0xff]
        %v463 = vld [vmem:[%s412] sm:$0xf]
        %v464 = vld [vmem:[%s412 + $0x4] sm:$0xf]
        %v465 = vld [vmem:[%s412 + $0x8] sm:$0xf]
        %v466 = vld [vmem:[%s412 + $0xc] sm:$0xf]
        %v467 = vld [vmem:[%s412 + $0x10] sm:$0xf]
        %v468 = vld [vmem:[%s412 + $0x14] sm:$0xf]
        %v469 = vld [vmem:[%s412 + $0x18] sm:$0xf]
        %v470 = vld [vmem:[%s412 + $0x1c] sm:$0xf]
        %v471 = vld [vmem:[%s412 + $0x20] sm:$0xf]
        %v472 = vld [vmem:[%s412 + $0x24] sm:$0xf]
        %v473 = vld [vmem:[%s412 + $0x28] sm:$0xf]
        %v474 = vld [vmem:[%s412 + $0x2c] sm:$0xf]
        %v475 = vld [vmem:[%s412 + $0x30] sm:$0xf]
        %v476 = vld [vmem:[%s412 + $0x34] sm:$0xf]
        %v477 = vld [vmem:[%s412 + $0x38] sm:$0xf]
        %v478 = vld [vmem:[%s412 + $0x3c] sm:$0xf]
        %v479 = vld [vmem:[%s412 + $0x40] sm:$0xf]
        %v480 = vld [vmem:[%s412 + $0x44] sm:$0xf]
        %v481 = vld [vmem:[%s412 + $0x48] sm:$0xf]
        %v482 = vld [vmem:[%s412 + $0x4c] sm:$0xf]
        %v483 = vld [vmem:[%s412 + $0x50] sm:$0xf]
        %v484 = vld [vmem:[%s412 + $0x54] sm:$0xf]
        %v485 = vld [vmem:[%s412 + $0x58] sm:$0xf]
        %v486 = vld [vmem:[%s412 + $0x5c] sm:$0xf]
        %v487 = vld [vmem:[%s412 + $0x60] sm:$0xf]
        %v488 = vld [vmem:[%s412 + $0x64] sm:$0xf]
        %v489 = vld [vmem:[%s412 + $0x68] sm:$0xf]
        %v490 = vld [vmem:[%s412 + $0x6c] sm:$0xf]
        %v491 = vld [vmem:[%s412 + $0x70] sm:$0xf]
        %v492 = vld [vmem:[%s412 + $0x74] sm:$0xf]
        %v493 = vld [vmem:[%s412 + $0x78] sm:$0xf]
        %v494 = vld [vmem:[%s412 + $0x7c] sm:$0xf]
        %v499 = vunpack.c.l.b16 %v459
        %v500 = vunpack.c.h.b16 %v459
        %v501 = vunpack.c.l.b16 %v460
        %v502 = vunpack.c.h.b16 %v460
        %v503 = vunpack.c.l.b16 %v461
        %v504 = vunpack.c.h.b16 %v461
        %v505 = vunpack.c.l.b16 %v462
        %v506 = vunpack.c.h.b16 %v462
        %v507 = vpack.c.b16 %v501, %v499
        %v508 = vpack.c.b16 %v502, %v500
        %v509 = vpack.c.b16 %v505, %v503
        %v510 = vpack.c.b16 %v506, %v504
        %v547 = vunpack.c.l.b16 %v463
        %v548 = vunpack.c.l.b16 %v464
        %v549 = vunpack.c.l.b16 %v465
        %v550 = vunpack.c.l.b16 %v466
        %v551 = vunpack.c.l.b16 %v467
        %v552 = vunpack.c.l.b16 %v468
        %v553 = vunpack.c.l.b16 %v469
        %v554 = vunpack.c.l.b16 %v470
        %v555 = vunpack.c.l.b16 %v471
        %v556 = vunpack.c.l.b16 %v472
        %v557 = vunpack.c.l.b16 %v473
        %v558 = vunpack.c.l.b16 %v474
        %v559 = vunpack.c.l.b16 %v475
        %v560 = vunpack.c.l.b16 %v476
        %v561 = vunpack.c.l.b16 %v477
        %v562 = vunpack.c.l.b16 %v478
        %v563 = vunpack.c.l.b16 %v479
        %v564 = vunpack.c.l.b16 %v480
        %v565 = vunpack.c.l.b16 %v481
        %v566 = vunpack.c.l.b16 %v482
        %v567 = vunpack.c.l.b16 %v483
        %v568 = vunpack.c.l.b16 %v484
        %v569 = vunpack.c.l.b16 %v485
        %v570 = vunpack.c.l.b16 %v486
        %v571 = vunpack.c.l.b16 %v487
        %v572 = vunpack.c.l.b16 %v488
        %v573 = vunpack.c.l.b16 %v489
        %v574 = vunpack.c.l.b16 %v490
        %v575 = vunpack.c.l.b16 %v491
        %v576 = vunpack.c.l.b16 %v492
        %v577 = vunpack.c.l.b16 %v493
        %v578 = vunpack.c.l.b16 %v494
        %v579 = vpack.c.b16 %v548, %v547
        %v580 = vpack.c.b16 %v550, %v549
        %v581 = vpack.c.b16 %v552, %v551
        %v582 = vpack.c.b16 %v554, %v553
        %v583 = vpack.c.b16 %v556, %v555
        %v584 = vpack.c.b16 %v558, %v557
        %v585 = vpack.c.b16 %v560, %v559
        %v586 = vpack.c.b16 %v562, %v561
        %v587 = vpack.c.b16 %v564, %v563
        %v588 = vpack.c.b16 %v566, %v565
        %v589 = vpack.c.b16 %v568, %v567
        %v590 = vpack.c.b16 %v570, %v569
        %v591 = vpack.c.b16 %v572, %v571
        %v592 = vpack.c.b16 %v574, %v573
        %v593 = vpack.c.b16 %v576, %v575
        %v594 = vpack.c.b16 %v578, %v577
        %611 = vmatprep.subr.bf16.mxu0 0
        %612 = vmatpush1.bf16.msra.mxu0 %v579
        %613 = vmatprep.subr.bf16.mxu0 0
        %614 = vmatpush1.bf16.msra.mxu0 %v580
        %615 = vmatprep.subr.bf16.mxu0 0
        %616 = vmatpush1.bf16.msra.mxu0 %v581
        %617 = vmatprep.subr.bf16.mxu0 0
        %618 = vmatpush1.bf16.msra.mxu0 %v582
        %619 = vmatprep.subr.bf16.mxu0 0
        %620 = vmatpush1.bf16.msra.mxu0 %v583
        %621 = vmatprep.subr.bf16.mxu0 0
        %622 = vmatpush1.bf16.msra.mxu0 %v584
        %623 = vmatprep.subr.bf16.mxu0 0
        %624 = vmatpush1.bf16.msra.mxu0 %v585
        %625 = vmatprep.subr.bf16.mxu0 0
        %626 = vmatpush1.bf16.msra.mxu0 %v586
        %627 = vmatprep.subr.bf16.mxu0 0
        %628 = vmatpush1.bf16.msra.mxu0 %v587
        %629 = vmatprep.subr.bf16.mxu0 0
        %630 = vmatpush1.bf16.msra.mxu0 %v588
        %631 = vmatprep.subr.bf16.mxu0 0
        %632 = vmatpush1.bf16.msra.mxu0 %v589
        %633 = vmatprep.subr.bf16.mxu0 0
        %634 = vmatpush1.bf16.msra.mxu0 %v590
        %635 = vmatprep.subr.bf16.mxu0 0
        %636 = vmatpush1.bf16.msra.mxu0 %v591
        %637 = vmatprep.subr.bf16.mxu0 0
        %638 = vmatpush1.bf16.msra.mxu0 %v592
        %639 = vmatprep.subr.bf16.mxu0 0
        %640 = vmatpush1.bf16.msra.mxu0 %v593
        %641 = vmatprep.subr.bf16.mxu0 0
        %642 = vmatpush1.bf16.msra.mxu0 %v594
        %643 = vmatprep.mubr.bf16.mxu0 %v508
        %644 = vmatmul.mubr.bf16.gmra.mrb[0].mxu0 %v507
        %v645 = vpop.f32.mrb[0].mxu0
        %v646 = vadd.f32 0.0, %v645
        %v647 = vpop.f32.mrb[0].mxu0
        %v648 = vpop.f32.mrb[0].mxu0
        %v649 = vadd.f32 0.0, %v648
        %v650 = vpop.f32.mrb[0].mxu0
        %651 = vmatprep.mubr.bf16.mxu0 %v510
        %652 = vmatmul.mubr.bf16.gmra.mrb[0].mxu0 %v509
        %v653 = vpop.f32.mrb[0].mxu0
        %v654 = vadd.f32 0.0, %v653
        %v655 = vpop.f32.mrb[0].mxu0
        %v656 = vpop.f32.mrb[0].mxu0
        %v657 = vadd.f32 0.0, %v656
        %v658 = vpop.f32.mrb[0].mxu0
        %659 = vdwg.mxu0
        %v660 = vadd.f32 %v455, %v646
        %v661 = vadd.f32 %v456, %v649
        %v662 = vadd.f32 %v457, %v654
        %v663 = vadd.f32 %v458, %v657
        %664 = vst [vmem:[#allocation2] sm:$0xff] %v660
        %665 = vst [vmem:[#allocation2 + $0x8] sm:$0xff] %v661
        %666 = vst [vmem:[#allocation2 + $0x10] sm:$0xff] %v662
        %667 = vst [vmem:[#allocation2 + $0x18] sm:$0xff] %v663
        %p668 = scmp.eq.s32.totalorder %s21, 8
        // Predicated region
        $region116: #{alexnet_forward.17} parent=102 // pred_check
          %p669 = pneg %p668
        $region117: #{alexnet_forward.17} parent=102 // pred_check_branch
          %671 = sbr.rel (%p669) target = $region119
        $region118: #{alexnet_forward.17} parent=102 // pred_region
          %v672 = vld [vmem:[#allocation2] sm:$0xff]
          %v673 = vld [vmem:[#allocation2 + $0x8] sm:$0xff]
          %v674 = vld [vmem:[#allocation2 + $0x10] sm:$0xff]
          %v675 = vld [vmem:[#allocation2 + $0x18] sm:$0xff]
          %v676 = vld [vmem:[%s444] sm:$0x1]
          %v678 = vlaneseq
          %v679 = vshrl.u32 %v678, 7
          %v680 = vsub.s32 0, %v679
          %v681 = vrot.slane %v676, %v680
          %v683 = vadd.f32 %v672, %v681
          %v684 = vadd.f32 %v673, %v681
          %v685 = vadd.f32 %v674, %v681
          %v686 = vadd.f32 %v675, %v681
          %v687 = vmax.f32 %v683, 0.0
          %v688 = vmax.f32 %v684, 0.0
          %v689 = vmax.f32 %v685, 0.0
          %v690 = vmax.f32 %v686, 0.0
          %v691 = vpack.c.bf16 %v688, %v687
          %v692 = vpack.c.bf16 %v690, %v689
          %v695 = vunpack.c.l.b16 %v691
          %v696 = vunpack.c.h.b16 %v691
          %v697 = vunpack.c.l.b16 %v692
          %v698 = vunpack.c.h.b16 %v692
          %v699 = vpack.c.b16 %v695, %v695
          %v700 = vpack.c.b16 %v696, %v696
          %v701 = vpack.c.b16 %v697, %v697
          %v702 = vpack.c.b16 %v698, %v698
          %707 = vst [vmem:[%s438] sm:$0xf] %v699
          %708 = vst [vmem:[%s438 + $0x4] sm:$0xf] %v700
          %709 = vst [vmem:[%s438 + $0x8] sm:$0xf] %v701
          %710 = vst [vmem:[%s438 + $0xc] sm:$0xf] %v702
        $region119: #{alexnet_forward.17} parent=102 // pred_fallthru
          _
        %s711 = sand.u32 %s125, 1
        %s712 = sand.u32 %s125, 1
        %s713 = smul.addr %s712, 16
        %s714 = scalar_lea.vmem [#allocation5], %s713
        // Predicated region
        $region120: #{alexnet_forward.17} parent=102 // pred_check
          %p715 = pneg %p135
        $region121: #{alexnet_forward.17} parent=102 // pred_check_branch
          %717 = sbr.rel (%p715) target = $region123
        $region122: #{alexnet_forward.17} parent=102 // pred_region
          %s718 = smul.u32 4, %s19
          %s719 = smul.addr %s718, 3
          %s720 = sadd.s32 %s20, %s719
          %s721 = smul.addr %s720, 4
          %s722 = scalar_lea.vmem %s3, %s721
          // Predicated region
          $region124: #{alexnet_forward.17} parent=122 // pred_check
            _
          $region125: #{alexnet_forward.17} parent=122 // pred_check_branch
            %724 = sbr.rel (0) target = $region127
          $region126: #{alexnet_forward.17} parent=122 // pred_region
            // Predicated region
            $region128: #{alexnet_forward.17} parent=126 // pred_check
              _
            $region129: #{alexnet_forward.17} parent=126 // pred_check_branch
              %726 = sbr.rel target = $region131
            $region130: #{alexnet_forward.17} parent=126 // pred_region
              // Predicated region
              $region143: #{alexnet_forward.17} parent=130 // pred_check
                _
              $region144: #{alexnet_forward.17} parent=130 // pred_check_branch
                %747 = sbr.rel (0) target = $region146
              $region145: #{alexnet_forward.17} parent=130 // pred_region
                loop: start=0, step=1, limit=1
                $region147: #{alexnet_forward.17} parent=145 // loop_pre_header
                  _
                $region148: #{alexnet_forward.17} parent=145 // loop_header
                  %s749 = sphi 0, %s753
                  %p750 = scmp.ge.s32.totalorder %s749, 1
                  %s754 = sphi %s714, %s714
                  %s755 = sphi %s722, %s722
                $region149: #{alexnet_forward.17} parent=145 // loop_header_branch
                  %752 = sbr.rel (%p750) target = $region153
                $region150: #{alexnet_forward.17} parent=145 // loop_body
                  _
                $region151: #{alexnet_forward.17} parent=145 // loop_footer
                  %s753 = sadd.s32 1, %s749
                $region152: #{alexnet_forward.17} parent=145 // loop_footer_branch
                  %748 = sbr.rel target = $region148
                $region153: #{alexnet_forward.17} parent=145 // loop_exit
                  _
                loop: start=0, step=1, limit=1
                $region154: #{alexnet_forward.17} parent=145 // loop_pre_header
                  _
                $region155: #{alexnet_forward.17} parent=145 // loop_header
                  %s758 = sphi 0, %s762
                  %p759 = scmp.ge.s32.totalorder %s758, 1
                  %s763 = sphi %s714, %s714
                  %s764 = sphi %s722, %s722
                $region156: #{alexnet_forward.17} parent=145 // loop_header_branch
                  %761 = sbr.rel (%p759) target = $region160
                $region157: #{alexnet_forward.17} parent=145 // loop_body
                  %v765 = vld [vmem:[%s763] sm:$0xf]
                  %766 = vst [vmem:[%s764] sm:$0xf] %v765
                  %v767 = vld [vmem:[%s763 + $0x4] sm:$0xf]
                  %768 = vst [vmem:[%s764 + $0xc] sm:$0xf] %v767
                  %v769 = vld [vmem:[%s763 + $0x8] sm:$0xf]
                  %770 = vst [vmem:[%s764 + $0x18] sm:$0xf] %v769
                  %v771 = vld [vmem:[%s763 + $0xc] sm:$0xf]
                  %772 = vst [vmem:[%s764 + $0x24] sm:$0xf] %v771
                $region158: #{alexnet_forward.17} parent=145 // loop_footer
                  %s762 = sadd.s32 1, %s758
                $region159: #{alexnet_forward.17} parent=145 // loop_footer_branch
                  %757 = sbr.rel target = $region155
                $region160: #{alexnet_forward.17} parent=145 // loop_exit
                  _
              $region146: #{alexnet_forward.17} parent=130 // pred_fallthru
                _
            $region131: #{alexnet_forward.17} parent=126 // pred_fallthru
              _
            // Predicated region
            $region132: #{alexnet_forward.17} parent=126 // pred_check
              _
            $region133: #{alexnet_forward.17} parent=126 // pred_check_branch
              %728 = sbr.rel (0) target = $region135
            $region134: #{alexnet_forward.17} parent=126 // pred_region
              loop: start=0, step=1, limit=1
              $region136: #{alexnet_forward.17} parent=134 // loop_pre_header
                _
              $region137: #{alexnet_forward.17} parent=134 // loop_header
                %s731 = sphi 0, %s735
                %p732 = scmp.ge.s32.totalorder %s731, 1
                %s736 = sphi %s714, %s714
                %s737 = sphi %s722, %s722
              $region138: #{alexnet_forward.17} parent=134 // loop_header_branch
                %734 = sbr.rel (%p732) target = $region142
              $region139: #{alexnet_forward.17} parent=134 // loop_body
                %v738 = vld [vmem:[%s736] sm:$0xf]
                %739 = vst [vmem:[%s737] sm:$0xf] %v738
                %v740 = vld [vmem:[%s736 + $0x4] sm:$0xf]
                %741 = vst [vmem:[%s737 + $0xc] sm:$0xf] %v740
                %v742 = vld [vmem:[%s736 + $0x8] sm:$0xf]
                %743 = vst [vmem:[%s737 + $0x18] sm:$0xf] %v742
                %v744 = vld [vmem:[%s736 + $0xc] sm:$0xf]
                %745 = vst [vmem:[%s737 + $0x24] sm:$0xf] %v744
              $region140: #{alexnet_forward.17} parent=134 // loop_footer
                %s735 = sadd.s32 1, %s731
              $region141: #{alexnet_forward.17} parent=134 // loop_footer_branch
                %730 = sbr.rel target = $region137
              $region142: #{alexnet_forward.17} parent=134 // loop_exit
                _
            $region135: #{alexnet_forward.17} parent=126 // pred_fallthru
              _
          $region127: #{alexnet_forward.17} parent=122 // pred_fallthru
            _
          %773 = vnop
        $region123: #{alexnet_forward.17} parent=102 // pred_fallthru
          _
      $region103: #{alexnet_forward.17} parent=5 // pred_fallthru
        _
      %p774 = scmp.le.s32.totalorder 2, %s9
      // Predicated region
      $region161: #{alexnet_forward.17} parent=5 // pred_check
        %p775 = pneg %p774
      $region162: #{alexnet_forward.17} parent=5 // pred_check_branch
        %777 = sbr.rel (%p775) target = $region164
      $region163: #{alexnet_forward.17} parent=5 // pred_region
        %s778 = ssub.s32 %s9, 2
        // Predicated region
        $region165: #{alexnet_forward.17} parent=163 // pred_check
          %p779 = pneg %p141
        $region166: #{alexnet_forward.17} parent=163 // pred_check_branch
          %781 = sbr.rel (%p779) target = $region168
        $region167: #{alexnet_forward.17} parent=163 // pred_region
          %s782 = sand.u32 %s126, 1
          %s783 = sand.u32 %s126, 1
          %s784 = smul.addr %s783, 16
          %s785 = scalar_lea.vmem [#allocation5], %s784
        $region168: #{alexnet_forward.17} parent=163 // pred_fallthru
          _
      $region164: #{alexnet_forward.17} parent=5 // pred_fallthru
        _
    $region6: #{alexnet_forward.17} parent=1 // loop_footer
      %s13 = sadd.s32 1, %s9
    $region7: #{alexnet_forward.17} parent=1 // loop_footer_branch
      %8 = sbr.rel target = $region3
    $region8: #{alexnet_forward.17} parent=1 // loop_exit
      _

// kernel: alexnet_forward.18
$region0: #{alexnet_forward.18}
  #allocation0 [shape = 'u32[]', space=smem, size = 0x4, offset = 0x4, fixed_abs, tag = 'smem constant byte address 0x4 - core index']
  #allocation1 [shape = 'u32[144,128]{1,0:T(1,128)}', space=vmem, size = 0x12000, scoped, tag = 'internal scratch']
  %s0 = inlined_call_operand.vmem [shape: bf16[9,16,384], index: 0, kind: input, shape index: {}]
  %s1 = inlined_call_operand.vmem [shape: bf16[16,384], index: 1, kind: output, shape index: {}]
  %s2 = sld [smem:[#allocation0]]
  $region14: #{alexnet_forward.18} parent=0
    _
  %s4 = ssub.s32 1, %s2
  %s5 = scalar_select 0, %s4, %s2
  // Predicated region
  $region2: #{alexnet_forward.18} parent=0 // pred_check
    _
  $region3: #{alexnet_forward.18} parent=0 // pred_check_branch
    %7 = sbr.rel (0) target = $region5
  $region4: #{alexnet_forward.18} parent=0 // pred_region
    _
  $region5: #{alexnet_forward.18} parent=0 // pred_fallthru
    _
  %v9 = vld [vmem:[%s0] sm:$0xff]
  %v10 = vld [vmem:[%s0 + $0x8] sm:$0xf]
  %v11 = vld [vmem:[%s0 + $0xc] sm:$0xff]
  %v12 = vld [vmem:[%s0 + $0x14] sm:$0xf]
  %v13 = vld [vmem:[%s0 + $0x18] sm:$0xff]
  %v14 = vld [vmem:[%s0 + $0x20] sm:$0xf]
  %v15 = vld [vmem:[%s0 + $0x24] sm:$0xff]
  %v16 = vld [vmem:[%s0 + $0x2c] sm:$0xf]
  %v17 = vld [vmem:[%s0 + $0x30] sm:$0xff]
  %v18 = vld [vmem:[%s0 + $0x38] sm:$0xf]
  %v19 = vld [vmem:[%s0 + $0x3c] sm:$0xff]
  %v20 = vld [vmem:[%s0 + $0x44] sm:$0xf]
  %v21 = vld [vmem:[%s0 + $0x48] sm:$0xff]
  %v22 = vld [vmem:[%s0 + $0x50] sm:$0xf]
  %v23 = vld [vmem:[%s0 + $0x54] sm:$0xff]
  %v24 = vld [vmem:[%s0 + $0x5c] sm:$0xf]
  %v25 = vld [vmem:[%s0 + $0x60] sm:$0xff]
  %v26 = vld [vmem:[%s0 + $0x68] sm:$0xf]
  %v27 = vld [vmem:[%s0 + $0x6c] sm:$0xff]
  %v28 = vld [vmem:[%s0 + $0x74] sm:$0xf]
  %v29 = vld [vmem:[%s0 + $0x78] sm:$0xff]
  %v30 = vld [vmem:[%s0 + $0x80] sm:$0xf]
  %v31 = vld [vmem:[%s0 + $0x84] sm:$0xff]
  %v32 = vld [vmem:[%s0 + $0x8c] sm:$0xf]
  %v33 = vld [vmem:[%s0 + $0x90] sm:$0xff]
  %v34 = vld [vmem:[%s0 + $0x98] sm:$0xf]
  %v35 = vld [vmem:[%s0 + $0x9c] sm:$0xff]
  %v36 = vld [vmem:[%s0 + $0xa4] sm:$0xf]
  %v37 = vld [vmem:[%s0 + $0xa8] sm:$0xff]
  %v38 = vld [vmem:[%s0 + $0xb0] sm:$0xf]
  %v39 = vld [vmem:[%s0 + $0xb4] sm:$0xff]
  %v40 = vld [vmem:[%s0 + $0xbc] sm:$0xf]
  %v41 = vld [vmem:[%s0 + $0xc0] sm:$0xff]
  %v42 = vld [vmem:[%s0 + $0xc8] sm:$0xf]
  %v43 = vld [vmem:[%s0 + $0xcc] sm:$0xff]
  %v44 = vld [vmem:[%s0 + $0xd4] sm:$0xf]
  %v45 = vmax.bf16 %v9, %v13
  %v46 = vmax.bf16 %v45, %v17
  %v47 = vmax.bf16 %v46, %v21
  %v48 = vmax.bf16 %v47, %v25
  %v49 = vmax.bf16 %v48, %v29
  %v50 = vmax.bf16 %v49, %v33
  %v51 = vmax.bf16 %v50, %v37
  %v52 = vmax.bf16 %v51, %v41
  %vm53 = vcmask 1043456
  %v56 = vsel %vm53, %v10, 4286644096
  %v59 = vsel %vm53, %v14, 4286644096
  %v61 = vmax.bf16 %v56, %v59
  %v63 = vsel %vm53, %v18, 4286644096
  %v65 = vmax.bf16 %v61, %v63
  %v67 = vsel %vm53, %v22, 4286644096
  %v69 = vmax.bf16 %v65, %v67
  %v71 = vsel %vm53, %v26, 4286644096
  %v73 = vmax.bf16 %v69, %v71
  %v75 = vsel %vm53, %v30, 4286644096
  %v77 = vmax.bf16 %v73, %v75
  %v79 = vsel %vm53, %v34, 4286644096
  %v81 = vmax.bf16 %v77, %v79
  %v83 = vsel %vm53, %v38, 4286644096
  %v85 = vmax.bf16 %v81, %v83
  %v87 = vsel %vm53, %v42, 4286644096
  %v89 = vmax.bf16 %v85, %v87
  %v90 = vmax.bf16 %v11, %v15
  %v91 = vmax.bf16 %v90, %v19
  %v92 = vmax.bf16 %v91, %v23
  %v93 = vmax.bf16 %v92, %v27
  %v94 = vmax.bf16 %v93, %v31
  %v95 = vmax.bf16 %v94, %v35
  %v96 = vmax.bf16 %v95, %v39
  %v97 = vmax.bf16 %v96, %v43
  %v99 = vsel %vm53, %v12, 4286644096
  %v102 = vsel %vm53, %v16, 4286644096
  %v104 = vmax.bf16 %v99, %v102
  %v106 = vsel %vm53, %v20, 4286644096
  %v108 = vmax.bf16 %v104, %v106
  %v110 = vsel %vm53, %v24, 4286644096
  %v112 = vmax.bf16 %v108, %v110
  %v114 = vsel %vm53, %v28, 4286644096
  %v116 = vmax.bf16 %v112, %v114
  %v118 = vsel %vm53, %v32, 4286644096
  %v120 = vmax.bf16 %v116, %v118
  %v122 = vsel %vm53, %v36, 4286644096
  %v124 = vmax.bf16 %v120, %v122
  %v126 = vsel %vm53, %v40, 4286644096
  %v128 = vmax.bf16 %v124, %v126
  %v130 = vsel %vm53, %v44, 4286644096
  %v132 = vmax.bf16 %v128, %v130
  %133 = vst [vmem:[%s1] sm:$0xff] %v52
  %134 = vst [vmem:[%s1 + $0x8] sm:$0xf] %v89
  %135 = vst [vmem:[%s1 + $0xc] sm:$0xff] %v97
  %136 = vst [vmem:[%s1 + $0x14] sm:$0xf] %v132
  // Predicated region
  $region6: #{alexnet_forward.18} parent=0 // pred_check
    _
  $region7: #{alexnet_forward.18} parent=0 // pred_check_branch
    %138 = sbr.rel (0) target = $region9
  $region8: #{alexnet_forward.18} parent=0 // pred_region
    _
  $region9: #{alexnet_forward.18} parent=0 // pred_fallthru
    _
  // Predicated region
  $region10: #{alexnet_forward.18} parent=0 // pred_check
    _
  $region11: #{alexnet_forward.18} parent=0 // pred_check_branch
    %140 = sbr.rel (0) target = $region13
  $region12: #{alexnet_forward.18} parent=0 // pred_region
    _
  $region13: #{alexnet_forward.18} parent=0 // pred_fallthru
    _

// kernel: alexnet_forward.19
$region0: #{alexnet_forward.19}
  #allocation0 [shape = 'u32[]', space=smem, size = 0x4, offset = 0x4, fixed_abs, tag = 'smem constant byte address 0x4 - core index']
  #allocation1 [shape = 'u32[144,128]{1,0:T(1,128)}', space=vmem, size = 0x12000, scoped, tag = 'internal scratch']
  #allocation2 [shape = 'f32[16,256]{1,0:T(8,128)}', space=vmem, size = 0x4000, scoped, tag = 'scratch operand']
  %s0 = inlined_call_operand.vmem [shape: bf16[16,1792], index: 0, kind: input, shape index: {}]
  %s1 = inlined_call_operand.vmem [shape: bf16[1792,256], index: 1, kind: input, shape index: {}]
  %s2 = inlined_call_operand.vmem [shape: f32[1,256], index: 2, kind: input, shape index: {}]
  %s3 = inlined_call_operand.vmem [shape: bf16[16,256], index: 3, kind: output, shape index: {}]
  %s4 = sld [smem:[#allocation0]]
  $region91: #{alexnet_forward.19} parent=0
    _
  %s6 = ssub.s32 1, %s4
  %s7 = scalar_select 0, %s6, %s4
  $region1: #{alexnet_forward.19} parent=0
    #allocation3 [shape = 'u8[16384]{0}', space=vmem, size = 0x4000, scoped, tag = 'input window, operand 0']
    loop: start=0, step=1, limit=9
    $region2: #{alexnet_forward.19} parent=1 // loop_pre_header
      _
    $region3: #{alexnet_forward.19} parent=1 // loop_header
      %s9 = sphi 0, %s13
      %p10 = scmp.ge.s32.totalorder %s9, 9
      %s16 = sphi 0, %s35
      %s17 = sphi 0, %s31
      %s18 = sphi 0, %s27
      %s19 = sphi 0, %s16
      %s20 = sphi 0, %s17
      %s21 = sphi 0, %s18
      %s22 = sphi 0, %s19
      %s23 = sphi 0, %s20
      %s24 = sphi 0, %s21
      %s40 = sphi 0, %s42
      %s43 = sphi 0, %s40
      %s44 = sphi 0, %s43
      %s60 = sphi 0, %s44
      %s68 = sphi 0, %s70
      %s71 = sphi 0, %s68
      %s72 = sphi 0, %s71
      %s88 = sphi 0, %s72
      %s94 = sphi 0, %s96
      %s97 = sphi 0, %s94
      %s98 = sphi 0, %s97
      %s114 = sphi 0, %s98
      %s122 = sphi 0, %s124
      %s125 = sphi 0, %s122
      %s126 = sphi 0, %s125
      %s142 = sphi 0, %s126
    $region4: #{alexnet_forward.19} parent=1 // loop_header_branch
      %12 = sbr.rel (%p10) target = $region8
    $region5: #{alexnet_forward.19} parent=1 // loop_body
      %s14 = ssub.s32 %s9, 1
      %s15 = ssub.s32 %s9, 2
      %s25 = sadd.s32 1, %s18
      %p26 = scmp.ge.s32.totalorder %s25, 7
      %s27 = scalar_select %p26, 0, %s25
      %s28 = sadd.s32 1, %s17
      %s29 = scalar_select %p26, %s28, %s17
      %p30 = scmp.ge.s32.totalorder %s29, 1
      %s31 = scalar_select %p30, 0, %s29
      %s32 = sadd.s32 1, %s16
      %s33 = scalar_select %p30, %s32, %s16
      %p34 = scmp.ge.s32.totalorder %s33, 1
      %s35 = scalar_select %p34, 0, %s33
      %s36 = ssub.s32 %s16, %s35
      %s37 = ssub.s32 %s18, %s27
      %s38 = sor.u32 %s36, %s37
      %p39 = scmp.eq.s32.totalorder %s38, 0
      %s41 = sadd.s32 %s40, 1
      %s42 = scalar_select %p39, %s40, %s41
      %p45 = pneg %p39
      %p46 = scmp.eq.s32.totalorder %s9, 6
      %p47 = por %p45, %p46
      %p48 = scmp.ne.s32.totalorder %s40, %s43
      %p49 = scmp.eq.s32.totalorder %s9, 0
      %p50 = por %p48, %p49
      %p51 = scmp.ne.s32.totalorder %s40, %s43
      %p52 = scmp.eq.s32.totalorder %s14, 6
      %p53 = por %p51, %p52
      %p54 = scmp.ne.s32.totalorder %s43, %s44
      %p55 = scmp.eq.s32.totalorder %s14, 0
      %p56 = por %p54, %p55
      %p57 = scmp.ne.s32.totalorder %s43, %s44
      %p58 = scmp.eq.s32.totalorder %s15, 6
      %p59 = por %p57, %p58
      %p61 = scmp.ne.s32.totalorder %s44, %s60
      %p62 = scmp.eq.s32.totalorder %s15, 0
      %p63 = por %p61, %p62
      %s64 = ssub.s32 %s18, %s27
      %s65 = ssub.s32 %s17, %s31
      %s66 = sor.u32 %s64, %s65
      %p67 = scmp.eq.s32.totalorder %s66, 0
      %s69 = sadd.s32 %s68, 1
      %s70 = scalar_select %p67, %s68, %s69
      %p73 = pneg %p67
      %p74 = scmp.eq.s32.totalorder %s9, 6
      %p75 = por %p73, %p74
      %p76 = scmp.ne.s32.totalorder %s68, %s71
      %p77 = scmp.eq.s32.totalorder %s9, 0
      %p78 = por %p76, %p77
      %p79 = scmp.ne.s32.totalorder %s68, %s71
      %p80 = scmp.eq.s32.totalorder %s14, 6
      %p81 = por %p79, %p80
      %p82 = scmp.ne.s32.totalorder %s71, %s72
      %p83 = scmp.eq.s32.totalorder %s14, 0
      %p84 = por %p82, %p83
      %p85 = scmp.ne.s32.totalorder %s71, %s72
      %p86 = scmp.eq.s32.totalorder %s15, 6
      %p87 = por %p85, %p86
      %p89 = scmp.ne.s32.totalorder %s72, %s88
      %p90 = scmp.eq.s32.totalorder %s15, 0
      %p91 = por %p89, %p90
      %s92 = ssub.s32 %s17, %s31
      %p93 = scmp.eq.s32.totalorder %s92, 0
      %s95 = sadd.s32 %s94, 1
      %s96 = scalar_select %p93, %s94, %s95
      %p99 = pneg %p93
      %p100 = scmp.eq.s32.totalorder %s9, 6
      %p101 = por %p99, %p100
      %p102 = scmp.ne.s32.totalorder %s94, %s97
      %p103 = scmp.eq.s32.totalorder %s9, 0
      %p104 = por %p102, %p103
      %p105 = scmp.ne.s32.totalorder %s94, %s97
      %p106 = scmp.eq.s32.totalorder %s14, 6
      %p107 = por %p105, %p106
      %p108 = scmp.ne.s32.totalorder %s97, %s98
      %p109 = scmp.eq.s32.totalorder %s14, 0
      %p110 = por %p108, %p109
      %p111 = scmp.ne.s32.totalorder %s97, %s98
      %p112 = scmp.eq.s32.totalorder %s15, 6
      %p113 = por %p111, %p112
      %p115 = scmp.ne.s32.totalorder %s98, %s114
      %p116 = scmp.eq.s32.totalorder %s15, 0
      %p117 = por %p115, %p116
      %s118 = ssub.s32 %s16, %s35
      %s119 = ssub.s32 %s17, %s31
      %s120 = sor.u32 %s118, %s119
      %p121 = scmp.eq.s32.totalorder %s120, 0
      %s123 = sadd.s32 %s122, 1
      %s124 = scalar_select %p121, %s122, %s123
      %p127 = pneg %p121
      %p128 = scmp.eq.s32.totalorder %s9, 6
      %p129 = por %p127, %p128
      %p130 = scmp.ne.s32.totalorder %s122, %s125
      %p131 = scmp.eq.s32.totalorder %s9, 0
      %p132 = por %p130, %p131
      %p133 = scmp.ne.s32.totalorder %s122, %s125
      %p134 = scmp.eq.s32.totalorder %s14, 6
      %p135 = por %p133, %p134
      %p136 = scmp.ne.s32.totalorder %s125, %s126
      %p137 = scmp.eq.s32.totalorder %s14, 0
      %p138 = por %p136, %p137
      %p139 = scmp.ne.s32.totalorder %s125, %s126
      %p140 = scmp.eq.s32.totalorder %s15, 6
      %p141 = por %p139, %p140
      %p143 = scmp.ne.s32.totalorder %s126, %s142
      %p144 = scmp.eq.s32.totalorder %s15, 0
      %p145 = por %p143, %p144
      %p146 = scmp.le.s32.totalorder 1, %s9
      %p147 = scmp.lt.s32.totalorder %s9, 8
      %p148 = pnand %p146, %p147
      %p149 = pneg %p148
      // Predicated region
      $region9: #{alexnet_forward.19} parent=5 // pred_check
        _
      $region10: #{alexnet_forward.19} parent=5 // pred_check_branch
        %151 = sbr.rel (%p148) target = $region12
      $region11: #{alexnet_forward.19} parent=5 // pred_region
        %s152 = ssub.s32 %s9, 1
        // Predicated region
        $region13: #{alexnet_forward.19} parent=11 // pred_check
          %p153 = pneg %p110
        $region14: #{alexnet_forward.19} parent=11 // pred_check_branch
          %155 = sbr.rel (%p153) target = $region16
        $region15: #{alexnet_forward.19} parent=11 // pred_region
          %s156 = smul.u32 2, %s20
          %p157 = scmp.lt.s32.totalorder %s156, 1
          %s158 = scalar_select %p157, %s156, 1
          %s159 = scalar_lea.vmem %s2, %s158
          %s160 = smul.u32 2, %s20
        $region16: #{alexnet_forward.19} parent=11 // pred_fallthru
          _
      $region12: #{alexnet_forward.19} parent=5 // pred_fallthru
        _
      %p161 = scmp.lt.s32.totalorder %s9, 7
      // Predicated region
      $region17: #{alexnet_forward.19} parent=5 // pred_check
        %p162 = pneg %p161
      $region18: #{alexnet_forward.19} parent=5 // pred_check_branch
        %164 = sbr.rel (%p162) target = $region20
      $region19: #{alexnet_forward.19} parent=5 // pred_region
        // Predicated region
        $region21: #{alexnet_forward.19} parent=19 // pred_check
          %p165 = pneg %p50
        $region22: #{alexnet_forward.19} parent=19 // pred_check_branch
          %167 = sbr.rel (%p165) target = $region24
        $region23: #{alexnet_forward.19} parent=19 // pred_region
          %s168 = sand.u32 %s40, 1
          %s169 = sand.u32 %s40, 1
          %s170 = smul.addr %s169, 16
          %s171 = scalar_lea.vmem [#allocation3], %s170
          %s172 = smul.u32 2, %s16
          %s173 = smul.u32 2, %s18
          %s174 = smul.addr %s172, 14
          %s175 = sadd.s32 %s173, %s174
          %s176 = smul.addr %s175, 4
          %s177 = scalar_lea.vmem %s0, %s176
          // Predicated region
          $region25: #{alexnet_forward.19} parent=23 // pred_check
            _
          $region26: #{alexnet_forward.19} parent=23 // pred_check_branch
            %179 = sbr.rel (0) target = $region28
          $region27: #{alexnet_forward.19} parent=23 // pred_region
            // Predicated region
            $region29: #{alexnet_forward.19} parent=27 // pred_check
              _
            $region30: #{alexnet_forward.19} parent=27 // pred_check_branch
              %181 = sbr.rel (0) target = $region32
            $region31: #{alexnet_forward.19} parent=27 // pred_region
              // Predicated region
              $region44: #{alexnet_forward.19} parent=31 // pred_check
                _
              $region45: #{alexnet_forward.19} parent=31 // pred_check_branch
                %198 = sbr.rel (0) target = $region47
              $region46: #{alexnet_forward.19} parent=31 // pred_region
                loop: start=0, step=1, limit=1
                $region48: #{alexnet_forward.19} parent=46 // loop_pre_header
                  _
                $region49: #{alexnet_forward.19} parent=46 // loop_header
                  %s200 = sphi 0, %s204
                  %p201 = scmp.ge.s32.totalorder %s200, 1
                  %s205 = sphi %s177, %s177
                  %s206 = sphi %s171, %s171
                $region50: #{alexnet_forward.19} parent=46 // loop_header_branch
                  %203 = sbr.rel (%p201) target = $region54
                $region51: #{alexnet_forward.19} parent=46 // loop_body
                  %v207 = vld [vmem:[%s205] sm:$0xff]
                  %208 = vst [vmem:[%s206] sm:$0xff] %v207
                  %v209 = vld [vmem:[%s205 + $0x38] sm:$0xff]
                  %210 = vst [vmem:[%s206 + $0x8] sm:$0xff] %v209
                $region52: #{alexnet_forward.19} parent=46 // loop_footer
                  %s204 = sadd.s32 1, %s200
                $region53: #{alexnet_forward.19} parent=46 // loop_footer_branch
                  %199 = sbr.rel target = $region49
                $region54: #{alexnet_forward.19} parent=46 // loop_exit
                  _
              $region47: #{alexnet_forward.19} parent=31 // pred_fallthru
                _
              // Predicated region
              $region55: #{alexnet_forward.19} parent=31 // pred_check
                _
              $region56: #{alexnet_forward.19} parent=31 // pred_check_branch
                %212 = sbr.rel target = $region58
              $region57: #{alexnet_forward.19} parent=31 // pred_region
                _
              $region58: #{alexnet_forward.19} parent=31 // pred_fallthru
                _
            $region32: #{alexnet_forward.19} parent=27 // pred_fallthru
              _
            // Predicated region
            $region33: #{alexnet_forward.19} parent=27 // pred_check
              _
            $region34: #{alexnet_forward.19} parent=27 // pred_check_branch
              %183 = sbr.rel target = $region36
            $region35: #{alexnet_forward.19} parent=27 // pred_region
              loop: start=0, step=1, limit=1
              $region37: #{alexnet_forward.19} parent=35 // loop_pre_header
                _
              $region38: #{alexnet_forward.19} parent=35 // loop_header
                %s186 = sphi 0, %s190
                %p187 = scmp.ge.s32.totalorder %s186, 1
                %s191 = sphi %s177, %s177
                %s192 = sphi %s171, %s171
              $region39: #{alexnet_forward.19} parent=35 // loop_header_branch
                %189 = sbr.rel (%p187) target = $region43
              $region40: #{alexnet_forward.19} parent=35 // loop_body
                %v193 = vld [vmem:[%s191] sm:$0xff]
                %194 = vst [vmem:[%s192] sm:$0xff] %v193
                %v195 = vld [vmem:[%s191 + $0x38] sm:$0xff]
                %196 = vst [vmem:[%s192 + $0x8] sm:$0xff] %v195
              $region41: #{alexnet_forward.19} parent=35 // loop_footer
                %s190 = sadd.s32 1, %s186
              $region42: #{alexnet_forward.19} parent=35 // loop_footer_branch
                %185 = sbr.rel target = $region38
              $region43: #{alexnet_forward.19} parent=35 // loop_exit
                _
            $region36: #{alexnet_forward.19} parent=27 // pred_fallthru
              _
          $region28: #{alexnet_forward.19} parent=23 // pred_fallthru
            _
          %213 = vnop
        $region24: #{alexnet_forward.19} parent=19 // pred_fallthru
          _
        // Predicated region
        $region59: #{alexnet_forward.19} parent=19 // pred_check
          %p214 = pneg %p78
        $region60: #{alexnet_forward.19} parent=19 // pred_check_branch
          %216 = sbr.rel (%p214) target = $region62
        $region61: #{alexnet_forward.19} parent=19 // pred_region
          %s217 = smul.u32 32, %s18
          %s218 = smul.u32 2, %s17
          %p219 = scmp.lt.s32.totalorder %s217, 223
          %s220 = scalar_select %p219, %s217, 223
          %p221 = scmp.lt.s32.totalorder %s218, 1
          %s222 = scalar_select %p221, %s218, 1
          %s223 = smul.addr %s220, 2
          %s224 = sadd.s32 %s222, %s223
          %s225 = smul.addr %s224, 4
          %s226 = scalar_lea.vmem %s1, %s225
          %s227 = smul.u32 32, %s18
          %s228 = smul.u32 2, %s17
        $region62: #{alexnet_forward.19} parent=19 // pred_fallthru
          _
      $region20: #{alexnet_forward.19} parent=5 // pred_fallthru
        _
      %p229 = scmp.le.s32.totalorder 1, %s9
      %p230 = scmp.lt.s32.totalorder %s9, 8
      %p231 = pnand %p229, %p230
      %p232 = pneg %p231
      // Predicated region
      $region63: #{alexnet_forward.19} parent=5 // pred_check
        _
      $region64: #{alexnet_forward.19} parent=5 // pred_check_branch
        %234 = sbr.rel (%p231) target = $region66
      $region65: #{alexnet_forward.19} parent=5 // pred_region
        %s235 = ssub.s32 %s9, 1
        %s236 = sand.u32 %s43, 1
        %s237 = sand.u32 %s43, 1
        %s238 = smul.addr %s237, 16
        %s239 = scalar_lea.vmem [#allocation3], %s238
        // Predicated region
        $region67: #{alexnet_forward.19} parent=65 // pred_check
          %p240 = pneg %p56
        $region68: #{alexnet_forward.19} parent=65 // pred_check_branch
          %242 = sbr.rel (%p240) target = $region70
        $region69: #{alexnet_forward.19} parent=65 // pred_region
          _
        $region70: #{alexnet_forward.19} parent=65 // pred_fallthru
          _
        %s243 = sand.u32 %s43, 1
        %s244 = sand.u32 %s43, 1
        %s245 = smul.addr %s244, 16
        %s246 = scalar_lea.vmem [#allocation3], %s245
        %p247 = pneg %p56
        %p248 = pneg %p53
        %s249 = smul.u32 32, %s21
        %s250 = smul.u32 2, %s20
        %p251 = scmp.lt.s32.totalorder %s249, 223
        %s252 = scalar_select %p251, %s249, 223
        %p253 = scmp.lt.s32.totalorder %s250, 1
        %s254 = scalar_select %p253, %s250, 1
        %s255 = smul.addr %s252, 2
        %s256 = sadd.s32 %s254, %s255
        %s257 = smul.addr %s256, 4
        %s258 = scalar_lea.vmem %s1, %s257
        %p259 = pneg %p84
        %p260 = pneg %p81
        %s261 = smul.u32 2, %s20
        %p262 = scmp.lt.s32.totalorder %s261, 1
        %s263 = scalar_select %p262, %s261, 1
        %s264 = scalar_lea.vmem %s2, %s263
        %p265 = pneg %p110
        %p266 = pneg %p107
        %p267 = pneg %p138
        %p268 = pneg %p135
        %s269 = smul.u32 2, %s19
        %s270 = smul.u32 2, %s20
        %p271 = scmp.lt.s32.totalorder %s269, 1
        %s272 = scalar_select %p271, %s269, 1
        %p273 = scmp.lt.s32.totalorder %s270, 1
        %s274 = scalar_select %p273, %s270, 1
        %s275 = smul.addr %s272, 2
        %s276 = sadd.s32 %s274, %s275
        %s277 = smul.addr %s276, 4
        %s278 = scalar_lea.vmem %s3, %s277
        %s279 = smul.u32 2, %s19
        %s280 = smul.u32 2, %s21
        %s281 = smul.u32 32, %s21
        %s282 = smul.u32 2, %s20
        %p283 = scmp.lt.s32.totalorder %s281, 223
        %s284 = scalar_select %p283, %s281, 223
        %p285 = scmp.lt.s32.totalorder %s282, 1
        %s286 = scalar_select %p285, %s282, 1
        %s287 = smul.addr %s284, 2
        %s288 = sadd.s32 %s286, %s287
        %s289 = smul.addr %s288, 4
        %s290 = scalar_lea.vmem %s1, %s289
        %s291 = smul.u32 32, %s21
        %s292 = smul.u32 2, %s20
        %s293 = smul.u32 2, %s20
        %p294 = scmp.lt.s32.totalorder %s293, 1
        %s295 = scalar_select %p294, %s293, 1
        %s296 = scalar_lea.vmem %s2, %s295
        %s297 = smul.u32 2, %s20
        %s298 = smul.u32 2, %s19
        %s299 = smul.u32 2, %s20
        %p300 = scmp.lt.s32.totalorder %s298, 1
        %s301 = scalar_select %p300, %s298, 1
        %p302 = scmp.lt.s32.totalorder %s299, 1
        %s303 = scalar_select %p302, %s299, 1
        %s304 = smul.addr %s301, 2
        %s305 = sadd.s32 %s303, %s304
        %s306 = smul.addr %s305, 4
        %s307 = scalar_lea.vmem %s3, %s306
        %s308 = smul.u32 2, %s19
        %s309 = smul.u32 2, %s20
        %p310 = scmp.eq.s32.totalorder %s21, 0
        // Predicated region
        $region71: #{alexnet_forward.19} parent=65 // pred_check
          %p311 = pneg %p310
        $region72: #{alexnet_forward.19} parent=65 // pred_check_branch
          %313 = sbr.rel (%p311) target = $region74
        $region73: #{alexnet_forward.19} parent=65 // pred_region
          %314 = vst [vmem:[#allocation2] sm:$0xff] 0.0
          %315 = vst [vmem:[#allocation2 + $0x8] sm:$0xff] 0.0
          %316 = vst [vmem:[#allocation2 + $0x10] sm:$0xff] 0.0
          %317 = vst [vmem:[#allocation2 + $0x18] sm:$0xff] 0.0
        $region74: #{alexnet_forward.19} parent=65 // pred_fallthru
          _
        %v318 = vld [vmem:[#allocation2] sm:$0xff]
        %v319 = vld [vmem:[#allocation2 + $0x8] sm:$0xff]
        %v320 = vld [vmem:[#allocation2 + $0x10] sm:$0xff]
        %v321 = vld [vmem:[#allocation2 + $0x18] sm:$0xff]
        %v322 = vld [vmem:[%s239] sm:$0xff]
        %v323 = vld [vmem:[%s239 + $0x8] sm:$0xff]
        %v324 = vld [vmem:[%s290] sm:$0xff]
        %v325 = vld [vmem:[%s290 + $0x8] sm:$0xff]
        %v326 = vld [vmem:[%s290 + $0x10] sm:$0xff]
        %v327 = vld [vmem:[%s290 + $0x18] sm:$0xff]
        %v328 = vld [vmem:[%s290 + $0x20] sm:$0xff]
        %v329 = vld [vmem:[%s290 + $0x28] sm:$0xff]
        %v330 = vld [vmem:[%s290 + $0x30] sm:$0xff]
        %v331 = vld [vmem:[%s290 + $0x38] sm:$0xff]
        %v332 = vld [vmem:[%s290 + $0x40] sm:$0xff]
        %v333 = vld [vmem:[%s290 + $0x48] sm:$0xff]
        %v334 = vld [vmem:[%s290 + $0x50] sm:$0xff]
        %v335 = vld [vmem:[%s290 + $0x58] sm:$0xff]
        %v336 = vld [vmem:[%s290 + $0x60] sm:$0xff]
        %v337 = vld [vmem:[%s290 + $0x68] sm:$0xff]
        %v338 = vld [vmem:[%s290 + $0x70] sm:$0xff]
        %v339 = vld [vmem:[%s290 + $0x78] sm:$0xff]
        %v340 = vld [vmem:[%s290 + $0x80] sm:$0xff]
        %v341 = vld [vmem:[%s290 + $0x88] sm:$0xff]
        %v342 = vld [vmem:[%s290 + $0x90] sm:$0xff]
        %v343 = vld [vmem:[%s290 + $0x98] sm:$0xff]
        %v344 = vld [vmem:[%s290 + $0xa0] sm:$0xff]
        %v345 = vld [vmem:[%s290 + $0xa8] sm:$0xff]
        %v346 = vld [vmem:[%s290 + $0xb0] sm:$0xff]
        %v347 = vld [vmem:[%s290 + $0xb8] sm:$0xff]
        %v348 = vld [vmem:[%s290 + $0xc0] sm:$0xff]
        %v349 = vld [vmem:[%s290 + $0xc8] sm:$0xff]
        %v350 = vld [vmem:[%s290 + $0xd0] sm:$0xff]
        %v351 = vld [vmem:[%s290 + $0xd8] sm:$0xff]
        %v352 = vld [vmem:[%s290 + $0xe0] sm:$0xff]
        %v353 = vld [vmem:[%s290 + $0xe8] sm:$0xff]
        %v354 = vld [vmem:[%s290 + $0xf0] sm:$0xff]
        %v355 = vld [vmem:[%s290 + $0xf8] sm:$0xff]
        %v358 = vunpack.c.l.b16 %v322
        %v359 = vunpack.c.h.b16 %v322
        %v360 = vunpack.c.l.b16 %v323
        %v361 = vunpack.c.h.b16 %v323
        %v362 = vpack.c.b16 %v360, %v358
        %v363 = vpack.c.b16 %v361, %v359
        %v398 = vunpack.c.l.b16 %v324
        %v399 = vunpack.c.h.b16 %v324
        %v400 = vunpack.c.l.b16 %v325
        %v401 = vunpack.c.h.b16 %v325
        %v402 = vunpack.c.l.b16 %v326
        %v403 = vunpack.c.h.b16 %v326
        %v404 = vunpack.c.l.b16 %v327
        %v405 = vunpack.c.h.b16 %v327
        %v406 = vunpack.c.l.b16 %v328
        %v407 = vunpack.c.h.b16 %v328
        %v408 = vunpack.c.l.b16 %v329
        %v409 = vunpack.c.h.b16 %v329
        %v410 = vunpack.c.l.b16 %v330
        %v411 = vunpack.c.h.b16 %v330
        %v412 = vunpack.c.l.b16 %v331
        %v413 = vunpack.c.h.b16 %v331
        %v414 = vunpack.c.l.b16 %v332
        %v415 = vunpack.c.h.b16 %v332
        %v416 = vunpack.c.l.b16 %v333
        %v417 = vunpack.c.h.b16 %v333
        %v418 = vunpack.c.l.b16 %v334
        %v419 = vunpack.c.h.b16 %v334
        %v420 = vunpack.c.l.b16 %v335
        %v421 = vunpack.c.h.b16 %v335
        %v422 = vunpack.c.l.b16 %v336
        %v423 = vunpack.c.h.b16 %v336
        %v424 = vunpack.c.l.b16 %v337
        %v425 = vunpack.c.h.b16 %v337
        %v426 = vunpack.c.l.b16 %v338
        %v427 = vunpack.c.h.b16 %v338
        %v428 = vunpack.c.l.b16 %v339
        %v429 = vunpack.c.h.b16 %v339
        %v430 = vunpack.c.l.b16 %v340
        %v431 = vunpack.c.h.b16 %v340
        %v432 = vunpack.c.l.b16 %v341
        %v433 = vunpack.c.h.b16 %v341
        %v434 = vunpack.c.l.b16 %v342
        %v435 = vunpack.c.h.b16 %v342
        %v436 = vunpack.c.l.b16 %v343
        %v437 = vunpack.c.h.b16 %v343
        %v438 = vunpack.c.l.b16 %v344
        %v439 = vunpack.c.h.b16 %v344
        %v440 = vunpack.c.l.b16 %v345
        %v441 = vunpack.c.h.b16 %v345
        %v442 = vunpack.c.l.b16 %v346
        %v443 = vunpack.c.h.b16 %v346
        %v444 = vunpack.c.l.b16 %v347
        %v445 = vunpack.c.h.b16 %v347
        %v446 = vunpack.c.l.b16 %v348
        %v447 = vunpack.c.h.b16 %v348
        %v448 = vunpack.c.l.b16 %v349
        %v449 = vunpack.c.h.b16 %v349
        %v450 = vunpack.c.l.b16 %v350
        %v451 = vunpack.c.h.b16 %v350
        %v452 = vunpack.c.l.b16 %v351
        %v453 = vunpack.c.h.b16 %v351
        %v454 = vunpack.c.l.b16 %v352
        %v455 = vunpack.c.h.b16 %v352
        %v456 = vunpack.c.l.b16 %v353
        %v457 = vunpack.c.h.b16 %v353
        %v458 = vunpack.c.l.b16 %v354
        %v459 = vunpack.c.h.b16 %v354
        %v460 = vunpack.c.l.b16 %v355
        %v461 = vunpack.c.h.b16 %v355
        %v462 = vpack.c.b16 %v400, %v398
        %v463 = vpack.c.b16 %v401, %v399
        %v464 = vpack.c.b16 %v404, %v402
        %v465 = vpack.c.b16 %v405, %v403
        %v466 = vpack.c.b16 %v408, %v406
        %v467 = vpack.c.b16 %v409, %v407
        %v468 = vpack.c.b16 %v412, %v410
        %v469 = vpack.c.b16 %v413, %v411
        %v470 = vpack.c.b16 %v416, %v414
        %v471 = vpack.c.b16 %v417, %v415
        %v472 = vpack.c.b16 %v420, %v418
        %v473 = vpack.c.b16 %v421, %v419
        %v474 = vpack.c.b16 %v424, %v422
        %v475 = vpack.c.b16 %v425, %v423
        %v476 = vpack.c.b16 %v428, %v426
        %v477 = vpack.c.b16 %v429, %v427
        %v478 = vpack.c.b16 %v432, %v430
        %v479 = vpack.c.b16 %v433, %v431
        %v480 = vpack.c.b16 %v436, %v434
        %v481 = vpack.c.b16 %v437, %v435
        %v482 = vpack.c.b16 %v440, %v438
        %v483 = vpack.c.b16 %v441, %v439
        %v484 = vpack.c.b16 %v444, %v442
        %v485 = vpack.c.b16 %v445, %v443
        %v486 = vpack.c.b16 %v448, %v446
        %v487 = vpack.c.b16 %v449, %v447
        %v488 = vpack.c.b16 %v452, %v450
        %v489 = vpack.c.b16 %v453, %v451
        %v490 = vpack.c.b16 %v456, %v454
        %v491 = vpack.c.b16 %v457, %v455
        %v492 = vpack.c.b16 %v460, %v458
        %v493 = vpack.c.b16 %v461, %v459
        %526 = vmatprep.subr.bf16.mxu0 %v463
        %527 = vmatpush1.bf16.msra.mxu0 %v462
        %528 = vmatprep.subr.bf16.mxu0 %v465
        %529 = vmatpush1.bf16.msra.mxu0 %v464
        %530 = vmatprep.subr.bf16.mxu0 %v467
        %531 = vmatpush1.bf16.msra.mxu0 %v466
        %532 = vmatprep.subr.bf16.mxu0 %v469
        %533 = vmatpush1.bf16.msra.mxu0 %v468
        %534 = vmatprep.subr.bf16.mxu0 %v471
        %535 = vmatpush1.bf16.msra.mxu0 %v470
        %536 = vmatprep.subr.bf16.mxu0 %v473
        %537 = vmatpush1.bf16.msra.mxu0 %v472
        %538 = vmatprep.subr.bf16.mxu0 %v475
        %539 = vmatpush1.bf16.msra.mxu0 %v474
        %540 = vmatprep.subr.bf16.mxu0 %v477
        %541 = vmatpush1.bf16.msra.mxu0 %v476
        %542 = vmatprep.subr.bf16.mxu0 %v479
        %543 = vmatpush1.bf16.msra.mxu0 %v478
        %544 = vmatprep.subr.bf16.mxu0 %v481
        %545 = vmatpush1.bf16.msra.mxu0 %v480
        %546 = vmatprep.subr.bf16.mxu0 %v483
        %547 = vmatpush1.bf16.msra.mxu0 %v482
        %548 = vmatprep.subr.bf16.mxu0 %v485
        %549 = vmatpush1.bf16.msra.mxu0 %v484
        %550 = vmatprep.subr.bf16.mxu0 %v487
        %551 = vmatpush1.bf16.msra.mxu0 %v486
        %552 = vmatprep.subr.bf16.mxu0 %v489
        %553 = vmatpush1.bf16.msra.mxu0 %v488
        %554 = vmatprep.subr.bf16.mxu0 %v491
        %555 = vmatpush1.bf16.msra.mxu0 %v490
        %556 = vmatprep.subr.bf16.mxu0 %v493
        %557 = vmatpush1.bf16.msra.mxu0 %v492
        %558 = vmatprep.mubr.bf16.mxu0 %v363
        %559 = vmatmul.mubr.bf16.gmra.mrb[0].mxu0 %v362
        %v560 = vpop.f32.mrb[0].mxu0
        %v561 = vadd.f32 0.0, %v560
        %v562 = vpop.f32.mrb[0].mxu0
        %v563 = vadd.f32 0.0, %v562
        %v564 = vpop.f32.mrb[0].mxu0
        %v565 = vadd.f32 0.0, %v564
        %v566 = vpop.f32.mrb[0].mxu0
        %v567 = vadd.f32 0.0, %v566
        %568 = vdwg.mxu0
        %v569 = vadd.f32 %v318, %v561
        %v570 = vadd.f32 %v319, %v563
        %v571 = vadd.f32 %v320, %v565
        %v572 = vadd.f32 %v321, %v567
        %573 = vst [vmem:[#allocation2] sm:$0xff] %v569
        %574 = vst [vmem:[#allocation2 + $0x8] sm:$0xff] %v570
        %575 = vst [vmem:[#allocation2 + $0x10] sm:$0xff] %v571
        %576 = vst [vmem:[#allocation2 + $0x18] sm:$0xff] %v572
        %p577 = scmp.eq.s32.totalorder %s21, 6
        // Predicated region
        $region75: #{alexnet_forward.19} parent=65 // pred_check
          %p578 = pneg %p577
        $region76: #{alexnet_forward.19} parent=65 // pred_check_branch
          %580 = sbr.rel (%p578) target = $region78
        $region77: #{alexnet_forward.19} parent=65 // pred_region
          %v581 = vld [vmem:[#allocation2] sm:$0xff]
          %v582 = vld [vmem:[#allocation2 + $0x8] sm:$0xff]
          %v583 = vld [vmem:[#allocation2 + $0x10] sm:$0xff]
          %v584 = vld [vmem:[#allocation2 + $0x18] sm:$0xff]
          %v585 = vld [vmem:[%s296] sm:$0x3]
          %v587 = vlaneseq
          %v588 = vshrl.u32 %v587, 7
          %v589 = vsub.s32 0, %v588
          %v590 = vrot.slane %v585, %v589
          %v591 = vlaneseq
          %v592 = vshrl.u32 %v591, 7
          %v593 = vsub.s32 1, %v592
          %v594 = vrot.slane %v585, %v593
          %v597 = vadd.f32 %v581, %v590
          %v598 = vadd.f32 %v582, %v594
          %v599 = vadd.f32 %v583, %v590
          %v600 = vadd.f32 %v584, %v594
          %v601 = vmax.f32 %v597, 0.0
          %v602 = vmax.f32 %v598, 0.0
          %v603 = vmax.f32 %v599, 0.0
          %v604 = vmax.f32 %v600, 0.0
          %v605 = vpack.c.bf16 %v603, %v601
          %v606 = vpack.c.bf16 %v604, %v602
          %v609 = vunpack.c.l.b16 %v605
          %v610 = vunpack.c.l.b16 %v606
          %v611 = vunpack.c.h.b16 %v605
          %v612 = vunpack.c.h.b16 %v606
          %v613 = vpack.c.b16 %v610, %v609
          %v614 = vpack.c.b16 %v612, %v611
          %617 = vst [vmem:[%s307] sm:$0xff] %v613
          %618 = vst [vmem:[%s307 + $0x8] sm:$0xff] %v614
        $region78: #{alexnet_forward.19} parent=65 // pred_fallthru
          _
        %s619 = smul.u32 2, %s19
        %s620 = smul.u32 2, %s20
        %p621 = scmp.lt.s32.totalorder %s619, 1
        %s622 = scalar_select %p621, %s619, 1
        %p623 = scmp.lt.s32.totalorder %s620, 1
        %s624 = scalar_select %p623, %s620, 1
        %s625 = smul.addr %s622, 2
        %s626 = sadd.s32 %s624, %s625
        %s627 = smul.addr %s626, 4
        %s628 = scalar_lea.vmem %s3, %s627
        // Predicated region
        $region79: #{alexnet_forward.19} parent=65 // pred_check
          %p629 = pneg %p135
        $region80: #{alexnet_forward.19} parent=65 // pred_check_branch
          %631 = sbr.rel (%p629) target = $region82
        $region81: #{alexnet_forward.19} parent=65 // pred_region
          %s632 = smul.u32 2, %s19
          %s633 = smul.u32 2, %s20
        $region82: #{alexnet_forward.19} parent=65 // pred_fallthru
          _
        // Predicated region
        $region83: #{alexnet_forward.19} parent=65 // pred_check
          %p634 = pneg %p135
        $region84: #{alexnet_forward.19} parent=65 // pred_check_branch
          %636 = sbr.rel (%p634) target = $region86
        $region85: #{alexnet_forward.19} parent=65 // pred_region
          %s637 = smul.u32 2, %s19
          %s638 = smul.u32 2, %s20
          %p639 = scmp.lt.s32.totalorder %s637, 1
          %s640 = scalar_select %p639, %s637, 1
          %p641 = scmp.lt.s32.totalorder %s638, 1
          %s642 = scalar_select %p641, %s638, 1
          %s643 = smul.addr %s640, 2
          %s644 = sadd.s32 %s642, %s643
          %s645 = smul.addr %s644, 4
          %s646 = scalar_lea.vmem %s3, %s645
        $region86: #{alexnet_forward.19} parent=65 // pred_fallthru
          _
      $region66: #{alexnet_forward.19} parent=5 // pred_fallthru
        _
      %p647 = scmp.le.s32.totalorder 2, %s9
      // Predicated region
      $region87: #{alexnet_forward.19} parent=5 // pred_check
        %p648 = pneg %p647
      $region88: #{alexnet_forward.19} parent=5 // pred_check_branch
        %650 = sbr.rel (%p648) target = $region90
      $region89: #{alexnet_forward.19} parent=5 // pred_region
        %s651 = ssub.s32 %s9, 2
      $region90: #{alexnet_forward.19} parent=5 // pred_fallthru
        _
    $region6: #{alexnet_forward.19} parent=1 // loop_footer
      %s13 = sadd.s32 1, %s9
    $region7: #{alexnet_forward.19} parent=1 // loop_footer_branch
      %8 = sbr.rel target = $region3
    $region8: #{alexnet_forward.19} parent=1 // loop_exit
      _

// kernel: alexnet_forward.20
$region0: #{alexnet_forward.20}
  #allocation0 [shape = 'u32[]', space=smem, size = 0x4, offset = 0x4, fixed_abs, tag = 'smem constant byte address 0x4 - core index']
  #allocation1 [shape = 'u32[144,128]{1,0:T(1,128)}', space=vmem, size = 0x12000, scoped, tag = 'internal scratch']
  #allocation2 [shape = 'f32[16,128]{1,0:T(8,128)}', space=vmem, size = 0x2000, scoped, tag = 'scratch operand']
  %s0 = inlined_call_operand.vmem [shape: bf16[16,1792], index: 0, kind: input, shape index: {}]
  %s1 = inlined_call_operand.vmem [shape: bf16[1792,128], index: 1, kind: input, shape index: {}]
  %s2 = inlined_call_operand.vmem [shape: f32[1,128], index: 2, kind: input, shape index: {}]
  %s3 = inlined_call_operand.vmem [shape: bf16[16,128], index: 3, kind: output, shape index: {}]
  %s4 = sld [smem:[#allocation0]]
  $region91: #{alexnet_forward.20} parent=0
    _
  %s6 = ssub.s32 1, %s4
  %s7 = scalar_select 0, %s6, %s4
  $region1: #{alexnet_forward.20} parent=0
    #allocation3 [shape = 'u8[16384]{0}', space=vmem, size = 0x4000, scoped, tag = 'input window, operand 0']
    loop: start=0, step=1, limit=9
    $region2: #{alexnet_forward.20} parent=1 // loop_pre_header
      _
    $region3: #{alexnet_forward.20} parent=1 // loop_header
      %s9 = sphi 0, %s13
      %p10 = scmp.ge.s32.totalorder %s9, 9
      %s16 = sphi 0, %s35
      %s17 = sphi 0, %s31
      %s18 = sphi 0, %s27
      %s19 = sphi 0, %s16
      %s20 = sphi 0, %s17
      %s21 = sphi 0, %s18
      %s22 = sphi 0, %s19
      %s23 = sphi 0, %s20
      %s24 = sphi 0, %s21
      %s40 = sphi 0, %s42
      %s43 = sphi 0, %s40
      %s44 = sphi 0, %s43
      %s60 = sphi 0, %s44
      %s68 = sphi 0, %s70
      %s71 = sphi 0, %s68
      %s72 = sphi 0, %s71
      %s88 = sphi 0, %s72
      %s94 = sphi 0, %s96
      %s97 = sphi 0, %s94
      %s98 = sphi 0, %s97
      %s114 = sphi 0, %s98
      %s122 = sphi 0, %s124
      %s125 = sphi 0, %s122
      %s126 = sphi 0, %s125
      %s142 = sphi 0, %s126
    $region4: #{alexnet_forward.20} parent=1 // loop_header_branch
      %12 = sbr.rel (%p10) target = $region8
    $region5: #{alexnet_forward.20} parent=1 // loop_body
      %s14 = ssub.s32 %s9, 1
      %s15 = ssub.s32 %s9, 2
      %s25 = sadd.s32 1, %s18
      %p26 = scmp.ge.s32.totalorder %s25, 7
      %s27 = scalar_select %p26, 0, %s25
      %s28 = sadd.s32 1, %s17
      %s29 = scalar_select %p26, %s28, %s17
      %p30 = scmp.ge.s32.totalorder %s29, 1
      %s31 = scalar_select %p30, 0, %s29
      %s32 = sadd.s32 1, %s16
      %s33 = scalar_select %p30, %s32, %s16
      %p34 = scmp.ge.s32.totalorder %s33, 1
      %s35 = scalar_select %p34, 0, %s33
      %s36 = ssub.s32 %s16, %s35
      %s37 = ssub.s32 %s18, %s27
      %s38 = sor.u32 %s36, %s37
      %p39 = scmp.eq.s32.totalorder %s38, 0
      %s41 = sadd.s32 %s40, 1
      %s42 = scalar_select %p39, %s40, %s41
      %p45 = pneg %p39
      %p46 = scmp.eq.s32.totalorder %s9, 6
      %p47 = por %p45, %p46
      %p48 = scmp.ne.s32.totalorder %s40, %s43
      %p49 = scmp.eq.s32.totalorder %s9, 0
      %p50 = por %p48, %p49
      %p51 = scmp.ne.s32.totalorder %s40, %s43
      %p52 = scmp.eq.s32.totalorder %s14, 6
      %p53 = por %p51, %p52
      %p54 = scmp.ne.s32.totalorder %s43, %s44
      %p55 = scmp.eq.s32.totalorder %s14, 0
      %p56 = por %p54, %p55
      %p57 = scmp.ne.s32.totalorder %s43, %s44
      %p58 = scmp.eq.s32.totalorder %s15, 6
      %p59 = por %p57, %p58
      %p61 = scmp.ne.s32.totalorder %s44, %s60
      %p62 = scmp.eq.s32.totalorder %s15, 0
      %p63 = por %p61, %p62
      %s64 = ssub.s32 %s18, %s27
      %s65 = ssub.s32 %s17, %s31
      %s66 = sor.u32 %s64, %s65
      %p67 = scmp.eq.s32.totalorder %s66, 0
      %s69 = sadd.s32 %s68, 1
      %s70 = scalar_select %p67, %s68, %s69
      %p73 = pneg %p67
      %p74 = scmp.eq.s32.totalorder %s9, 6
      %p75 = por %p73, %p74
      %p76 = scmp.ne.s32.totalorder %s68, %s71
      %p77 = scmp.eq.s32.totalorder %s9, 0
      %p78 = por %p76, %p77
      %p79 = scmp.ne.s32.totalorder %s68, %s71
      %p80 = scmp.eq.s32.totalorder %s14, 6
      %p81 = por %p79, %p80
      %p82 = scmp.ne.s32.totalorder %s71, %s72
      %p83 = scmp.eq.s32.totalorder %s14, 0
      %p84 = por %p82, %p83
      %p85 = scmp.ne.s32.totalorder %s71, %s72
      %p86 = scmp.eq.s32.totalorder %s15, 6
      %p87 = por %p85, %p86
      %p89 = scmp.ne.s32.totalorder %s72, %s88
      %p90 = scmp.eq.s32.totalorder %s15, 0
      %p91 = por %p89, %p90
      %s92 = ssub.s32 %s17, %s31
      %p93 = scmp.eq.s32.totalorder %s92, 0
      %s95 = sadd.s32 %s94, 1
      %s96 = scalar_select %p93, %s94, %s95
      %p99 = pneg %p93
      %p100 = scmp.eq.s32.totalorder %s9, 6
      %p101 = por %p99, %p100
      %p102 = scmp.ne.s32.totalorder %s94, %s97
      %p103 = scmp.eq.s32.totalorder %s9, 0
      %p104 = por %p102, %p103
      %p105 = scmp.ne.s32.totalorder %s94, %s97
      %p106 = scmp.eq.s32.totalorder %s14, 6
      %p107 = por %p105, %p106
      %p108 = scmp.ne.s32.totalorder %s97, %s98
      %p109 = scmp.eq.s32.totalorder %s14, 0
      %p110 = por %p108, %p109
      %p111 = scmp.ne.s32.totalorder %s97, %s98
      %p112 = scmp.eq.s32.totalorder %s15, 6
      %p113 = por %p111, %p112
      %p115 = scmp.ne.s32.totalorder %s98, %s114
      %p116 = scmp.eq.s32.totalorder %s15, 0
      %p117 = por %p115, %p116
      %s118 = ssub.s32 %s16, %s35
      %s119 = ssub.s32 %s17, %s31
      %s120 = sor.u32 %s118, %s119
      %p121 = scmp.eq.s32.totalorder %s120, 0
      %s123 = sadd.s32 %s122, 1
      %s124 = scalar_select %p121, %s122, %s123
      %p127 = pneg %p121
      %p128 = scmp.eq.s32.totalorder %s9, 6
      %p129 = por %p127, %p128
      %p130 = scmp.ne.s32.totalorder %s122, %s125
      %p131 = scmp.eq.s32.totalorder %s9, 0
      %p132 = por %p130, %p131
      %p133 = scmp.ne.s32.totalorder %s122, %s125
      %p134 = scmp.eq.s32.totalorder %s14, 6
      %p135 = por %p133, %p134
      %p136 = scmp.ne.s32.totalorder %s125, %s126
      %p137 = scmp.eq.s32.totalorder %s14, 0
      %p138 = por %p136, %p137
      %p139 = scmp.ne.s32.totalorder %s125, %s126
      %p140 = scmp.eq.s32.totalorder %s15, 6
      %p141 = por %p139, %p140
      %p143 = scmp.ne.s32.totalorder %s126, %s142
      %p144 = scmp.eq.s32.totalorder %s15, 0
      %p145 = por %p143, %p144
      %p146 = scmp.le.s32.totalorder 1, %s9
      %p147 = scmp.lt.s32.totalorder %s9, 8
      %p148 = pnand %p146, %p147
      %p149 = pneg %p148
      // Predicated region
      $region9: #{alexnet_forward.20} parent=5 // pred_check
        _
      $region10: #{alexnet_forward.20} parent=5 // pred_check_branch
        %151 = sbr.rel (%p148) target = $region12
      $region11: #{alexnet_forward.20} parent=5 // pred_region
        %s152 = ssub.s32 %s9, 1
        // Predicated region
        $region13: #{alexnet_forward.20} parent=11 // pred_check
          %p153 = pneg %p110
        $region14: #{alexnet_forward.20} parent=11 // pred_check_branch
          %155 = sbr.rel (%p153) target = $region16
        $region15: #{alexnet_forward.20} parent=11 // pred_region
          %p156 = scmp.lt.s32.totalorder %s20, 0
          %s157 = scalar_select %p156, %s20, 0
          %s158 = scalar_lea.vmem %s2, %s157
        $region16: #{alexnet_forward.20} parent=11 // pred_fallthru
          _
      $region12: #{alexnet_forward.20} parent=5 // pred_fallthru
        _
      %p159 = scmp.lt.s32.totalorder %s9, 7
      // Predicated region
      $region17: #{alexnet_forward.20} parent=5 // pred_check
        %p160 = pneg %p159
      $region18: #{alexnet_forward.20} parent=5 // pred_check_branch
        %162 = sbr.rel (%p160) target = $region20
      $region19: #{alexnet_forward.20} parent=5 // pred_region
        // Predicated region
        $region21: #{alexnet_forward.20} parent=19 // pred_check
          %p163 = pneg %p50
        $region22: #{alexnet_forward.20} parent=19 // pred_check_branch
          %165 = sbr.rel (%p163) target = $region24
        $region23: #{alexnet_forward.20} parent=19 // pred_region
          %s166 = sand.u32 %s40, 1
          %s167 = sand.u32 %s40, 1
          %s168 = smul.addr %s167, 16
          %s169 = scalar_lea.vmem [#allocation3], %s168
          %s170 = smul.u32 2, %s16
          %s171 = smul.u32 2, %s18
          %s172 = smul.addr %s170, 14
          %s173 = sadd.s32 %s171, %s172
          %s174 = smul.addr %s173, 4
          %s175 = scalar_lea.vmem %s0, %s174
          // Predicated region
          $region25: #{alexnet_forward.20} parent=23 // pred_check
            _
          $region26: #{alexnet_forward.20} parent=23 // pred_check_branch
            %177 = sbr.rel (0) target = $region28
          $region27: #{alexnet_forward.20} parent=23 // pred_region
            // Predicated region
            $region29: #{alexnet_forward.20} parent=27 // pred_check
              _
            $region30: #{alexnet_forward.20} parent=27 // pred_check_branch
              %179 = sbr.rel (0) target = $region32
            $region31: #{alexnet_forward.20} parent=27 // pred_region
              // Predicated region
              $region44: #{alexnet_forward.20} parent=31 // pred_check
                _
              $region45: #{alexnet_forward.20} parent=31 // pred_check_branch
                %196 = sbr.rel (0) target = $region47
              $region46: #{alexnet_forward.20} parent=31 // pred_region
                loop: start=0, step=1, limit=1
                $region48: #{alexnet_forward.20} parent=46 // loop_pre_header
                  _
                $region49: #{alexnet_forward.20} parent=46 // loop_header
                  %s198 = sphi 0, %s202
                  %p199 = scmp.ge.s32.totalorder %s198, 1
                  %s203 = sphi %s175, %s175
                  %s204 = sphi %s169, %s169
                $region50: #{alexnet_forward.20} parent=46 // loop_header_branch
                  %201 = sbr.rel (%p199) target = $region54
                $region51: #{alexnet_forward.20} parent=46 // loop_body
                  %v205 = vld [vmem:[%s203] sm:$0xff]
                  %206 = vst [vmem:[%s204] sm:$0xff] %v205
                  %v207 = vld [vmem:[%s203 + $0x38] sm:$0xff]
                  %208 = vst [vmem:[%s204 + $0x8] sm:$0xff] %v207
                $region52: #{alexnet_forward.20} parent=46 // loop_footer
                  %s202 = sadd.s32 1, %s198
                $region53: #{alexnet_forward.20} parent=46 // loop_footer_branch
                  %197 = sbr.rel target = $region49
                $region54: #{alexnet_forward.20} parent=46 // loop_exit
                  _
              $region47: #{alexnet_forward.20} parent=31 // pred_fallthru
                _
              // Predicated region
              $region55: #{alexnet_forward.20} parent=31 // pred_check
                _
              $region56: #{alexnet_forward.20} parent=31 // pred_check_branch
                %210 = sbr.rel target = $region58
              $region57: #{alexnet_forward.20} parent=31 // pred_region
                _
              $region58: #{alexnet_forward.20} parent=31 // pred_fallthru
                _
            $region32: #{alexnet_forward.20} parent=27 // pred_fallthru
              _
            // Predicated region
            $region33: #{alexnet_forward.20} parent=27 // pred_check
              _
            $region34: #{alexnet_forward.20} parent=27 // pred_check_branch
              %181 = sbr.rel target = $region36
            $region35: #{alexnet_forward.20} parent=27 // pred_region
              loop: start=0, step=1, limit=1
              $region37: #{alexnet_forward.20} parent=35 // loop_pre_header
                _
              $region38: #{alexnet_forward.20} parent=35 // loop_header
                %s184 = sphi 0, %s188
                %p185 = scmp.ge.s32.totalorder %s184, 1
                %s189 = sphi %s175, %s175
                %s190 = sphi %s169, %s169
              $region39: #{alexnet_forward.20} parent=35 // loop_header_branch
                %187 = sbr.rel (%p185) target = $region43
              $region40: #{alexnet_forward.20} parent=35 // loop_body
                %v191 = vld [vmem:[%s189] sm:$0xff]
                %192 = vst [vmem:[%s190] sm:$0xff] %v191
                %v193 = vld [vmem:[%s189 + $0x38] sm:$0xff]
                %194 = vst [vmem:[%s190 + $0x8] sm:$0xff] %v193
              $region41: #{alexnet_forward.20} parent=35 // loop_footer
                %s188 = sadd.s32 1, %s184
              $region42: #{alexnet_forward.20} parent=35 // loop_footer_branch
                %183 = sbr.rel target = $region38
              $region43: #{alexnet_forward.20} parent=35 // loop_exit
                _
            $region36: #{alexnet_forward.20} parent=27 // pred_fallthru
              _
          $region28: #{alexnet_forward.20} parent=23 // pred_fallthru
            _
          %211 = vnop
        $region24: #{alexnet_forward.20} parent=19 // pred_fallthru
          _
        // Predicated region
        $region59: #{alexnet_forward.20} parent=19 // pred_check
          %p212 = pneg %p78
        $region60: #{alexnet_forward.20} parent=19 // pred_check_branch
          %214 = sbr.rel (%p212) target = $region62
        $region61: #{alexnet_forward.20} parent=19 // pred_region
          %s215 = smul.u32 32, %s18
          %p216 = scmp.lt.s32.totalorder %s215, 223
          %s217 = scalar_select %p216, %s215, 223
          %p218 = scmp.lt.s32.totalorder %s17, 0
          %s219 = scalar_select %p218, %s17, 0
          %s220 = sadd.s32 %s219, %s217
          %s221 = smul.addr %s220, 4
          %s222 = scalar_lea.vmem %s1, %s221
          %s223 = smul.u32 32, %s18
        $region62: #{alexnet_forward.20} parent=19 // pred_fallthru
          _
      $region20: #{alexnet_forward.20} parent=5 // pred_fallthru
        _
      %p224 = scmp.le.s32.totalorder 1, %s9
      %p225 = scmp.lt.s32.totalorder %s9, 8
      %p226 = pnand %p224, %p225
      %p227 = pneg %p226
      // Predicated region
      $region63: #{alexnet_forward.20} parent=5 // pred_check
        _
      $region64: #{alexnet_forward.20} parent=5 // pred_check_branch
        %229 = sbr.rel (%p226) target = $region66
      $region65: #{alexnet_forward.20} parent=5 // pred_region
        %s230 = ssub.s32 %s9, 1
        %s231 = sand.u32 %s43, 1
        %s232 = sand.u32 %s43, 1
        %s233 = smul.addr %s232, 16
        %s234 = scalar_lea.vmem [#allocation3], %s233
        // Predicated region
        $region67: #{alexnet_forward.20} parent=65 // pred_check
          %p235 = pneg %p56
        $region68: #{alexnet_forward.20} parent=65 // pred_check_branch
          %237 = sbr.rel (%p235) target = $region70
        $region69: #{alexnet_forward.20} parent=65 // pred_region
          _
        $region70: #{alexnet_forward.20} parent=65 // pred_fallthru
          _
        %s238 = sand.u32 %s43, 1
        %s239 = sand.u32 %s43, 1
        %s240 = smul.addr %s239, 16
        %s241 = scalar_lea.vmem [#allocation3], %s240
        %p242 = pneg %p56
        %p243 = pneg %p53
        %s244 = smul.u32 32, %s21
        %p245 = scmp.lt.s32.totalorder %s244, 223
        %s246 = scalar_select %p245, %s244, 223
        %p247 = scmp.lt.s32.totalorder %s20, 0
        %s248 = scalar_select %p247, %s20, 0
        %s249 = sadd.s32 %s248, %s246
        %s250 = smul.addr %s249, 4
        %s251 = scalar_lea.vmem %s1, %s250
        %p252 = pneg %p84
        %p253 = pneg %p81
        %p254 = scmp.lt.s32.totalorder %s20, 0
        %s255 = scalar_select %p254, %s20, 0
        %s256 = scalar_lea.vmem %s2, %s255
        %p257 = pneg %p110
        %p258 = pneg %p107
        %p259 = pneg %p138
        %p260 = pneg %p135
        %s261 = smul.u32 2, %s19
        %p262 = scmp.lt.s32.totalorder %s261, 1
        %s263 = scalar_select %p262, %s261, 1
        %p264 = scmp.lt.s32.totalorder %s20, 0
        %s265 = scalar_select %p264, %s20, 0
        %s266 = sadd.s32 %s265, %s263
        %s267 = smul.addr %s266, 4
        %s268 = scalar_lea.vmem %s3, %s267
        %s269 = smul.u32 2, %s19
        %s270 = smul.u32 2, %s21
        %s271 = smul.u32 32, %s21
        %p272 = scmp.lt.s32.totalorder %s271, 223
        %s273 = scalar_select %p272, %s271, 223
        %p274 = scmp.lt.s32.totalorder %s20, 0
        %s275 = scalar_select %p274, %s20, 0
        %s276 = sadd.s32 %s275, %s273
        %s277 = smul.addr %s276, 4
        %s278 = scalar_lea.vmem %s1, %s277
        %s279 = smul.u32 32, %s21
        %p280 = scmp.lt.s32.totalorder %s20, 0
        %s281 = scalar_select %p280, %s20, 0
        %s282 = scalar_lea.vmem %s2, %s281
        %s283 = smul.u32 2, %s19
        %p284 = scmp.lt.s32.totalorder %s283, 1
        %s285 = scalar_select %p284, %s283, 1
        %p286 = scmp.lt.s32.totalorder %s20, 0
        %s287 = scalar_select %p286, %s20, 0
        %s288 = sadd.s32 %s287, %s285
        %s289 = smul.addr %s288, 4
        %s290 = scalar_lea.vmem %s3, %s289
        %s291 = smul.u32 2, %s19
        %p293 = scmp.eq.s32.totalorder %s21, 0
        // Predicated region
        $region71: #{alexnet_forward.20} parent=65 // pred_check
          %p294 = pneg %p293
        $region72: #{alexnet_forward.20} parent=65 // pred_check_branch
          %296 = sbr.rel (%p294) target = $region74
        $region73: #{alexnet_forward.20} parent=65 // pred_region
          %297 = vst [vmem:[#allocation2] sm:$0xff] 0.0
          %298 = vst [vmem:[#allocation2 + $0x8] sm:$0xff] 0.0
        $region74: #{alexnet_forward.20} parent=65 // pred_fallthru
          _
        %v299 = vld [vmem:[#allocation2] sm:$0xff]
        %v300 = vld [vmem:[#allocation2 + $0x8] sm:$0xff]
        %v301 = vld [vmem:[%s234] sm:$0xff]
        %v302 = vld [vmem:[%s234 + $0x8] sm:$0xff]
        %v303 = vld [vmem:[%s278] sm:$0xf]
        %v304 = vld [vmem:[%s278 + $0x4] sm:$0xf]
        %v305 = vld [vmem:[%s278 + $0x8] sm:$0xf]
        %v306 = vld [vmem:[%s278 + $0xc] sm:$0xf]
        %v307 = vld [vmem:[%s278 + $0x10] sm:$0xf]
        %v308 = vld [vmem:[%s278 + $0x14] sm:$0xf]
        %v309 = vld [vmem:[%s278 + $0x18] sm:$0xf]
        %v310 = vld [vmem:[%s278 + $0x1c] sm:$0xf]
        %v311 = vld [vmem:[%s278 + $0x20] sm:$0xf]
        %v312 = vld [vmem:[%s278 + $0x24] sm:$0xf]
        %v313 = vld [vmem:[%s278 + $0x28] sm:$0xf]
        %v314 = vld [vmem:[%s278 + $0x2c] sm:$0xf]
        %v315 = vld [vmem:[%s278 + $0x30] sm:$0xf]
        %v316 = vld [vmem:[%s278 + $0x34] sm:$0xf]
        %v317 = vld [vmem:[%s278 + $0x38] sm:$0xf]
        %v318 = vld [vmem:[%s278 + $0x3c] sm:$0xf]
        %v319 = vld [vmem:[%s278 + $0x40] sm:$0xf]
        %v320 = vld [vmem:[%s278 + $0x44] sm:$0xf]
        %v321 = vld [vmem:[%s278 + $0x48] sm:$0xf]
        %v322 = vld [vmem:[%s278 + $0x4c] sm:$0xf]
        %v323 = vld [vmem:[%s278 + $0x50] sm:$0xf]
        %v324 = vld [vmem:[%s278 + $0x54] sm:$0xf]
        %v325 = vld [vmem:[%s278 + $0x58] sm:$0xf]
        %v326 = vld [vmem:[%s278 + $0x5c] sm:$0xf]
        %v327 = vld [vmem:[%s278 + $0x60] sm:$0xf]
        %v328 = vld [vmem:[%s278 + $0x64] sm:$0xf]
        %v329 = vld [vmem:[%s278 + $0x68] sm:$0xf]
        %v330 = vld [vmem:[%s278 + $0x6c] sm:$0xf]
        %v331 = vld [vmem:[%s278 + $0x70] sm:$0xf]
        %v332 = vld [vmem:[%s278 + $0x74] sm:$0xf]
        %v333 = vld [vmem:[%s278 + $0x78] sm:$0xf]
        %v334 = vld [vmem:[%s278 + $0x7c] sm:$0xf]
        %v337 = vunpack.c.l.b16 %v301
        %v338 = vunpack.c.h.b16 %v301
        %v339 = vunpack.c.l.b16 %v302
        %v340 = vunpack.c.h.b16 %v302
        %v341 = vpack.c.b16 %v339, %v337
        %v342 = vpack.c.b16 %v340, %v338
        %v377 = vunpack.c.l.b16 %v303
        %v378 = vunpack.c.l.b16 %v304
        %v379 = vunpack.c.l.b16 %v305
        %v380 = vunpack.c.l.b16 %v306
        %v381 = vunpack.c.l.b16 %v307
        %v382 = vunpack.c.l.b16 %v308
        %v383 = vunpack.c.l.b16 %v309
        %v384 = vunpack.c.l.b16 %v310
        %v385 = vunpack.c.l.b16 %v311
        %v386 = vunpack.c.l.b16 %v312
        %v387 = vunpack.c.l.b16 %v313
        %v388 = vunpack.c.l.b16 %v314
        %v389 = vunpack.c.l.b16 %v315
        %v390 = vunpack.c.l.b16 %v316
        %v391 = vunpack.c.l.b16 %v317
        %v392 = vunpack.c.l.b16 %v318
        %v393 = vunpack.c.l.b16 %v319
        %v394 = vunpack.c.l.b16 %v320
        %v395 = vunpack.c.l.b16 %v321
        %v396 = vunpack.c.l.b16 %v322
        %v397 = vunpack.c.l.b16 %v323
        %v398 = vunpack.c.l.b16 %v324
        %v399 = vunpack.c.l.b16 %v325
        %v400 = vunpack.c.l.b16 %v326
        %v401 = vunpack.c.l.b16 %v327
        %v402 = vunpack.c.l.b16 %v328
        %v403 = vunpack.c.l.b16 %v329
        %v404 = vunpack.c.l.b16 %v330
        %v405 = vunpack.c.l.b16 %v331
        %v406 = vunpack.c.l.b16 %v332
        %v407 = vunpack.c.l.b16 %v333
        %v408 = vunpack.c.l.b16 %v334
        %v409 = vpack.c.b16 %v378, %v377
        %v410 = vpack.c.b16 %v380, %v379
        %v411 = vpack.c.b16 %v382, %v381
        %v412 = vpack.c.b16 %v384, %v383
        %v413 = vpack.c.b16 %v386, %v385
        %v414 = vpack.c.b16 %v388, %v387
        %v415 = vpack.c.b16 %v390, %v389
        %v416 = vpack.c.b16 %v392, %v391
        %v417 = vpack.c.b16 %v394, %v393
        %v418 = vpack.c.b16 %v396, %v395
        %v419 = vpack.c.b16 %v398, %v397
        %v420 = vpack.c.b16 %v400, %v399
        %v421 = vpack.c.b16 %v402, %v401
        %v422 = vpack.c.b16 %v404, %v403
        %v423 = vpack.c.b16 %v406, %v405
        %v424 = vpack.c.b16 %v408, %v407
        %441 = vmatprep.subr.bf16.mxu0 0
        %442 = vmatpush1.bf16.msra.mxu0 %v409
        %443 = vmatprep.subr.bf16.mxu0 0
        %444 = vmatpush1.bf16.msra.mxu0 %v410
        %445 = vmatprep.subr.bf16.mxu0 0
        %446 = vmatpush1.bf16.msra.mxu0 %v411
        %447 = vmatprep.subr.bf16.mxu0 0
        %448 = vmatpush1.bf16.msra.mxu0 %v412
        %449 = vmatprep.subr.bf16.mxu0 0
        %450 = vmatpush1.bf16.msra.mxu0 %v413
        %451 = vmatprep.subr.bf16.mxu0 0
        %452 = vmatpush1.bf16.msra.mxu0 %v414
        %453 = vmatprep.subr.bf16.mxu0 0
        %454 = vmatpush1.bf16.msra.mxu0 %v415
        %455 = vmatprep.subr.bf16.mxu0 0
        %456 = vmatpush1.bf16.msra.mxu0 %v416
        %457 = vmatprep.subr.bf16.mxu0 0
        %458 = vmatpush1.bf16.msra.mxu0 %v417
        %459 = vmatprep.subr.bf16.mxu0 0
        %460 = vmatpush1.bf16.msra.mxu0 %v418
        %461 = vmatprep.subr.bf16.mxu0 0
        %462 = vmatpush1.bf16.msra.mxu0 %v419
        %463 = vmatprep.subr.bf16.mxu0 0
        %464 = vmatpush1.bf16.msra.mxu0 %v420
        %465 = vmatprep.subr.bf16.mxu0 0
        %466 = vmatpush1.bf16.msra.mxu0 %v421
        %467 = vmatprep.subr.bf16.mxu0 0
        %468 = vmatpush1.bf16.msra.mxu0 %v422
        %469 = vmatprep.subr.bf16.mxu0 0
        %470 = vmatpush1.bf16.msra.mxu0 %v423
        %471 = vmatprep.subr.bf16.mxu0 0
        %472 = vmatpush1.bf16.msra.mxu0 %v424
        %473 = vmatprep.mubr.bf16.mxu0 %v342
        %474 = vmatmul.mubr.bf16.gmra.mrb[0].mxu0 %v341
        %v475 = vpop.f32.mrb[0].mxu0
        %v476 = vadd.f32 0.0, %v475
        %v477 = vpop.f32.mrb[0].mxu0
        %v478 = vpop.f32.mrb[0].mxu0
        %v479 = vadd.f32 0.0, %v478
        %v480 = vpop.f32.mrb[0].mxu0
        %481 = vdwg.mxu0
        %v482 = vadd.f32 %v299, %v476
        %v483 = vadd.f32 %v300, %v479
        %484 = vst [vmem:[#allocation2] sm:$0xff] %v482
        %485 = vst [vmem:[#allocation2 + $0x8] sm:$0xff] %v483
        %p486 = scmp.eq.s32.totalorder %s21, 6
        // Predicated region
        $region75: #{alexnet_forward.20} parent=65 // pred_check
          %p487 = pneg %p486
        $region76: #{alexnet_forward.20} parent=65 // pred_check_branch
          %489 = sbr.rel (%p487) target = $region78
        $region77: #{alexnet_forward.20} parent=65 // pred_region
          %v490 = vld [vmem:[#allocation2] sm:$0xff]
          %v491 = vld [vmem:[#allocation2 + $0x8] sm:$0xff]
          %v492 = vld [vmem:[%s282] sm:$0x1]
          %v494 = vlaneseq
          %v495 = vshrl.u32 %v494, 7
          %v496 = vsub.s32 0, %v495
          %v497 = vrot.slane %v492, %v496
          %v499 = vadd.f32 %v490, %v497
          %v500 = vadd.f32 %v491, %v497
          %v501 = vpack.c.bf16 %v500, %v499
          %v503 = vunpack.c.l.b16 %v501
          %v504 = vunpack.c.h.b16 %v501
          %v505 = vpack.c.b16 %v503, %v503
          %v506 = vpack.c.b16 %v504, %v504
          %509 = vst [vmem:[%s290] sm:$0xf] %v505
          %510 = vst [vmem:[%s290 + $0x4] sm:$0xf] %v506
        $region78: #{alexnet_forward.20} parent=65 // pred_fallthru
          _
        %s511 = smul.u32 2, %s19
        %p512 = scmp.lt.s32.totalorder %s511, 1
        %s513 = scalar_select %p512, %s511, 1
        %p514 = scmp.lt.s32.totalorder %s20, 0
        %s515 = scalar_select %p514, %s20, 0
        %s516 = sadd.s32 %s515, %s513
        %s517 = smul.addr %s516, 4
        %s518 = scalar_lea.vmem %s3, %s517
        // Predicated region
        $region79: #{alexnet_forward.20} parent=65 // pred_check
          %p519 = pneg %p135
        $region80: #{alexnet_forward.20} parent=65 // pred_check_branch
          %521 = sbr.rel (%p519) target = $region82
        $region81: #{alexnet_forward.20} parent=65 // pred_region
          %s522 = smul.u32 2, %s19
        $region82: #{alexnet_forward.20} parent=65 // pred_fallthru
          _
        // Predicated region
        $region83: #{alexnet_forward.20} parent=65 // pred_check
          %p523 = pneg %p135
        $region84: #{alexnet_forward.20} parent=65 // pred_check_branch
          %525 = sbr.rel (%p523) target = $region86
        $region85: #{alexnet_forward.20} parent=65 // pred_region
          %s526 = smul.u32 2, %s19
          %p527 = scmp.lt.s32.totalorder %s526, 1
          %s528 = scalar_select %p527, %s526, 1
          %p529 = scmp.lt.s32.totalorder %s20, 0
          %s530 = scalar_select %p529, %s20, 0
          %s531 = sadd.s32 %s530, %s528
          %s532 = smul.addr %s531, 4
          %s533 = scalar_lea.vmem %s3, %s532
        $region86: #{alexnet_forward.20} parent=65 // pred_fallthru
          _
      $region66: #{alexnet_forward.20} parent=5 // pred_fallthru
        _
      %p534 = scmp.le.s32.totalorder 2, %s9
      // Predicated region
      $region87: #{alexnet_forward.20} parent=5 // pred_check
        %p535 = pneg %p534
      $region88: #{alexnet_forward.20} parent=5 // pred_check_branch
        %537 = sbr.rel (%p535) target = $region90
      $region89: #{alexnet_forward.20} parent=5 // pred_region
        %s538 = ssub.s32 %s9, 2
      $region90: #{alexnet_forward.20} parent=5 // pred_fallthru
        _
    $region6: #{alexnet_forward.20} parent=1 // loop_footer
      %s13 = sadd.s32 1, %s9
    $region7: #{alexnet_forward.20} parent=1 // loop_footer_branch
      %8 = sbr.rel target = $region3
    $region8: #{alexnet_forward.20} parent=1 // loop_exit
      _

// kernel: alexnet_forward.23
$region0: #{alexnet_forward.23}
  #allocation0 [shape = 'u32[]', space=smem, size = 0x4, offset = 0x4, fixed_abs, tag = 'smem constant byte address 0x4 - core index']
  #allocation1 [shape = 'u32[144,128]{1,0:T(1,128)}', space=vmem, size = 0x12000, scoped, tag = 'internal scratch']
  #allocation2 [shape = 'f32[16,256]{1,0:T(8,128)}', space=vmem, size = 0x4000, scoped, tag = 'scratch operand']
  %s0 = inlined_call_operand.vmem [shape: bf16[16,256], index: 0, kind: input, shape index: {}]
  %s1 = inlined_call_operand.vmem [shape: bf16[256,2048], index: 1, kind: input, shape index: {}]
  %s2 = inlined_call_operand.vmem [shape: f32[1,2048], index: 2, kind: input, shape index: {}]
  %s3 = inlined_call_operand.vmem [shape: bf16[16,2048], index: 3, kind: output, shape index: {}]
  %s4 = sld [smem:[#allocation0]]
  $region125: #{alexnet_forward.23} parent=0
    _
  %s6 = ssub.s32 1, %s4
  %s7 = scalar_select 0, %s6, %s4
  $region1: #{alexnet_forward.23} parent=0
    #allocation3 [shape = 'u8[262144]{0}', space=vmem, size = 0x40000, scoped, tag = 'input window, operand 1']
    #allocation4 [shape = 'u8[16384]{0}', space=vmem, size = 0x4000, scoped, tag = 'output window, operand 0']
    loop: start=0, step=1, limit=10
    $region2: #{alexnet_forward.23} parent=1 // loop_pre_header
      _
    $region3: #{alexnet_forward.23} parent=1 // loop_header
      %s9 = sphi 0, %s13
      %p10 = scmp.ge.s32.totalorder %s9, 10
      %s16 = sphi 0, %s35
      %s17 = sphi 0, %s31
      %s18 = sphi 0, %s27
      %s19 = sphi 0, %s16
      %s20 = sphi 0, %s17
      %s21 = sphi 0, %s18
      %s22 = sphi 0, %s19
      %s23 = sphi 0, %s20
      %s24 = sphi 0, %s21
      %s40 = sphi 0, %s42
      %s43 = sphi 0, %s40
      %s44 = sphi 0, %s43
      %s60 = sphi 0, %s44
      %s68 = sphi 0, %s70
      %s71 = sphi 0, %s68
      %s72 = sphi 0, %s71
      %s88 = sphi 0, %s72
      %s94 = sphi 0, %s96
      %s97 = sphi 0, %s94
      %s98 = sphi 0, %s97
      %s114 = sphi 0, %s98
      %s122 = sphi 0, %s124
      %s125 = sphi 0, %s122
      %s126 = sphi 0, %s125
      %s142 = sphi 0, %s126
    $region4: #{alexnet_forward.23} parent=1 // loop_header_branch
      %12 = sbr.rel (%p10) target = $region8
    $region5: #{alexnet_forward.23} parent=1 // loop_body
      %s14 = ssub.s32 %s9, 1
      %s15 = ssub.s32 %s9, 2
      %s25 = sadd.s32 1, %s18
      %p26 = scmp.ge.s32.totalorder %s25, 1
      %s27 = scalar_select %p26, 0, %s25
      %s28 = sadd.s32 1, %s17
      %s29 = scalar_select %p26, %s28, %s17
      %p30 = scmp.ge.s32.totalorder %s29, 8
      %s31 = scalar_select %p30, 0, %s29
      %s32 = sadd.s32 1, %s16
      %s33 = scalar_select %p30, %s32, %s16
      %p34 = scmp.ge.s32.totalorder %s33, 1
      %s35 = scalar_select %p34, 0, %s33
      %s36 = ssub.s32 %s16, %s35
      %s37 = ssub.s32 %s18, %s27
      %s38 = sor.u32 %s36, %s37
      %p39 = scmp.eq.s32.totalorder %s38, 0
      %s41 = sadd.s32 %s40, 1
      %s42 = scalar_select %p39, %s40, %s41
      %p45 = pneg %p39
      %p46 = scmp.eq.s32.totalorder %s9, 7
      %p47 = por %p45, %p46
      %p48 = scmp.ne.s32.totalorder %s40, %s43
      %p49 = scmp.eq.s32.totalorder %s9, 0
      %p50 = por %p48, %p49
      %p51 = scmp.ne.s32.totalorder %s40, %s43
      %p52 = scmp.eq.s32.totalorder %s14, 7
      %p53 = por %p51, %p52
      %p54 = scmp.ne.s32.totalorder %s43, %s44
      %p55 = scmp.eq.s32.totalorder %s14, 0
      %p56 = por %p54, %p55
      %p57 = scmp.ne.s32.totalorder %s43, %s44
      %p58 = scmp.eq.s32.totalorder %s15, 7
      %p59 = por %p57, %p58
      %p61 = scmp.ne.s32.totalorder %s44, %s60
      %p62 = scmp.eq.s32.totalorder %s15, 0
      %p63 = por %p61, %p62
      %s64 = ssub.s32 %s18, %s27
      %s65 = ssub.s32 %s17, %s31
      %s66 = sor.u32 %s64, %s65
      %p67 = scmp.eq.s32.totalorder %s66, 0
      %s69 = sadd.s32 %s68, 1
      %s70 = scalar_select %p67, %s68, %s69
      %p73 = pneg %p67
      %p74 = scmp.eq.s32.totalorder %s9, 7
      %p75 = por %p73, %p74
      %p76 = scmp.ne.s32.totalorder %s68, %s71
      %p77 = scmp.eq.s32.totalorder %s9, 0
      %p78 = por %p76, %p77
      %p79 = scmp.ne.s32.totalorder %s68, %s71
      %p80 = scmp.eq.s32.totalorder %s14, 7
      %p81 = por %p79, %p80
      %p82 = scmp.ne.s32.totalorder %s71, %s72
      %p83 = scmp.eq.s32.totalorder %s14, 0
      %p84 = por %p82, %p83
      %p85 = scmp.ne.s32.totalorder %s71, %s72
      %p86 = scmp.eq.s32.totalorder %s15, 7
      %p87 = por %p85, %p86
      %p89 = scmp.ne.s32.totalorder %s72, %s88
      %p90 = scmp.eq.s32.totalorder %s15, 0
      %p91 = por %p89, %p90
      %s92 = ssub.s32 %s17, %s31
      %p93 = scmp.eq.s32.totalorder %s92, 0
      %s95 = sadd.s32 %s94, 1
      %s96 = scalar_select %p93, %s94, %s95
      %p99 = pneg %p93
      %p100 = scmp.eq.s32.totalorder %s9, 7
      %p101 = por %p99, %p100
      %p102 = scmp.ne.s32.totalorder %s94, %s97
      %p103 = scmp.eq.s32.totalorder %s9, 0
      %p104 = por %p102, %p103
      %p105 = scmp.ne.s32.totalorder %s94, %s97
      %p106 = scmp.eq.s32.totalorder %s14, 7
      %p107 = por %p105, %p106
      %p108 = scmp.ne.s32.totalorder %s97, %s98
      %p109 = scmp.eq.s32.totalorder %s14, 0
      %p110 = por %p108, %p109
      %p111 = scmp.ne.s32.totalorder %s97, %s98
      %p112 = scmp.eq.s32.totalorder %s15, 7
      %p113 = por %p111, %p112
      %p115 = scmp.ne.s32.totalorder %s98, %s114
      %p116 = scmp.eq.s32.totalorder %s15, 0
      %p117 = por %p115, %p116
      %s118 = ssub.s32 %s16, %s35
      %s119 = ssub.s32 %s17, %s31
      %s120 = sor.u32 %s118, %s119
      %p121 = scmp.eq.s32.totalorder %s120, 0
      %s123 = sadd.s32 %s122, 1
      %s124 = scalar_select %p121, %s122, %s123
      %p127 = pneg %p121
      %p128 = scmp.eq.s32.totalorder %s9, 7
      %p129 = por %p127, %p128
      %p130 = scmp.ne.s32.totalorder %s122, %s125
      %p131 = scmp.eq.s32.totalorder %s9, 0
      %p132 = por %p130, %p131
      %p133 = scmp.ne.s32.totalorder %s122, %s125
      %p134 = scmp.eq.s32.totalorder %s14, 7
      %p135 = por %p133, %p134
      %p136 = scmp.ne.s32.totalorder %s125, %s126
      %p137 = scmp.eq.s32.totalorder %s14, 0
      %p138 = por %p136, %p137
      %p139 = scmp.ne.s32.totalorder %s125, %s126
      %p140 = scmp.eq.s32.totalorder %s15, 7
      %p141 = por %p139, %p140
      %p143 = scmp.ne.s32.totalorder %s126, %s142
      %p144 = scmp.eq.s32.totalorder %s15, 0
      %p145 = por %p143, %p144
      %p146 = scmp.le.s32.totalorder 1, %s9
      %p147 = scmp.lt.s32.totalorder %s9, 9
      %p148 = pnand %p146, %p147
      %p149 = pneg %p148
      // Predicated region
      $region9: #{alexnet_forward.23} parent=5 // pred_check
        _
      $region10: #{alexnet_forward.23} parent=5 // pred_check_branch
        %151 = sbr.rel (%p148) target = $region12
      $region11: #{alexnet_forward.23} parent=5 // pred_region
        %s152 = ssub.s32 %s9, 1
        // Predicated region
        $region13: #{alexnet_forward.23} parent=11 // pred_check
          %p153 = pneg %p56
        $region14: #{alexnet_forward.23} parent=11 // pred_check_branch
          %155 = sbr.rel (%p153) target = $region16
        $region15: #{alexnet_forward.23} parent=11 // pred_region
          %s156 = smul.u32 2, %s19
          %s157 = smul.u32 2, %s21
          %p158 = scmp.lt.s32.totalorder %s156, 1
          %s159 = scalar_select %p158, %s156, 1
          %p160 = scmp.lt.s32.totalorder %s157, 1
          %s161 = scalar_select %p160, %s157, 1
          %s162 = smul.addr %s159, 2
          %s163 = sadd.s32 %s161, %s162
          %s164 = smul.addr %s163, 4
          %s165 = scalar_lea.vmem %s0, %s164
          %s166 = smul.u32 2, %s19
          %s167 = smul.u32 2, %s21
        $region16: #{alexnet_forward.23} parent=11 // pred_fallthru
          _
      $region12: #{alexnet_forward.23} parent=5 // pred_fallthru
        _
      %p168 = scmp.lt.s32.totalorder %s9, 8
      // Predicated region
      $region17: #{alexnet_forward.23} parent=5 // pred_check
        %p169 = pneg %p168
      $region18: #{alexnet_forward.23} parent=5 // pred_check_branch
        %171 = sbr.rel (%p169) target = $region20
      $region19: #{alexnet_forward.23} parent=5 // pred_region
        // Predicated region
        $region21: #{alexnet_forward.23} parent=19 // pred_check
          %p172 = pneg %p78
        $region22: #{alexnet_forward.23} parent=19 // pred_check_branch
          %174 = sbr.rel (%p172) target = $region24
        $region23: #{alexnet_forward.23} parent=19 // pred_region
          %s175 = sand.u32 %s68, 1
          %s176 = sand.u32 %s68, 1
          %s177 = smul.addr %s176, 256
          %s178 = scalar_lea.vmem [#allocation3], %s177
          %s179 = smul.u32 32, %s18
          %s180 = smul.u32 2, %s17
          %s181 = smul.addr %s179, 16
          %s182 = sadd.s32 %s180, %s181
          %s183 = smul.addr %s182, 4
          %s184 = scalar_lea.vmem %s1, %s183
          // Predicated region
          $region25: #{alexnet_forward.23} parent=23 // pred_check
            _
          $region26: #{alexnet_forward.23} parent=23 // pred_check_branch
            %186 = sbr.rel (0) target = $region28
          $region27: #{alexnet_forward.23} parent=23 // pred_region
            // Predicated region
            $region29: #{alexnet_forward.23} parent=27 // pred_check
              _
            $region30: #{alexnet_forward.23} parent=27 // pred_check_branch
              %188 = sbr.rel (0) target = $region32
            $region31: #{alexnet_forward.23} parent=27 // pred_region
              // Predicated region
              $region44: #{alexnet_forward.23} parent=31 // pred_check
                _
              $region45: #{alexnet_forward.23} parent=31 // pred_check_branch
                %265 = sbr.rel (0) target = $region47
              $region46: #{alexnet_forward.23} parent=31 // pred_region
                loop: start=0, step=1, limit=1
                $region48: #{alexnet_forward.23} parent=46 // loop_pre_header
                  _
                $region49: #{alexnet_forward.23} parent=46 // loop_header
                  %s267 = sphi 0, %s271
                  %p268 = scmp.ge.s32.totalorder %s267, 1
                  %s272 = sphi %s184, %s184
                  %s273 = sphi %s178, %s178
                $region50: #{alexnet_forward.23} parent=46 // loop_header_branch
                  %270 = sbr.rel (%p268) target = $region54
                $region51: #{alexnet_forward.23} parent=46 // loop_body
                  %v274 = vld [vmem:[%s272] sm:$0xff]
                  %275 = vst [vmem:[%s273] sm:$0xff] %v274
                  %v276 = vld [vmem:[%s272 + $0x40] sm:$0xff]
                  %277 = vst [vmem:[%s273 + $0x8] sm:$0xff] %v276
                  %v278 = vld [vmem:[%s272 + $0x80] sm:$0xff]
                  %279 = vst [vmem:[%s273 + $0x10] sm:$0xff] %v278
                  %v280 = vld [vmem:[%s272 + $0xc0] sm:$0xff]
                  %281 = vst [vmem:[%s273 + $0x18] sm:$0xff] %v280
                  %v282 = vld [vmem:[%s272 + $0x100] sm:$0xff]
                  %283 = vst [vmem:[%s273 + $0x20] sm:$0xff] %v282
                  %v284 = vld [vmem:[%s272 + $0x140] sm:$0xff]
                  %285 = vst [vmem:[%s273 + $0x28] sm:$0xff] %v284
                  %v286 = vld [vmem:[%s272 + $0x180] sm:$0xff]
                  %287 = vst [vmem:[%s273 + $0x30] sm:$0xff] %v286
                  %v288 = vld [vmem:[%s272 + $0x1c0] sm:$0xff]
                  %289 = vst [vmem:[%s273 + $0x38] sm:$0xff] %v288
                  %v290 = vld [vmem:[%s272 + $0x200] sm:$0xff]
                  %291 = vst [vmem:[%s273 + $0x40] sm:$0xff] %v290
                  %v292 = vld [vmem:[%s272 + $0x240] sm:$0xff]
                  %293 = vst [vmem:[%s273 + $0x48] sm:$0xff] %v292
                  %v294 = vld [vmem:[%s272 + $0x280] sm:$0xff]
                  %295 = vst [vmem:[%s273 + $0x50] sm:$0xff] %v294
                  %v296 = vld [vmem:[%s272 + $0x2c0] sm:$0xff]
                  %297 = vst [vmem:[%s273 + $0x58] sm:$0xff] %v296
                  %v298 = vld [vmem:[%s272 + $0x300] sm:$0xff]
                  %299 = vst [vmem:[%s273 + $0x60] sm:$0xff] %v298
                  %v300 = vld [vmem:[%s272 + $0x340] sm:$0xff]
                  %301 = vst [vmem:[%s273 + $0x68] sm:$0xff] %v300
                  %v302 = vld [vmem:[%s272 + $0x380] sm:$0xff]
                  %303 = vst [vmem:[%s273 + $0x70] sm:$0xff] %v302
                  %v304 = vld [vmem:[%s272 + $0x3c0] sm:$0xff]
                  %305 = vst [vmem:[%s273 + $0x78] sm:$0xff] %v304
                  %v306 = vld [vmem:[%s272 + $0x400] sm:$0xff]
                  %307 = vst [vmem:[%s273 + $0x80] sm:$0xff] %v306
                  %v308 = vld [vmem:[%s272 + $0x440] sm:$0xff]
                  %309 = vst [vmem:[%s273 + $0x88] sm:$0xff] %v308
                  %v310 = vld [vmem:[%s272 + $0x480] sm:$0xff]
                  %311 = vst [vmem:[%s273 + $0x90] sm:$0xff] %v310
                  %v312 = vld [vmem:[%s272 + $0x4c0] sm:$0xff]
                  %313 = vst [vmem:[%s273 + $0x98] sm:$0xff] %v312
                  %v314 = vld [vmem:[%s272 + $0x500] sm:$0xff]
                  %315 = vst [vmem:[%s273 + $0xa0] sm:$0xff] %v314
                  %v316 = vld [vmem:[%s272 + $0x540] sm:$0xff]
                  %317 = vst [vmem:[%s273 + $0xa8] sm:$0xff] %v316
                  %v318 = vld [vmem:[%s272 + $0x580] sm:$0xff]
                  %319 = vst [vmem:[%s273 + $0xb0] sm:$0xff] %v318
                  %v320 = vld [vmem:[%s272 + $0x5c0] sm:$0xff]
                  %321 = vst [vmem:[%s273 + $0xb8] sm:$0xff] %v320
                  %v322 = vld [vmem:[%s272 + $0x600] sm:$0xff]
                  %323 = vst [vmem:[%s273 + $0xc0] sm:$0xff] %v322
                  %v324 = vld [vmem:[%s272 + $0x640] sm:$0xff]
                  %325 = vst [vmem:[%s273 + $0xc8] sm:$0xff] %v324
                  %v326 = vld [vmem:[%s272 + $0x680] sm:$0xff]
                  %327 = vst [vmem:[%s273 + $0xd0] sm:$0xff] %v326
                  %v328 = vld [vmem:[%s272 + $0x6c0] sm:$0xff]
                  %329 = vst [vmem:[%s273 + $0xd8] sm:$0xff] %v328
                  %v330 = vld [vmem:[%s272 + $0x700] sm:$0xff]
                  %331 = vst [vmem:[%s273 + $0xe0] sm:$0xff] %v330
                  %v332 = vld [vmem:[%s272 + $0x740] sm:$0xff]
                  %333 = vst [vmem:[%s273 + $0xe8] sm:$0xff] %v332
                  %v334 = vld [vmem:[%s272 + $0x780] sm:$0xff]
                  %335 = vst [vmem:[%s273 + $0xf0] sm:$0xff] %v334
                  %v336 = vld [vmem:[%s272 + $0x7c0] sm:$0xff]
                  %337 = vst [vmem:[%s273 + $0xf8] sm:$0xff] %v336
                $region52: #{alexnet_forward.23} parent=46 // loop_footer
                  %s271 = sadd.s32 1, %s267
                $region53: #{alexnet_forward.23} parent=46 // loop_footer_branch
                  %266 = sbr.rel target = $region49
                $region54: #{alexnet_forward.23} parent=46 // loop_exit
                  _
              $region47: #{alexnet_forward.23} parent=31 // pred_fallthru
                _
              // Predicated region
              $region55: #{alexnet_forward.23} parent=31 // pred_check
                _
              $region56: #{alexnet_forward.23} parent=31 // pred_check_branch
                %339 = sbr.rel target = $region58
              $region57: #{alexnet_forward.23} parent=31 // pred_region
                _
              $region58: #{alexnet_forward.23} parent=31 // pred_fallthru
                _
            $region32: #{alexnet_forward.23} parent=27 // pred_fallthru
              _
            // Predicated region
            $region33: #{alexnet_forward.23} parent=27 // pred_check
              _
            $region34: #{alexnet_forward.23} parent=27 // pred_check_branch
              %190 = sbr.rel target = $region36
            $region35: #{alexnet_forward.23} parent=27 // pred_region
              loop: start=0, step=1, limit=1
              $region37: #{alexnet_forward.23} parent=35 // loop_pre_header
                _
              $region38: #{alexnet_forward.23} parent=35 // loop_header
                %s193 = sphi 0, %s197
                %p194 = scmp.ge.s32.totalorder %s193, 1
                %s198 = sphi %s184, %s184
                %s199 = sphi %s178, %s178
              $region39: #{alexnet_forward.23} parent=35 // loop_header_branch
                %196 = sbr.rel (%p194) target = $region43
              $region40: #{alexnet_forward.23} parent=35 // loop_body
                %v200 = vld [vmem:[%s198] sm:$0xff]
                %201 = vst [vmem:[%s199] sm:$0xff] %v200
                %v202 = vld [vmem:[%s198 + $0x40] sm:$0xff]
                %203 = vst [vmem:[%s199 + $0x8] sm:$0xff] %v202
                %v204 = vld [vmem:[%s198 + $0x80] sm:$0xff]
                %205 = vst [vmem:[%s199 + $0x10] sm:$0xff] %v204
                %v206 = vld [vmem:[%s198 + $0xc0] sm:$0xff]
                %207 = vst [vmem:[%s199 + $0x18] sm:$0xff] %v206
                %v208 = vld [vmem:[%s198 + $0x100] sm:$0xff]
                %209 = vst [vmem:[%s199 + $0x20] sm:$0xff] %v208
                %v210 = vld [vmem:[%s198 + $0x140] sm:$0xff]
                %211 = vst [vmem:[%s199 + $0x28] sm:$0xff] %v210
                %v212 = vld [vmem:[%s198 + $0x180] sm:$0xff]
                %213 = vst [vmem:[%s199 + $0x30] sm:$0xff] %v212
                %v214 = vld [vmem:[%s198 + $0x1c0] sm:$0xff]
                %215 = vst [vmem:[%s199 + $0x38] sm:$0xff] %v214
                %v216 = vld [vmem:[%s198 + $0x200] sm:$0xff]
                %217 = vst [vmem:[%s199 + $0x40] sm:$0xff] %v216
                %v218 = vld [vmem:[%s198 + $0x240] sm:$0xff]
                %219 = vst [vmem:[%s199 + $0x48] sm:$0xff] %v218
                %v220 = vld [vmem:[%s198 + $0x280] sm:$0xff]
                %221 = vst [vmem:[%s199 + $0x50] sm:$0xff] %v220
                %v222 = vld [vmem:[%s198 + $0x2c0] sm:$0xff]
                %223 = vst [vmem:[%s199 + $0x58] sm:$0xff] %v222
                %v224 = vld [vmem:[%s198 + $0x300] sm:$0xff]
                %225 = vst [vmem:[%s199 + $0x60] sm:$0xff] %v224
                %v226 = vld [vmem:[%s198 + $0x340] sm:$0xff]
                %227 = vst [vmem:[%s199 + $0x68] sm:$0xff] %v226
                %v228 = vld [vmem:[%s198 + $0x380] sm:$0xff]
                %229 = vst [vmem:[%s199 + $0x70] sm:$0xff] %v228
                %v230 = vld [vmem:[%s198 + $0x3c0] sm:$0xff]
                %231 = vst [vmem:[%s199 + $0x78] sm:$0xff] %v230
                %v232 = vld [vmem:[%s198 + $0x400] sm:$0xff]
                %233 = vst [vmem:[%s199 + $0x80] sm:$0xff] %v232
                %v234 = vld [vmem:[%s198 + $0x440] sm:$0xff]
                %235 = vst [vmem:[%s199 + $0x88] sm:$0xff] %v234
                %v236 = vld [vmem:[%s198 + $0x480] sm:$0xff]
                %237 = vst [vmem:[%s199 + $0x90] sm:$0xff] %v236
                %v238 = vld [vmem:[%s198 + $0x4c0] sm:$0xff]
                %239 = vst [vmem:[%s199 + $0x98] sm:$0xff] %v238
                %v240 = vld [vmem:[%s198 + $0x500] sm:$0xff]
                %241 = vst [vmem:[%s199 + $0xa0] sm:$0xff] %v240
                %v242 = vld [vmem:[%s198 + $0x540] sm:$0xff]
                %243 = vst [vmem:[%s199 + $0xa8] sm:$0xff] %v242
                %v244 = vld [vmem:[%s198 + $0x580] sm:$0xff]
                %245 = vst [vmem:[%s199 + $0xb0] sm:$0xff] %v244
                %v246 = vld [vmem:[%s198 + $0x5c0] sm:$0xff]
                %247 = vst [vmem:[%s199 + $0xb8] sm:$0xff] %v246
                %v248 = vld [vmem:[%s198 + $0x600] sm:$0xff]
                %249 = vst [vmem:[%s199 + $0xc0] sm:$0xff] %v248
                %v250 = vld [vmem:[%s198 + $0x640] sm:$0xff]
                %251 = vst [vmem:[%s199 + $0xc8] sm:$0xff] %v250
                %v252 = vld [vmem:[%s198 + $0x680] sm:$0xff]
                %253 = vst [vmem:[%s199 + $0xd0] sm:$0xff] %v252
                %v254 = vld [vmem:[%s198 + $0x6c0] sm:$0xff]
                %255 = vst [vmem:[%s199 + $0xd8] sm:$0xff] %v254
                %v256 = vld [vmem:[%s198 + $0x700] sm:$0xff]
                %257 = vst [vmem:[%s199 + $0xe0] sm:$0xff] %v256
                %v258 = vld [vmem:[%s198 + $0x740] sm:$0xff]
                %259 = vst [vmem:[%s199 + $0xe8] sm:$0xff] %v258
                %v260 = vld [vmem:[%s198 + $0x780] sm:$0xff]
                %261 = vst [vmem:[%s199 + $0xf0] sm:$0xff] %v260
                %v262 = vld [vmem:[%s198 + $0x7c0] sm:$0xff]
                %263 = vst [vmem:[%s199 + $0xf8] sm:$0xff] %v262
              $region41: #{alexnet_forward.23} parent=35 // loop_footer
                %s197 = sadd.s32 1, %s193
              $region42: #{alexnet_forward.23} parent=35 // loop_footer_branch
                %192 = sbr.rel target = $region38
              $region43: #{alexnet_forward.23} parent=35 // loop_exit
                _
            $region36: #{alexnet_forward.23} parent=27 // pred_fallthru
              _
          $region28: #{alexnet_forward.23} parent=23 // pred_fallthru
            _
          %340 = vnop
        $region24: #{alexnet_forward.23} parent=19 // pred_fallthru
          _
        // Predicated region
        $region59: #{alexnet_forward.23} parent=19 // pred_check
          %p341 = pneg %p104
        $region60: #{alexnet_forward.23} parent=19 // pred_check_branch
          %343 = sbr.rel (%p341) target = $region62
        $region61: #{alexnet_forward.23} parent=19 // pred_region
          %s344 = smul.u32 2, %s17
          %p345 = scmp.lt.s32.totalorder %s344, 15
          %s346 = scalar_select %p345, %s344, 15
          %s347 = scalar_lea.vmem %s2, %s346
          %s348 = smul.u32 2, %s17
        $region62: #{alexnet_forward.23} parent=19 // pred_fallthru
          _
      $region20: #{alexnet_forward.23} parent=5 // pred_fallthru
        _
      %p349 = scmp.le.s32.totalorder 1, %s9
      %p350 = scmp.lt.s32.totalorder %s9, 9
      %p351 = pnand %p349, %p350
      %p352 = pneg %p351
      // Predicated region
      $region63: #{alexnet_forward.23} parent=5 // pred_check
        _
      $region64: #{alexnet_forward.23} parent=5 // pred_check_branch
        %354 = sbr.rel (%p351) target = $region66
      $region65: #{alexnet_forward.23} parent=5 // pred_region
        %s355 = ssub.s32 %s9, 1
        %s356 = sand.u32 %s71, 1
        %s357 = sand.u32 %s71, 1
        %s358 = smul.addr %s357, 256
        %s359 = scalar_lea.vmem [#allocation3], %s358
        // Predicated region
        $region67: #{alexnet_forward.23} parent=65 // pred_check
          %p360 = pneg %p84
        $region68: #{alexnet_forward.23} parent=65 // pred_check_branch
          %362 = sbr.rel (%p360) target = $region70
        $region69: #{alexnet_forward.23} parent=65 // pred_region
          _
        $region70: #{alexnet_forward.23} parent=65 // pred_fallthru
          _
        %s363 = smul.u32 2, %s19
        %s364 = smul.u32 2, %s21
        %p365 = scmp.lt.s32.totalorder %s363, 1
        %s366 = scalar_select %p365, %s363, 1
        %p367 = scmp.lt.s32.totalorder %s364, 1
        %s368 = scalar_select %p367, %s364, 1
        %s369 = smul.addr %s366, 2
        %s370 = sadd.s32 %s368, %s369
        %s371 = smul.addr %s370, 4
        %s372 = scalar_lea.vmem %s0, %s371
        %p373 = pneg %p56
        %p374 = pneg %p53
        %s375 = sand.u32 %s71, 1
        %s376 = sand.u32 %s71, 1
        %s377 = smul.addr %s376, 256
        %s378 = scalar_lea.vmem [#allocation3], %s377
        %p379 = pneg %p84
        %p380 = pneg %p81
        %s381 = smul.u32 2, %s20
        %p382 = scmp.lt.s32.totalorder %s381, 15
        %s383 = scalar_select %p382, %s381, 15
        %s384 = scalar_lea.vmem %s2, %s383
        %p385 = pneg %p110
        %p386 = pneg %p107
        %p387 = pneg %p138
        %p388 = pneg %p135
        %s389 = sand.u32 %s125, 1
        %s390 = sand.u32 %s125, 1
        %s391 = smul.addr %s390, 16
        %s392 = scalar_lea.vmem [#allocation4], %s391
        %s393 = smul.u32 2, %s19
        %s394 = smul.u32 2, %s21
        %p395 = scmp.lt.s32.totalorder %s393, 1
        %s396 = scalar_select %p395, %s393, 1
        %p397 = scmp.lt.s32.totalorder %s394, 1
        %s398 = scalar_select %p397, %s394, 1
        %s399 = smul.addr %s396, 2
        %s400 = sadd.s32 %s398, %s399
        %s401 = smul.addr %s400, 4
        %s402 = scalar_lea.vmem %s0, %s401
        %s403 = smul.u32 2, %s19
        %s404 = smul.u32 2, %s21
        %s405 = smul.u32 32, %s21
        %s406 = smul.u32 2, %s20
        %s407 = smul.u32 2, %s20
        %p408 = scmp.lt.s32.totalorder %s407, 15
        %s409 = scalar_select %p408, %s407, 15
        %s410 = scalar_lea.vmem %s2, %s409
        %s411 = smul.u32 2, %s20
        %s412 = smul.u32 2, %s19
        %s413 = smul.u32 2, %s20
        %p414 = scmp.eq.s32.totalorder %s21, 0
        // Predicated region
        $region71: #{alexnet_forward.23} parent=65 // pred_check
          %p415 = pneg %p414
        $region72: #{alexnet_forward.23} parent=65 // pred_check_branch
          %417 = sbr.rel (%p415) target = $region74
        $region73: #{alexnet_forward.23} parent=65 // pred_region
          %418 = vst [vmem:[#allocation2] sm:$0xff] 0.0
          %419 = vst [vmem:[#allocation2 + $0x8] sm:$0xff] 0.0
          %420 = vst [vmem:[#allocation2 + $0x10] sm:$0xff] 0.0
          %421 = vst [vmem:[#allocation2 + $0x18] sm:$0xff] 0.0
        $region74: #{alexnet_forward.23} parent=65 // pred_fallthru
          _
        %v422 = vld [vmem:[#allocation2] sm:$0xff]
        %v423 = vld [vmem:[#allocation2 + $0x8] sm:$0xff]
        %v424 = vld [vmem:[#allocation2 + $0x10] sm:$0xff]
        %v425 = vld [vmem:[#allocation2 + $0x18] sm:$0xff]
        %v426 = vld [vmem:[%s402] sm:$0xff]
        %v427 = vld [vmem:[%s402 + $0x8] sm:$0xff]
        %v428 = vld [vmem:[%s359] sm:$0xff]
        %v429 = vld [vmem:[%s359 + $0x8] sm:$0xff]
        %v430 = vld [vmem:[%s359 + $0x10] sm:$0xff]
        %v431 = vld [vmem:[%s359 + $0x18] sm:$0xff]
        %v432 = vld [vmem:[%s359 + $0x20] sm:$0xff]
        %v433 = vld [vmem:[%s359 + $0x28] sm:$0xff]
        %v434 = vld [vmem:[%s359 + $0x30] sm:$0xff]
        %v435 = vld [vmem:[%s359 + $0x38] sm:$0xff]
        %v436 = vld [vmem:[%s359 + $0x40] sm:$0xff]
        %v437 = vld [vmem:[%s359 + $0x48] sm:$0xff]
        %v438 = vld [vmem:[%s359 + $0x50] sm:$0xff]
        %v439 = vld [vmem:[%s359 + $0x58] sm:$0xff]
        %v440 = vld [vmem:[%s359 + $0x60] sm:$0xff]
        %v441 = vld [vmem:[%s359 + $0x68] sm:$0xff]
        %v442 = vld [vmem:[%s359 + $0x70] sm:$0xff]
        %v443 = vld [vmem:[%s359 + $0x78] sm:$0xff]
        %v444 = vld [vmem:[%s359 + $0x80] sm:$0xff]
        %v445 = vld [vmem:[%s359 + $0x88] sm:$0xff]
        %v446 = vld [vmem:[%s359 + $0x90] sm:$0xff]
        %v447 = vld [vmem:[%s359 + $0x98] sm:$0xff]
        %v448 = vld [vmem:[%s359 + $0xa0] sm:$0xff]
        %v449 = vld [vmem:[%s359 + $0xa8] sm:$0xff]
        %v450 = vld [vmem:[%s359 + $0xb0] sm:$0xff]
        %v451 = vld [vmem:[%s359 + $0xb8] sm:$0xff]
        %v452 = vld [vmem:[%s359 + $0xc0] sm:$0xff]
        %v453 = vld [vmem:[%s359 + $0xc8] sm:$0xff]
        %v454 = vld [vmem:[%s359 + $0xd0] sm:$0xff]
        %v455 = vld [vmem:[%s359 + $0xd8] sm:$0xff]
        %v456 = vld [vmem:[%s359 + $0xe0] sm:$0xff]
        %v457 = vld [vmem:[%s359 + $0xe8] sm:$0xff]
        %v458 = vld [vmem:[%s359 + $0xf0] sm:$0xff]
        %v459 = vld [vmem:[%s359 + $0xf8] sm:$0xff]
        %v462 = vunpack.c.l.b16 %v426
        %v463 = vunpack.c.h.b16 %v426
        %v464 = vunpack.c.l.b16 %v427
        %v465 = vunpack.c.h.b16 %v427
        %v466 = vpack.c.b16 %v464, %v462
        %v467 = vpack.c.b16 %v465, %v463
        %v502 = vunpack.c.l.b16 %v428
        %v503 = vunpack.c.h.b16 %v428
        %v504 = vunpack.c.l.b16 %v429
        %v505 = vunpack.c.h.b16 %v429
        %v506 = vunpack.c.l.b16 %v430
        %v507 = vunpack.c.h.b16 %v430
        %v508 = vunpack.c.l.b16 %v431
        %v509 = vunpack.c.h.b16 %v431
        %v510 = vunpack.c.l.b16 %v432
        %v511 = vunpack.c.h.b16 %v432
        %v512 = vunpack.c.l.b16 %v433
        %v513 = vunpack.c.h.b16 %v433
        %v514 = vunpack.c.l.b16 %v434
        %v515 = vunpack.c.h.b16 %v434
        %v516 = vunpack.c.l.b16 %v435
        %v517 = vunpack.c.h.b16 %v435
        %v518 = vunpack.c.l.b16 %v436
        %v519 = vunpack.c.h.b16 %v436
        %v520 = vunpack.c.l.b16 %v437
        %v521 = vunpack.c.h.b16 %v437
        %v522 = vunpack.c.l.b16 %v438
        %v523 = vunpack.c.h.b16 %v438
        %v524 = vunpack.c.l.b16 %v439
        %v525 = vunpack.c.h.b16 %v439
        %v526 = vunpack.c.l.b16 %v440
        %v527 = vunpack.c.h.b16 %v440
        %v528 = vunpack.c.l.b16 %v441
        %v529 = vunpack.c.h.b16 %v441
        %v530 = vunpack.c.l.b16 %v442
        %v531 = vunpack.c.h.b16 %v442
        %v532 = vunpack.c.l.b16 %v443
        %v533 = vunpack.c.h.b16 %v443
        %v534 = vunpack.c.l.b16 %v444
        %v535 = vunpack.c.h.b16 %v444
        %v536 = vunpack.c.l.b16 %v445
        %v537 = vunpack.c.h.b16 %v445
        %v538 = vunpack.c.l.b16 %v446
        %v539 = vunpack.c.h.b16 %v446
        %v540 = vunpack.c.l.b16 %v447
        %v541 = vunpack.c.h.b16 %v447
        %v542 = vunpack.c.l.b16 %v448
        %v543 = vunpack.c.h.b16 %v448
        %v544 = vunpack.c.l.b16 %v449
        %v545 = vunpack.c.h.b16 %v449
        %v546 = vunpack.c.l.b16 %v450
        %v547 = vunpack.c.h.b16 %v450
        %v548 = vunpack.c.l.b16 %v451
        %v549 = vunpack.c.h.b16 %v451
        %v550 = vunpack.c.l.b16 %v452
        %v551 = vunpack.c.h.b16 %v452
        %v552 = vunpack.c.l.b16 %v453
        %v553 = vunpack.c.h.b16 %v453
        %v554 = vunpack.c.l.b16 %v454
        %v555 = vunpack.c.h.b16 %v454
        %v556 = vunpack.c.l.b16 %v455
        %v557 = vunpack.c.h.b16 %v455
        %v558 = vunpack.c.l.b16 %v456
        %v559 = vunpack.c.h.b16 %v456
        %v560 = vunpack.c.l.b16 %v457
        %v561 = vunpack.c.h.b16 %v457
        %v562 = vunpack.c.l.b16 %v458
        %v563 = vunpack.c.h.b16 %v458
        %v564 = vunpack.c.l.b16 %v459
        %v565 = vunpack.c.h.b16 %v459
        %v566 = vpack.c.b16 %v504, %v502
        %v567 = vpack.c.b16 %v505, %v503
        %v568 = vpack.c.b16 %v508, %v506
        %v569 = vpack.c.b16 %v509, %v507
        %v570 = vpack.c.b16 %v512, %v510
        %v571 = vpack.c.b16 %v513, %v511
        %v572 = vpack.c.b16 %v516, %v514
        %v573 = vpack.c.b16 %v517, %v515
        %v574 = vpack.c.b16 %v520, %v518
        %v575 = vpack.c.b16 %v521, %v519
        %v576 = vpack.c.b16 %v524, %v522
        %v577 = vpack.c.b16 %v525, %v523
        %v578 = vpack.c.b16 %v528, %v526
        %v579 = vpack.c.b16 %v529, %v527
        %v580 = vpack.c.b16 %v532, %v530
        %v581 = vpack.c.b16 %v533, %v531
        %v582 = vpack.c.b16 %v536, %v534
        %v583 = vpack.c.b16 %v537, %v535
        %v584 = vpack.c.b16 %v540, %v538
        %v585 = vpack.c.b16 %v541, %v539
        %v586 = vpack.c.b16 %v544, %v542
        %v587 = vpack.c.b16 %v545, %v543
        %v588 = vpack.c.b16 %v548, %v546
        %v589 = vpack.c.b16 %v549, %v547
        %v590 = vpack.c.b16 %v552, %v550
        %v591 = vpack.c.b16 %v553, %v551
        %v592 = vpack.c.b16 %v556, %v554
        %v593 = vpack.c.b16 %v557, %v555
        %v594 = vpack.c.b16 %v560, %v558
        %v595 = vpack.c.b16 %v561, %v559
        %v596 = vpack.c.b16 %v564, %v562
        %v597 = vpack.c.b16 %v565, %v563
        %630 = vmatprep.subr.bf16.mxu0 %v567
        %631 = vmatpush1.bf16.msra.mxu0 %v566
        %632 = vmatprep.subr.bf16.mxu0 %v569
        %633 = vmatpush1.bf16.msra.mxu0 %v568
        %634 = vmatprep.subr.bf16.mxu0 %v571
        %635 = vmatpush1.bf16.msra.mxu0 %v570
        %636 = vmatprep.subr.bf16.mxu0 %v573
        %637 = vmatpush1.bf16.msra.mxu0 %v572
        %638 = vmatprep.subr.bf16.mxu0 %v575
        %639 = vmatpush1.bf16.msra.mxu0 %v574
        %640 = vmatprep.subr.bf16.mxu0 %v577
        %641 = vmatpush1.bf16.msra.mxu0 %v576
        %642 = vmatprep.subr.bf16.mxu0 %v579
        %643 = vmatpush1.bf16.msra.mxu0 %v578
        %644 = vmatprep.subr.bf16.mxu0 %v581
        %645 = vmatpush1.bf16.msra.mxu0 %v580
        %646 = vmatprep.subr.bf16.mxu0 %v583
        %647 = vmatpush1.bf16.msra.mxu0 %v582
        %648 = vmatprep.subr.bf16.mxu0 %v585
        %649 = vmatpush1.bf16.msra.mxu0 %v584
        %650 = vmatprep.subr.bf16.mxu0 %v587
        %651 = vmatpush1.bf16.msra.mxu0 %v586
        %652 = vmatprep.subr.bf16.mxu0 %v589
        %653 = vmatpush1.bf16.msra.mxu0 %v588
        %654 = vmatprep.subr.bf16.mxu0 %v591
        %655 = vmatpush1.bf16.msra.mxu0 %v590
        %656 = vmatprep.subr.bf16.mxu0 %v593
        %657 = vmatpush1.bf16.msra.mxu0 %v592
        %658 = vmatprep.subr.bf16.mxu0 %v595
        %659 = vmatpush1.bf16.msra.mxu0 %v594
        %660 = vmatprep.subr.bf16.mxu0 %v597
        %661 = vmatpush1.bf16.msra.mxu0 %v596
        %662 = vmatprep.mubr.bf16.mxu0 %v467
        %663 = vmatmul.mubr.bf16.gmra.mrb[0].mxu0 %v466
        %v664 = vpop.f32.mrb[0].mxu0
        %v665 = vadd.f32 0.0, %v664
        %v666 = vpop.f32.mrb[0].mxu0
        %v667 = vadd.f32 0.0, %v666
        %v668 = vpop.f32.mrb[0].mxu0
        %v669 = vadd.f32 0.0, %v668
        %v670 = vpop.f32.mrb[0].mxu0
        %v671 = vadd.f32 0.0, %v670
        %672 = vdwg.mxu0
        %v673 = vadd.f32 %v422, %v665
        %v674 = vadd.f32 %v423, %v667
        %v675 = vadd.f32 %v424, %v669
        %v676 = vadd.f32 %v425, %v671
        %677 = vst [vmem:[#allocation2] sm:$0xff] %v673
        %678 = vst [vmem:[#allocation2 + $0x8] sm:$0xff] %v674
        %679 = vst [vmem:[#allocation2 + $0x10] sm:$0xff] %v675
        %680 = vst [vmem:[#allocation2 + $0x18] sm:$0xff] %v676
        // Predicated region
        $region75: #{alexnet_forward.23} parent=65 // pred_check
          %p681 = pneg %p414
        $region76: #{alexnet_forward.23} parent=65 // pred_check_branch
          %683 = sbr.rel (%p681) target = $region78
        $region77: #{alexnet_forward.23} parent=65 // pred_region
          %v684 = vld [vmem:[#allocation2] sm:$0xff]
          %v685 = vld [vmem:[#allocation2 + $0x8] sm:$0xff]
          %v686 = vld [vmem:[#allocation2 + $0x10] sm:$0xff]
          %v687 = vld [vmem:[#allocation2 + $0x18] sm:$0xff]
          %v688 = vld [vmem:[%s410] sm:$0x3]
          %v690 = vlaneseq
          %v691 = vshrl.u32 %v690, 7
          %v692 = vsub.s32 0, %v691
          %v693 = vrot.slane %v688, %v692
          %v694 = vlaneseq
          %v695 = vshrl.u32 %v694, 7
          %v696 = vsub.s32 1, %v695
          %v697 = vrot.slane %v688, %v696
          %v700 = vadd.f32 %v684, %v693
          %v701 = vadd.f32 %v685, %v697
          %v702 = vadd.f32 %v686, %v693
          %v703 = vadd.f32 %v687, %v697
          %v704 = vmax.f32 %v700, 0.0
          %v705 = vmax.f32 %v701, 0.0
          %v706 = vmax.f32 %v702, 0.0
          %v707 = vmax.f32 %v703, 0.0
          %v708 = vpack.c.bf16 %v706, %v704
          %v709 = vpack.c.bf16 %v707, %v705
          %v712 = vunpack.c.l.b16 %v708
          %v713 = vunpack.c.l.b16 %v709
          %v714 = vunpack.c.h.b16 %v708
          %v715 = vunpack.c.h.b16 %v709
          %v716 = vpack.c.b16 %v713, %v712
          %v717 = vpack.c.b16 %v715, %v714
          %720 = vst [vmem:[%s392] sm:$0xff] %v716
          %721 = vst [vmem:[%s392 + $0x8] sm:$0xff] %v717
        $region78: #{alexnet_forward.23} parent=65 // pred_fallthru
          _
        %s722 = sand.u32 %s125, 1
        %s723 = sand.u32 %s125, 1
        %s724 = smul.addr %s723, 16
        %s725 = scalar_lea.vmem [#allocation4], %s724
        // Predicated region
        $region79: #{alexnet_forward.23} parent=65 // pred_check
          %p726 = pneg %p135
        $region80: #{alexnet_forward.23} parent=65 // pred_check_branch
          %728 = sbr.rel (%p726) target = $region82
        $region81: #{alexnet_forward.23} parent=65 // pred_region
          %s729 = smul.u32 2, %s19
          %s730 = smul.u32 2, %s20
          %s731 = smul.addr %s729, 16
          %s732 = sadd.s32 %s730, %s731
          %s733 = smul.addr %s732, 4
          %s734 = scalar_lea.vmem %s3, %s733
          // Predicated region
          $region83: #{alexnet_forward.23} parent=81 // pred_check
            _
          $region84: #{alexnet_forward.23} parent=81 // pred_check_branch
            %736 = sbr.rel (0) target = $region86
          $region85: #{alexnet_forward.23} parent=81 // pred_region
            // Predicated region
            $region87: #{alexnet_forward.23} parent=85 // pred_check
              _
            $region88: #{alexnet_forward.23} parent=85 // pred_check_branch
              %738 = sbr.rel (0) target = $region90
            $region89: #{alexnet_forward.23} parent=85 // pred_region
              // Predicated region
              $region102: #{alexnet_forward.23} parent=89 // pred_check
                _
              $region103: #{alexnet_forward.23} parent=89 // pred_check_branch
                %755 = sbr.rel (0) target = $region105
              $region104: #{alexnet_forward.23} parent=89 // pred_region
                loop: start=0, step=1, limit=1
                $region106: #{alexnet_forward.23} parent=104 // loop_pre_header
                  _
                $region107: #{alexnet_forward.23} parent=104 // loop_header
                  %s757 = sphi 0, %s761
                  %p758 = scmp.ge.s32.totalorder %s757, 1
                  %s762 = sphi %s725, %s725
                  %s763 = sphi %s734, %s734
                $region108: #{alexnet_forward.23} parent=104 // loop_header_branch
                  %760 = sbr.rel (%p758) target = $region112
                $region109: #{alexnet_forward.23} parent=104 // loop_body
                  %v764 = vld [vmem:[%s762] sm:$0xff]
                  %765 = vst [vmem:[%s763] sm:$0xff] %v764
                  %v766 = vld [vmem:[%s762 + $0x8] sm:$0xff]
                  %767 = vst [vmem:[%s763 + $0x40] sm:$0xff] %v766
                $region110: #{alexnet_forward.23} parent=104 // loop_footer
                  %s761 = sadd.s32 1, %s757
                $region111: #{alexnet_forward.23} parent=104 // loop_footer_branch
                  %756 = sbr.rel target = $region107
                $region112: #{alexnet_forward.23} parent=104 // loop_exit
                  _
              $region105: #{alexnet_forward.23} parent=89 // pred_fallthru
                _
              // Predicated region
              $region113: #{alexnet_forward.23} parent=89 // pred_check
                _
              $region114: #{alexnet_forward.23} parent=89 // pred_check_branch
                %769 = sbr.rel target = $region116
              $region115: #{alexnet_forward.23} parent=89 // pred_region
                _
              $region116: #{alexnet_forward.23} parent=89 // pred_fallthru
                _
            $region90: #{alexnet_forward.23} parent=85 // pred_fallthru
              _
            // Predicated region
            $region91: #{alexnet_forward.23} parent=85 // pred_check
              _
            $region92: #{alexnet_forward.23} parent=85 // pred_check_branch
              %740 = sbr.rel target = $region94
            $region93: #{alexnet_forward.23} parent=85 // pred_region
              loop: start=0, step=1, limit=1
              $region95: #{alexnet_forward.23} parent=93 // loop_pre_header
                _
              $region96: #{alexnet_forward.23} parent=93 // loop_header
                %s743 = sphi 0, %s747
                %p744 = scmp.ge.s32.totalorder %s743, 1
                %s748 = sphi %s725, %s725
                %s749 = sphi %s734, %s734
              $region97: #{alexnet_forward.23} parent=93 // loop_header_branch
                %746 = sbr.rel (%p744) target = $region101
              $region98: #{alexnet_forward.23} parent=93 // loop_body
                %v750 = vld [vmem:[%s748] sm:$0xff]
                %751 = vst [vmem:[%s749] sm:$0xff] %v750
                %v752 = vld [vmem:[%s748 + $0x8] sm:$0xff]
                %753 = vst [vmem:[%s749 + $0x40] sm:$0xff] %v752
              $region99: #{alexnet_forward.23} parent=93 // loop_footer
                %s747 = sadd.s32 1, %s743
              $region100: #{alexnet_forward.23} parent=93 // loop_footer_branch
                %742 = sbr.rel target = $region96
              $region101: #{alexnet_forward.23} parent=93 // loop_exit
                _
            $region94: #{alexnet_forward.23} parent=85 // pred_fallthru
              _
          $region86: #{alexnet_forward.23} parent=81 // pred_fallthru
            _
          %770 = vnop
        $region82: #{alexnet_forward.23} parent=65 // pred_fallthru
          _
      $region66: #{alexnet_forward.23} parent=5 // pred_fallthru
        _
      %p771 = scmp.le.s32.totalorder 2, %s9
      // Predicated region
      $region117: #{alexnet_forward.23} parent=5 // pred_check
        %p772 = pneg %p771
      $region118: #{alexnet_forward.23} parent=5 // pred_check_branch
        %774 = sbr.rel (%p772) target = $region120
      $region119: #{alexnet_forward.23} parent=5 // pred_region
        %s775 = ssub.s32 %s9, 2
        // Predicated region
        $region121: #{alexnet_forward.23} parent=119 // pred_check
          %p776 = pneg %p141
        $region122: #{alexnet_forward.23} parent=119 // pred_check_branch
          %778 = sbr.rel (%p776) target = $region124
        $region123: #{alexnet_forward.23} parent=119 // pred_region
          %s779 = sand.u32 %s126, 1
          %s780 = sand.u32 %s126, 1
          %s781 = smul.addr %s780, 16
          %s782 = scalar_lea.vmem [#allocation4], %s781
        $region124: #{alexnet_forward.23} parent=119 // pred_fallthru
          _
      $region120: #{alexnet_forward.23} parent=5 // pred_fallthru
        _
    $region6: #{alexnet_forward.23} parent=1 // loop_footer
      %s13 = sadd.s32 1, %s9
    $region7: #{alexnet_forward.23} parent=1 // loop_footer_branch
      %8 = sbr.rel target = $region3
    $region8: #{alexnet_forward.23} parent=1 // loop_exit
      _

// kernel: alexnet_forward.24
$region0: #{alexnet_forward.24}
  #allocation0 [shape = 'u32[]', space=smem, size = 0x4, offset = 0x4, fixed_abs, tag = 'smem constant byte address 0x4 - core index']
  #allocation1 [shape = 'u32[144,128]{1,0:T(1,128)}', space=vmem, size = 0x12000, scoped, tag = 'internal scratch']
  #allocation2 [shape = 'f32[16,256]{1,0:T(8,128)}', space=vmem, size = 0x4000, scoped, tag = 'scratch operand']
  %s0 = inlined_call_operand.vmem [shape: bf16[16,2048], index: 0, kind: input, shape index: {}]
  %s1 = inlined_call_operand.vmem [shape: bf16[2048,2048], index: 1, kind: input, shape index: {}]
  %s2 = inlined_call_operand.vmem [shape: f32[1,2048], index: 2, kind: input, shape index: {}]
  %s3 = inlined_call_operand.vmem [shape: bf16[16,2048], index: 3, kind: output, shape index: {}]
  %s4 = sld [smem:[#allocation0]]
  $region148: #{alexnet_forward.24} parent=0
    _
  %s6 = ssub.s32 1, %s4
  %s7 = scalar_select 0, %s6, %s4
  $region1: #{alexnet_forward.24} parent=0
    #allocation3 [shape = 'u8[32768]{0}', space=vmem, size = 0x8000, scoped, tag = 'input window, operand 0']
    #allocation4 [shape = 'u8[524288]{0}', space=vmem, size = 0x80000, scoped, tag = 'input window, operand 1']
    #allocation5 [shape = 'u8[16384]{0}', space=vmem, size = 0x4000, scoped, tag = 'output window, operand 0']
    loop: start=0, step=1, limit=34
    $region2: #{alexnet_forward.24} parent=1 // loop_pre_header
      _
    $region3: #{alexnet_forward.24} parent=1 // loop_header
      %s9 = sphi 0, %s13
      %p10 = scmp.ge.s32.totalorder %s9, 34
      %s16 = sphi 0, %s35
      %s17 = sphi 0, %s31
      %s18 = sphi 0, %s27
      %s19 = sphi 0, %s16
      %s20 = sphi 0, %s17
      %s21 = sphi 0, %s18
      %s22 = sphi 0, %s19
      %s23 = sphi 0, %s20
      %s24 = sphi 0, %s21
      %s40 = sphi 0, %s42
      %s43 = sphi 0, %s40
      %s44 = sphi 0, %s43
      %s60 = sphi 0, %s44
      %s68 = sphi 0, %s70
      %s71 = sphi 0, %s68
      %s72 = sphi 0, %s71
      %s88 = sphi 0, %s72
      %s94 = sphi 0, %s96
      %s97 = sphi 0, %s94
      %s98 = sphi 0, %s97
      %s114 = sphi 0, %s98
      %s122 = sphi 0, %s124
      %s125 = sphi 0, %s122
      %s126 = sphi 0, %s125
      %s142 = sphi 0, %s126
    $region4: #{alexnet_forward.24} parent=1 // loop_header_branch
      %12 = sbr.rel (%p10) target = $region8
    $region5: #{alexnet_forward.24} parent=1 // loop_body
      %s14 = ssub.s32 %s9, 1
      %s15 = ssub.s32 %s9, 2
      %s25 = sadd.s32 1, %s18
      %p26 = scmp.ge.s32.totalorder %s25, 4
      %s27 = scalar_select %p26, 0, %s25
      %s28 = sadd.s32 1, %s17
      %s29 = scalar_select %p26, %s28, %s17
      %p30 = scmp.ge.s32.totalorder %s29, 8
      %s31 = scalar_select %p30, 0, %s29
      %s32 = sadd.s32 1, %s16
      %s33 = scalar_select %p30, %s32, %s16
      %p34 = scmp.ge.s32.totalorder %s33, 1
      %s35 = scalar_select %p34, 0, %s33
      %s36 = ssub.s32 %s16, %s35
      %s37 = ssub.s32 %s18, %s27
      %s38 = sor.u32 %s36, %s37
      %p39 = scmp.eq.s32.totalorder %s38, 0
      %s41 = sadd.s32 %s40, 1
      %s42 = scalar_select %p39, %s40, %s41
      %p45 = pneg %p39
      %p46 = scmp.eq.s32.totalorder %s9, 31
      %p47 = por %p45, %p46
      %p48 = scmp.ne.s32.totalorder %s40, %s43
      %p49 = scmp.eq.s32.totalorder %s9, 0
      %p50 = por %p48, %p49
      %p51 = scmp.ne.s32.totalorder %s40, %s43
      %p52 = scmp.eq.s32.totalorder %s14, 31
      %p53 = por %p51, %p52
      %p54 = scmp.ne.s32.totalorder %s43, %s44
      %p55 = scmp.eq.s32.totalorder %s14, 0
      %p56 = por %p54, %p55
      %p57 = scmp.ne.s32.totalorder %s43, %s44
      %p58 = scmp.eq.s32.totalorder %s15, 31
      %p59 = por %p57, %p58
      %p61 = scmp.ne.s32.totalorder %s44, %s60
      %p62 = scmp.eq.s32.totalorder %s15, 0
      %p63 = por %p61, %p62
      %s64 = ssub.s32 %s18, %s27
      %s65 = ssub.s32 %s17, %s31
      %s66 = sor.u32 %s64, %s65
      %p67 = scmp.eq.s32.totalorder %s66, 0
      %s69 = sadd.s32 %s68, 1
      %s70 = scalar_select %p67, %s68, %s69
      %p73 = pneg %p67
      %p74 = scmp.eq.s32.totalorder %s9, 31
      %p75 = por %p73, %p74
      %p76 = scmp.ne.s32.totalorder %s68, %s71
      %p77 = scmp.eq.s32.totalorder %s9, 0
      %p78 = por %p76, %p77
      %p79 = scmp.ne.s32.totalorder %s68, %s71
      %p80 = scmp.eq.s32.totalorder %s14, 31
      %p81 = por %p79, %p80
      %p82 = scmp.ne.s32.totalorder %s71, %s72
      %p83 = scmp.eq.s32.totalorder %s14, 0
      %p84 = por %p82, %p83
      %p85 = scmp.ne.s32.totalorder %s71, %s72
      %p86 = scmp.eq.s32.totalorder %s15, 31
      %p87 = por %p85, %p86
      %p89 = scmp.ne.s32.totalorder %s72, %s88
      %p90 = scmp.eq.s32.totalorder %s15, 0
      %p91 = por %p89, %p90
      %s92 = ssub.s32 %s17, %s31
      %p93 = scmp.eq.s32.totalorder %s92, 0
      %s95 = sadd.s32 %s94, 1
      %s96 = scalar_select %p93, %s94, %s95
      %p99 = pneg %p93
      %p100 = scmp.eq.s32.totalorder %s9, 31
      %p101 = por %p99, %p100
      %p102 = scmp.ne.s32.totalorder %s94, %s97
      %p103 = scmp.eq.s32.totalorder %s9, 0
      %p104 = por %p102, %p103
      %p105 = scmp.ne.s32.totalorder %s94, %s97
      %p106 = scmp.eq.s32.totalorder %s14, 31
      %p107 = por %p105, %p106
      %p108 = scmp.ne.s32.totalorder %s97, %s98
      %p109 = scmp.eq.s32.totalorder %s14, 0
      %p110 = por %p108, %p109
      %p111 = scmp.ne.s32.totalorder %s97, %s98
      %p112 = scmp.eq.s32.totalorder %s15, 31
      %p113 = por %p111, %p112
      %p115 = scmp.ne.s32.totalorder %s98, %s114
      %p116 = scmp.eq.s32.totalorder %s15, 0
      %p117 = por %p115, %p116
      %s118 = ssub.s32 %s16, %s35
      %s119 = ssub.s32 %s17, %s31
      %s120 = sor.u32 %s118, %s119
      %p121 = scmp.eq.s32.totalorder %s120, 0
      %s123 = sadd.s32 %s122, 1
      %s124 = scalar_select %p121, %s122, %s123
      %p127 = pneg %p121
      %p128 = scmp.eq.s32.totalorder %s9, 31
      %p129 = por %p127, %p128
      %p130 = scmp.ne.s32.totalorder %s122, %s125
      %p131 = scmp.eq.s32.totalorder %s9, 0
      %p132 = por %p130, %p131
      %p133 = scmp.ne.s32.totalorder %s122, %s125
      %p134 = scmp.eq.s32.totalorder %s14, 31
      %p135 = por %p133, %p134
      %p136 = scmp.ne.s32.totalorder %s125, %s126
      %p137 = scmp.eq.s32.totalorder %s14, 0
      %p138 = por %p136, %p137
      %p139 = scmp.ne.s32.totalorder %s125, %s126
      %p140 = scmp.eq.s32.totalorder %s15, 31
      %p141 = por %p139, %p140
      %p143 = scmp.ne.s32.totalorder %s126, %s142
      %p144 = scmp.eq.s32.totalorder %s15, 0
      %p145 = por %p143, %p144
      %p146 = scmp.le.s32.totalorder 1, %s9
      %p147 = scmp.lt.s32.totalorder %s9, 33
      %p148 = pnand %p146, %p147
      %p149 = pneg %p148
      // Predicated region
      $region9: #{alexnet_forward.24} parent=5 // pred_check
        _
      $region10: #{alexnet_forward.24} parent=5 // pred_check_branch
        %151 = sbr.rel (%p148) target = $region12
      $region11: #{alexnet_forward.24} parent=5 // pred_region
        %s152 = ssub.s32 %s9, 1
      $region12: #{alexnet_forward.24} parent=5 // pred_fallthru
        _
      %p153 = scmp.lt.s32.totalorder %s9, 32
      // Predicated region
      $region13: #{alexnet_forward.24} parent=5 // pred_check
        %p154 = pneg %p153
      $region14: #{alexnet_forward.24} parent=5 // pred_check_branch
        %156 = sbr.rel (%p154) target = $region16
      $region15: #{alexnet_forward.24} parent=5 // pred_region
        // Predicated region
        $region17: #{alexnet_forward.24} parent=15 // pred_check
          %p157 = pneg %p50
        $region18: #{alexnet_forward.24} parent=15 // pred_check_branch
          %159 = sbr.rel (%p157) target = $region20
        $region19: #{alexnet_forward.24} parent=15 // pred_region
          %s160 = sand.u32 %s40, 1
          %s161 = sand.u32 %s40, 1
          %s162 = smul.addr %s161, 32
          %s163 = scalar_lea.vmem [#allocation3], %s162
          %s164 = smul.u32 2, %s16
          %s165 = smul.u32 4, %s18
          %s166 = smul.addr %s164, 16
          %s167 = sadd.s32 %s165, %s166
          %s168 = smul.addr %s167, 4
          %s169 = scalar_lea.vmem %s0, %s168
          // Predicated region
          $region21: #{alexnet_forward.24} parent=19 // pred_check
            _
          $region22: #{alexnet_forward.24} parent=19 // pred_check_branch
            %171 = sbr.rel (0) target = $region24
          $region23: #{alexnet_forward.24} parent=19 // pred_region
            // Predicated region
            $region25: #{alexnet_forward.24} parent=23 // pred_check
              _
            $region26: #{alexnet_forward.24} parent=23 // pred_check_branch
              %173 = sbr.rel (0) target = $region28
            $region27: #{alexnet_forward.24} parent=23 // pred_region
              loop: start=0, step=1, limit=1
              $region29: #{alexnet_forward.24} parent=27 // loop_pre_header
                _
              $region30: #{alexnet_forward.24} parent=27 // loop_header
                %s175 = sphi 0, %s179
                %p176 = scmp.ge.s32.totalorder %s175, 1
                %s180 = sphi %s169, %s169
                %s181 = sphi %s163, %s163
              $region31: #{alexnet_forward.24} parent=27 // loop_header_branch
                %178 = sbr.rel (%p176) target = $region35
              $region32: #{alexnet_forward.24} parent=27 // loop_body
                %v182 = vld [vmem:[%s180] sm:$0xff]
                %183 = vst [vmem:[%s181] sm:$0xff] %v182
                %v184 = vld [vmem:[%s180 + $0x8] sm:$0xff]
                %185 = vst [vmem:[%s181 + $0x8] sm:$0xff] %v184
                %v186 = vld [vmem:[%s180 + $0x40] sm:$0xff]
                %187 = vst [vmem:[%s181 + $0x10] sm:$0xff] %v186
                %v188 = vld [vmem:[%s180 + $0x48] sm:$0xff]
                %189 = vst [vmem:[%s181 + $0x18] sm:$0xff] %v188
              $region33: #{alexnet_forward.24} parent=27 // loop_footer
                %s179 = sadd.s32 1, %s175
              $region34: #{alexnet_forward.24} parent=27 // loop_footer_branch
                %174 = sbr.rel target = $region30
              $region35: #{alexnet_forward.24} parent=27 // loop_exit
                _
            $region28: #{alexnet_forward.24} parent=23 // pred_fallthru
              _
            // Predicated region
            $region36: #{alexnet_forward.24} parent=23 // pred_check
              _
            $region37: #{alexnet_forward.24} parent=23 // pred_check_branch
              %191 = sbr.rel target = $region39
            $region38: #{alexnet_forward.24} parent=23 // pred_region
              _
            $region39: #{alexnet_forward.24} parent=23 // pred_fallthru
              _
          $region24: #{alexnet_forward.24} parent=19 // pred_fallthru
            _
          %192 = vnop
        $region20: #{alexnet_forward.24} parent=15 // pred_fallthru
          _
        // Predicated region
        $region40: #{alexnet_forward.24} parent=15 // pred_check
          %p193 = pneg %p78
        $region41: #{alexnet_forward.24} parent=15 // pred_check_branch
          %195 = sbr.rel (%p193) target = $region43
        $region42: #{alexnet_forward.24} parent=15 // pred_region
          %s196 = sand.u32 %s68, 1
          %s197 = sand.u32 %s68, 1
          %s198 = smul.addr %s197, 512
          %s199 = scalar_lea.vmem [#allocation4], %s198
          %s200 = smul.u32 64, %s18
          %s201 = smul.u32 2, %s17
          %s202 = smul.addr %s200, 16
          %s203 = sadd.s32 %s201, %s202
          %s204 = smul.addr %s203, 4
          %s205 = scalar_lea.vmem %s1, %s204
          // Predicated region
          $region44: #{alexnet_forward.24} parent=42 // pred_check
            _
          $region45: #{alexnet_forward.24} parent=42 // pred_check_branch
            %207 = sbr.rel (0) target = $region47
          $region46: #{alexnet_forward.24} parent=42 // pred_region
            // Predicated region
            $region48: #{alexnet_forward.24} parent=46 // pred_check
              _
            $region49: #{alexnet_forward.24} parent=46 // pred_check_branch
              %209 = sbr.rel (0) target = $region51
            $region50: #{alexnet_forward.24} parent=46 // pred_region
              // Predicated region
              $region63: #{alexnet_forward.24} parent=50 // pred_check
                _
              $region64: #{alexnet_forward.24} parent=50 // pred_check_branch
                %350 = sbr.rel (0) target = $region66
              $region65: #{alexnet_forward.24} parent=50 // pred_region
                loop: start=0, step=1, limit=1
                $region67: #{alexnet_forward.24} parent=65 // loop_pre_header
                  _
                $region68: #{alexnet_forward.24} parent=65 // loop_header
                  %s352 = sphi 0, %s356
                  %p353 = scmp.ge.s32.totalorder %s352, 1
                  %s357 = sphi %s205, %s205
                  %s358 = sphi %s199, %s199
                $region69: #{alexnet_forward.24} parent=65 // loop_header_branch
                  %355 = sbr.rel (%p353) target = $region73
                $region70: #{alexnet_forward.24} parent=65 // loop_body
                  %v359 = vld [vmem:[%s357] sm:$0xff]
                  %360 = vst [vmem:[%s358] sm:$0xff] %v359
                  %v361 = vld [vmem:[%s357 + $0x40] sm:$0xff]
                  %362 = vst [vmem:[%s358 + $0x8] sm:$0xff] %v361
                  %v363 = vld [vmem:[%s357 + $0x80] sm:$0xff]
                  %364 = vst [vmem:[%s358 + $0x10] sm:$0xff] %v363
                  %v365 = vld [vmem:[%s357 + $0xc0] sm:$0xff]
                  %366 = vst [vmem:[%s358 + $0x18] sm:$0xff] %v365
                  %v367 = vld [vmem:[%s357 + $0x100] sm:$0xff]
                  %368 = vst [vmem:[%s358 + $0x20] sm:$0xff] %v367
                  %v369 = vld [vmem:[%s357 + $0x140] sm:$0xff]
                  %370 = vst [vmem:[%s358 + $0x28] sm:$0xff] %v369
                  %v371 = vld [vmem:[%s357 + $0x180] sm:$0xff]
                  %372 = vst [vmem:[%s358 + $0x30] sm:$0xff] %v371
                  %v373 = vld [vmem:[%s357 + $0x1c0] sm:$0xff]
                  %374 = vst [vmem:[%s358 + $0x38] sm:$0xff] %v373
                  %v375 = vld [vmem:[%s357 + $0x200] sm:$0xff]
                  %376 = vst [vmem:[%s358 + $0x40] sm:$0xff] %v375
                  %v377 = vld [vmem:[%s357 + $0x240] sm:$0xff]
                  %378 = vst [vmem:[%s358 + $0x48] sm:$0xff] %v377
                  %v379 = vld [vmem:[%s357 + $0x280] sm:$0xff]
                  %380 = vst [vmem:[%s358 + $0x50] sm:$0xff] %v379
                  %v381 = vld [vmem:[%s357 + $0x2c0] sm:$0xff]
                  %382 = vst [vmem:[%s358 + $0x58] sm:$0xff] %v381
                  %v383 = vld [vmem:[%s357 + $0x300] sm:$0xff]
                  %384 = vst [vmem:[%s358 + $0x60] sm:$0xff] %v383
                  %v385 = vld [vmem:[%s357 + $0x340] sm:$0xff]
                  %386 = vst [vmem:[%s358 + $0x68] sm:$0xff] %v385
                  %v387 = vld [vmem:[%s357 + $0x380] sm:$0xff]
                  %388 = vst [vmem:[%s358 + $0x70] sm:$0xff] %v387
                  %v389 = vld [vmem:[%s357 + $0x3c0] sm:$0xff]
                  %390 = vst [vmem:[%s358 + $0x78] sm:$0xff] %v389
                  %v391 = vld [vmem:[%s357 + $0x400] sm:$0xff]
                  %392 = vst [vmem:[%s358 + $0x80] sm:$0xff] %v391
                  %v393 = vld [vmem:[%s357 + $0x440] sm:$0xff]
                  %394 = vst [vmem:[%s358 + $0x88] sm:$0xff] %v393
                  %v395 = vld [vmem:[%s357 + $0x480] sm:$0xff]
                  %396 = vst [vmem:[%s358 + $0x90] sm:$0xff] %v395
                  %v397 = vld [vmem:[%s357 + $0x4c0] sm:$0xff]
                  %398 = vst [vmem:[%s358 + $0x98] sm:$0xff] %v397
                  %v399 = vld [vmem:[%s357 + $0x500] sm:$0xff]
                  %400 = vst [vmem:[%s358 + $0xa0] sm:$0xff] %v399
                  %v401 = vld [vmem:[%s357 + $0x540] sm:$0xff]
                  %402 = vst [vmem:[%s358 + $0xa8] sm:$0xff] %v401
                  %v403 = vld [vmem:[%s357 + $0x580] sm:$0xff]
                  %404 = vst [vmem:[%s358 + $0xb0] sm:$0xff] %v403
                  %v405 = vld [vmem:[%s357 + $0x5c0] sm:$0xff]
                  %406 = vst [vmem:[%s358 + $0xb8] sm:$0xff] %v405
                  %v407 = vld [vmem:[%s357 + $0x600] sm:$0xff]
                  %408 = vst [vmem:[%s358 + $0xc0] sm:$0xff] %v407
                  %v409 = vld [vmem:[%s357 + $0x640] sm:$0xff]
                  %410 = vst [vmem:[%s358 + $0xc8] sm:$0xff] %v409
                  %v411 = vld [vmem:[%s357 + $0x680] sm:$0xff]
                  %412 = vst [vmem:[%s358 + $0xd0] sm:$0xff] %v411
                  %v413 = vld [vmem:[%s357 + $0x6c0] sm:$0xff]
                  %414 = vst [vmem:[%s358 + $0xd8] sm:$0xff] %v413
                  %v415 = vld [vmem:[%s357 + $0x700] sm:$0xff]
                  %416 = vst [vmem:[%s358 + $0xe0] sm:$0xff] %v415
                  %v417 = vld [vmem:[%s357 + $0x740] sm:$0xff]
                  %418 = vst [vmem:[%s358 + $0xe8] sm:$0xff] %v417
                  %v419 = vld [vmem:[%s357 + $0x780] sm:$0xff]
                  %420 = vst [vmem:[%s358 + $0xf0] sm:$0xff] %v419
                  %v421 = vld [vmem:[%s357 + $0x7c0] sm:$0xff]
                  %422 = vst [vmem:[%s358 + $0xf8] sm:$0xff] %v421
                  %v423 = vld [vmem:[%s357 + $0x800] sm:$0xff]
                  %424 = vst [vmem:[%s358 + $0x100] sm:$0xff] %v423
                  %v425 = vld [vmem:[%s357 + $0x840] sm:$0xff]
                  %426 = vst [vmem:[%s358 + $0x108] sm:$0xff] %v425
                  %v427 = vld [vmem:[%s357 + $0x880] sm:$0xff]
                  %428 = vst [vmem:[%s358 + $0x110] sm:$0xff] %v427
                  %v429 = vld [vmem:[%s357 + $0x8c0] sm:$0xff]
                  %430 = vst [vmem:[%s358 + $0x118] sm:$0xff] %v429
                  %v431 = vld [vmem:[%s357 + $0x900] sm:$0xff]
                  %432 = vst [vmem:[%s358 + $0x120] sm:$0xff] %v431
                  %v433 = vld [vmem:[%s357 + $0x940] sm:$0xff]
                  %434 = vst [vmem:[%s358 + $0x128] sm:$0xff] %v433
                  %v435 = vld [vmem:[%s357 + $0x980] sm:$0xff]
                  %436 = vst [vmem:[%s358 + $0x130] sm:$0xff] %v435
                  %v437 = vld [vmem:[%s357 + $0x9c0] sm:$0xff]
                  %438 = vst [vmem:[%s358 + $0x138] sm:$0xff] %v437
                  %v439 = vld [vmem:[%s357 + $0xa00] sm:$0xff]
                  %440 = vst [vmem:[%s358 + $0x140] sm:$0xff] %v439
                  %v441 = vld [vmem:[%s357 + $0xa40] sm:$0xff]
                  %442 = vst [vmem:[%s358 + $0x148] sm:$0xff] %v441
                  %v443 = vld [vmem:[%s357 + $0xa80] sm:$0xff]
                  %444 = vst [vmem:[%s358 + $0x150] sm:$0xff] %v443
                  %v445 = vld [vmem:[%s357 + $0xac0] sm:$0xff]
                  %446 = vst [vmem:[%s358 + $0x158] sm:$0xff] %v445
                  %v447 = vld [vmem:[%s357 + $0xb00] sm:$0xff]
                  %448 = vst [vmem:[%s358 + $0x160] sm:$0xff] %v447
                  %v449 = vld [vmem:[%s357 + $0xb40] sm:$0xff]
                  %450 = vst [vmem:[%s358 + $0x168] sm:$0xff] %v449
                  %v451 = vld [vmem:[%s357 + $0xb80] sm:$0xff]
                  %452 = vst [vmem:[%s358 + $0x170] sm:$0xff] %v451
                  %v453 = vld [vmem:[%s357 + $0xbc0] sm:$0xff]
                  %454 = vst [vmem:[%s358 + $0x178] sm:$0xff] %v453
                  %v455 = vld [vmem:[%s357 + $0xc00] sm:$0xff]
                  %456 = vst [vmem:[%s358 + $0x180] sm:$0xff] %v455
                  %v457 = vld [vmem:[%s357 + $0xc40] sm:$0xff]
                  %458 = vst [vmem:[%s358 + $0x188] sm:$0xff] %v457
                  %v459 = vld [vmem:[%s357 + $0xc80] sm:$0xff]
                  %460 = vst [vmem:[%s358 + $0x190] sm:$0xff] %v459
                  %v461 = vld [vmem:[%s357 + $0xcc0] sm:$0xff]
                  %462 = vst [vmem:[%s358 + $0x198] sm:$0xff] %v461
                  %v463 = vld [vmem:[%s357 + $0xd00] sm:$0xff]
                  %464 = vst [vmem:[%s358 + $0x1a0] sm:$0xff] %v463
                  %v465 = vld [vmem:[%s357 + $0xd40] sm:$0xff]
                  %466 = vst [vmem:[%s358 + $0x1a8] sm:$0xff] %v465
                  %v467 = vld [vmem:[%s357 + $0xd80] sm:$0xff]
                  %468 = vst [vmem:[%s358 + $0x1b0] sm:$0xff] %v467
                  %v469 = vld [vmem:[%s357 + $0xdc0] sm:$0xff]
                  %470 = vst [vmem:[%s358 + $0x1b8] sm:$0xff] %v469
                  %v471 = vld [vmem:[%s357 + $0xe00] sm:$0xff]
                  %472 = vst [vmem:[%s358 + $0x1c0] sm:$0xff] %v471
                  %v473 = vld [vmem:[%s357 + $0xe40] sm:$0xff]
                  %474 = vst [vmem:[%s358 + $0x1c8] sm:$0xff] %v473
                  %v475 = vld [vmem:[%s357 + $0xe80] sm:$0xff]
                  %476 = vst [vmem:[%s358 + $0x1d0] sm:$0xff] %v475
                  %v477 = vld [vmem:[%s357 + $0xec0] sm:$0xff]
                  %478 = vst [vmem:[%s358 + $0x1d8] sm:$0xff] %v477
                  %v479 = vld [vmem:[%s357 + $0xf00] sm:$0xff]
                  %480 = vst [vmem:[%s358 + $0x1e0] sm:$0xff] %v479
                  %v481 = vld [vmem:[%s357 + $0xf40] sm:$0xff]
                  %482 = vst [vmem:[%s358 + $0x1e8] sm:$0xff] %v481
                  %v483 = vld [vmem:[%s357 + $0xf80] sm:$0xff]
                  %484 = vst [vmem:[%s358 + $0x1f0] sm:$0xff] %v483
                  %v485 = vld [vmem:[%s357 + $0xfc0] sm:$0xff]
                  %486 = vst [vmem:[%s358 + $0x1f8] sm:$0xff] %v485
                $region71: #{alexnet_forward.24} parent=65 // loop_footer
                  %s356 = sadd.s32 1, %s352
                $region72: #{alexnet_forward.24} parent=65 // loop_footer_branch
                  %351 = sbr.rel target = $region68
                $region73: #{alexnet_forward.24} parent=65 // loop_exit
                  _
              $region66: #{alexnet_forward.24} parent=50 // pred_fallthru
                _
              // Predicated region
              $region74: #{alexnet_forward.24} parent=50 // pred_check
                _
              $region75: #{alexnet_forward.24} parent=50 // pred_check_branch
                %488 = sbr.rel target = $region77
              $region76: #{alexnet_forward.24} parent=50 // pred_region
                _
              $region77: #{alexnet_forward.24} parent=50 // pred_fallthru
                _
            $region51: #{alexnet_forward.24} parent=46 // pred_fallthru
              _
            // Predicated region
            $region52: #{alexnet_forward.24} parent=46 // pred_check
              _
            $region53: #{alexnet_forward.24} parent=46 // pred_check_branch
              %211 = sbr.rel target = $region55
            $region54: #{alexnet_forward.24} parent=46 // pred_region
              loop: start=0, step=1, limit=1
              $region56: #{alexnet_forward.24} parent=54 // loop_pre_header
                _
              $region57: #{alexnet_forward.24} parent=54 // loop_header
                %s214 = sphi 0, %s218
                %p215 = scmp.ge.s32.totalorder %s214, 1
                %s219 = sphi %s205, %s205
                %s220 = sphi %s199, %s199
              $region58: #{alexnet_forward.24} parent=54 // loop_header_branch
                %217 = sbr.rel (%p215) target = $region62
              $region59: #{alexnet_forward.24} parent=54 // loop_body
                %v221 = vld [vmem:[%s219] sm:$0xff]
                %222 = vst [vmem:[%s220] sm:$0xff] %v221
                %v223 = vld [vmem:[%s219 + $0x40] sm:$0xff]
                %224 = vst [vmem:[%s220 + $0x8] sm:$0xff] %v223
                %v225 = vld [vmem:[%s219 + $0x80] sm:$0xff]
                %226 = vst [vmem:[%s220 + $0x10] sm:$0xff] %v225
                %v227 = vld [vmem:[%s219 + $0xc0] sm:$0xff]
                %228 = vst [vmem:[%s220 + $0x18] sm:$0xff] %v227
                %v229 = vld [vmem:[%s219 + $0x100] sm:$0xff]
                %230 = vst [vmem:[%s220 + $0x20] sm:$0xff] %v229
                %v231 = vld [vmem:[%s219 + $0x140] sm:$0xff]
                %232 = vst [vmem:[%s220 + $0x28] sm:$0xff] %v231
                %v233 = vld [vmem:[%s219 + $0x180] sm:$0xff]
                %234 = vst [vmem:[%s220 + $0x30] sm:$0xff] %v233
                %v235 = vld [vmem:[%s219 + $0x1c0] sm:$0xff]
                %236 = vst [vmem:[%s220 + $0x38] sm:$0xff] %v235
                %v237 = vld [vmem:[%s219 + $0x200] sm:$0xff]
                %238 = vst [vmem:[%s220 + $0x40] sm:$0xff] %v237
                %v239 = vld [vmem:[%s219 + $0x240] sm:$0xff]
                %240 = vst [vmem:[%s220 + $0x48] sm:$0xff] %v239
                %v241 = vld [vmem:[%s219 + $0x280] sm:$0xff]
                %242 = vst [vmem:[%s220 + $0x50] sm:$0xff] %v241
                %v243 = vld [vmem:[%s219 + $0x2c0] sm:$0xff]
                %244 = vst [vmem:[%s220 + $0x58] sm:$0xff] %v243
                %v245 = vld [vmem:[%s219 + $0x300] sm:$0xff]
                %246 = vst [vmem:[%s220 + $0x60] sm:$0xff] %v245
                %v247 = vld [vmem:[%s219 + $0x340] sm:$0xff]
                %248 = vst [vmem:[%s220 + $0x68] sm:$0xff] %v247
                %v249 = vld [vmem:[%s219 + $0x380] sm:$0xff]
                %250 = vst [vmem:[%s220 + $0x70] sm:$0xff] %v249
                %v251 = vld [vmem:[%s219 + $0x3c0] sm:$0xff]
                %252 = vst [vmem:[%s220 + $0x78] sm:$0xff] %v251
                %v253 = vld [vmem:[%s219 + $0x400] sm:$0xff]
                %254 = vst [vmem:[%s220 + $0x80] sm:$0xff] %v253
                %v255 = vld [vmem:[%s219 + $0x440] sm:$0xff]
                %256 = vst [vmem:[%s220 + $0x88] sm:$0xff] %v255
                %v257 = vld [vmem:[%s219 + $0x480] sm:$0xff]
                %258 = vst [vmem:[%s220 + $0x90] sm:$0xff] %v257
                %v259 = vld [vmem:[%s219 + $0x4c0] sm:$0xff]
                %260 = vst [vmem:[%s220 + $0x98] sm:$0xff] %v259
                %v261 = vld [vmem:[%s219 + $0x500] sm:$0xff]
                %262 = vst [vmem:[%s220 + $0xa0] sm:$0xff] %v261
                %v263 = vld [vmem:[%s219 + $0x540] sm:$0xff]
                %264 = vst [vmem:[%s220 + $0xa8] sm:$0xff] %v263
                %v265 = vld [vmem:[%s219 + $0x580] sm:$0xff]
                %266 = vst [vmem:[%s220 + $0xb0] sm:$0xff] %v265
                %v267 = vld [vmem:[%s219 + $0x5c0] sm:$0xff]
                %268 = vst [vmem:[%s220 + $0xb8] sm:$0xff] %v267
                %v269 = vld [vmem:[%s219 + $0x600] sm:$0xff]
                %270 = vst [vmem:[%s220 + $0xc0] sm:$0xff] %v269
                %v271 = vld [vmem:[%s219 + $0x640] sm:$0xff]
                %272 = vst [vmem:[%s220 + $0xc8] sm:$0xff] %v271
                %v273 = vld [vmem:[%s219 + $0x680] sm:$0xff]
                %274 = vst [vmem:[%s220 + $0xd0] sm:$0xff] %v273
                %v275 = vld [vmem:[%s219 + $0x6c0] sm:$0xff]
                %276 = vst [vmem:[%s220 + $0xd8] sm:$0xff] %v275
                %v277 = vld [vmem:[%s219 + $0x700] sm:$0xff]
                %278 = vst [vmem:[%s220 + $0xe0] sm:$0xff] %v277
                %v279 = vld [vmem:[%s219 + $0x740] sm:$0xff]
                %280 = vst [vmem:[%s220 + $0xe8] sm:$0xff] %v279
                %v281 = vld [vmem:[%s219 + $0x780] sm:$0xff]
                %282 = vst [vmem:[%s220 + $0xf0] sm:$0xff] %v281
                %v283 = vld [vmem:[%s219 + $0x7c0] sm:$0xff]
                %284 = vst [vmem:[%s220 + $0xf8] sm:$0xff] %v283
                %v285 = vld [vmem:[%s219 + $0x800] sm:$0xff]
                %286 = vst [vmem:[%s220 + $0x100] sm:$0xff] %v285
                %v287 = vld [vmem:[%s219 + $0x840] sm:$0xff]
                %288 = vst [vmem:[%s220 + $0x108] sm:$0xff] %v287
                %v289 = vld [vmem:[%s219 + $0x880] sm:$0xff]
                %290 = vst [vmem:[%s220 + $0x110] sm:$0xff] %v289
                %v291 = vld [vmem:[%s219 + $0x8c0] sm:$0xff]
                %292 = vst [vmem:[%s220 + $0x118] sm:$0xff] %v291
                %v293 = vld [vmem:[%s219 + $0x900] sm:$0xff]
                %294 = vst [vmem:[%s220 + $0x120] sm:$0xff] %v293
                %v295 = vld [vmem:[%s219 + $0x940] sm:$0xff]
                %296 = vst [vmem:[%s220 + $0x128] sm:$0xff] %v295
                %v297 = vld [vmem:[%s219 + $0x980] sm:$0xff]
                %298 = vst [vmem:[%s220 + $0x130] sm:$0xff] %v297
                %v299 = vld [vmem:[%s219 + $0x9c0] sm:$0xff]
                %300 = vst [vmem:[%s220 + $0x138] sm:$0xff] %v299
                %v301 = vld [vmem:[%s219 + $0xa00] sm:$0xff]
                %302 = vst [vmem:[%s220 + $0x140] sm:$0xff] %v301
                %v303 = vld [vmem:[%s219 + $0xa40] sm:$0xff]
                %304 = vst [vmem:[%s220 + $0x148] sm:$0xff] %v303
                %v305 = vld [vmem:[%s219 + $0xa80] sm:$0xff]
                %306 = vst [vmem:[%s220 + $0x150] sm:$0xff] %v305
                %v307 = vld [vmem:[%s219 + $0xac0] sm:$0xff]
                %308 = vst [vmem:[%s220 + $0x158] sm:$0xff] %v307
                %v309 = vld [vmem:[%s219 + $0xb00] sm:$0xff]
                %310 = vst [vmem:[%s220 + $0x160] sm:$0xff] %v309
                %v311 = vld [vmem:[%s219 + $0xb40] sm:$0xff]
                %312 = vst [vmem:[%s220 + $0x168] sm:$0xff] %v311
                %v313 = vld [vmem:[%s219 + $0xb80] sm:$0xff]
                %314 = vst [vmem:[%s220 + $0x170] sm:$0xff] %v313
                %v315 = vld [vmem:[%s219 + $0xbc0] sm:$0xff]
                %316 = vst [vmem:[%s220 + $0x178] sm:$0xff] %v315
                %v317 = vld [vmem:[%s219 + $0xc00] sm:$0xff]
                %318 = vst [vmem:[%s220 + $0x180] sm:$0xff] %v317
                %v319 = vld [vmem:[%s219 + $0xc40] sm:$0xff]
                %320 = vst [vmem:[%s220 + $0x188] sm:$0xff] %v319
                %v321 = vld [vmem:[%s219 + $0xc80] sm:$0xff]
                %322 = vst [vmem:[%s220 + $0x190] sm:$0xff] %v321
                %v323 = vld [vmem:[%s219 + $0xcc0] sm:$0xff]
                %324 = vst [vmem:[%s220 + $0x198] sm:$0xff] %v323
                %v325 = vld [vmem:[%s219 + $0xd00] sm:$0xff]
                %326 = vst [vmem:[%s220 + $0x1a0] sm:$0xff] %v325
                %v327 = vld [vmem:[%s219 + $0xd40] sm:$0xff]
                %328 = vst [vmem:[%s220 + $0x1a8] sm:$0xff] %v327
                %v329 = vld [vmem:[%s219 + $0xd80] sm:$0xff]
                %330 = vst [vmem:[%s220 + $0x1b0] sm:$0xff] %v329
                %v331 = vld [vmem:[%s219 + $0xdc0] sm:$0xff]
                %332 = vst [vmem:[%s220 + $0x1b8] sm:$0xff] %v331
                %v333 = vld [vmem:[%s219 + $0xe00] sm:$0xff]
                %334 = vst [vmem:[%s220 + $0x1c0] sm:$0xff] %v333
                %v335 = vld [vmem:[%s219 + $0xe40] sm:$0xff]
                %336 = vst [vmem:[%s220 + $0x1c8] sm:$0xff] %v335
                %v337 = vld [vmem:[%s219 + $0xe80] sm:$0xff]
                %338 = vst [vmem:[%s220 + $0x1d0] sm:$0xff] %v337
                %v339 = vld [vmem:[%s219 + $0xec0] sm:$0xff]
                %340 = vst [vmem:[%s220 + $0x1d8] sm:$0xff] %v339
                %v341 = vld [vmem:[%s219 + $0xf00] sm:$0xff]
                %342 = vst [vmem:[%s220 + $0x1e0] sm:$0xff] %v341
                %v343 = vld [vmem:[%s219 + $0xf40] sm:$0xff]
                %344 = vst [vmem:[%s220 + $0x1e8] sm:$0xff] %v343
                %v345 = vld [vmem:[%s219 + $0xf80] sm:$0xff]
                %346 = vst [vmem:[%s220 + $0x1f0] sm:$0xff] %v345
                %v347 = vld [vmem:[%s219 + $0xfc0] sm:$0xff]
                %348 = vst [vmem:[%s220 + $0x1f8] sm:$0xff] %v347
              $region60: #{alexnet_forward.24} parent=54 // loop_footer
                %s218 = sadd.s32 1, %s214
              $region61: #{alexnet_forward.24} parent=54 // loop_footer_branch
                %213 = sbr.rel target = $region57
              $region62: #{alexnet_forward.24} parent=54 // loop_exit
                _
            $region55: #{alexnet_forward.24} parent=46 // pred_fallthru
              _
          $region47: #{alexnet_forward.24} parent=42 // pred_fallthru
            _
          %489 = vnop
        $region43: #{alexnet_forward.24} parent=15 // pred_fallthru
          _
        // Predicated region
        $region78: #{alexnet_forward.24} parent=15 // pred_check
          %p490 = pneg %p104
        $region79: #{alexnet_forward.24} parent=15 // pred_check_branch
          %492 = sbr.rel (%p490) target = $region81
        $region80: #{alexnet_forward.24} parent=15 // pred_region
          %s493 = smul.u32 2, %s17
          %p494 = scmp.lt.s32.totalorder %s493, 15
          %s495 = scalar_select %p494, %s493, 15
          %s496 = scalar_lea.vmem %s2, %s495
          %s497 = smul.u32 2, %s17
        $region81: #{alexnet_forward.24} parent=15 // pred_fallthru
          _
      $region16: #{alexnet_forward.24} parent=5 // pred_fallthru
        _
      %p498 = scmp.le.s32.totalorder 1, %s9
      %p499 = scmp.lt.s32.totalorder %s9, 33
      %p500 = pnand %p498, %p499
      %p501 = pneg %p500
      // Predicated region
      $region82: #{alexnet_forward.24} parent=5 // pred_check
        _
      $region83: #{alexnet_forward.24} parent=5 // pred_check_branch
        %503 = sbr.rel (%p500) target = $region85
      $region84: #{alexnet_forward.24} parent=5 // pred_region
        %s504 = ssub.s32 %s9, 1
        %s505 = sand.u32 %s43, 1
        %s506 = sand.u32 %s43, 1
        %s507 = smul.addr %s506, 32
        %s508 = scalar_lea.vmem [#allocation3], %s507
        // Predicated region
        $region86: #{alexnet_forward.24} parent=84 // pred_check
          %p509 = pneg %p56
        $region87: #{alexnet_forward.24} parent=84 // pred_check_branch
          %511 = sbr.rel (%p509) target = $region89
        $region88: #{alexnet_forward.24} parent=84 // pred_region
          _
        $region89: #{alexnet_forward.24} parent=84 // pred_fallthru
          _
        %s512 = sand.u32 %s71, 1
        %s513 = sand.u32 %s71, 1
        %s514 = smul.addr %s513, 512
        %s515 = scalar_lea.vmem [#allocation4], %s514
        // Predicated region
        $region90: #{alexnet_forward.24} parent=84 // pred_check
          %p516 = pneg %p84
        $region91: #{alexnet_forward.24} parent=84 // pred_check_branch
          %518 = sbr.rel (%p516) target = $region93
        $region92: #{alexnet_forward.24} parent=84 // pred_region
          _
        $region93: #{alexnet_forward.24} parent=84 // pred_fallthru
          _
        %s519 = sand.u32 %s43, 1
        %s520 = sand.u32 %s43, 1
        %s521 = smul.addr %s520, 32
        %s522 = scalar_lea.vmem [#allocation3], %s521
        %p523 = pneg %p56
        %p524 = pneg %p53
        %s525 = sand.u32 %s71, 1
        %s526 = sand.u32 %s71, 1
        %s527 = smul.addr %s526, 512
        %s528 = scalar_lea.vmem [#allocation4], %s527
        %p529 = pneg %p84
        %p530 = pneg %p81
        %s531 = smul.u32 2, %s20
        %p532 = scmp.lt.s32.totalorder %s531, 15
        %s533 = scalar_select %p532, %s531, 15
        %s534 = scalar_lea.vmem %s2, %s533
        %p535 = pneg %p110
        %p536 = pneg %p107
        %p537 = pneg %p138
        %p538 = pneg %p135
        %s539 = sand.u32 %s125, 1
        %s540 = sand.u32 %s125, 1
        %s541 = smul.addr %s540, 16
        %s542 = scalar_lea.vmem [#allocation5], %s541
        %s543 = smul.u32 2, %s19
        %s544 = smul.u32 4, %s21
        %s545 = smul.u32 64, %s21
        %s546 = smul.u32 2, %s20
        %s547 = smul.u32 2, %s20
        %p548 = scmp.lt.s32.totalorder %s547, 15
        %s549 = scalar_select %p548, %s547, 15
        %s550 = scalar_lea.vmem %s2, %s549
        %s551 = smul.u32 2, %s20
        %s552 = smul.u32 2, %s19
        %s553 = smul.u32 2, %s20
        %p554 = scmp.eq.s32.totalorder %s21, 0
        // Predicated region
        $region94: #{alexnet_forward.24} parent=84 // pred_check
          %p555 = pneg %p554
        $region95: #{alexnet_forward.24} parent=84 // pred_check_branch
          %557 = sbr.rel (%p555) target = $region97
        $region96: #{alexnet_forward.24} parent=84 // pred_region
          %558 = vst [vmem:[#allocation2] sm:$0xff] 0.0
          %559 = vst [vmem:[#allocation2 + $0x8] sm:$0xff] 0.0
          %560 = vst [vmem:[#allocation2 + $0x10] sm:$0xff] 0.0
          %561 = vst [vmem:[#allocation2 + $0x18] sm:$0xff] 0.0
        $region97: #{alexnet_forward.24} parent=84 // pred_fallthru
          _
        %v562 = vld [vmem:[#allocation2] sm:$0xff]
        %v563 = vld [vmem:[#allocation2 + $0x8] sm:$0xff]
        %v564 = vld [vmem:[#allocation2 + $0x10] sm:$0xff]
        %v565 = vld [vmem:[#allocation2 + $0x18] sm:$0xff]
        %v566 = vld [vmem:[%s508] sm:$0xff]
        %v567 = vld [vmem:[%s508 + $0x8] sm:$0xff]
        %v568 = vld [vmem:[%s508 + $0x10] sm:$0xff]
        %v569 = vld [vmem:[%s508 + $0x18] sm:$0xff]
        %v570 = vld [vmem:[%s515] sm:$0xff]
        %v571 = vld [vmem:[%s515 + $0x8] sm:$0xff]
        %v572 = vld [vmem:[%s515 + $0x10] sm:$0xff]
        %v573 = vld [vmem:[%s515 + $0x18] sm:$0xff]
        %v574 = vld [vmem:[%s515 + $0x20] sm:$0xff]
        %v575 = vld [vmem:[%s515 + $0x28] sm:$0xff]
        %v576 = vld [vmem:[%s515 + $0x30] sm:$0xff]
        %v577 = vld [vmem:[%s515 + $0x38] sm:$0xff]
        %v578 = vld [vmem:[%s515 + $0x40] sm:$0xff]
        %v579 = vld [vmem:[%s515 + $0x48] sm:$0xff]
        %v580 = vld [vmem:[%s515 + $0x50] sm:$0xff]
        %v581 = vld [vmem:[%s515 + $0x58] sm:$0xff]
        %v582 = vld [vmem:[%s515 + $0x60] sm:$0xff]
        %v583 = vld [vmem:[%s515 + $0x68] sm:$0xff]
        %v584 = vld [vmem:[%s515 + $0x70] sm:$0xff]
        %v585 = vld [vmem:[%s515 + $0x78] sm:$0xff]
        %v586 = vld [vmem:[%s515 + $0x80] sm:$0xff]
        %v587 = vld [vmem:[%s515 + $0x88] sm:$0xff]
        %v588 = vld [vmem:[%s515 + $0x90] sm:$0xff]
        %v589 = vld [vmem:[%s515 + $0x98] sm:$0xff]
        %v590 = vld [vmem:[%s515 + $0xa0] sm:$0xff]
        %v591 = vld [vmem:[%s515 + $0xa8] sm:$0xff]
        %v592 = vld [vmem:[%s515 + $0xb0] sm:$0xff]
        %v593 = vld [vmem:[%s515 + $0xb8] sm:$0xff]
        %v594 = vld [vmem:[%s515 + $0xc0] sm:$0xff]
        %v595 = vld [vmem:[%s515 + $0xc8] sm:$0xff]
        %v596 = vld [vmem:[%s515 + $0xd0] sm:$0xff]
        %v597 = vld [vmem:[%s515 + $0xd8] sm:$0xff]
        %v598 = vld [vmem:[%s515 + $0xe0] sm:$0xff]
        %v599 = vld [vmem:[%s515 + $0xe8] sm:$0xff]
        %v600 = vld [vmem:[%s515 + $0xf0] sm:$0xff]
        %v601 = vld [vmem:[%s515 + $0xf8] sm:$0xff]
        %v602 = vld [vmem:[%s515 + $0x100] sm:$0xff]
        %v603 = vld [vmem:[%s515 + $0x108] sm:$0xff]
        %v604 = vld [vmem:[%s515 + $0x110] sm:$0xff]
        %v605 = vld [vmem:[%s515 + $0x118] sm:$0xff]
        %v606 = vld [vmem:[%s515 + $0x120] sm:$0xff]
        %v607 = vld [vmem:[%s515 + $0x128] sm:$0xff]
        %v608 = vld [vmem:[%s515 + $0x130] sm:$0xff]
        %v609 = vld [vmem:[%s515 + $0x138] sm:$0xff]
        %v610 = vld [vmem:[%s515 + $0x140] sm:$0xff]
        %v611 = vld [vmem:[%s515 + $0x148] sm:$0xff]
        %v612 = vld [vmem:[%s515 + $0x150] sm:$0xff]
        %v613 = vld [vmem:[%s515 + $0x158] sm:$0xff]
        %v614 = vld [vmem:[%s515 + $0x160] sm:$0xff]
        %v615 = vld [vmem:[%s515 + $0x168] sm:$0xff]
        %v616 = vld [vmem:[%s515 + $0x170] sm:$0xff]
        %v617 = vld [vmem:[%s515 + $0x178] sm:$0xff]
        %v618 = vld [vmem:[%s515 + $0x180] sm:$0xff]
        %v619 = vld [vmem:[%s515 + $0x188] sm:$0xff]
        %v620 = vld [vmem:[%s515 + $0x190] sm:$0xff]
        %v621 = vld [vmem:[%s515 + $0x198] sm:$0xff]
        %v622 = vld [vmem:[%s515 + $0x1a0] sm:$0xff]
        %v623 = vld [vmem:[%s515 + $0x1a8] sm:$0xff]
        %v624 = vld [vmem:[%s515 + $0x1b0] sm:$0xff]
        %v625 = vld [vmem:[%s515 + $0x1b8] sm:$0xff]
        %v626 = vld [vmem:[%s515 + $0x1c0] sm:$0xff]
        %v627 = vld [vmem:[%s515 + $0x1c8] sm:$0xff]
        %v628 = vld [vmem:[%s515 + $0x1d0] sm:$0xff]
        %v629 = vld [vmem:[%s515 + $0x1d8] sm:$0xff]
        %v630 = vld [vmem:[%s515 + $0x1e0] sm:$0xff]
        %v631 = vld [vmem:[%s515 + $0x1e8] sm:$0xff]
        %v632 = vld [vmem:[%s515 + $0x1f0] sm:$0xff]
        %v633 = vld [vmem:[%s515 + $0x1f8] sm:$0xff]
        %v638 = vunpack.c.l.b16 %v566
        %v639 = vunpack.c.h.b16 %v566
        %v640 = vunpack.c.l.b16 %v567
        %v641 = vunpack.c.h.b16 %v567
        %v642 = vunpack.c.l.b16 %v568
        %v643 = vunpack.c.h.b16 %v568
        %v644 = vunpack.c.l.b16 %v569
        %v645 = vunpack.c.h.b16 %v569
        %v646 = vpack.c.b16 %v642, %v638
        %v647 = vpack.c.b16 %v643, %v639
        %v648 = vpack.c.b16 %v644, %v640
        %v649 = vpack.c.b16 %v645, %v641
        %v718 = vunpack.c.l.b16 %v570
        %v719 = vunpack.c.h.b16 %v570
        %v720 = vunpack.c.l.b16 %v571
        %v721 = vunpack.c.h.b16 %v571
        %v722 = vunpack.c.l.b16 %v572
        %v723 = vunpack.c.h.b16 %v572
        %v724 = vunpack.c.l.b16 %v573
        %v725 = vunpack.c.h.b16 %v573
        %v726 = vunpack.c.l.b16 %v574
        %v727 = vunpack.c.h.b16 %v574
        %v728 = vunpack.c.l.b16 %v575
        %v729 = vunpack.c.h.b16 %v575
        %v730 = vunpack.c.l.b16 %v576
        %v731 = vunpack.c.h.b16 %v576
        %v732 = vunpack.c.l.b16 %v577
        %v733 = vunpack.c.h.b16 %v577
        %v734 = vunpack.c.l.b16 %v578
        %v735 = vunpack.c.h.b16 %v578
        %v736 = vunpack.c.l.b16 %v579
        %v737 = vunpack.c.h.b16 %v579
        %v738 = vunpack.c.l.b16 %v580
        %v739 = vunpack.c.h.b16 %v580
        %v740 = vunpack.c.l.b16 %v581
        %v741 = vunpack.c.h.b16 %v581
        %v742 = vunpack.c.l.b16 %v582
        %v743 = vunpack.c.h.b16 %v582
        %v744 = vunpack.c.l.b16 %v583
        %v745 = vunpack.c.h.b16 %v583
        %v746 = vunpack.c.l.b16 %v584
        %v747 = vunpack.c.h.b16 %v584
        %v748 = vunpack.c.l.b16 %v585
        %v749 = vunpack.c.h.b16 %v585
        %v750 = vunpack.c.l.b16 %v586
        %v751 = vunpack.c.h.b16 %v586
        %v752 = vunpack.c.l.b16 %v587
        %v753 = vunpack.c.h.b16 %v587
        %v754 = vunpack.c.l.b16 %v588
        %v755 = vunpack.c.h.b16 %v588
        %v756 = vunpack.c.l.b16 %v589
        %v757 = vunpack.c.h.b16 %v589
        %v758 = vunpack.c.l.b16 %v590
        %v759 = vunpack.c.h.b16 %v590
        %v760 = vunpack.c.l.b16 %v591
        %v761 = vunpack.c.h.b16 %v591
        %v762 = vunpack.c.l.b16 %v592
        %v763 = vunpack.c.h.b16 %v592
        %v764 = vunpack.c.l.b16 %v593
        %v765 = vunpack.c.h.b16 %v593
        %v766 = vunpack.c.l.b16 %v594
        %v767 = vunpack.c.h.b16 %v594
        %v768 = vunpack.c.l.b16 %v595
        %v769 = vunpack.c.h.b16 %v595
        %v770 = vunpack.c.l.b16 %v596
        %v771 = vunpack.c.h.b16 %v596
        %v772 = vunpack.c.l.b16 %v597
        %v773 = vunpack.c.h.b16 %v597
        %v774 = vunpack.c.l.b16 %v598
        %v775 = vunpack.c.h.b16 %v598
        %v776 = vunpack.c.l.b16 %v599
        %v777 = vunpack.c.h.b16 %v599
        %v778 = vunpack.c.l.b16 %v600
        %v779 = vunpack.c.h.b16 %v600
        %v780 = vunpack.c.l.b16 %v601
        %v781 = vunpack.c.h.b16 %v601
        %v782 = vunpack.c.l.b16 %v602
        %v783 = vunpack.c.h.b16 %v602
        %v784 = vunpack.c.l.b16 %v603
        %v785 = vunpack.c.h.b16 %v603
        %v786 = vunpack.c.l.b16 %v604
        %v787 = vunpack.c.h.b16 %v604
        %v788 = vunpack.c.l.b16 %v605
        %v789 = vunpack.c.h.b16 %v605
        %v790 = vunpack.c.l.b16 %v606
        %v791 = vunpack.c.h.b16 %v606
        %v792 = vunpack.c.l.b16 %v607
        %v793 = vunpack.c.h.b16 %v607
        %v794 = vunpack.c.l.b16 %v608
        %v795 = vunpack.c.h.b16 %v608
        %v796 = vunpack.c.l.b16 %v609
        %v797 = vunpack.c.h.b16 %v609
        %v798 = vunpack.c.l.b16 %v610
        %v799 = vunpack.c.h.b16 %v610
        %v800 = vunpack.c.l.b16 %v611
        %v801 = vunpack.c.h.b16 %v611
        %v802 = vunpack.c.l.b16 %v612
        %v803 = vunpack.c.h.b16 %v612
        %v804 = vunpack.c.l.b16 %v613
        %v805 = vunpack.c.h.b16 %v613
        %v806 = vunpack.c.l.b16 %v614
        %v807 = vunpack.c.h.b16 %v614
        %v808 = vunpack.c.l.b16 %v615
        %v809 = vunpack.c.h.b16 %v615
        %v810 = vunpack.c.l.b16 %v616
        %v811 = vunpack.c.h.b16 %v616
        %v812 = vunpack.c.l.b16 %v617
        %v813 = vunpack.c.h.b16 %v617
        %v814 = vunpack.c.l.b16 %v618
        %v815 = vunpack.c.h.b16 %v618
        %v816 = vunpack.c.l.b16 %v619
        %v817 = vunpack.c.h.b16 %v619
        %v818 = vunpack.c.l.b16 %v620
        %v819 = vunpack.c.h.b16 %v620
        %v820 = vunpack.c.l.b16 %v621
        %v821 = vunpack.c.h.b16 %v621
        %v822 = vunpack.c.l.b16 %v622
        %v823 = vunpack.c.h.b16 %v622
        %v824 = vunpack.c.l.b16 %v623
        %v825 = vunpack.c.h.b16 %v623
        %v826 = vunpack.c.l.b16 %v624
        %v827 = vunpack.c.h.b16 %v624
        %v828 = vunpack.c.l.b16 %v625
        %v829 = vunpack.c.h.b16 %v625
        %v830 = vunpack.c.l.b16 %v626
        %v831 = vunpack.c.h.b16 %v626
        %v832 = vunpack.c.l.b16 %v627
        %v833 = vunpack.c.h.b16 %v627
        %v834 = vunpack.c.l.b16 %v628
        %v835 = vunpack.c.h.b16 %v628
        %v836 = vunpack.c.l.b16 %v629
        %v837 = vunpack.c.h.b16 %v629
        %v838 = vunpack.c.l.b16 %v630
        %v839 = vunpack.c.h.b16 %v630
        %v840 = vunpack.c.l.b16 %v631
        %v841 = vunpack.c.h.b16 %v631
        %v842 = vunpack.c.l.b16 %v632
        %v843 = vunpack.c.h.b16 %v632
        %v844 = vunpack.c.l.b16 %v633
        %v845 = vunpack.c.h.b16 %v633
        %v846 = vpack.c.b16 %v720, %v718
        %v847 = vpack.c.b16 %v721, %v719
        %v848 = vpack.c.b16 %v724, %v722
        %v849 = vpack.c.b16 %v725, %v723
        %v850 = vpack.c.b16 %v728, %v726
        %v851 = vpack.c.b16 %v729, %v727
        %v852 = vpack.c.b16 %v732, %v730
        %v853 = vpack.c.b16 %v733, %v731
        %v854 = vpack.c.b16 %v736, %v734
        %v855 = vpack.c.b16 %v737, %v735
        %v856 = vpack.c.b16 %v740, %v738
        %v857 = vpack.c.b16 %v741, %v739
        %v858 = vpack.c.b16 %v744, %v742
        %v859 = vpack.c.b16 %v745, %v743
        %v860 = vpack.c.b16 %v748, %v746
        %v861 = vpack.c.b16 %v749, %v747
        %v862 = vpack.c.b16 %v752, %v750
        %v863 = vpack.c.b16 %v753, %v751
        %v864 = vpack.c.b16 %v756, %v754
        %v865 = vpack.c.b16 %v757, %v755
        %v866 = vpack.c.b16 %v760, %v758
        %v867 = vpack.c.b16 %v761, %v759
        %v868 = vpack.c.b16 %v764, %v762
        %v869 = vpack.c.b16 %v765, %v763
        %v870 = vpack.c.b16 %v768, %v766
        %v871 = vpack.c.b16 %v769, %v767
        %v872 = vpack.c.b16 %v772, %v770
        %v873 = vpack.c.b16 %v773, %v771
        %v874 = vpack.c.b16 %v776, %v774
        %v875 = vpack.c.b16 %v777, %v775
        %v876 = vpack.c.b16 %v780, %v778
        %v877 = vpack.c.b16 %v781, %v779
        %v878 = vpack.c.b16 %v784, %v782
        %v879 = vpack.c.b16 %v785, %v783
        %v880 = vpack.c.b16 %v788, %v786
        %v881 = vpack.c.b16 %v789, %v787
        %v882 = vpack.c.b16 %v792, %v790
        %v883 = vpack.c.b16 %v793, %v791
        %v884 = vpack.c.b16 %v796, %v794
        %v885 = vpack.c.b16 %v797, %v795
        %v886 = vpack.c.b16 %v800, %v798
        %v887 = vpack.c.b16 %v801, %v799
        %v888 = vpack.c.b16 %v804, %v802
        %v889 = vpack.c.b16 %v805, %v803
        %v890 = vpack.c.b16 %v808, %v806
        %v891 = vpack.c.b16 %v809, %v807
        %v892 = vpack.c.b16 %v812, %v810
        %v893 = vpack.c.b16 %v813, %v811
        %v894 = vpack.c.b16 %v816, %v814
        %v895 = vpack.c.b16 %v817, %v815
        %v896 = vpack.c.b16 %v820, %v818
        %v897 = vpack.c.b16 %v821, %v819
        %v898 = vpack.c.b16 %v824, %v822
        %v899 = vpack.c.b16 %v825, %v823
        %v900 = vpack.c.b16 %v828, %v826
        %v901 = vpack.c.b16 %v829, %v827
        %v902 = vpack.c.b16 %v832, %v830
        %v903 = vpack.c.b16 %v833, %v831
        %v904 = vpack.c.b16 %v836, %v834
        %v905 = vpack.c.b16 %v837, %v835
        %v906 = vpack.c.b16 %v840, %v838
        %v907 = vpack.c.b16 %v841, %v839
        %v908 = vpack.c.b16 %v844, %v842
        %v909 = vpack.c.b16 %v845, %v843
        %974 = vmatprep.subr.bf16.mxu0 %v847
        %975 = vmatpush1.bf16.msra.mxu0 %v846
        %976 = vmatprep.subr.bf16.mxu0 %v849
        %977 = vmatpush1.bf16.msra.mxu0 %v848
        %978 = vmatprep.subr.bf16.mxu0 %v851
        %979 = vmatpush1.bf16.msra.mxu0 %v850
        %980 = vmatprep.subr.bf16.mxu0 %v853
        %981 = vmatpush1.bf16.msra.mxu0 %v852
        %982 = vmatprep.subr.bf16.mxu0 %v855
        %983 = vmatpush1.bf16.msra.mxu0 %v854
        %984 = vmatprep.subr.bf16.mxu0 %v857
        %985 = vmatpush1.bf16.msra.mxu0 %v856
        %986 = vmatprep.subr.bf16.mxu0 %v859
        %987 = vmatpush1.bf16.msra.mxu0 %v858
        %988 = vmatprep.subr.bf16.mxu0 %v861
        %989 = vmatpush1.bf16.msra.mxu0 %v860
        %990 = vmatprep.subr.bf16.mxu0 %v863
        %991 = vmatpush1.bf16.msra.mxu0 %v862
        %992 = vmatprep.subr.bf16.mxu0 %v865
        %993 = vmatpush1.bf16.msra.mxu0 %v864
        %994 = vmatprep.subr.bf16.mxu0 %v867
        %995 = vmatpush1.bf16.msra.mxu0 %v866
        %996 = vmatprep.subr.bf16.mxu0 %v869
        %997 = vmatpush1.bf16.msra.mxu0 %v868
        %998 = vmatprep.subr.bf16.mxu0 %v871
        %999 = vmatpush1.bf16.msra.mxu0 %v870
        %1000 = vmatprep.subr.bf16.mxu0 %v873
        %1001 = vmatpush1.bf16.msra.mxu0 %v872
        %1002 = vmatprep.subr.bf16.mxu0 %v875
        %1003 = vmatpush1.bf16.msra.mxu0 %v874
        %1004 = vmatprep.subr.bf16.mxu0 %v877
        %1005 = vmatpush1.bf16.msra.mxu0 %v876
        %1006 = vmatprep.mubr.bf16.mxu0 %v647
        %1007 = vmatmul.mubr.bf16.gmra.mrb[0].mxu0 %v646
        %v1008 = vpop.f32.mrb[0].mxu0
        %v1009 = vadd.f32 0.0, %v1008
        %v1010 = vpop.f32.mrb[0].mxu0
        %v1011 = vadd.f32 0.0, %v1010
        %v1012 = vpop.f32.mrb[0].mxu0
        %v1013 = vadd.f32 0.0, %v1012
        %v1014 = vpop.f32.mrb[0].mxu0
        %v1015 = vadd.f32 0.0, %v1014
        %1016 = vdwg.mxu0
        %1017 = vmatprep.subr.bf16.mxu0 %v879
        %1018 = vmatpush1.bf16.msra.mxu0 %v878
        %1019 = vmatprep.subr.bf16.mxu0 %v881
        %1020 = vmatpush1.bf16.msra.mxu0 %v880
        %1021 = vmatprep.subr.bf16.mxu0 %v883
        %1022 = vmatpush1.bf16.msra.mxu0 %v882
        %1023 = vmatprep.subr.bf16.mxu0 %v885
        %1024 = vmatpush1.bf16.msra.mxu0 %v884
        %1025 = vmatprep.subr.bf16.mxu0 %v887
        %1026 = vmatpush1.bf16.msra.mxu0 %v886
        %1027 = vmatprep.subr.bf16.mxu0 %v889
        %1028 = vmatpush1.bf16.msra.mxu0 %v888
        %1029 = vmatprep.subr.bf16.mxu0 %v891
        %1030 = vmatpush1.bf16.msra.mxu0 %v890
        %1031 = vmatprep.subr.bf16.mxu0 %v893
        %1032 = vmatpush1.bf16.msra.mxu0 %v892
        %1033 = vmatprep.subr.bf16.mxu0 %v895
        %1034 = vmatpush1.bf16.msra.mxu0 %v894
        %1035 = vmatprep.subr.bf16.mxu0 %v897
        %1036 = vmatpush1.bf16.msra.mxu0 %v896
        %1037 = vmatprep.subr.bf16.mxu0 %v899
        %1038 = vmatpush1.bf16.msra.mxu0 %v898
        %1039 = vmatprep.subr.bf16.mxu0 %v901
        %1040 = vmatpush1.bf16.msra.mxu0 %v900
        %1041 = vmatprep.subr.bf16.mxu0 %v903
        %1042 = vmatpush1.bf16.msra.mxu0 %v902
        %1043 = vmatprep.subr.bf16.mxu0 %v905
        %1044 = vmatpush1.bf16.msra.mxu0 %v904
        %1045 = vmatprep.subr.bf16.mxu0 %v907
        %1046 = vmatpush1.bf16.msra.mxu0 %v906
        %1047 = vmatprep.subr.bf16.mxu0 %v909
        %1048 = vmatpush1.bf16.msra.mxu0 %v908
        %1049 = vmatprep.mubr.bf16.mxu0 %v649
        %1050 = vmatmul.mubr.bf16.gmra.mrb[0].mxu0 %v648
        %v1051 = vpop.f32.mrb[0].mxu0
        %v1052 = vadd.f32 %v1009, %v1051
        %v1053 = vpop.f32.mrb[0].mxu0
        %v1054 = vadd.f32 %v1011, %v1053
        %v1055 = vpop.f32.mrb[0].mxu0
        %v1056 = vadd.f32 %v1013, %v1055
        %v1057 = vpop.f32.mrb[0].mxu0
        %v1058 = vadd.f32 %v1015, %v1057
        %1059 = vdwg.mxu0
        %v1060 = vadd.f32 %v562, %v1052
        %v1061 = vadd.f32 %v563, %v1054
        %v1062 = vadd.f32 %v564, %v1056
        %v1063 = vadd.f32 %v565, %v1058
        %1064 = vst [vmem:[#allocation2] sm:$0xff] %v1060
        %1065 = vst [vmem:[#allocation2 + $0x8] sm:$0xff] %v1061
        %1066 = vst [vmem:[#allocation2 + $0x10] sm:$0xff] %v1062
        %1067 = vst [vmem:[#allocation2 + $0x18] sm:$0xff] %v1063
        %p1068 = scmp.eq.s32.totalorder %s21, 3
        // Predicated region
        $region98: #{alexnet_forward.24} parent=84 // pred_check
          %p1069 = pneg %p1068
        $region99: #{alexnet_forward.24} parent=84 // pred_check_branch
          %1071 = sbr.rel (%p1069) target = $region101
        $region100: #{alexnet_forward.24} parent=84 // pred_region
          %v1072 = vld [vmem:[#allocation2] sm:$0xff]
          %v1073 = vld [vmem:[#allocation2 + $0x8] sm:$0xff]
          %v1074 = vld [vmem:[#allocation2 + $0x10] sm:$0xff]
          %v1075 = vld [vmem:[#allocation2 + $0x18] sm:$0xff]
          %v1076 = vld [vmem:[%s550] sm:$0x3]
          %v1078 = vlaneseq
          %v1079 = vshrl.u32 %v1078, 7
          %v1080 = vsub.s32 0, %v1079
          %v1081 = vrot.slane %v1076, %v1080
          %v1082 = vlaneseq
          %v1083 = vshrl.u32 %v1082, 7
          %v1084 = vsub.s32 1, %v1083
          %v1085 = vrot.slane %v1076, %v1084
          %v1088 = vadd.f32 %v1072, %v1081
          %v1089 = vadd.f32 %v1073, %v1085
          %v1090 = vadd.f32 %v1074, %v1081
          %v1091 = vadd.f32 %v1075, %v1085
          %v1092 = vmax.f32 %v1088, 0.0
          %v1093 = vmax.f32 %v1089, 0.0
          %v1094 = vmax.f32 %v1090, 0.0
          %v1095 = vmax.f32 %v1091, 0.0
          %v1096 = vpack.c.bf16 %v1094, %v1092
          %v1097 = vpack.c.bf16 %v1095, %v1093
          %v1100 = vunpack.c.l.b16 %v1096
          %v1101 = vunpack.c.l.b16 %v1097
          %v1102 = vunpack.c.h.b16 %v1096
          %v1103 = vunpack.c.h.b16 %v1097
          %v1104 = vpack.c.b16 %v1101, %v1100
          %v1105 = vpack.c.b16 %v1103, %v1102
          %1108 = vst [vmem:[%s542] sm:$0xff] %v1104
          %1109 = vst [vmem:[%s542 + $0x8] sm:$0xff] %v1105
        $region101: #{alexnet_forward.24} parent=84 // pred_fallthru
          _
        %s1110 = sand.u32 %s125, 1
        %s1111 = sand.u32 %s125, 1
        %s1112 = smul.addr %s1111, 16
        %s1113 = scalar_lea.vmem [#allocation5], %s1112
        // Predicated region
        $region102: #{alexnet_forward.24} parent=84 // pred_check
          %p1114 = pneg %p135
        $region103: #{alexnet_forward.24} parent=84 // pred_check_branch
          %1116 = sbr.rel (%p1114) target = $region105
        $region104: #{alexnet_forward.24} parent=84 // pred_region
          %s1117 = smul.u32 2, %s19
          %s1118 = smul.u32 2, %s20
          %s1119 = smul.addr %s1117, 16
          %s1120 = sadd.s32 %s1118, %s1119
          %s1121 = smul.addr %s1120, 4
          %s1122 = scalar_lea.vmem %s3, %s1121
          // Predicated region
          $region106: #{alexnet_forward.24} parent=104 // pred_check
            _
          $region107: #{alexnet_forward.24} parent=104 // pred_check_branch
            %1124 = sbr.rel (0) target = $region109
          $region108: #{alexnet_forward.24} parent=104 // pred_region
            // Predicated region
            $region110: #{alexnet_forward.24} parent=108 // pred_check
              _
            $region111: #{alexnet_forward.24} parent=108 // pred_check_branch
              %1126 = sbr.rel (0) target = $region113
            $region112: #{alexnet_forward.24} parent=108 // pred_region
              // Predicated region
              $region125: #{alexnet_forward.24} parent=112 // pred_check
                _
              $region126: #{alexnet_forward.24} parent=112 // pred_check_branch
                %1143 = sbr.rel (0) target = $region128
              $region127: #{alexnet_forward.24} parent=112 // pred_region
                loop: start=0, step=1, limit=1
                $region129: #{alexnet_forward.24} parent=127 // loop_pre_header
                  _
                $region130: #{alexnet_forward.24} parent=127 // loop_header
                  %s1145 = sphi 0, %s1149
                  %p1146 = scmp.ge.s32.totalorder %s1145, 1
                  %s1150 = sphi %s1113, %s1113
                  %s1151 = sphi %s1122, %s1122
                $region131: #{alexnet_forward.24} parent=127 // loop_header_branch
                  %1148 = sbr.rel (%p1146) target = $region135
                $region132: #{alexnet_forward.24} parent=127 // loop_body
                  %v1152 = vld [vmem:[%s1150] sm:$0xff]
                  %1153 = vst [vmem:[%s1151] sm:$0xff] %v1152
                  %v1154 = vld [vmem:[%s1150 + $0x8] sm:$0xff]
                  %1155 = vst [vmem:[%s1151 + $0x40] sm:$0xff] %v1154
                $region133: #{alexnet_forward.24} parent=127 // loop_footer
                  %s1149 = sadd.s32 1, %s1145
                $region134: #{alexnet_forward.24} parent=127 // loop_footer_branch
                  %1144 = sbr.rel target = $region130
                $region135: #{alexnet_forward.24} parent=127 // loop_exit
                  _
              $region128: #{alexnet_forward.24} parent=112 // pred_fallthru
                _
              // Predicated region
              $region136: #{alexnet_forward.24} parent=112 // pred_check
                _
              $region137: #{alexnet_forward.24} parent=112 // pred_check_branch
                %1157 = sbr.rel target = $region139
              $region138: #{alexnet_forward.24} parent=112 // pred_region
                _
              $region139: #{alexnet_forward.24} parent=112 // pred_fallthru
                _
            $region113: #{alexnet_forward.24} parent=108 // pred_fallthru
              _
            // Predicated region
            $region114: #{alexnet_forward.24} parent=108 // pred_check
              _
            $region115: #{alexnet_forward.24} parent=108 // pred_check_branch
              %1128 = sbr.rel target = $region117
            $region116: #{alexnet_forward.24} parent=108 // pred_region
              loop: start=0, step=1, limit=1
              $region118: #{alexnet_forward.24} parent=116 // loop_pre_header
                _
              $region119: #{alexnet_forward.24} parent=116 // loop_header
                %s1131 = sphi 0, %s1135
                %p1132 = scmp.ge.s32.totalorder %s1131, 1
                %s1136 = sphi %s1113, %s1113
                %s1137 = sphi %s1122, %s1122
              $region120: #{alexnet_forward.24} parent=116 // loop_header_branch
                %1134 = sbr.rel (%p1132) target = $region124
              $region121: #{alexnet_forward.24} parent=116 // loop_body
                %v1138 = vld [vmem:[%s1136] sm:$0xff]
                %1139 = vst [vmem:[%s1137] sm:$0xff] %v1138
                %v1140 = vld [vmem:[%s1136 + $0x8] sm:$0xff]
                %1141 = vst [vmem:[%s1137 + $0x40] sm:$0xff] %v1140
              $region122: #{alexnet_forward.24} parent=116 // loop_footer
                %s1135 = sadd.s32 1, %s1131
              $region123: #{alexnet_forward.24} parent=116 // loop_footer_branch
                %1130 = sbr.rel target = $region119
              $region124: #{alexnet_forward.24} parent=116 // loop_exit
                _
            $region117: #{alexnet_forward.24} parent=108 // pred_fallthru
              _
          $region109: #{alexnet_forward.24} parent=104 // pred_fallthru
            _
          %1158 = vnop
        $region105: #{alexnet_forward.24} parent=84 // pred_fallthru
          _
      $region85: #{alexnet_forward.24} parent=5 // pred_fallthru
        _
      %p1159 = scmp.le.s32.totalorder 2, %s9
      // Predicated region
      $region140: #{alexnet_forward.24} parent=5 // pred_check
        %p1160 = pneg %p1159
      $region141: #{alexnet_forward.24} parent=5 // pred_check_branch
        %1162 = sbr.rel (%p1160) target = $region143
      $region142: #{alexnet_forward.24} parent=5 // pred_region
        %s1163 = ssub.s32 %s9, 2
        // Predicated region
        $region144: #{alexnet_forward.24} parent=142 // pred_check
          %p1164 = pneg %p141
        $region145: #{alexnet_forward.24} parent=142 // pred_check_branch
          %1166 = sbr.rel (%p1164) target = $region147
        $region146: #{alexnet_forward.24} parent=142 // pred_region
          %s1167 = sand.u32 %s126, 1
          %s1168 = sand.u32 %s126, 1
          %s1169 = smul.addr %s1168, 16
          %s1170 = scalar_lea.vmem [#allocation5], %s1169
        $region147: #{alexnet_forward.24} parent=142 // pred_fallthru
          _
      $region143: #{alexnet_forward.24} parent=5 // pred_fallthru
        _
    $region6: #{alexnet_forward.24} parent=1 // loop_footer
      %s13 = sadd.s32 1, %s9
    $region7: #{alexnet_forward.24} parent=1 // loop_footer_branch
      %8 = sbr.rel target = $region3
    $region8: #{alexnet_forward.24} parent=1 // loop_exit
      _

// kernel: alexnet_forward.25
$region0: #{alexnet_forward.25}
  #allocation0 [shape = 'u32[]', space=smem, size = 0x4, offset = 0x4, fixed_abs, tag = 'smem constant byte address 0x4 - core index']
  #allocation1 [shape = 'u32[144,128]{1,0:T(1,128)}', space=vmem, size = 0x12000, scoped, tag = 'internal scratch']
  #allocation2 [shape = 'f32[16,128]{1,0:T(8,128)}', space=vmem, size = 0x2000, scoped, tag = 'scratch operand']
  %s0 = inlined_call_operand.vmem [shape: bf16[16,2048], index: 0, kind: input, shape index: {}]
  %s1 = inlined_call_operand.vmem [shape: bf16[2048,128], index: 1, kind: input, shape index: {}]
  %s2 = inlined_call_operand.vmem [shape: f32[1,128], index: 2, kind: input, shape index: {}]
  %s3 = inlined_call_operand.vmem [shape: f32[16,128], index: 3, kind: output, shape index: {}]
  %s4 = sld [smem:[#allocation0]]
  $region76: #{alexnet_forward.25} parent=0
    _
  %s6 = ssub.s32 1, %s4
  %s7 = scalar_select 0, %s6, %s4
  $region1: #{alexnet_forward.25} parent=0
    #allocation3 [shape = 'u8[32768]{0}', space=vmem, size = 0x8000, scoped, tag = 'input window, operand 0']
    loop: start=0, step=1, limit=6
    $region2: #{alexnet_forward.25} parent=1 // loop_pre_header
      _
    $region3: #{alexnet_forward.25} parent=1 // loop_header
      %s9 = sphi 0, %s13
      %p10 = scmp.ge.s32.totalorder %s9, 6
      %s16 = sphi 0, %s35
      %s17 = sphi 0, %s31
      %s18 = sphi 0, %s27
      %s19 = sphi 0, %s16
      %s20 = sphi 0, %s17
      %s21 = sphi 0, %s18
      %s22 = sphi 0, %s19
      %s23 = sphi 0, %s20
      %s24 = sphi 0, %s21
      %s40 = sphi 0, %s42
      %s43 = sphi 0, %s40
      %s44 = sphi 0, %s43
      %s60 = sphi 0, %s44
      %s68 = sphi 0, %s70
      %s71 = sphi 0, %s68
      %s72 = sphi 0, %s71
      %s88 = sphi 0, %s72
      %s94 = sphi 0, %s96
      %s97 = sphi 0, %s94
      %s98 = sphi 0, %s97
      %s114 = sphi 0, %s98
      %s122 = sphi 0, %s124
      %s125 = sphi 0, %s122
      %s126 = sphi 0, %s125
      %s142 = sphi 0, %s126
    $region4: #{alexnet_forward.25} parent=1 // loop_header_branch
      %12 = sbr.rel (%p10) target = $region8
    $region5: #{alexnet_forward.25} parent=1 // loop_body
      %s14 = ssub.s32 %s9, 1
      %s15 = ssub.s32 %s9, 2
      %s25 = sadd.s32 1, %s18
      %p26 = scmp.ge.s32.totalorder %s25, 4
      %s27 = scalar_select %p26, 0, %s25
      %s28 = sadd.s32 1, %s17
      %s29 = scalar_select %p26, %s28, %s17
      %p30 = scmp.ge.s32.totalorder %s29, 1
      %s31 = scalar_select %p30, 0, %s29
      %s32 = sadd.s32 1, %s16
      %s33 = scalar_select %p30, %s32, %s16
      %p34 = scmp.ge.s32.totalorder %s33, 1
      %s35 = scalar_select %p34, 0, %s33
      %s36 = ssub.s32 %s16, %s35
      %s37 = ssub.s32 %s18, %s27
      %s38 = sor.u32 %s36, %s37
      %p39 = scmp.eq.s32.totalorder %s38, 0
      %s41 = sadd.s32 %s40, 1
      %s42 = scalar_select %p39, %s40, %s41
      %p45 = pneg %p39
      %p46 = scmp.eq.s32.totalorder %s9, 3
      %p47 = por %p45, %p46
      %p48 = scmp.ne.s32.totalorder %s40, %s43
      %p49 = scmp.eq.s32.totalorder %s9, 0
      %p50 = por %p48, %p49
      %p51 = scmp.ne.s32.totalorder %s40, %s43
      %p52 = scmp.eq.s32.totalorder %s14, 3
      %p53 = por %p51, %p52
      %p54 = scmp.ne.s32.totalorder %s43, %s44
      %p55 = scmp.eq.s32.totalorder %s14, 0
      %p56 = por %p54, %p55
      %p57 = scmp.ne.s32.totalorder %s43, %s44
      %p58 = scmp.eq.s32.totalorder %s15, 3
      %p59 = por %p57, %p58
      %p61 = scmp.ne.s32.totalorder %s44, %s60
      %p62 = scmp.eq.s32.totalorder %s15, 0
      %p63 = por %p61, %p62
      %s64 = ssub.s32 %s18, %s27
      %s65 = ssub.s32 %s17, %s31
      %s66 = sor.u32 %s64, %s65
      %p67 = scmp.eq.s32.totalorder %s66, 0
      %s69 = sadd.s32 %s68, 1
      %s70 = scalar_select %p67, %s68, %s69
      %p73 = pneg %p67
      %p74 = scmp.eq.s32.totalorder %s9, 3
      %p75 = por %p73, %p74
      %p76 = scmp.ne.s32.totalorder %s68, %s71
      %p77 = scmp.eq.s32.totalorder %s9, 0
      %p78 = por %p76, %p77
      %p79 = scmp.ne.s32.totalorder %s68, %s71
      %p80 = scmp.eq.s32.totalorder %s14, 3
      %p81 = por %p79, %p80
      %p82 = scmp.ne.s32.totalorder %s71, %s72
      %p83 = scmp.eq.s32.totalorder %s14, 0
      %p84 = por %p82, %p83
      %p85 = scmp.ne.s32.totalorder %s71, %s72
      %p86 = scmp.eq.s32.totalorder %s15, 3
      %p87 = por %p85, %p86
      %p89 = scmp.ne.s32.totalorder %s72, %s88
      %p90 = scmp.eq.s32.totalorder %s15, 0
      %p91 = por %p89, %p90
      %s92 = ssub.s32 %s17, %s31
      %p93 = scmp.eq.s32.totalorder %s92, 0
      %s95 = sadd.s32 %s94, 1
      %s96 = scalar_select %p93, %s94, %s95
      %p99 = pneg %p93
      %p100 = scmp.eq.s32.totalorder %s9, 3
      %p101 = por %p99, %p100
      %p102 = scmp.ne.s32.totalorder %s94, %s97
      %p103 = scmp.eq.s32.totalorder %s9, 0
      %p104 = por %p102, %p103
      %p105 = scmp.ne.s32.totalorder %s94, %s97
      %p106 = scmp.eq.s32.totalorder %s14, 3
      %p107 = por %p105, %p106
      %p108 = scmp.ne.s32.totalorder %s97, %s98
      %p109 = scmp.eq.s32.totalorder %s14, 0
      %p110 = por %p108, %p109
      %p111 = scmp.ne.s32.totalorder %s97, %s98
      %p112 = scmp.eq.s32.totalorder %s15, 3
      %p113 = por %p111, %p112
      %p115 = scmp.ne.s32.totalorder %s98, %s114
      %p116 = scmp.eq.s32.totalorder %s15, 0
      %p117 = por %p115, %p116
      %s118 = ssub.s32 %s16, %s35
      %s119 = ssub.s32 %s17, %s31
      %s120 = sor.u32 %s118, %s119
      %p121 = scmp.eq.s32.totalorder %s120, 0
      %s123 = sadd.s32 %s122, 1
      %s124 = scalar_select %p121, %s122, %s123
      %p127 = pneg %p121
      %p128 = scmp.eq.s32.totalorder %s9, 3
      %p129 = por %p127, %p128
      %p130 = scmp.ne.s32.totalorder %s122, %s125
      %p131 = scmp.eq.s32.totalorder %s9, 0
      %p132 = por %p130, %p131
      %p133 = scmp.ne.s32.totalorder %s122, %s125
      %p134 = scmp.eq.s32.totalorder %s14, 3
      %p135 = por %p133, %p134
      %p136 = scmp.ne.s32.totalorder %s125, %s126
      %p137 = scmp.eq.s32.totalorder %s14, 0
      %p138 = por %p136, %p137
      %p139 = scmp.ne.s32.totalorder %s125, %s126
      %p140 = scmp.eq.s32.totalorder %s15, 3
      %p141 = por %p139, %p140
      %p143 = scmp.ne.s32.totalorder %s126, %s142
      %p144 = scmp.eq.s32.totalorder %s15, 0
      %p145 = por %p143, %p144
      %p146 = scmp.le.s32.totalorder 1, %s9
      %p147 = scmp.lt.s32.totalorder %s9, 5
      %p148 = pnand %p146, %p147
      %p149 = pneg %p148
      // Predicated region
      $region9: #{alexnet_forward.25} parent=5 // pred_check
        _
      $region10: #{alexnet_forward.25} parent=5 // pred_check_branch
        %151 = sbr.rel (%p148) target = $region12
      $region11: #{alexnet_forward.25} parent=5 // pred_region
        %s152 = ssub.s32 %s9, 1
        // Predicated region
        $region13: #{alexnet_forward.25} parent=11 // pred_check
          %p153 = pneg %p110
        $region14: #{alexnet_forward.25} parent=11 // pred_check_branch
          %155 = sbr.rel (%p153) target = $region16
        $region15: #{alexnet_forward.25} parent=11 // pred_region
          %p156 = scmp.lt.s32.totalorder %s20, 0
          %s157 = scalar_select %p156, %s20, 0
          %s158 = scalar_lea.vmem %s2, %s157
        $region16: #{alexnet_forward.25} parent=11 // pred_fallthru
          _
      $region12: #{alexnet_forward.25} parent=5 // pred_fallthru
        _
      %p159 = scmp.lt.s32.totalorder %s9, 4
      // Predicated region
      $region17: #{alexnet_forward.25} parent=5 // pred_check
        %p160 = pneg %p159
      $region18: #{alexnet_forward.25} parent=5 // pred_check_branch
        %162 = sbr.rel (%p160) target = $region20
      $region19: #{alexnet_forward.25} parent=5 // pred_region
        // Predicated region
        $region21: #{alexnet_forward.25} parent=19 // pred_check
          %p163 = pneg %p50
        $region22: #{alexnet_forward.25} parent=19 // pred_check_branch
          %165 = sbr.rel (%p163) target = $region24
        $region23: #{alexnet_forward.25} parent=19 // pred_region
          %s166 = sand.u32 %s40, 1
          %s167 = sand.u32 %s40, 1
          %s168 = smul.addr %s167, 32
          %s169 = scalar_lea.vmem [#allocation3], %s168
          %s170 = smul.u32 2, %s16
          %s171 = smul.u32 4, %s18
          %s172 = smul.addr %s170, 16
          %s173 = sadd.s32 %s171, %s172
          %s174 = smul.addr %s173, 4
          %s175 = scalar_lea.vmem %s0, %s174
          // Predicated region
          $region25: #{alexnet_forward.25} parent=23 // pred_check
            _
          $region26: #{alexnet_forward.25} parent=23 // pred_check_branch
            %177 = sbr.rel (0) target = $region28
          $region27: #{alexnet_forward.25} parent=23 // pred_region
            // Predicated region
            $region29: #{alexnet_forward.25} parent=27 // pred_check
              _
            $region30: #{alexnet_forward.25} parent=27 // pred_check_branch
              %179 = sbr.rel (0) target = $region32
            $region31: #{alexnet_forward.25} parent=27 // pred_region
              loop: start=0, step=1, limit=1
              $region33: #{alexnet_forward.25} parent=31 // loop_pre_header
                _
              $region34: #{alexnet_forward.25} parent=31 // loop_header
                %s181 = sphi 0, %s185
                %p182 = scmp.ge.s32.totalorder %s181, 1
                %s186 = sphi %s175, %s175
                %s187 = sphi %s169, %s169
              $region35: #{alexnet_forward.25} parent=31 // loop_header_branch
                %184 = sbr.rel (%p182) target = $region39
              $region36: #{alexnet_forward.25} parent=31 // loop_body
                %v188 = vld [vmem:[%s186] sm:$0xff]
                %189 = vst [vmem:[%s187] sm:$0xff] %v188
                %v190 = vld [vmem:[%s186 + $0x8] sm:$0xff]
                %191 = vst [vmem:[%s187 + $0x8] sm:$0xff] %v190
                %v192 = vld [vmem:[%s186 + $0x40] sm:$0xff]
                %193 = vst [vmem:[%s187 + $0x10] sm:$0xff] %v192
                %v194 = vld [vmem:[%s186 + $0x48] sm:$0xff]
                %195 = vst [vmem:[%s187 + $0x18] sm:$0xff] %v194
              $region37: #{alexnet_forward.25} parent=31 // loop_footer
                %s185 = sadd.s32 1, %s181
              $region38: #{alexnet_forward.25} parent=31 // loop_footer_branch
                %180 = sbr.rel target = $region34
              $region39: #{alexnet_forward.25} parent=31 // loop_exit
                _
            $region32: #{alexnet_forward.25} parent=27 // pred_fallthru
              _
            // Predicated region
            $region40: #{alexnet_forward.25} parent=27 // pred_check
              _
            $region41: #{alexnet_forward.25} parent=27 // pred_check_branch
              %197 = sbr.rel target = $region43
            $region42: #{alexnet_forward.25} parent=27 // pred_region
              _
            $region43: #{alexnet_forward.25} parent=27 // pred_fallthru
              _
          $region28: #{alexnet_forward.25} parent=23 // pred_fallthru
            _
          %198 = vnop
        $region24: #{alexnet_forward.25} parent=19 // pred_fallthru
          _
        // Predicated region
        $region44: #{alexnet_forward.25} parent=19 // pred_check
          %p199 = pneg %p78
        $region45: #{alexnet_forward.25} parent=19 // pred_check_branch
          %201 = sbr.rel (%p199) target = $region47
        $region46: #{alexnet_forward.25} parent=19 // pred_region
          %s202 = smul.u32 64, %s18
          %p203 = scmp.lt.s32.totalorder %s202, 255
          %s204 = scalar_select %p203, %s202, 255
          %p205 = scmp.lt.s32.totalorder %s17, 0
          %s206 = scalar_select %p205, %s17, 0
          %s207 = sadd.s32 %s206, %s204
          %s208 = smul.addr %s207, 4
          %s209 = scalar_lea.vmem %s1, %s208
          %s210 = smul.u32 64, %s18
        $region47: #{alexnet_forward.25} parent=19 // pred_fallthru
          _
      $region20: #{alexnet_forward.25} parent=5 // pred_fallthru
        _
      %p211 = scmp.le.s32.totalorder 1, %s9
      %p212 = scmp.lt.s32.totalorder %s9, 5
      %p213 = pnand %p211, %p212
      %p214 = pneg %p213
      // Predicated region
      $region48: #{alexnet_forward.25} parent=5 // pred_check
        _
      $region49: #{alexnet_forward.25} parent=5 // pred_check_branch
        %216 = sbr.rel (%p213) target = $region51
      $region50: #{alexnet_forward.25} parent=5 // pred_region
        %s217 = ssub.s32 %s9, 1
        %s218 = sand.u32 %s43, 1
        %s219 = sand.u32 %s43, 1
        %s220 = smul.addr %s219, 32
        %s221 = scalar_lea.vmem [#allocation3], %s220
        // Predicated region
        $region52: #{alexnet_forward.25} parent=50 // pred_check
          %p222 = pneg %p56
        $region53: #{alexnet_forward.25} parent=50 // pred_check_branch
          %224 = sbr.rel (%p222) target = $region55
        $region54: #{alexnet_forward.25} parent=50 // pred_region
          _
        $region55: #{alexnet_forward.25} parent=50 // pred_fallthru
          _
        %s225 = sand.u32 %s43, 1
        %s226 = sand.u32 %s43, 1
        %s227 = smul.addr %s226, 32
        %s228 = scalar_lea.vmem [#allocation3], %s227
        %p229 = pneg %p56
        %p230 = pneg %p53
        %s231 = smul.u32 64, %s21
        %p232 = scmp.lt.s32.totalorder %s231, 255
        %s233 = scalar_select %p232, %s231, 255
        %p234 = scmp.lt.s32.totalorder %s20, 0
        %s235 = scalar_select %p234, %s20, 0
        %s236 = sadd.s32 %s235, %s233
        %s237 = smul.addr %s236, 4
        %s238 = scalar_lea.vmem %s1, %s237
        %p239 = pneg %p84
        %p240 = pneg %p81
        %p241 = scmp.lt.s32.totalorder %s20, 0
        %s242 = scalar_select %p241, %s20, 0
        %s243 = scalar_lea.vmem %s2, %s242
        %p244 = pneg %p110
        %p245 = pneg %p107
        %p246 = pneg %p138
        %p247 = pneg %p135
        %s248 = smul.u32 2, %s19
        %p249 = scmp.lt.s32.totalorder %s248, 1
        %s250 = scalar_select %p249, %s248, 1
        %p251 = scmp.lt.s32.totalorder %s20, 0
        %s252 = scalar_select %p251, %s20, 0
        %s253 = sadd.s32 %s252, %s250
        %s254 = smul.addr %s253, 8
        %s255 = scalar_lea.vmem %s3, %s254
        %s256 = smul.u32 2, %s19
        %s257 = smul.u32 4, %s21
        %s258 = smul.u32 64, %s21
        %p259 = scmp.lt.s32.totalorder %s258, 255
        %s260 = scalar_select %p259, %s258, 255
        %p261 = scmp.lt.s32.totalorder %s20, 0
        %s262 = scalar_select %p261, %s20, 0
        %s263 = sadd.s32 %s262, %s260
        %s264 = smul.addr %s263, 4
        %s265 = scalar_lea.vmem %s1, %s264
        %s266 = smul.u32 64, %s21
        %p267 = scmp.lt.s32.totalorder %s20, 0
        %s268 = scalar_select %p267, %s20, 0
        %s269 = scalar_lea.vmem %s2, %s268
        %s270 = smul.u32 2, %s19
        %p271 = scmp.lt.s32.totalorder %s270, 1
        %s272 = scalar_select %p271, %s270, 1
        %p273 = scmp.lt.s32.totalorder %s20, 0
        %s274 = scalar_select %p273, %s20, 0
        %s275 = sadd.s32 %s274, %s272
        %s276 = smul.addr %s275, 8
        %s277 = scalar_lea.vmem %s3, %s276
        %s278 = smul.u32 2, %s19
        %p280 = scmp.eq.s32.totalorder %s21, 0
        // Predicated region
        $region56: #{alexnet_forward.25} parent=50 // pred_check
          %p281 = pneg %p280
        $region57: #{alexnet_forward.25} parent=50 // pred_check_branch
          %283 = sbr.rel (%p281) target = $region59
        $region58: #{alexnet_forward.25} parent=50 // pred_region
          %284 = vst [vmem:[#allocation2] sm:$0xff] 0.0
          %285 = vst [vmem:[#allocation2 + $0x8] sm:$0xff] 0.0
        $region59: #{alexnet_forward.25} parent=50 // pred_fallthru
          _
        %v286 = vld [vmem:[#allocation2] sm:$0xff]
        %v287 = vld [vmem:[#allocation2 + $0x8] sm:$0xff]
        %v288 = vld [vmem:[%s221] sm:$0xff]
        %v289 = vld [vmem:[%s221 + $0x8] sm:$0xff]
        %v290 = vld [vmem:[%s221 + $0x10] sm:$0xff]
        %v291 = vld [vmem:[%s221 + $0x18] sm:$0xff]
        %v292 = vld [vmem:[%s265] sm:$0xf]
        %v293 = vld [vmem:[%s265 + $0x4] sm:$0xf]
        %v294 = vld [vmem:[%s265 + $0x8] sm:$0xf]
        %v295 = vld [vmem:[%s265 + $0xc] sm:$0xf]
        %v296 = vld [vmem:[%s265 + $0x10] sm:$0xf]
        %v297 = vld [vmem:[%s265 + $0x14] sm:$0xf]
        %v298 = vld [vmem:[%s265 + $0x18] sm:$0xf]
        %v299 = vld [vmem:[%s265 + $0x1c] sm:$0xf]
        %v300 = vld [vmem:[%s265 + $0x20] sm:$0xf]
        %v301 = vld [vmem:[%s265 + $0x24] sm:$0xf]
        %v302 = vld [vmem:[%s265 + $0x28] sm:$0xf]
        %v303 = vld [vmem:[%s265 + $0x2c] sm:$0xf]
        %v304 = vld [vmem:[%s265 + $0x30] sm:$0xf]
        %v305 = vld [vmem:[%s265 + $0x34] sm:$0xf]
        %v306 = vld [vmem:[%s265 + $0x38] sm:$0xf]
        %v307 = vld [vmem:[%s265 + $0x3c] sm:$0xf]
        %v308 = vld [vmem:[%s265 + $0x40] sm:$0xf]
        %v309 = vld [vmem:[%s265 + $0x44] sm:$0xf]
        %v310 = vld [vmem:[%s265 + $0x48] sm:$0xf]
        %v311 = vld [vmem:[%s265 + $0x4c] sm:$0xf]
        %v312 = vld [vmem:[%s265 + $0x50] sm:$0xf]
        %v313 = vld [vmem:[%s265 + $0x54] sm:$0xf]
        %v314 = vld [vmem:[%s265 + $0x58] sm:$0xf]
        %v315 = vld [vmem:[%s265 + $0x5c] sm:$0xf]
        %v316 = vld [vmem:[%s265 + $0x60] sm:$0xf]
        %v317 = vld [vmem:[%s265 + $0x64] sm:$0xf]
        %v318 = vld [vmem:[%s265 + $0x68] sm:$0xf]
        %v319 = vld [vmem:[%s265 + $0x6c] sm:$0xf]
        %v320 = vld [vmem:[%s265 + $0x70] sm:$0xf]
        %v321 = vld [vmem:[%s265 + $0x74] sm:$0xf]
        %v322 = vld [vmem:[%s265 + $0x78] sm:$0xf]
        %v323 = vld [vmem:[%s265 + $0x7c] sm:$0xf]
        %v324 = vld [vmem:[%s265 + $0x80] sm:$0xf]
        %v325 = vld [vmem:[%s265 + $0x84] sm:$0xf]
        %v326 = vld [vmem:[%s265 + $0x88] sm:$0xf]
        %v327 = vld [vmem:[%s265 + $0x8c] sm:$0xf]
        %v328 = vld [vmem:[%s265 + $0x90] sm:$0xf]
        %v329 = vld [vmem:[%s265 + $0x94] sm:$0xf]
        %v330 = vld [vmem:[%s265 + $0x98] sm:$0xf]
        %v331 = vld [vmem:[%s265 + $0x9c] sm:$0xf]
        %v332 = vld [vmem:[%s265 + $0xa0] sm:$0xf]
        %v333 = vld [vmem:[%s265 + $0xa4] sm:$0xf]
        %v334 = vld [vmem:[%s265 + $0xa8] sm:$0xf]
        %v335 = vld [vmem:[%s265 + $0xac] sm:$0xf]
        %v336 = vld [vmem:[%s265 + $0xb0] sm:$0xf]
        %v337 = vld [vmem:[%s265 + $0xb4] sm:$0xf]
        %v338 = vld [vmem:[%s265 + $0xb8] sm:$0xf]
        %v339 = vld [vmem:[%s265 + $0xbc] sm:$0xf]
        %v340 = vld [vmem:[%s265 + $0xc0] sm:$0xf]
        %v341 = vld [vmem:[%s265 + $0xc4] sm:$0xf]
        %v342 = vld [vmem:[%s265 + $0xc8] sm:$0xf]
        %v343 = vld [vmem:[%s265 + $0xcc] sm:$0xf]
        %v344 = vld [vmem:[%s265 + $0xd0] sm:$0xf]
        %v345 = vld [vmem:[%s265 + $0xd4] sm:$0xf]
        %v346 = vld [vmem:[%s265 + $0xd8] sm:$0xf]
        %v347 = vld [vmem:[%s265 + $0xdc] sm:$0xf]
        %v348 = vld [vmem:[%s265 + $0xe0] sm:$0xf]
        %v349 = vld [vmem:[%s265 + $0xe4] sm:$0xf]
        %v350 = vld [vmem:[%s265 + $0xe8] sm:$0xf]
        %v351 = vld [vmem:[%s265 + $0xec] sm:$0xf]
        %v352 = vld [vmem:[%s265 + $0xf0] sm:$0xf]
        %v353 = vld [vmem:[%s265 + $0xf4] sm:$0xf]
        %v354 = vld [vmem:[%s265 + $0xf8] sm:$0xf]
        %v355 = vld [vmem:[%s265 + $0xfc] sm:$0xf]
        %v360 = vunpack.c.l.b16 %v288
        %v361 = vunpack.c.h.b16 %v288
        %v362 = vunpack.c.l.b16 %v289
        %v363 = vunpack.c.h.b16 %v289
        %v364 = vunpack.c.l.b16 %v290
        %v365 = vunpack.c.h.b16 %v290
        %v366 = vunpack.c.l.b16 %v291
        %v367 = vunpack.c.h.b16 %v291
        %v368 = vpack.c.b16 %v364, %v360
        %v369 = vpack.c.b16 %v365, %v361
        %v370 = vpack.c.b16 %v366, %v362
        %v371 = vpack.c.b16 %v367, %v363
        %v440 = vunpack.c.l.b16 %v292
        %v441 = vunpack.c.l.b16 %v293
        %v442 = vunpack.c.l.b16 %v294
        %v443 = vunpack.c.l.b16 %v295
        %v444 = vunpack.c.l.b16 %v296
        %v445 = vunpack.c.l.b16 %v297
        %v446 = vunpack.c.l.b16 %v298
        %v447 = vunpack.c.l.b16 %v299
        %v448 = vunpack.c.l.b16 %v300
        %v449 = vunpack.c.l.b16 %v301
        %v450 = vunpack.c.l.b16 %v302
        %v451 = vunpack.c.l.b16 %v303
        %v452 = vunpack.c.l.b16 %v304
        %v453 = vunpack.c.l.b16 %v305
        %v454 = vunpack.c.l.b16 %v306
        %v455 = vunpack.c.l.b16 %v307
        %v456 = vunpack.c.l.b16 %v308
        %v457 = vunpack.c.l.b16 %v309
        %v458 = vunpack.c.l.b16 %v310
        %v459 = vunpack.c.l.b16 %v311
        %v460 = vunpack.c.l.b16 %v312
        %v461 = vunpack.c.l.b16 %v313
        %v462 = vunpack.c.l.b16 %v314
        %v463 = vunpack.c.l.b16 %v315
        %v464 = vunpack.c.l.b16 %v316
        %v465 = vunpack.c.l.b16 %v317
        %v466 = vunpack.c.l.b16 %v318
        %v467 = vunpack.c.l.b16 %v319
        %v468 = vunpack.c.l.b16 %v320
        %v469 = vunpack.c.l.b16 %v321
        %v470 = vunpack.c.l.b16 %v322
        %v471 = vunpack.c.l.b16 %v323
        %v472 = vunpack.c.l.b16 %v324
        %v473 = vunpack.c.l.b16 %v325
        %v474 = vunpack.c.l.b16 %v326
        %v475 = vunpack.c.l.b16 %v327
        %v476 = vunpack.c.l.b16 %v328
        %v477 = vunpack.c.l.b16 %v329
        %v478 = vunpack.c.l.b16 %v330
        %v479 = vunpack.c.l.b16 %v331
        %v480 = vunpack.c.l.b16 %v332
        %v481 = vunpack.c.l.b16 %v333
        %v482 = vunpack.c.l.b16 %v334
        %v483 = vunpack.c.l.b16 %v335
        %v484 = vunpack.c.l.b16 %v336
        %v485 = vunpack.c.l.b16 %v337
        %v486 = vunpack.c.l.b16 %v338
        %v487 = vunpack.c.l.b16 %v339
        %v488 = vunpack.c.l.b16 %v340
        %v489 = vunpack.c.l.b16 %v341
        %v490 = vunpack.c.l.b16 %v342
        %v491 = vunpack.c.l.b16 %v343
        %v492 = vunpack.c.l.b16 %v344
        %v493 = vunpack.c.l.b16 %v345
        %v494 = vunpack.c.l.b16 %v346
        %v495 = vunpack.c.l.b16 %v347
        %v496 = vunpack.c.l.b16 %v348
        %v497 = vunpack.c.l.b16 %v349
        %v498 = vunpack.c.l.b16 %v350
        %v499 = vunpack.c.l.b16 %v351
        %v500 = vunpack.c.l.b16 %v352
        %v501 = vunpack.c.l.b16 %v353
        %v502 = vunpack.c.l.b16 %v354
        %v503 = vunpack.c.l.b16 %v355
        %v504 = vpack.c.b16 %v441, %v440
        %v505 = vpack.c.b16 %v443, %v442
        %v506 = vpack.c.b16 %v445, %v444
        %v507 = vpack.c.b16 %v447, %v446
        %v508 = vpack.c.b16 %v449, %v448
        %v509 = vpack.c.b16 %v451, %v450
        %v510 = vpack.c.b16 %v453, %v452
        %v511 = vpack.c.b16 %v455, %v454
        %v512 = vpack.c.b16 %v457, %v456
        %v513 = vpack.c.b16 %v459, %v458
        %v514 = vpack.c.b16 %v461, %v460
        %v515 = vpack.c.b16 %v463, %v462
        %v516 = vpack.c.b16 %v465, %v464
        %v517 = vpack.c.b16 %v467, %v466
        %v518 = vpack.c.b16 %v469, %v468
        %v519 = vpack.c.b16 %v471, %v470
        %v520 = vpack.c.b16 %v473, %v472
        %v521 = vpack.c.b16 %v475, %v474
        %v522 = vpack.c.b16 %v477, %v476
        %v523 = vpack.c.b16 %v479, %v478
        %v524 = vpack.c.b16 %v481, %v480
        %v525 = vpack.c.b16 %v483, %v482
        %v526 = vpack.c.b16 %v485, %v484
        %v527 = vpack.c.b16 %v487, %v486
        %v528 = vpack.c.b16 %v489, %v488
        %v529 = vpack.c.b16 %v491, %v490
        %v530 = vpack.c.b16 %v493, %v492
        %v531 = vpack.c.b16 %v495, %v494
        %v532 = vpack.c.b16 %v497, %v496
        %v533 = vpack.c.b16 %v499, %v498
        %v534 = vpack.c.b16 %v501, %v500
        %v535 = vpack.c.b16 %v503, %v502
        %568 = vmatprep.subr.bf16.mxu0 0
        %569 = vmatpush1.bf16.msra.mxu0 %v504
        %570 = vmatprep.subr.bf16.mxu0 0
        %571 = vmatpush1.bf16.msra.mxu0 %v505
        %572 = vmatprep.subr.bf16.mxu0 0
        %573 = vmatpush1.bf16.msra.mxu0 %v506
        %574 = vmatprep.subr.bf16.mxu0 0
        %575 = vmatpush1.bf16.msra.mxu0 %v507
        %576 = vmatprep.subr.bf16.mxu0 0
        %577 = vmatpush1.bf16.msra.mxu0 %v508
        %578 = vmatprep.subr.bf16.mxu0 0
        %579 = vmatpush1.bf16.msra.mxu0 %v509
        %580 = vmatprep.subr.bf16.mxu0 0
        %581 = vmatpush1.bf16.msra.mxu0 %v510
        %582 = vmatprep.subr.bf16.mxu0 0
        %583 = vmatpush1.bf16.msra.mxu0 %v511
        %584 = vmatprep.subr.bf16.mxu0 0
        %585 = vmatpush1.bf16.msra.mxu0 %v512
        %586 = vmatprep.subr.bf16.mxu0 0
        %587 = vmatpush1.bf16.msra.mxu0 %v513
        %588 = vmatprep.subr.bf16.mxu0 0
        %589 = vmatpush1.bf16.msra.mxu0 %v514
        %590 = vmatprep.subr.bf16.mxu0 0
        %591 = vmatpush1.bf16.msra.mxu0 %v515
        %592 = vmatprep.subr.bf16.mxu0 0
        %593 = vmatpush1.bf16.msra.mxu0 %v516
        %594 = vmatprep.subr.bf16.mxu0 0
        %595 = vmatpush1.bf16.msra.mxu0 %v517
        %596 = vmatprep.subr.bf16.mxu0 0
        %597 = vmatpush1.bf16.msra.mxu0 %v518
        %598 = vmatprep.subr.bf16.mxu0 0
        %599 = vmatpush1.bf16.msra.mxu0 %v519
        %600 = vmatprep.mubr.bf16.mxu0 %v369
        %601 = vmatmul.mubr.bf16.gmra.mrb[0].mxu0 %v368
        %v602 = vpop.f32.mrb[0].mxu0
        %v603 = vadd.f32 0.0, %v602
        %v604 = vpop.f32.mrb[0].mxu0
        %v605 = vpop.f32.mrb[0].mxu0
        %v606 = vadd.f32 0.0, %v605
        %v607 = vpop.f32.mrb[0].mxu0
        %608 = vdwg.mxu0
        %609 = vmatprep.subr.bf16.mxu0 0
        %610 = vmatpush1.bf16.msra.mxu0 %v520
        %611 = vmatprep.subr.bf16.mxu0 0
        %612 = vmatpush1.bf16.msra.mxu0 %v521
        %613 = vmatprep.subr.bf16.mxu0 0
        %614 = vmatpush1.bf16.msra.mxu0 %v522
        %615 = vmatprep.subr.bf16.mxu0 0
        %616 = vmatpush1.bf16.msra.mxu0 %v523
        %617 = vmatprep.subr.bf16.mxu0 0
        %618 = vmatpush1.bf16.msra.mxu0 %v524
        %619 = vmatprep.subr.bf16.mxu0 0
        %620 = vmatpush1.bf16.msra.mxu0 %v525
        %621 = vmatprep.subr.bf16.mxu0 0
        %622 = vmatpush1.bf16.msra.mxu0 %v526
        %623 = vmatprep.subr.bf16.mxu0 0
        %624 = vmatpush1.bf16.msra.mxu0 %v527
        %625 = vmatprep.subr.bf16.mxu0 0
        %626 = vmatpush1.bf16.msra.mxu0 %v528
        %627 = vmatprep.subr.bf16.mxu0 0
        %628 = vmatpush1.bf16.msra.mxu0 %v529
        %629 = vmatprep.subr.bf16.mxu0 0
        %630 = vmatpush1.bf16.msra.mxu0 %v530
        %631 = vmatprep.subr.bf16.mxu0 0
        %632 = vmatpush1.bf16.msra.mxu0 %v531
        %633 = vmatprep.subr.bf16.mxu0 0
        %634 = vmatpush1.bf16.msra.mxu0 %v532
        %635 = vmatprep.subr.bf16.mxu0 0
        %636 = vmatpush1.bf16.msra.mxu0 %v533
        %637 = vmatprep.subr.bf16.mxu0 0
        %638 = vmatpush1.bf16.msra.mxu0 %v534
        %639 = vmatprep.subr.bf16.mxu0 0
        %640 = vmatpush1.bf16.msra.mxu0 %v535
        %641 = vmatprep.mubr.bf16.mxu0 %v371
        %642 = vmatmul.mubr.bf16.gmra.mrb[0].mxu0 %v370
        %v643 = vpop.f32.mrb[0].mxu0
        %v644 = vadd.f32 %v603, %v643
        %v645 = vpop.f32.mrb[0].mxu0
        %v646 = vpop.f32.mrb[0].mxu0
        %v647 = vadd.f32 %v606, %v646
        %v648 = vpop.f32.mrb[0].mxu0
        %649 = vdwg.mxu0
        %v650 = vadd.f32 %v286, %v644
        %v651 = vadd.f32 %v287, %v647
        %652 = vst [vmem:[#allocation2] sm:$0xff] %v650
        %653 = vst [vmem:[#allocation2 + $0x8] sm:$0xff] %v651
        %p654 = scmp.eq.s32.totalorder %s21, 3
        // Predicated region
        $region60: #{alexnet_forward.25} parent=50 // pred_check
          %p655 = pneg %p654
        $region61: #{alexnet_forward.25} parent=50 // pred_check_branch
          %657 = sbr.rel (%p655) target = $region63
        $region62: #{alexnet_forward.25} parent=50 // pred_region
          %v658 = vld [vmem:[#allocation2] sm:$0xff]
          %v659 = vld [vmem:[#allocation2 + $0x8] sm:$0xff]
          %v660 = vld [vmem:[%s269] sm:$0x1]
          %v662 = vlaneseq
          %v663 = vshrl.u32 %v662, 7
          %v664 = vsub.s32 0, %v663
          %v665 = vrot.slane %v660, %v664
          %v667 = vadd.f32 %v658, %v665
          %v668 = vadd.f32 %v659, %v665
          %669 = vst [vmem:[%s277] sm:$0xff] %v667
          %670 = vst [vmem:[%s277 + $0x8] sm:$0xff] %v668
        $region63: #{alexnet_forward.25} parent=50 // pred_fallthru
          _
        %s671 = smul.u32 2, %s19
        %p672 = scmp.lt.s32.totalorder %s671, 1
        %s673 = scalar_select %p672, %s671, 1
        %p674 = scmp.lt.s32.totalorder %s20, 0
        %s675 = scalar_select %p674, %s20, 0
        %s676 = sadd.s32 %s675, %s673
        %s677 = smul.addr %s676, 8
        %s678 = scalar_lea.vmem %s3, %s677
        // Predicated region
        $region64: #{alexnet_forward.25} parent=50 // pred_check
          %p679 = pneg %p135
        $region65: #{alexnet_forward.25} parent=50 // pred_check_branch
          %681 = sbr.rel (%p679) target = $region67
        $region66: #{alexnet_forward.25} parent=50 // pred_region
          %s682 = smul.u32 2, %s19
        $region67: #{alexnet_forward.25} parent=50 // pred_fallthru
          _
        // Predicated region
        $region68: #{alexnet_forward.25} parent=50 // pred_check
          %p683 = pneg %p135
        $region69: #{alexnet_forward.25} parent=50 // pred_check_branch
          %685 = sbr.rel (%p683) target = $region71
        $region70: #{alexnet_forward.25} parent=50 // pred_region
          %s686 = smul.u32 2, %s19
          %p687 = scmp.lt.s32.totalorder %s686, 1
          %s688 = scalar_select %p687, %s686, 1
          %p689 = scmp.lt.s32.totalorder %s20, 0
          %s690 = scalar_select %p689, %s20, 0
          %s691 = sadd.s32 %s690, %s688
          %s692 = smul.addr %s691, 8
          %s693 = scalar_lea.vmem %s3, %s692
        $region71: #{alexnet_forward.25} parent=50 // pred_fallthru
          _
      $region51: #{alexnet_forward.25} parent=5 // pred_fallthru
        _
      %p694 = scmp.le.s32.totalorder 2, %s9
      // Predicated region
      $region72: #{alexnet_forward.25} parent=5 // pred_check
        %p695 = pneg %p694
      $region73: #{alexnet_forward.25} parent=5 // pred_check_branch
        %697 = sbr.rel (%p695) target = $region75
      $region74: #{alexnet_forward.25} parent=5 // pred_region
        %s698 = ssub.s32 %s9, 2
      $region75: #{alexnet_forward.25} parent=5 // pred_fallthru
        _
    $region6: #{alexnet_forward.25} parent=1 // loop_footer
      %s13 = sadd.s32 1, %s9
    $region7: #{alexnet_forward.25} parent=1 // loop_footer_branch
      %8 = sbr.rel target = $region3
    $region8: #{alexnet_forward.25} parent=1 // loop_exit
      _

</llo_original>
